<compile_context>
chip_gen: v5e
topology: v5e:2x2
jax: 0.10.0
libtpu: 0.0.40
codegen_flags: <defaults>
</compile_context>

<pallas_src>
import jax
import jax.numpy as jnp
from jax import lax
from jax.experimental import pallas as pl
from jax.experimental.pallas import tpu as pltpu


# ---------------------------------------------------------------------------
# Parameter preparation: fold BN scale into conv weights (host side, once)
# ---------------------------------------------------------------------------
def fold_bn_into_params(params):
    """Fold the BN scale into the conv output-channel axis; keep only a bias."""
    w1 = params["w1"] * params["s1"][:, 0][None, :, None]          # (3, Cm, Ci)
    w2 = params["w2"] * params["s2"][:, 0][None, None, :, None]    # (3, 3, Cm, Cm)
    w3 = params["w3"] * params["s3"]                                # (Co, Cm)
    cm = w1.shape[1]
    return dict(
        w1=w1, b1=params["b1"],
        w2=w2.reshape(9, cm, cm), b2=params["b2"],   # tap index = kh*3 + kw
        w3=w3, b3=params["b3"],
    )


# ---------------------------------------------------------------------------
# Fused Bottleneck3d forward
# ---------------------------------------------------------------------------
def bottleneck3d_forward(x, prepared):
    """Forward pass of Bottleneck3d (default config) on NCDHW input."""
    N, Cin, T, H, W = x.shape
    HW = H * W
    THW = T * HW
    w1, b1 = prepared["w1"], prepared["b1"]
    w2, b2 = prepared["w2"], prepared["b2"]
    w3, b3 = prepared["w3"], prepared["b3"]
    Cmid = w1.shape[1]
    Cout = w3.shape[0]
    assert Cin == Cout, "downsample=None requires inplanes == planes * expansion"

    # Channels on sublanes, flattened (t, h, w) on lanes -- pure reshape.
    x_cl = x.reshape(N, Cin, THW)

    # Per-tap lane-roll amounts and boundary-validity masks (tap = kh*3 + kw).
    shifts = []
    mask_rows = []
    p = jnp.arange(HW)
    row = p // W
    col = p % W
    for dh in (-1, 0, 1):
        for dw in (-1, 0, 1):
            off = dh * W + dw
            shifts.append((-off) % THW)          # out[j] reads in[j + off]
            valid = ((row + dh >= 0) & (row + dh < H) &
                     (col + dw >= 0) & (col + dw < W))
            mask_rows.append(jnp.tile(valid.astype(x.dtype), T))
    mask = jnp.stack(mask_rows)[:, None, :]       # (9, 1, THW)

    def kernel(x_ref, w1_ref, b1_ref, w2_ref, b2_ref, w3_ref, b3_ref,
               mask_ref, o_ref, y1_ref):
        # x_ref:  (1, Cin, THW)      w1_ref: (3, Cmid, Cin)    b1_ref: (Cmid, 1)
        # w2_ref: (9, Cmid, Cmid)    b2_ref: (Cmid, 1)
        # w3_ref: (Cout, Cmid)       b3_ref: (Cout, 1)
        # mask_ref: (9, 1, THW)      o_ref: (1, Cout, THW)
        # y1_ref (VMEM scratch): (Cmid, THW) f32

        # ---- conv1: 3x1x1 temporal conv as 3 slab matmuls + bias + ReLU ----
        y1_ref[...] = jnp.dot(w1_ref[1], x_ref[0],
                              preferred_element_type=jnp.float32)
        if T > 1:
            # out[t] += W1[0] @ x[t-1]   (t >= 1)
            y1_ref[:, pl.ds(HW, THW - HW)] += jnp.dot(
                w1_ref[0], x_ref[0, :, pl.ds(0, THW - HW)],
                preferred_element_type=jnp.float32)
            # out[t] += W1[2] @ x[t+1]   (t <= T-2)
            y1_ref[:, pl.ds(0, THW - HW)] += jnp.dot(
                w1_ref[2], x_ref[0, :, pl.ds(HW, THW - HW)],
                preferred_element_type=jnp.float32)
        y1 = jnp.maximum(y1_ref[...] + b1_ref[...], 0.0)

        # ---- conv2: 1x3x3 spatial conv via roll + boundary mask + matmul ----
        acc = None
        for tap, shift in enumerate(shifts):
            if shift == 0:                     # center tap: mask is all-ones
                src = y1
            else:
                src = pltpu.roll(y1, shift=shift, axis=1) * mask_ref[tap]
            contrib = jnp.dot(w2_ref[tap], src,
                              preferred_element_type=jnp.float32)
            acc = contrib if acc is None else acc + contrib
        y2 = jnp.maximum(acc + b2_ref[...], 0.0)

        # ---- conv3 (1x1x1) + bias -> + identity -> ReLU ---------------------
        y3 = jnp.dot(w3_ref[...], y2, preferred_element_type=jnp.float32)
        y3 = y3 + b3_ref[...] + x_ref[0].astype(jnp.float32)
        o_ref[0] = jnp.maximum(y3, 0.0).astype(o_ref.dtype)

    out = pl.pallas_call(
        kernel,
        out_shape=jax.ShapeDtypeStruct((N, Cout, THW), x.dtype),
        grid_spec=pltpu.PrefetchScalarGridSpec(
            num_scalar_prefetch=0,
            grid=(N,),
            in_specs=[
                pl.BlockSpec((1, Cin, THW), lambda n: (n, 0, 0)),
                pl.BlockSpec((3, Cmid, Cin), lambda n: (0, 0, 0)),
                pl.BlockSpec((Cmid, 1), lambda n: (0, 0)),
                pl.BlockSpec((9, Cmid, Cmid), lambda n: (0, 0, 0)),
                pl.BlockSpec((Cmid, 1), lambda n: (0, 0)),
                pl.BlockSpec((Cout, Cmid), lambda n: (0, 0)),
                pl.BlockSpec((Cout, 1), lambda n: (0, 0)),
                pl.BlockSpec((9, 1, THW), lambda n: (0, 0, 0)),
            ],
            out_specs=pl.BlockSpec((1, Cout, THW), lambda n: (n, 0, 0)),
            scratch_shapes=[pltpu.VMEM((Cmid, THW), jnp.float32)],
        ),
        compiler_params=pltpu.CompilerParams(
            dimension_semantics=("parallel",)),
    )(x_cl, w1, b1, w2, b2, w3, b3, mask)

    return out.reshape(N, Cout, T, H, W)


# ---------------------------------------------------------------------------
# Independent plain-JAX reference (lax.conv_general_dilated, unfolded params)
# ---------------------------------------------------------------------------
def bottleneck3d_reference(x, params):
    dn = ("NCDHW", "OIDHW", "NCDHW")
    hp = lax.Precision.HIGHEST

    def bn(y, s, b):
        s = s[:, 0]
        b = b[:, 0]
        return y * s[None, :, None, None, None] + b[None, :, None, None, None]

    w1 = jnp.transpose(params["w1"], (1, 2, 0))[:, :, :, None, None]   # (Cm,Ci,3,1,1)
    y = lax.conv_general_dilated(x, w1, (1, 1, 1),
                                 padding=((1, 1), (0, 0), (0, 0)),
                                 dimension_numbers=dn, precision=hp)
    y = jnp.maximum(bn(y, params["s1"], params["b1"]), 0.0)

    w2 = jnp.transpose(params["w2"], (2, 3, 0, 1))[:, :, None, :, :]   # (Cm,Cm,1,3,3)
    y = lax.conv_general_dilated(y, w2, (1, 1, 1),
                                 padding=((0, 0), (1, 1), (1, 1)),
                                 dimension_numbers=dn, precision=hp)
    y = jnp.maximum(bn(y, params["s2"], params["b2"]), 0.0)

    w3 = params["w3"][:, :, None, None, None]                          # (Co,Cm,1,1,1)
    y = lax.conv_general_dilated(y, w3, (1, 1, 1),
                                 padding=((0, 0), (0, 0), (0, 0)),
                                 dimension_numbers=dn, precision=hp)
    y = bn(y, params["s3"], params["b3"])
    return jnp.maximum(y + x, 0.0)


if __name__ == "__main__":
    key = jax.random.PRNGKey(0)
    ks = jax.random.split(key, 16)

    # Small shapes: batch=2, bottleneck width planes=4, inplanes=planes*4=16,
    # temporal=8, spatial=16x16.
    N, planes, T, H, W = 2, 4, 8, 16, 16
    inplanes = planes * 4          # downsample=None => inplanes == planes*expansion
    C4 = planes * 4

    x = jax.random.normal(ks[0], (N, inplanes, T, H, W), dtype=jnp.float32)

    def fold_bn(kg, kb, km, kv, c, eps=1e-5):
        gamma = 1.0 + 0.1 * jax.random.normal(kg, (c,), jnp.float32)
        beta = 0.1 * jax.random.normal(kb, (c,), jnp.float32)
        mean = 0.1 * jax.random.normal(km, (c,), jnp.float32)
        var = jnp.abs(jax.random.normal(kv, (c,), jnp.float32)) + 0.5
        scale = gamma * lax.rsqrt(var + eps)
        bias = beta - mean * scale
        return scale[:, None], bias[:, None]

    w1 = 0.2 * jax.random.normal(ks[1], (3, planes, inplanes), jnp.float32)      # (kt, co, ci)
    w2 = 0.2 * jax.random.normal(ks[2], (3, 3, planes, planes), jnp.float32)     # (kh, kw, co, ci)
    w3 = 0.2 * jax.random.normal(ks[3], (C4, planes), jnp.float32)               # (co, ci)
    s1, b1 = fold_bn(ks[4], ks[5], ks[6], ks[7], planes)
    s2, b2 = fold_bn(ks[8], ks[9], ks[10], ks[11], planes)
    s3, b3 = fold_bn(ks[12], ks[13], ks[14], ks[15], C4)

    params = dict(w1=w1, s1=s1, b1=b1, w2=w2, s2=s2, b2=b2, w3=w3, s3=s3, b3=b3)
    prepared = fold_bn_into_params(params)     # one-time, host-side

    y = jax.jit(bottleneck3d_forward)(x, prepared)
    y = jax.block_until_ready(y)

    ref = jax.block_until_ready(bottleneck3d_reference(x, params))

    assert y.shape == (N, C4, T, H, W), y.shape
    max_err = float(jnp.max(jnp.abs(y - ref)))
    assert max_err < 2e-2, f"max abs err {max_err}"
    print("KERNEL_OK")
</pallas_src>

<mosaic_0001>
module attributes {stable_mosaic.version = 11 : i64} {
  func.func @kernel(%arg0: i32, %arg1: memref<1x16x2048xf32, #tpu.memory_space<vmem>>, %arg2: memref<3x4x16xf32, #tpu.memory_space<vmem>>, %arg3: memref<4x1xf32, #tpu.memory_space<vmem>>, %arg4: memref<9x4x4xf32, #tpu.memory_space<vmem>>, %arg5: memref<4x1xf32, #tpu.memory_space<vmem>>, %arg6: memref<16x4xf32, #tpu.memory_space<vmem>>, %arg7: memref<16x1xf32, #tpu.memory_space<vmem>>, %arg8: memref<9x1x2048xf32, #tpu.memory_space<vmem>>, %arg9: memref<1x16x2048xf32, #tpu.memory_space<vmem>>, %arg10: memref<4x2048xf32, #tpu.memory_space<vmem>>) attributes {dimension_semantics = [#tpu.dimension_semantics<parallel>], iteration_bounds = array<i64: 2>, scalar_prefetch = 0 : i64, scratch_operands = 1 : i64, tpu.core_type = #tpu.core_type<tc>, window_params = [{transform_indices = @transform_0, window_bounds = array<i64: 1, 16, 2048>}, {pipeline_mode = #tpu.pipeline_mode<synchronous>, transform_indices = @transform_1, window_bounds = array<i64: 3, 4, 16>}, {pipeline_mode = #tpu.pipeline_mode<synchronous>, transform_indices = @transform_2, window_bounds = array<i64: 4, 1>}, {pipeline_mode = #tpu.pipeline_mode<synchronous>, transform_indices = @transform_3, window_bounds = array<i64: 9, 4, 4>}, {pipeline_mode = #tpu.pipeline_mode<synchronous>, transform_indices = @transform_4, window_bounds = array<i64: 4, 1>}, {pipeline_mode = #tpu.pipeline_mode<synchronous>, transform_indices = @transform_5, window_bounds = array<i64: 16, 4>}, {pipeline_mode = #tpu.pipeline_mode<synchronous>, transform_indices = @transform_6, window_bounds = array<i64: 16, 1>}, {pipeline_mode = #tpu.pipeline_mode<synchronous>, transform_indices = @transform_7, window_bounds = array<i64: 9, 1, 2048>}, {transform_indices = @transform_8, window_bounds = array<i64: 1, 16, 2048>}]} {
    %c1 = arith.constant 1 : index
    %c0 = arith.constant 0 : index
    %c0_0 = arith.constant 0 : index
    %0 = vector.load %arg2[%c1, %c0, %c0_0] : memref<3x4x16xf32, #tpu.memory_space<vmem>>, vector<1x4x16xf32>
    %1 = vector.shape_cast %0 : vector<1x4x16xf32> to vector<4x16xf32>
    %c0_1 = arith.constant 0 : index
    %c0_2 = arith.constant 0 : index
    %c0_3 = arith.constant 0 : index
    %2 = vector.load %arg1[%c0_1, %c0_2, %c0_3] : memref<1x16x2048xf32, #tpu.memory_space<vmem>>, vector<1x16x2048xf32>
    %3 = vector.shape_cast %2 : vector<1x16x2048xf32> to vector<16x2048xf32>
    %cst = arith.constant dense<0.000000e+00> : vector<4x2048xf32>
    %4 = tpu.matmul %1, %3, %cst {dimension_numbers = #tpu.dot_dimension_numbers<[1], [0], [0], [1], [0, 0, 1, 1], [], []>} : vector<4x16xf32>, vector<16x2048xf32>, vector<4x2048xf32> -> vector<4x2048xf32>
    %c0_4 = arith.constant 0 : index
    %c0_5 = arith.constant 0 : index
    %5 = vector.load %arg10[%c0_4, %c0_5] : memref<4x2048xf32, #tpu.memory_space<vmem>>, vector<4x2048xf32>
    tpu.vector_store %arg10[%c0_4, %c0_5], %4 {strides = array<i32>} : memref<4x2048xf32, #tpu.memory_space<vmem>>, vector<4x2048xf32>,
    %c0_6 = arith.constant 0 : index
    %c256 = arith.constant 256 : index
    %6 = vector.load %arg10[%c0_6, %c256] : memref<4x2048xf32, #tpu.memory_space<vmem>>, vector<4x1792xf32>
    %c0_7 = arith.constant 0 : index
    %c0_8 = arith.constant 0 : index
    %c0_9 = arith.constant 0 : index
    %7 = vector.load %arg2[%c0_7, %c0_8, %c0_9] : memref<3x4x16xf32, #tpu.memory_space<vmem>>, vector<1x4x16xf32>
    %8 = vector.shape_cast %7 : vector<1x4x16xf32> to vector<4x16xf32>
    %c0_10 = arith.constant 0 : index
    %c0_11 = arith.constant 0 : index
    %c0_12 = arith.constant 0 : index
    %9 = vector.load %arg1[%c0_10, %c0_11, %c0_12] : memref<1x16x2048xf32, #tpu.memory_space<vmem>>, vector<1x16x1792xf32>
    %10 = vector.shape_cast %9 : vector<1x16x1792xf32> to vector<16x1792xf32>
    %cst_13 = arith.constant dense<0.000000e+00> : vector<4x1792xf32>
    %11 = tpu.matmul %8, %10, %cst_13 {dimension_numbers = #tpu.dot_dimension_numbers<[1], [0], [0], [1], [0, 0, 1, 1], [], []>} : vector<4x16xf32>, vector<16x1792xf32>, vector<4x1792xf32> -> vector<4x1792xf32>
    %12 = arith.addf %6, %11 : vector<4x1792xf32>
    %c0_14 = arith.constant 0 : index
    %c256_15 = arith.constant 256 : index
    %13 = vector.load %arg10[%c0_14, %c256_15] : memref<4x2048xf32, #tpu.memory_space<vmem>>, vector<4x1792xf32>
    tpu.vector_store %arg10[%c0_14, %c256_15], %12 {strides = array<i32>} : memref<4x2048xf32, #tpu.memory_space<vmem>>, vector<4x1792xf32>,
    %c0_16 = arith.constant 0 : index
    %c0_17 = arith.constant 0 : index
    %14 = vector.load %arg10[%c0_16, %c0_17] : memref<4x2048xf32, #tpu.memory_space<vmem>>, vector<4x1792xf32>
    %c2 = arith.constant 2 : index
    %c0_18 = arith.constant 0 : index
    %c0_19 = arith.constant 0 : index
    %15 = vector.load %arg2[%c2, %c0_18, %c0_19] : memref<3x4x16xf32, #tpu.memory_space<vmem>>, vector<1x4x16xf32>
    %16 = vector.shape_cast %15 : vector<1x4x16xf32> to vector<4x16xf32>
    %c0_20 = arith.constant 0 : index
    %c0_21 = arith.constant 0 : index
    %c256_22 = arith.constant 256 : index
    %17 = vector.load %arg1[%c0_20, %c0_21, %c256_22] : memref<1x16x2048xf32, #tpu.memory_space<vmem>>, vector<1x16x1792xf32>
    %18 = vector.shape_cast %17 : vector<1x16x1792xf32> to vector<16x1792xf32>
    %cst_23 = arith.constant dense<0.000000e+00> : vector<4x1792xf32>
    %19 = tpu.matmul %16, %18, %cst_23 {dimension_numbers = #tpu.dot_dimension_numbers<[1], [0], [0], [1], [0, 0, 1, 1], [], []>} : vector<4x16xf32>, vector<16x1792xf32>, vector<4x1792xf32> -> vector<4x1792xf32>
    %20 = arith.addf %14, %19 : vector<4x1792xf32>
    %c0_24 = arith.constant 0 : index
    %c0_25 = arith.constant 0 : index
    %21 = vector.load %arg10[%c0_24, %c0_25] : memref<4x2048xf32, #tpu.memory_space<vmem>>, vector<4x1792xf32>
    tpu.vector_store %arg10[%c0_24, %c0_25], %20 {strides = array<i32>} : memref<4x2048xf32, #tpu.memory_space<vmem>>, vector<4x1792xf32>,
    %c0_26 = arith.constant 0 : index
    %c0_27 = arith.constant 0 : index
    %22 = vector.load %arg10[%c0_26, %c0_27] : memref<4x2048xf32, #tpu.memory_space<vmem>>, vector<4x2048xf32>
    %c0_28 = arith.constant 0 : index
    %c0_29 = arith.constant 0 : index
    %23 = vector.load %arg3[%c0_28, %c0_29] : memref<4x1xf32, #tpu.memory_space<vmem>>, vector<4x1xf32>
    %24 = vector.broadcast %23 : vector<4x1xf32> to vector<4x2048xf32>
    %25 = arith.addf %22, %24 : vector<4x2048xf32>
    %cst_30 = arith.constant 0.000000e+00 : f32
    %26 = vector.broadcast %cst_30 : f32 to vector<4x2048xf32>
    %27 = arith.maximumf %25, %26 : vector<4x2048xf32>
    %c17_i32 = arith.constant 17 : i32
    %28 = tpu.dynamic_rotate %27 by %c17_i32 dim 1 : vector<4x2048xf32>, i32 -> vector<4x2048xf32>
    %c0_31 = arith.constant 0 : index
    %c0_32 = arith.constant 0 : index
    %c0_33 = arith.constant 0 : index
    %29 = vector.load %arg8[%c0_31, %c0_32, %c0_33] : memref<9x1x2048xf32, #tpu.memory_space<vmem>>, vector<1x1x2048xf32>
    %30 = vector.shape_cast %29 : vector<1x1x2048xf32> to vector<1x2048xf32>
    %31 = vector.broadcast %30 : vector<1x2048xf32> to vector<4x2048xf32>
    %32 = arith.mulf %28, %31 : vector<4x2048xf32>
    %c0_34 = arith.constant 0 : index
    %c0_35 = arith.constant 0 : index
    %c0_36 = arith.constant 0 : index
    %33 = vector.load %arg4[%c0_34, %c0_35, %c0_36] : memref<9x4x4xf32, #tpu.memory_space<vmem>>, vector<1x4x4xf32>
    %34 = vector.shape_cast %33 : vector<1x4x4xf32> to vector<4x4xf32>
    %cst_37 = arith.constant dense<0.000000e+00> : vector<4x2048xf32>
    %35 = tpu.matmul %34, %32, %cst_37 {dimension_numbers = #tpu.dot_dimension_numbers<[1], [0], [0], [1], [0, 0, 1, 1], [], []>} : vector<4x4xf32>, vector<4x2048xf32>, vector<4x2048xf32> -> vector<4x2048xf32>
    %c16_i32 = arith.constant 16 : i32
    %36 = tpu.dynamic_rotate %27 by %c16_i32 dim 1 : vector<4x2048xf32>, i32 -> vector<4x2048xf32>
    %c1_38 = arith.constant 1 : index
    %c0_39 = arith.constant 0 : index
    %c0_40 = arith.constant 0 : index
    %37 = vector.load %arg8[%c1_38, %c0_39, %c0_40] : memref<9x1x2048xf32, #tpu.memory_space<vmem>>, vector<1x1x2048xf32>
    %38 = vector.shape_cast %37 : vector<1x1x2048xf32> to vector<1x2048xf32>
    %39 = vector.broadcast %38 : vector<1x2048xf32> to vector<4x2048xf32>
    %40 = arith.mulf %36, %39 : vector<4x2048xf32>
    %c1_41 = arith.constant 1 : index
    %c0_42 = arith.constant 0 : index
    %c0_43 = arith.constant 0 : index
    %41 = vector.load %arg4[%c1_41, %c0_42, %c0_43] : memref<9x4x4xf32, #tpu.memory_space<vmem>>, vector<1x4x4xf32>
    %42 = vector.shape_cast %41 : vector<1x4x4xf32> to vector<4x4xf32>
    %cst_44 = arith.constant dense<0.000000e+00> : vector<4x2048xf32>
    %43 = tpu.matmul %42, %40, %cst_44 {dimension_numbers = #tpu.dot_dimension_numbers<[1], [0], [0], [1], [0, 0, 1, 1], [], []>} : vector<4x4xf32>, vector<4x2048xf32>, vector<4x2048xf32> -> vector<4x2048xf32>
    %44 = arith.addf %35, %43 : vector<4x2048xf32>
    %c15_i32 = arith.constant 15 : i32
    %45 = tpu.dynamic_rotate %27 by %c15_i32 dim 1 : vector<4x2048xf32>, i32 -> vector<4x2048xf32>
    %c2_45 = arith.constant 2 : index
    %c0_46 = arith.constant 0 : index
    %c0_47 = arith.constant 0 : index
    %46 = vector.load %arg8[%c2_45, %c0_46, %c0_47] : memref<9x1x2048xf32, #tpu.memory_space<vmem>>, vector<1x1x2048xf32>
    %47 = vector.shape_cast %46 : vector<1x1x2048xf32> to vector<1x2048xf32>
    %48 = vector.broadcast %47 : vector<1x2048xf32> to vector<4x2048xf32>
    %49 = arith.mulf %45, %48 : vector<4x2048xf32>
    %c2_48 = arith.constant 2 : index
    %c0_49 = arith.constant 0 : index
    %c0_50 = arith.constant 0 : index
    %50 = vector.load %arg4[%c2_48, %c0_49, %c0_50] : memref<9x4x4xf32, #tpu.memory_space<vmem>>, vector<1x4x4xf32>
    %51 = vector.shape_cast %50 : vector<1x4x4xf32> to vector<4x4xf32>
    %cst_51 = arith.constant dense<0.000000e+00> : vector<4x2048xf32>
    %52 = tpu.matmul %51, %49, %cst_51 {dimension_numbers = #tpu.dot_dimension_numbers<[1], [0], [0], [1], [0, 0, 1, 1], [], []>} : vector<4x4xf32>, vector<4x2048xf32>, vector<4x2048xf32> -> vector<4x2048xf32>
    %53 = arith.addf %44, %52 : vector<4x2048xf32>
    %c1_i32 = arith.constant 1 : i32
    %54 = tpu.dynamic_rotate %27 by %c1_i32 dim 1 : vector<4x2048xf32>, i32 -> vector<4x2048xf32>
    %c3 = arith.constant 3 : index
    %c0_52 = arith.constant 0 : index
    %c0_53 = arith.constant 0 : index
    %55 = vector.load %arg8[%c3, %c0_52, %c0_53] : memref<9x1x2048xf32, #tpu.memory_space<vmem>>, vector<1x1x2048xf32>
    %56 = vector.shape_cast %55 : vector<1x1x2048xf32> to vector<1x2048xf32>
    %57 = vector.broadcast %56 : vector<1x2048xf32> to vector<4x2048xf32>
    %58 = arith.mulf %54, %57 : vector<4x2048xf32>
    %c3_54 = arith.constant 3 : index
    %c0_55 = arith.constant 0 : index
    %c0_56 = arith.constant 0 : index
    %59 = vector.load %arg4[%c3_54, %c0_55, %c0_56] : memref<9x4x4xf32, #tpu.memory_space<vmem>>, vector<1x4x4xf32>
    %60 = vector.shape_cast %59 : vector<1x4x4xf32> to vector<4x4xf32>
    %cst_57 = arith.constant dense<0.000000e+00> : vector<4x2048xf32>
    %61 = tpu.matmul %60, %58, %cst_57 {dimension_numbers = #tpu.dot_dimension_numbers<[1], [0], [0], [1], [0, 0, 1, 1], [], []>} : vector<4x4xf32>, vector<4x2048xf32>, vector<4x2048xf32> -> vector<4x2048xf32>
    %62 = arith.addf %53, %61 : vector<4x2048xf32>
    %c4 = arith.constant 4 : index
    %c0_58 = arith.constant 0 : index
    %c0_59 = arith.constant 0 : index
    %63 = vector.load %arg4[%c4, %c0_58, %c0_59] : memref<9x4x4xf32, #tpu.memory_space<vmem>>, vector<1x4x4xf32>
    %64 = vector.shape_cast %63 : vector<1x4x4xf32> to vector<4x4xf32>
    %cst_60 = arith.constant dense<0.000000e+00> : vector<4x2048xf32>
    %65 = tpu.matmul %64, %27, %cst_60 {dimension_numbers = #tpu.dot_dimension_numbers<[1], [0], [0], [1], [0, 0, 1, 1], [], []>} : vector<4x4xf32>, vector<4x2048xf32>, vector<4x2048xf32> -> vector<4x2048xf32>
    %66 = arith.addf %62, %65 : vector<4x2048xf32>
    %c2047_i32 = arith.constant 2047 : i32
    %67 = tpu.dynamic_rotate %27 by %c2047_i32 dim 1 : vector<4x2048xf32>, i32 -> vector<4x2048xf32>
    %c5 = arith.constant 5 : index
    %c0_61 = arith.constant 0 : index
    %c0_62 = arith.constant 0 : index
    %68 = vector.load %arg8[%c5, %c0_61, %c0_62] : memref<9x1x2048xf32, #tpu.memory_space<vmem>>, vector<1x1x2048xf32>
    %69 = vector.shape_cast %68 : vector<1x1x2048xf32> to vector<1x2048xf32>
    %70 = vector.broadcast %69 : vector<1x2048xf32> to vector<4x2048xf32>
    %71 = arith.mulf %67, %70 : vector<4x2048xf32>
    %c5_63 = arith.constant 5 : index
    %c0_64 = arith.constant 0 : index
    %c0_65 = arith.constant 0 : index
    %72 = vector.load %arg4[%c5_63, %c0_64, %c0_65] : memref<9x4x4xf32, #tpu.memory_space<vmem>>, vector<1x4x4xf32>
    %73 = vector.shape_cast %72 : vector<1x4x4xf32> to vector<4x4xf32>
    %cst_66 = arith.constant dense<0.000000e+00> : vector<4x2048xf32>
    %74 = tpu.matmul %73, %71, %cst_66 {dimension_numbers = #tpu.dot_dimension_numbers<[1], [0], [0], [1], [0, 0, 1, 1], [], []>} : vector<4x4xf32>, vector<4x2048xf32>, vector<4x2048xf32> -> vector<4x2048xf32>
    %75 = arith.addf %66, %74 : vector<4x2048xf32>
    %c2033_i32 = arith.constant 2033 : i32
    %76 = tpu.dynamic_rotate %27 by %c2033_i32 dim 1 : vector<4x2048xf32>, i32 -> vector<4x2048xf32>
    %c6 = arith.constant 6 : index
    %c0_67 = arith.constant 0 : index
    %c0_68 = arith.constant 0 : index
    %77 = vector.load %arg8[%c6, %c0_67, %c0_68] : memref<9x1x2048xf32, #tpu.memory_space<vmem>>, vector<1x1x2048xf32>
    %78 = vector.shape_cast %77 : vector<1x1x2048xf32> to vector<1x2048xf32>
    %79 = vector.broadcast %78 : vector<1x2048xf32> to vector<4x2048xf32>
    %80 = arith.mulf %76, %79 : vector<4x2048xf32>
    %c6_69 = arith.constant 6 : index
    %c0_70 = arith.constant 0 : index
    %c0_71 = arith.constant 0 : index
    %81 = vector.load %arg4[%c6_69, %c0_70, %c0_71] : memref<9x4x4xf32, #tpu.memory_space<vmem>>, vector<1x4x4xf32>
    %82 = vector.shape_cast %81 : vector<1x4x4xf32> to vector<4x4xf32>
    %cst_72 = arith.constant dense<0.000000e+00> : vector<4x2048xf32>
    %83 = tpu.matmul %82, %80, %cst_72 {dimension_numbers = #tpu.dot_dimension_numbers<[1], [0], [0], [1], [0, 0, 1, 1], [], []>} : vector<4x4xf32>, vector<4x2048xf32>, vector<4x2048xf32> -> vector<4x2048xf32>
    %84 = arith.addf %75, %83 : vector<4x2048xf32>
    %c2032_i32 = arith.constant 2032 : i32
    %85 = tpu.dynamic_rotate %27 by %c2032_i32 dim 1 : vector<4x2048xf32>, i32 -> vector<4x2048xf32>
    %c7 = arith.constant 7 : index
    %c0_73 = arith.constant 0 : index
    %c0_74 = arith.constant 0 : index
    %86 = vector.load %arg8[%c7, %c0_73, %c0_74] : memref<9x1x2048xf32, #tpu.memory_space<vmem>>, vector<1x1x2048xf32>
    %87 = vector.shape_cast %86 : vector<1x1x2048xf32> to vector<1x2048xf32>
    %88 = vector.broadcast %87 : vector<1x2048xf32> to vector<4x2048xf32>
    %89 = arith.mulf %85, %88 : vector<4x2048xf32>
    %c7_75 = arith.constant 7 : index
    %c0_76 = arith.constant 0 : index
    %c0_77 = arith.constant 0 : index
    %90 = vector.load %arg4[%c7_75, %c0_76, %c0_77] : memref<9x4x4xf32, #tpu.memory_space<vmem>>, vector<1x4x4xf32>
    %91 = vector.shape_cast %90 : vector<1x4x4xf32> to vector<4x4xf32>
    %cst_78 = arith.constant dense<0.000000e+00> : vector<4x2048xf32>
    %92 = tpu.matmul %91, %89, %cst_78 {dimension_numbers = #tpu.dot_dimension_numbers<[1], [0], [0], [1], [0, 0, 1, 1], [], []>} : vector<4x4xf32>, vector<4x2048xf32>, vector<4x2048xf32> -> vector<4x2048xf32>
    %93 = arith.addf %84, %92 : vector<4x2048xf32>
    %c2031_i32 = arith.constant 2031 : i32
    %94 = tpu.dynamic_rotate %27 by %c2031_i32 dim 1 : vector<4x2048xf32>, i32 -> vector<4x2048xf32>
    %c8 = arith.constant 8 : index
    %c0_79 = arith.constant 0 : index
    %c0_80 = arith.constant 0 : index
    %95 = vector.load %arg8[%c8, %c0_79, %c0_80] : memref<9x1x2048xf32, #tpu.memory_space<vmem>>, vector<1x1x2048xf32>
    %96 = vector.shape_cast %95 : vector<1x1x2048xf32> to vector<1x2048xf32>
    %97 = vector.broadcast %96 : vector<1x2048xf32> to vector<4x2048xf32>
    %98 = arith.mulf %94, %97 : vector<4x2048xf32>
    %c8_81 = arith.constant 8 : index
    %c0_82 = arith.constant 0 : index
    %c0_83 = arith.constant 0 : index
    %99 = vector.load %arg4[%c8_81, %c0_82, %c0_83] : memref<9x4x4xf32, #tpu.memory_space<vmem>>, vector<1x4x4xf32>
    %100 = vector.shape_cast %99 : vector<1x4x4xf32> to vector<4x4xf32>
    %cst_84 = arith.constant dense<0.000000e+00> : vector<4x2048xf32>
    %101 = tpu.matmul %100, %98, %cst_84 {dimension_numbers = #tpu.dot_dimension_numbers<[1], [0], [0], [1], [0, 0, 1, 1], [], []>} : vector<4x4xf32>, vector<4x2048xf32>, vector<4x2048xf32> -> vector<4x2048xf32>
    %102 = arith.addf %93, %101 : vector<4x2048xf32>
    %c0_85 = arith.constant 0 : index
    %c0_86 = arith.constant 0 : index
    %103 = vector.load %arg5[%c0_85, %c0_86] : memref<4x1xf32, #tpu.memory_space<vmem>>, vector<4x1xf32>
    %104 = vector.broadcast %103 : vector<4x1xf32> to vector<4x2048xf32>
    %105 = arith.addf %102, %104 : vector<4x2048xf32>
    %cst_87 = arith.constant 0.000000e+00 : f32
    %106 = vector.broadcast %cst_87 : f32 to vector<4x2048xf32>
    %107 = arith.maximumf %105, %106 : vector<4x2048xf32>
    %c0_88 = arith.constant 0 : index
    %c0_89 = arith.constant 0 : index
    %108 = vector.load %arg6[%c0_88, %c0_89] : memref<16x4xf32, #tpu.memory_space<vmem>>, vector<16x4xf32>
    %cst_90 = arith.constant dense<0.000000e+00> : vector<16x2048xf32>
    %109 = tpu.matmul %108, %107, %cst_90 {dimension_numbers = #tpu.dot_dimension_numbers<[1], [0], [0], [1], [0, 0, 1, 1], [], []>} : vector<16x4xf32>, vector<4x2048xf32>, vector<16x2048xf32> -> vector<16x2048xf32>
    %c0_91 = arith.constant 0 : index
    %c0_92 = arith.constant 0 : index
    %110 = vector.load %arg7[%c0_91, %c0_92] : memref<16x1xf32, #tpu.memory_space<vmem>>, vector<16x1xf32>
    %111 = vector.broadcast %110 : vector<16x1xf32> to vector<16x2048xf32>
    %112 = arith.addf %109, %111 : vector<16x2048xf32>
    %c0_93 = arith.constant 0 : index
    %c0_94 = arith.constant 0 : index
    %c0_95 = arith.constant 0 : index
    %113 = vector.load %arg1[%c0_93, %c0_94, %c0_95] : memref<1x16x2048xf32, #tpu.memory_space<vmem>>, vector<1x16x2048xf32>
    %114 = vector.shape_cast %113 : vector<1x16x2048xf32> to vector<16x2048xf32>
    %115 = arith.addf %112, %114 : vector<16x2048xf32>
    %cst_96 = arith.constant 0.000000e+00 : f32
    %116 = vector.broadcast %cst_96 : f32 to vector<16x2048xf32>
    %117 = arith.maximumf %115, %116 : vector<16x2048xf32>
    %c0_97 = arith.constant 0 : index
    %c0_98 = arith.constant 0 : index
    %c0_99 = arith.constant 0 : index
    %118 = vector.load %arg9[%c0_97, %c0_98, %c0_99] : memref<1x16x2048xf32, #tpu.memory_space<vmem>>, vector<1x16x2048xf32>
    %119 = vector.shape_cast %118 : vector<1x16x2048xf32> to vector<16x2048xf32>
    %120 = vector.shape_cast %117 : vector<16x2048xf32> to vector<1x16x2048xf32>
    tpu.vector_store %arg9[%c0_97, %c0_98, %c0_99], %120 {strides = array<i32>} : memref<1x16x2048xf32, #tpu.memory_space<vmem>>, vector<1x16x2048xf32>,
    return
  }
  func.func @transform_0(%arg0: i32) -> (i32, i32, i32) {
    %c0_i32 = arith.constant 0 : i32
    %c0_i32_0 = arith.constant 0 : i32
    %c0_i32_1 = arith.constant 0 : i32
    return %arg0, %c0_i32, %c0_i32_0 : i32, i32, i32
  }
  func.func @transform_1(%arg0: i32) -> (i32, i32, i32) {
    %c0_i32 = arith.constant 0 : i32
    %c0_i32_0 = arith.constant 0 : i32
    %c0_i32_1 = arith.constant 0 : i32
    %c0_i32_2 = arith.constant 0 : i32
    return %c0_i32, %c0_i32_0, %c0_i32_1 : i32, i32, i32
  }
  func.func @transform_2(%arg0: i32) -> (i32, i32) {
    %c0_i32 = arith.constant 0 : i32
    %c0_i32_0 = arith.constant 0 : i32
    %c0_i32_1 = arith.constant 0 : i32
    return %c0_i32, %c0_i32_0 : i32, i32
  }
  func.func @transform_3(%arg0: i32) -> (i32, i32, i32) {
    %c0_i32 = arith.constant 0 : i32
    %c0_i32_0 = arith.constant 0 : i32
    %c0_i32_1 = arith.constant 0 : i32
    %c0_i32_2 = arith.constant 0 : i32
    return %c0_i32, %c0_i32_0, %c0_i32_1 : i32, i32, i32
  }
  func.func @transform_4(%arg0: i32) -> (i32, i32) {
    %c0_i32 = arith.constant 0 : i32
    %c0_i32_0 = arith.constant 0 : i32
    %c0_i32_1 = arith.constant 0 : i32
    return %c0_i32, %c0_i32_0 : i32, i32
  }
  func.func @transform_5(%arg0: i32) -> (i32, i32) {
    %c0_i32 = arith.constant 0 : i32
    %c0_i32_0 = arith.constant 0 : i32
    %c0_i32_1 = arith.constant 0 : i32
    return %c0_i32, %c0_i32_0 : i32, i32
  }
  func.func @transform_6(%arg0: i32) -> (i32, i32) {
    %c0_i32 = arith.constant 0 : i32
    %c0_i32_0 = arith.constant 0 : i32
    %c0_i32_1 = arith.constant 0 : i32
    return %c0_i32, %c0_i32_0 : i32, i32
  }
  func.func @transform_7(%arg0: i32) -> (i32, i32, i32) {
    %c0_i32 = arith.constant 0 : i32
    %c0_i32_0 = arith.constant 0 : i32
    %c0_i32_1 = arith.constant 0 : i32
    %c0_i32_2 = arith.constant 0 : i32
    return %c0_i32, %c0_i32_0, %c0_i32_1 : i32, i32, i32
  }
  func.func @transform_8(%arg0: i32) -> (i32, i32, i32) {
    %c0_i32 = arith.constant 0 : i32
    %c0_i32_0 = arith.constant 0 : i32
    %c0_i32_1 = arith.constant 0 : i32
    return %arg0, %c0_i32, %c0_i32_0 : i32, i32, i32
  }
}

</mosaic_0001>

<llo_original>
// kernel: bottleneck3d_forward.1
$region0: #{bottleneck3d_forward.1}
  #allocation0 [shape = 'u32[]', space=smem, size = 0x4, offset = 0x4, fixed_abs, tag = 'smem constant byte address 0x4 - core index']
  #allocation1 [shape = 'u32[72,128]{1,0:T(1,128)}', space=vmem, size = 0x9000, scoped, tag = 'internal scratch']
  #allocation2 [shape = 'f32[4,2048]{1,0:T(4,128)}', space=vmem, size = 0x8000, scoped, tag = 'scratch operand']
  %s0 = inlined_call_operand.vmem [shape: f32[2,16,2048], index: 0, kind: input, shape index: {}]
  %s1 = inlined_call_operand.vmem [shape: f32[3,4,16], index: 1, kind: input, shape index: {}]
  %s2 = inlined_call_operand.vmem [shape: f32[4,1], index: 2, kind: input, shape index: {}]
  %s3 = inlined_call_operand.vmem [shape: f32[9,4,4], index: 3, kind: input, shape index: {}]
  %s4 = inlined_call_operand.vmem [shape: f32[4,1], index: 4, kind: input, shape index: {}]
  %s5 = inlined_call_operand.vmem [shape: f32[16,4], index: 5, kind: input, shape index: {}]
  %s6 = inlined_call_operand.vmem [shape: f32[16,1], index: 6, kind: input, shape index: {}]
  %s7 = inlined_call_operand.vmem [shape: f32[9,1,2048], index: 7, kind: input, shape index: {}]
  %s8 = inlined_call_operand.vmem [shape: f32[2,16,2048], index: 8, kind: output, shape index: {}]
  %s9 = sld [smem:[#allocation0]]
  $region65: #{bottleneck3d_forward.1} parent=0
    _
  %s11 = ssub.s32 1, %s9
  %s12 = scalar_select 0, %s11, %s9
  loop: start=0, step=1, limit=4
  $region2: #{bottleneck3d_forward.1} parent=0 // loop_pre_header
    _
  $region3: #{bottleneck3d_forward.1} parent=0 // loop_header
    %s14 = sphi 0, %s18
    %p15 = scmp.ge.s32.totalorder %s14, 4
    %s24 = sphi 0, %s26
    %s27 = sphi 0, %s24
    %s28 = sphi 0, %s27
    %s44 = sphi 0, %s28
    %s48 = sphi 0, %s48
    %s50 = sphi 0, %s48
    %s51 = sphi 0, %s50
    %s65 = sphi 0, %s51
    %s69 = sphi 0, %s69
    %s71 = sphi 0, %s69
    %s72 = sphi 0, %s71
    %s86 = sphi 0, %s72
    %s90 = sphi 0, %s90
    %s92 = sphi 0, %s90
    %s93 = sphi 0, %s92
    %s107 = sphi 0, %s93
    %s111 = sphi 0, %s111
    %s113 = sphi 0, %s111
    %s114 = sphi 0, %s113
    %s128 = sphi 0, %s114
    %s132 = sphi 0, %s132
    %s134 = sphi 0, %s132
    %s135 = sphi 0, %s134
    %s149 = sphi 0, %s135
    %s153 = sphi 0, %s153
    %s155 = sphi 0, %s153
    %s156 = sphi 0, %s155
    %s170 = sphi 0, %s156
    %s174 = sphi 0, %s174
    %s176 = sphi 0, %s174
    %s177 = sphi 0, %s176
    %s191 = sphi 0, %s177
    %s197 = sphi 0, %s199
    %s200 = sphi 0, %s197
    %s201 = sphi 0, %s200
    %s217 = sphi 0, %s201
  $region4: #{bottleneck3d_forward.1} parent=0 // loop_header_branch
    %17 = sbr.rel (%p15) target = $region8
  $region5: #{bottleneck3d_forward.1} parent=0 // loop_body
    %s19 = ssub.s32 %s14, 1
    %s20 = ssub.s32 %s14, 2
    %s21 = sadd.s32 %s14, 1
    %s22 = ssub.s32 %s14, %s21
    %p23 = scmp.eq.s32.totalorder %s22, 0
    %s25 = sadd.s32 %s24, 1
    %s26 = scalar_select %p23, %s24, %s25
    %p29 = pneg %p23
    %p30 = scmp.eq.s32.totalorder %s14, 1
    %p31 = por %p29, %p30
    %p32 = scmp.ne.s32.totalorder %s24, %s27
    %p33 = scmp.eq.s32.totalorder %s14, 0
    %p34 = por %p32, %p33
    %p35 = scmp.ne.s32.totalorder %s24, %s27
    %p36 = scmp.eq.s32.totalorder %s19, 1
    %p37 = por %p35, %p36
    %p38 = scmp.ne.s32.totalorder %s27, %s28
    %p39 = scmp.eq.s32.totalorder %s19, 0
    %p40 = por %p38, %p39
    %p41 = scmp.ne.s32.totalorder %s27, %s28
    %p42 = scmp.eq.s32.totalorder %s20, 1
    %p43 = por %p41, %p42
    %p45 = scmp.ne.s32.totalorder %s28, %s44
    %p46 = scmp.eq.s32.totalorder %s20, 0
    %p47 = por %p45, %p46
    %s49 = sadd.s32 %s48, 1
    %p52 = scmp.eq.s32.totalorder %s14, 1
    %p53 = scmp.ne.s32.totalorder %s48, %s50
    %p54 = scmp.eq.s32.totalorder %s14, 0
    %p55 = por %p53, %p54
    %p56 = scmp.ne.s32.totalorder %s48, %s50
    %p57 = scmp.eq.s32.totalorder %s19, 1
    %p58 = por %p56, %p57
    %p59 = scmp.ne.s32.totalorder %s50, %s51
    %p60 = scmp.eq.s32.totalorder %s19, 0
    %p61 = por %p59, %p60
    %p62 = scmp.ne.s32.totalorder %s50, %s51
    %p63 = scmp.eq.s32.totalorder %s20, 1
    %p64 = por %p62, %p63
    %p66 = scmp.ne.s32.totalorder %s51, %s65
    %p67 = scmp.eq.s32.totalorder %s20, 0
    %p68 = por %p66, %p67
    %s70 = sadd.s32 %s69, 1
    %p73 = scmp.eq.s32.totalorder %s14, 1
    %p74 = scmp.ne.s32.totalorder %s69, %s71
    %p75 = scmp.eq.s32.totalorder %s14, 0
    %p76 = por %p74, %p75
    %p77 = scmp.ne.s32.totalorder %s69, %s71
    %p78 = scmp.eq.s32.totalorder %s19, 1
    %p79 = por %p77, %p78
    %p80 = scmp.ne.s32.totalorder %s71, %s72
    %p81 = scmp.eq.s32.totalorder %s19, 0
    %p82 = por %p80, %p81
    %p83 = scmp.ne.s32.totalorder %s71, %s72
    %p84 = scmp.eq.s32.totalorder %s20, 1
    %p85 = por %p83, %p84
    %p87 = scmp.ne.s32.totalorder %s72, %s86
    %p88 = scmp.eq.s32.totalorder %s20, 0
    %p89 = por %p87, %p88
    %s91 = sadd.s32 %s90, 1
    %p94 = scmp.eq.s32.totalorder %s14, 1
    %p95 = scmp.ne.s32.totalorder %s90, %s92
    %p96 = scmp.eq.s32.totalorder %s14, 0
    %p97 = por %p95, %p96
    %p98 = scmp.ne.s32.totalorder %s90, %s92
    %p99 = scmp.eq.s32.totalorder %s19, 1
    %p100 = por %p98, %p99
    %p101 = scmp.ne.s32.totalorder %s92, %s93
    %p102 = scmp.eq.s32.totalorder %s19, 0
    %p103 = por %p101, %p102
    %p104 = scmp.ne.s32.totalorder %s92, %s93
    %p105 = scmp.eq.s32.totalorder %s20, 1
    %p106 = por %p104, %p105
    %p108 = scmp.ne.s32.totalorder %s93, %s107
    %p109 = scmp.eq.s32.totalorder %s20, 0
    %p110 = por %p108, %p109
    %s112 = sadd.s32 %s111, 1
    %p115 = scmp.eq.s32.totalorder %s14, 1
    %p116 = scmp.ne.s32.totalorder %s111, %s113
    %p117 = scmp.eq.s32.totalorder %s14, 0
    %p118 = por %p116, %p117
    %p119 = scmp.ne.s32.totalorder %s111, %s113
    %p120 = scmp.eq.s32.totalorder %s19, 1
    %p121 = por %p119, %p120
    %p122 = scmp.ne.s32.totalorder %s113, %s114
    %p123 = scmp.eq.s32.totalorder %s19, 0
    %p124 = por %p122, %p123
    %p125 = scmp.ne.s32.totalorder %s113, %s114
    %p126 = scmp.eq.s32.totalorder %s20, 1
    %p127 = por %p125, %p126
    %p129 = scmp.ne.s32.totalorder %s114, %s128
    %p130 = scmp.eq.s32.totalorder %s20, 0
    %p131 = por %p129, %p130
    %s133 = sadd.s32 %s132, 1
    %p136 = scmp.eq.s32.totalorder %s14, 1
    %p137 = scmp.ne.s32.totalorder %s132, %s134
    %p138 = scmp.eq.s32.totalorder %s14, 0
    %p139 = por %p137, %p138
    %p140 = scmp.ne.s32.totalorder %s132, %s134
    %p141 = scmp.eq.s32.totalorder %s19, 1
    %p142 = por %p140, %p141
    %p143 = scmp.ne.s32.totalorder %s134, %s135
    %p144 = scmp.eq.s32.totalorder %s19, 0
    %p145 = por %p143, %p144
    %p146 = scmp.ne.s32.totalorder %s134, %s135
    %p147 = scmp.eq.s32.totalorder %s20, 1
    %p148 = por %p146, %p147
    %p150 = scmp.ne.s32.totalorder %s135, %s149
    %p151 = scmp.eq.s32.totalorder %s20, 0
    %p152 = por %p150, %p151
    %s154 = sadd.s32 %s153, 1
    %p157 = scmp.eq.s32.totalorder %s14, 1
    %p158 = scmp.ne.s32.totalorder %s153, %s155
    %p159 = scmp.eq.s32.totalorder %s14, 0
    %p160 = por %p158, %p159
    %p161 = scmp.ne.s32.totalorder %s153, %s155
    %p162 = scmp.eq.s32.totalorder %s19, 1
    %p163 = por %p161, %p162
    %p164 = scmp.ne.s32.totalorder %s155, %s156
    %p165 = scmp.eq.s32.totalorder %s19, 0
    %p166 = por %p164, %p165
    %p167 = scmp.ne.s32.totalorder %s155, %s156
    %p168 = scmp.eq.s32.totalorder %s20, 1
    %p169 = por %p167, %p168
    %p171 = scmp.ne.s32.totalorder %s156, %s170
    %p172 = scmp.eq.s32.totalorder %s20, 0
    %p173 = por %p171, %p172
    %s175 = sadd.s32 %s174, 1
    %p178 = scmp.eq.s32.totalorder %s14, 1
    %p179 = scmp.ne.s32.totalorder %s174, %s176
    %p180 = scmp.eq.s32.totalorder %s14, 0
    %p181 = por %p179, %p180
    %p182 = scmp.ne.s32.totalorder %s174, %s176
    %p183 = scmp.eq.s32.totalorder %s19, 1
    %p184 = por %p182, %p183
    %p185 = scmp.ne.s32.totalorder %s176, %s177
    %p186 = scmp.eq.s32.totalorder %s19, 0
    %p187 = por %p185, %p186
    %p188 = scmp.ne.s32.totalorder %s176, %s177
    %p189 = scmp.eq.s32.totalorder %s20, 1
    %p190 = por %p188, %p189
    %p192 = scmp.ne.s32.totalorder %s177, %s191
    %p193 = scmp.eq.s32.totalorder %s20, 0
    %p194 = por %p192, %p193
    %s195 = ssub.s32 %s14, %s21
    %p196 = scmp.eq.s32.totalorder %s195, 0
    %s198 = sadd.s32 %s197, 1
    %s199 = scalar_select %p196, %s197, %s198
    %p202 = pneg %p196
    %p203 = scmp.eq.s32.totalorder %s14, 1
    %p204 = por %p202, %p203
    %p205 = scmp.ne.s32.totalorder %s197, %s200
    %p206 = scmp.eq.s32.totalorder %s14, 0
    %p207 = por %p205, %p206
    %p208 = scmp.ne.s32.totalorder %s197, %s200
    %p209 = scmp.eq.s32.totalorder %s19, 1
    %p210 = por %p208, %p209
    %p211 = scmp.ne.s32.totalorder %s200, %s201
    %p212 = scmp.eq.s32.totalorder %s19, 0
    %p213 = por %p211, %p212
    %p214 = scmp.ne.s32.totalorder %s200, %s201
    %p215 = scmp.eq.s32.totalorder %s20, 1
    %p216 = por %p214, %p215
    %p218 = scmp.ne.s32.totalorder %s201, %s217
    %p219 = scmp.eq.s32.totalorder %s20, 0
    %p220 = por %p218, %p219
    %p221 = scmp.le.s32.totalorder 1, %s14
    %p222 = scmp.lt.s32.totalorder %s14, 3
    %p223 = pnand %p221, %p222
    %p224 = pneg %p223
    // Predicated region
    $region9: #{bottleneck3d_forward.1} parent=5 // pred_check
      _
    $region10: #{bottleneck3d_forward.1} parent=5 // pred_check_branch
      %226 = sbr.rel (%p223) target = $region12
    $region11: #{bottleneck3d_forward.1} parent=5 // pred_region
      %s227 = ssub.s32 %s14, 1
      // Predicated region
      $region13: #{bottleneck3d_forward.1} parent=11 // pred_check
        %p228 = pneg %p61
      $region14: #{bottleneck3d_forward.1} parent=11 // pred_check_branch
        %230 = sbr.rel (%p228) target = $region16
      $region15: #{bottleneck3d_forward.1} parent=11 // pred_region
        _
      $region16: #{bottleneck3d_forward.1} parent=11 // pred_fallthru
        _
      // Predicated region
      $region17: #{bottleneck3d_forward.1} parent=11 // pred_check
        %p231 = pneg %p82
      $region18: #{bottleneck3d_forward.1} parent=11 // pred_check_branch
        %233 = sbr.rel (%p231) target = $region20
      $region19: #{bottleneck3d_forward.1} parent=11 // pred_region
        _
      $region20: #{bottleneck3d_forward.1} parent=11 // pred_fallthru
        _
      // Predicated region
      $region21: #{bottleneck3d_forward.1} parent=11 // pred_check
        %p234 = pneg %p103
      $region22: #{bottleneck3d_forward.1} parent=11 // pred_check_branch
        %236 = sbr.rel (%p234) target = $region24
      $region23: #{bottleneck3d_forward.1} parent=11 // pred_region
        _
      $region24: #{bottleneck3d_forward.1} parent=11 // pred_fallthru
        _
      // Predicated region
      $region25: #{bottleneck3d_forward.1} parent=11 // pred_check
        %p237 = pneg %p124
      $region26: #{bottleneck3d_forward.1} parent=11 // pred_check_branch
        %239 = sbr.rel (%p237) target = $region28
      $region27: #{bottleneck3d_forward.1} parent=11 // pred_region
        _
      $region28: #{bottleneck3d_forward.1} parent=11 // pred_fallthru
        _
      // Predicated region
      $region29: #{bottleneck3d_forward.1} parent=11 // pred_check
        %p240 = pneg %p145
      $region30: #{bottleneck3d_forward.1} parent=11 // pred_check_branch
        %242 = sbr.rel (%p240) target = $region32
      $region31: #{bottleneck3d_forward.1} parent=11 // pred_region
        _
      $region32: #{bottleneck3d_forward.1} parent=11 // pred_fallthru
        _
      // Predicated region
      $region33: #{bottleneck3d_forward.1} parent=11 // pred_check
        %p243 = pneg %p166
      $region34: #{bottleneck3d_forward.1} parent=11 // pred_check_branch
        %245 = sbr.rel (%p243) target = $region36
      $region35: #{bottleneck3d_forward.1} parent=11 // pred_region
        _
      $region36: #{bottleneck3d_forward.1} parent=11 // pred_fallthru
        _
      // Predicated region
      $region37: #{bottleneck3d_forward.1} parent=11 // pred_check
        %p246 = pneg %p187
      $region38: #{bottleneck3d_forward.1} parent=11 // pred_check_branch
        %248 = sbr.rel (%p246) target = $region40
      $region39: #{bottleneck3d_forward.1} parent=11 // pred_region
        _
      $region40: #{bottleneck3d_forward.1} parent=11 // pred_fallthru
        _
    $region12: #{bottleneck3d_forward.1} parent=5 // pred_fallthru
      _
    %p249 = scmp.lt.s32.totalorder %s14, 2
    // Predicated region
    $region41: #{bottleneck3d_forward.1} parent=5 // pred_check
      %p250 = pneg %p249
    $region42: #{bottleneck3d_forward.1} parent=5 // pred_check_branch
      %252 = sbr.rel (%p250) target = $region44
    $region43: #{bottleneck3d_forward.1} parent=5 // pred_region
      // Predicated region
      $region45: #{bottleneck3d_forward.1} parent=43 // pred_check
        %p253 = pneg %p34
      $region46: #{bottleneck3d_forward.1} parent=43 // pred_check_branch
        %255 = sbr.rel (%p253) target = $region48
      $region47: #{bottleneck3d_forward.1} parent=43 // pred_region
        %p256 = scmp.lt.s32.totalorder %s14, 1
        %s257 = scalar_select %p256, %s14, 1
        %s258 = smul.addr %s257, 32
        %s259 = smul.addr %s258, 8
        %s260 = scalar_lea.vmem %s0, %s259
      $region48: #{bottleneck3d_forward.1} parent=43 // pred_fallthru
        _
    $region44: #{bottleneck3d_forward.1} parent=5 // pred_fallthru
      _
    %p261 = scmp.le.s32.totalorder 1, %s14
    %p262 = scmp.lt.s32.totalorder %s14, 3
    %p263 = pnand %p261, %p262
    %p264 = pneg %p263
    // Predicated region
    $region49: #{bottleneck3d_forward.1} parent=5 // pred_check
      _
    $region50: #{bottleneck3d_forward.1} parent=5 // pred_check_branch
      %266 = sbr.rel (%p263) target = $region52
    $region51: #{bottleneck3d_forward.1} parent=5 // pred_region
      %s267 = ssub.s32 %s14, 1
      %p268 = scmp.lt.s32.totalorder %s19, 1
      %s269 = scalar_select %p268, %s19, 1
      %s270 = smul.addr %s269, 32
      %s271 = smul.addr %s270, 8
      %s272 = scalar_lea.vmem %s0, %s271
      %p273 = pneg %p40
      %p274 = pneg %p37
      %p275 = pneg %p61
      %p276 = pneg %p58
      %p277 = pneg %p82
      %p278 = pneg %p79
      %p279 = pneg %p103
      %p280 = pneg %p100
      %p281 = pneg %p124
      %p282 = pneg %p121
      %p283 = pneg %p145
      %p284 = pneg %p142
      %p285 = pneg %p166
      %p286 = pneg %p163
      %p287 = pneg %p187
      %p288 = pneg %p184
      %p289 = pneg %p213
      %p290 = pneg %p210
      %p291 = scmp.lt.s32.totalorder %s19, 1
      %s292 = scalar_select %p291, %s19, 1
      %s293 = smul.addr %s292, 32
      %s294 = smul.addr %s293, 8
      %s295 = scalar_lea.vmem %s8, %s294
      %p296 = scmp.lt.s32.totalorder %s19, 1
      %s297 = scalar_select %p296, %s19, 1
      %s298 = smul.addr %s297, 32
      %s299 = smul.addr %s298, 8
      %s300 = scalar_lea.vmem %s0, %s299
      %p301 = scmp.lt.s32.totalorder %s19, 1
      %s302 = scalar_select %p301, %s19, 1
      %s303 = smul.addr %s302, 32
      %s304 = smul.addr %s303, 8
      %s305 = scalar_lea.vmem %s8, %s304
      %s306 = scalar_lea.vmem %s1, 4
      %v307 = vld [vmem:[%s306] sm:$0xf]
      %v308 = vld [vmem:[%s300] sm:$0xff]
      %v309 = vld [vmem:[%s300 + $0x8] sm:$0xff]
      %v310 = vld [vmem:[%s300 + $0x10] sm:$0xff]
      %v311 = vld [vmem:[%s300 + $0x18] sm:$0xff]
      %v312 = vld [vmem:[%s300 + $0x20] sm:$0xff]
      %v313 = vld [vmem:[%s300 + $0x28] sm:$0xff]
      %v314 = vld [vmem:[%s300 + $0x30] sm:$0xff]
      %v315 = vld [vmem:[%s300 + $0x38] sm:$0xff]
      %v316 = vld [vmem:[%s300 + $0x40] sm:$0xff]
      %v317 = vld [vmem:[%s300 + $0x48] sm:$0xff]
      %v318 = vld [vmem:[%s300 + $0x50] sm:$0xff]
      %v319 = vld [vmem:[%s300 + $0x58] sm:$0xff]
      %v320 = vld [vmem:[%s300 + $0x60] sm:$0xff]
      %v321 = vld [vmem:[%s300 + $0x68] sm:$0xff]
      %v322 = vld [vmem:[%s300 + $0x70] sm:$0xff]
      %v323 = vld [vmem:[%s300 + $0x78] sm:$0xff]
      %v324 = vld [vmem:[%s300 + $0x80] sm:$0xff]
      %v325 = vld [vmem:[%s300 + $0x88] sm:$0xff]
      %v326 = vld [vmem:[%s300 + $0x90] sm:$0xff]
      %v327 = vld [vmem:[%s300 + $0x98] sm:$0xff]
      %v328 = vld [vmem:[%s300 + $0xa0] sm:$0xff]
      %v329 = vld [vmem:[%s300 + $0xa8] sm:$0xff]
      %v330 = vld [vmem:[%s300 + $0xb0] sm:$0xff]
      %v331 = vld [vmem:[%s300 + $0xb8] sm:$0xff]
      %v332 = vld [vmem:[%s300 + $0xc0] sm:$0xff]
      %v333 = vld [vmem:[%s300 + $0xc8] sm:$0xff]
      %v334 = vld [vmem:[%s300 + $0xd0] sm:$0xff]
      %v335 = vld [vmem:[%s300 + $0xd8] sm:$0xff]
      %v336 = vld [vmem:[%s300 + $0xe0] sm:$0xff]
      %v337 = vld [vmem:[%s300 + $0xe8] sm:$0xff]
      %v338 = vld [vmem:[%s300 + $0xf0] sm:$0xff]
      %v339 = vld [vmem:[%s300 + $0xf8] sm:$0xff]
      %vm340 = vcmask 130048
      %v342 = vsel %vm340, %v307, 0
      %344 = vmatpush.msra.mxu0 0.0
      %345 = vmatpush.msra.mxu0 0.0
      %346 = vmatpush.msra.mxu0 0.0
      %347 = vmatpush.msra.mxu0 0.0
      %348 = vmatpush.msra.mxu0 0.0
      %349 = vmatpush.msra.mxu0 0.0
      %350 = vmatpush.msra.mxu0 0.0
      %351 = vmatpush.msra.mxu0 0.0
      %352 = vmatpush.msra.mxu0 0.0
      %353 = vmatpush.msra.mxu0 0.0
      %354 = vmatpush.msra.mxu0 0.0
      %355 = vmatpush.msra.mxu0 0.0
      %356 = vmatpush.msra.mxu0 0.0
      %357 = vmatpush.msra.mxu0 0.0
      %358 = vmatpush.msra.mxu0 %v324
      %359 = vmatpush.msra.mxu0 %v308
      %360 = vmatmul.f32.gmra.mxu0 %v342
      %v361 = vpop.f32.mrf.mxu0
      %v362 = vadd.f32 0.0, %v361
      %363 = vdwg.mxu0
      %364 = vmatpush.msra.mxu0 0.0
      %365 = vmatpush.msra.mxu0 0.0
      %366 = vmatpush.msra.mxu0 0.0
      %367 = vmatpush.msra.mxu0 0.0
      %368 = vmatpush.msra.mxu0 0.0
      %369 = vmatpush.msra.mxu0 0.0
      %370 = vmatpush.msra.mxu0 0.0
      %371 = vmatpush.msra.mxu0 0.0
      %372 = vmatpush.msra.mxu0 0.0
      %373 = vmatpush.msra.mxu0 0.0
      %374 = vmatpush.msra.mxu0 0.0
      %375 = vmatpush.msra.mxu0 0.0
      %376 = vmatpush.msra.mxu0 0.0
      %377 = vmatpush.msra.mxu0 0.0
      %378 = vmatpush.msra.mxu0 %v325
      %379 = vmatpush.msra.mxu0 %v309
      %380 = vmatmul.f32.gmra.mxu0 %v342
      %v381 = vpop.f32.mrf.mxu0
      %v382 = vadd.f32 0.0, %v381
      %383 = vdwg.mxu0
      %384 = vmatpush.msra.mxu0 0.0
      %385 = vmatpush.msra.mxu0 0.0
      %386 = vmatpush.msra.mxu0 0.0
      %387 = vmatpush.msra.mxu0 0.0
      %388 = vmatpush.msra.mxu0 0.0
      %389 = vmatpush.msra.mxu0 0.0
      %390 = vmatpush.msra.mxu0 0.0
      %391 = vmatpush.msra.mxu0 0.0
      %392 = vmatpush.msra.mxu0 0.0
      %393 = vmatpush.msra.mxu0 0.0
      %394 = vmatpush.msra.mxu0 0.0
      %395 = vmatpush.msra.mxu0 0.0
      %396 = vmatpush.msra.mxu0 0.0
      %397 = vmatpush.msra.mxu0 0.0
      %398 = vmatpush.msra.mxu0 %v326
      %399 = vmatpush.msra.mxu0 %v310
      %400 = vmatmul.f32.gmra.mxu0 %v342
      %v401 = vpop.f32.mrf.mxu0
      %v402 = vadd.f32 0.0, %v401
      %403 = vdwg.mxu0
      %404 = vmatpush.msra.mxu0 0.0
      %405 = vmatpush.msra.mxu0 0.0
      %406 = vmatpush.msra.mxu0 0.0
      %407 = vmatpush.msra.mxu0 0.0
      %408 = vmatpush.msra.mxu0 0.0
      %409 = vmatpush.msra.mxu0 0.0
      %410 = vmatpush.msra.mxu0 0.0
      %411 = vmatpush.msra.mxu0 0.0
      %412 = vmatpush.msra.mxu0 0.0
      %413 = vmatpush.msra.mxu0 0.0
      %414 = vmatpush.msra.mxu0 0.0
      %415 = vmatpush.msra.mxu0 0.0
      %416 = vmatpush.msra.mxu0 0.0
      %417 = vmatpush.msra.mxu0 0.0
      %418 = vmatpush.msra.mxu0 %v327
      %419 = vmatpush.msra.mxu0 %v311
      %420 = vmatmul.f32.gmra.mxu0 %v342
      %v421 = vpop.f32.mrf.mxu0
      %v422 = vadd.f32 0.0, %v421
      %423 = vdwg.mxu0
      %424 = vmatpush.msra.mxu0 0.0
      %425 = vmatpush.msra.mxu0 0.0
      %426 = vmatpush.msra.mxu0 0.0
      %427 = vmatpush.msra.mxu0 0.0
      %428 = vmatpush.msra.mxu0 0.0
      %429 = vmatpush.msra.mxu0 0.0
      %430 = vmatpush.msra.mxu0 0.0
      %431 = vmatpush.msra.mxu0 0.0
      %432 = vmatpush.msra.mxu0 0.0
      %433 = vmatpush.msra.mxu0 0.0
      %434 = vmatpush.msra.mxu0 0.0
      %435 = vmatpush.msra.mxu0 0.0
      %436 = vmatpush.msra.mxu0 0.0
      %437 = vmatpush.msra.mxu0 0.0
      %438 = vmatpush.msra.mxu0 %v328
      %439 = vmatpush.msra.mxu0 %v312
      %440 = vmatmul.f32.gmra.mxu0 %v342
      %v441 = vpop.f32.mrf.mxu0
      %v442 = vadd.f32 0.0, %v441
      %443 = vdwg.mxu0
      %444 = vmatpush.msra.mxu0 0.0
      %445 = vmatpush.msra.mxu0 0.0
      %446 = vmatpush.msra.mxu0 0.0
      %447 = vmatpush.msra.mxu0 0.0
      %448 = vmatpush.msra.mxu0 0.0
      %449 = vmatpush.msra.mxu0 0.0
      %450 = vmatpush.msra.mxu0 0.0
      %451 = vmatpush.msra.mxu0 0.0
      %452 = vmatpush.msra.mxu0 0.0
      %453 = vmatpush.msra.mxu0 0.0
      %454 = vmatpush.msra.mxu0 0.0
      %455 = vmatpush.msra.mxu0 0.0
      %456 = vmatpush.msra.mxu0 0.0
      %457 = vmatpush.msra.mxu0 0.0
      %458 = vmatpush.msra.mxu0 %v329
      %459 = vmatpush.msra.mxu0 %v313
      %460 = vmatmul.f32.gmra.mxu0 %v342
      %v461 = vpop.f32.mrf.mxu0
      %v462 = vadd.f32 0.0, %v461
      %463 = vdwg.mxu0
      %464 = vmatpush.msra.mxu0 0.0
      %465 = vmatpush.msra.mxu0 0.0
      %466 = vmatpush.msra.mxu0 0.0
      %467 = vmatpush.msra.mxu0 0.0
      %468 = vmatpush.msra.mxu0 0.0
      %469 = vmatpush.msra.mxu0 0.0
      %470 = vmatpush.msra.mxu0 0.0
      %471 = vmatpush.msra.mxu0 0.0
      %472 = vmatpush.msra.mxu0 0.0
      %473 = vmatpush.msra.mxu0 0.0
      %474 = vmatpush.msra.mxu0 0.0
      %475 = vmatpush.msra.mxu0 0.0
      %476 = vmatpush.msra.mxu0 0.0
      %477 = vmatpush.msra.mxu0 0.0
      %478 = vmatpush.msra.mxu0 %v330
      %479 = vmatpush.msra.mxu0 %v314
      %480 = vmatmul.f32.gmra.mxu0 %v342
      %v481 = vpop.f32.mrf.mxu0
      %v482 = vadd.f32 0.0, %v481
      %483 = vdwg.mxu0
      %484 = vmatpush.msra.mxu0 0.0
      %485 = vmatpush.msra.mxu0 0.0
      %486 = vmatpush.msra.mxu0 0.0
      %487 = vmatpush.msra.mxu0 0.0
      %488 = vmatpush.msra.mxu0 0.0
      %489 = vmatpush.msra.mxu0 0.0
      %490 = vmatpush.msra.mxu0 0.0
      %491 = vmatpush.msra.mxu0 0.0
      %492 = vmatpush.msra.mxu0 0.0
      %493 = vmatpush.msra.mxu0 0.0
      %494 = vmatpush.msra.mxu0 0.0
      %495 = vmatpush.msra.mxu0 0.0
      %496 = vmatpush.msra.mxu0 0.0
      %497 = vmatpush.msra.mxu0 0.0
      %498 = vmatpush.msra.mxu0 %v331
      %499 = vmatpush.msra.mxu0 %v315
      %500 = vmatmul.f32.gmra.mxu0 %v342
      %v501 = vpop.f32.mrf.mxu0
      %v502 = vadd.f32 0.0, %v501
      %503 = vdwg.mxu0
      %504 = vmatpush.msra.mxu0 0.0
      %505 = vmatpush.msra.mxu0 0.0
      %506 = vmatpush.msra.mxu0 0.0
      %507 = vmatpush.msra.mxu0 0.0
      %508 = vmatpush.msra.mxu0 0.0
      %509 = vmatpush.msra.mxu0 0.0
      %510 = vmatpush.msra.mxu0 0.0
      %511 = vmatpush.msra.mxu0 0.0
      %512 = vmatpush.msra.mxu0 0.0
      %513 = vmatpush.msra.mxu0 0.0
      %514 = vmatpush.msra.mxu0 0.0
      %515 = vmatpush.msra.mxu0 0.0
      %516 = vmatpush.msra.mxu0 0.0
      %517 = vmatpush.msra.mxu0 0.0
      %518 = vmatpush.msra.mxu0 %v332
      %519 = vmatpush.msra.mxu0 %v316
      %520 = vmatmul.f32.gmra.mxu0 %v342
      %v521 = vpop.f32.mrf.mxu0
      %v522 = vadd.f32 0.0, %v521
      %523 = vdwg.mxu0
      %524 = vmatpush.msra.mxu0 0.0
      %525 = vmatpush.msra.mxu0 0.0
      %526 = vmatpush.msra.mxu0 0.0
      %527 = vmatpush.msra.mxu0 0.0
      %528 = vmatpush.msra.mxu0 0.0
      %529 = vmatpush.msra.mxu0 0.0
      %530 = vmatpush.msra.mxu0 0.0
      %531 = vmatpush.msra.mxu0 0.0
      %532 = vmatpush.msra.mxu0 0.0
      %533 = vmatpush.msra.mxu0 0.0
      %534 = vmatpush.msra.mxu0 0.0
      %535 = vmatpush.msra.mxu0 0.0
      %536 = vmatpush.msra.mxu0 0.0
      %537 = vmatpush.msra.mxu0 0.0
      %538 = vmatpush.msra.mxu0 %v333
      %539 = vmatpush.msra.mxu0 %v317
      %540 = vmatmul.f32.gmra.mxu0 %v342
      %v541 = vpop.f32.mrf.mxu0
      %v542 = vadd.f32 0.0, %v541
      %543 = vdwg.mxu0
      %544 = vmatpush.msra.mxu0 0.0
      %545 = vmatpush.msra.mxu0 0.0
      %546 = vmatpush.msra.mxu0 0.0
      %547 = vmatpush.msra.mxu0 0.0
      %548 = vmatpush.msra.mxu0 0.0
      %549 = vmatpush.msra.mxu0 0.0
      %550 = vmatpush.msra.mxu0 0.0
      %551 = vmatpush.msra.mxu0 0.0
      %552 = vmatpush.msra.mxu0 0.0
      %553 = vmatpush.msra.mxu0 0.0
      %554 = vmatpush.msra.mxu0 0.0
      %555 = vmatpush.msra.mxu0 0.0
      %556 = vmatpush.msra.mxu0 0.0
      %557 = vmatpush.msra.mxu0 0.0
      %558 = vmatpush.msra.mxu0 %v334
      %559 = vmatpush.msra.mxu0 %v318
      %560 = vmatmul.f32.gmra.mxu0 %v342
      %v561 = vpop.f32.mrf.mxu0
      %v562 = vadd.f32 0.0, %v561
      %563 = vdwg.mxu0
      %564 = vmatpush.msra.mxu0 0.0
      %565 = vmatpush.msra.mxu0 0.0
      %566 = vmatpush.msra.mxu0 0.0
      %567 = vmatpush.msra.mxu0 0.0
      %568 = vmatpush.msra.mxu0 0.0
      %569 = vmatpush.msra.mxu0 0.0
      %570 = vmatpush.msra.mxu0 0.0
      %571 = vmatpush.msra.mxu0 0.0
      %572 = vmatpush.msra.mxu0 0.0
      %573 = vmatpush.msra.mxu0 0.0
      %574 = vmatpush.msra.mxu0 0.0
      %575 = vmatpush.msra.mxu0 0.0
      %576 = vmatpush.msra.mxu0 0.0
      %577 = vmatpush.msra.mxu0 0.0
      %578 = vmatpush.msra.mxu0 %v335
      %579 = vmatpush.msra.mxu0 %v319
      %580 = vmatmul.f32.gmra.mxu0 %v342
      %v581 = vpop.f32.mrf.mxu0
      %v582 = vadd.f32 0.0, %v581
      %583 = vdwg.mxu0
      %584 = vmatpush.msra.mxu0 0.0
      %585 = vmatpush.msra.mxu0 0.0
      %586 = vmatpush.msra.mxu0 0.0
      %587 = vmatpush.msra.mxu0 0.0
      %588 = vmatpush.msra.mxu0 0.0
      %589 = vmatpush.msra.mxu0 0.0
      %590 = vmatpush.msra.mxu0 0.0
      %591 = vmatpush.msra.mxu0 0.0
      %592 = vmatpush.msra.mxu0 0.0
      %593 = vmatpush.msra.mxu0 0.0
      %594 = vmatpush.msra.mxu0 0.0
      %595 = vmatpush.msra.mxu0 0.0
      %596 = vmatpush.msra.mxu0 0.0
      %597 = vmatpush.msra.mxu0 0.0
      %598 = vmatpush.msra.mxu0 %v336
      %599 = vmatpush.msra.mxu0 %v320
      %600 = vmatmul.f32.gmra.mxu0 %v342
      %v601 = vpop.f32.mrf.mxu0
      %v602 = vadd.f32 0.0, %v601
      %603 = vdwg.mxu0
      %604 = vmatpush.msra.mxu0 0.0
      %605 = vmatpush.msra.mxu0 0.0
      %606 = vmatpush.msra.mxu0 0.0
      %607 = vmatpush.msra.mxu0 0.0
      %608 = vmatpush.msra.mxu0 0.0
      %609 = vmatpush.msra.mxu0 0.0
      %610 = vmatpush.msra.mxu0 0.0
      %611 = vmatpush.msra.mxu0 0.0
      %612 = vmatpush.msra.mxu0 0.0
      %613 = vmatpush.msra.mxu0 0.0
      %614 = vmatpush.msra.mxu0 0.0
      %615 = vmatpush.msra.mxu0 0.0
      %616 = vmatpush.msra.mxu0 0.0
      %617 = vmatpush.msra.mxu0 0.0
      %618 = vmatpush.msra.mxu0 %v337
      %619 = vmatpush.msra.mxu0 %v321
      %620 = vmatmul.f32.gmra.mxu0 %v342
      %v621 = vpop.f32.mrf.mxu0
      %v622 = vadd.f32 0.0, %v621
      %623 = vdwg.mxu0
      %624 = vmatpush.msra.mxu0 0.0
      %625 = vmatpush.msra.mxu0 0.0
      %626 = vmatpush.msra.mxu0 0.0
      %627 = vmatpush.msra.mxu0 0.0
      %628 = vmatpush.msra.mxu0 0.0
      %629 = vmatpush.msra.mxu0 0.0
      %630 = vmatpush.msra.mxu0 0.0
      %631 = vmatpush.msra.mxu0 0.0
      %632 = vmatpush.msra.mxu0 0.0
      %633 = vmatpush.msra.mxu0 0.0
      %634 = vmatpush.msra.mxu0 0.0
      %635 = vmatpush.msra.mxu0 0.0
      %636 = vmatpush.msra.mxu0 0.0
      %637 = vmatpush.msra.mxu0 0.0
      %638 = vmatpush.msra.mxu0 %v338
      %639 = vmatpush.msra.mxu0 %v322
      %640 = vmatmul.f32.gmra.mxu0 %v342
      %v641 = vpop.f32.mrf.mxu0
      %v642 = vadd.f32 0.0, %v641
      %643 = vdwg.mxu0
      %644 = vmatpush.msra.mxu0 0.0
      %645 = vmatpush.msra.mxu0 0.0
      %646 = vmatpush.msra.mxu0 0.0
      %647 = vmatpush.msra.mxu0 0.0
      %648 = vmatpush.msra.mxu0 0.0
      %649 = vmatpush.msra.mxu0 0.0
      %650 = vmatpush.msra.mxu0 0.0
      %651 = vmatpush.msra.mxu0 0.0
      %652 = vmatpush.msra.mxu0 0.0
      %653 = vmatpush.msra.mxu0 0.0
      %654 = vmatpush.msra.mxu0 0.0
      %655 = vmatpush.msra.mxu0 0.0
      %656 = vmatpush.msra.mxu0 0.0
      %657 = vmatpush.msra.mxu0 0.0
      %658 = vmatpush.msra.mxu0 %v339
      %659 = vmatpush.msra.mxu0 %v323
      %660 = vmatmul.f32.gmra.mxu0 %v342
      %v661 = vpop.f32.mrf.mxu0
      %v662 = vadd.f32 0.0, %v661
      %663 = vdwg.mxu0
      %v680 = vrot.slane %v382, 4
      %v681 = vrot.slane %v422, 4
      %v682 = vrot.slane %v462, 4
      %v683 = vrot.slane %v502, 4
      %v684 = vrot.slane %v542, 4
      %v685 = vrot.slane %v582, 4
      %v686 = vrot.slane %v622, 4
      %v687 = vrot.slane %v662, 4
      %vm688 = vcmask 1043456
      %v689 = vsel %vm688, %v362, %v680
      %v690 = vsel %vm688, %v402, %v681
      %v691 = vsel %vm688, %v442, %v682
      %v692 = vsel %vm688, %v482, %v683
      %v693 = vsel %vm688, %v522, %v684
      %v694 = vsel %vm688, %v562, %v685
      %v695 = vsel %vm688, %v602, %v686
      %v696 = vsel %vm688, %v642, %v687
      %705 = vst [vmem:[#allocation2] sm:$0xff] %v689
      %706 = vst [vmem:[#allocation2 + $0x8] sm:$0xff] %v690
      %707 = vst [vmem:[#allocation2 + $0x10] sm:$0xff] %v691
      %708 = vst [vmem:[#allocation2 + $0x18] sm:$0xff] %v692
      %709 = vst [vmem:[#allocation2 + $0x20] sm:$0xff] %v693
      %710 = vst [vmem:[#allocation2 + $0x28] sm:$0xff] %v694
      %711 = vst [vmem:[#allocation2 + $0x30] sm:$0xff] %v695
      %712 = vst [vmem:[#allocation2 + $0x38] sm:$0xff] %v696
      %v713 = vld [vmem:[#allocation2 + $0x8] sm:$0xff]
      %v714 = vld [vmem:[#allocation2 + $0x10] sm:$0xff]
      %v715 = vld [vmem:[#allocation2 + $0x18] sm:$0xff]
      %v716 = vld [vmem:[#allocation2 + $0x20] sm:$0xff]
      %v717 = vld [vmem:[#allocation2 + $0x28] sm:$0xff]
      %v718 = vld [vmem:[#allocation2 + $0x30] sm:$0xff]
      %v719 = vld [vmem:[#allocation2 + $0x38] sm:$0xff]
      %v720 = vld [vmem:[%s1] sm:$0xf]
      %v721 = vld [vmem:[%s300] sm:$0xff]
      %v722 = vld [vmem:[%s300 + $0x8] sm:$0xff]
      %v723 = vld [vmem:[%s300 + $0x10] sm:$0xff]
      %v724 = vld [vmem:[%s300 + $0x18] sm:$0xff]
      %v725 = vld [vmem:[%s300 + $0x20] sm:$0xff]
      %v726 = vld [vmem:[%s300 + $0x28] sm:$0xff]
      %v727 = vld [vmem:[%s300 + $0x30] sm:$0xff]
      %v728 = vld [vmem:[%s300 + $0x38] sm:$0xff]
      %v729 = vld [vmem:[%s300 + $0x40] sm:$0xff]
      %v730 = vld [vmem:[%s300 + $0x48] sm:$0xff]
      %v731 = vld [vmem:[%s300 + $0x50] sm:$0xff]
      %v732 = vld [vmem:[%s300 + $0x58] sm:$0xff]
      %v733 = vld [vmem:[%s300 + $0x60] sm:$0xff]
      %v734 = vld [vmem:[%s300 + $0x68] sm:$0xff]
      %v735 = vld [vmem:[%s300 + $0x80] sm:$0xff]
      %v736 = vld [vmem:[%s300 + $0x88] sm:$0xff]
      %v737 = vld [vmem:[%s300 + $0x90] sm:$0xff]
      %v738 = vld [vmem:[%s300 + $0x98] sm:$0xff]
      %v739 = vld [vmem:[%s300 + $0xa0] sm:$0xff]
      %v740 = vld [vmem:[%s300 + $0xa8] sm:$0xff]
      %v741 = vld [vmem:[%s300 + $0xb0] sm:$0xff]
      %v742 = vld [vmem:[%s300 + $0xb8] sm:$0xff]
      %v743 = vld [vmem:[%s300 + $0xc0] sm:$0xff]
      %v744 = vld [vmem:[%s300 + $0xc8] sm:$0xff]
      %v745 = vld [vmem:[%s300 + $0xd0] sm:$0xff]
      %v746 = vld [vmem:[%s300 + $0xd8] sm:$0xff]
      %v747 = vld [vmem:[%s300 + $0xe0] sm:$0xff]
      %v748 = vld [vmem:[%s300 + $0xe8] sm:$0xff]
      %v750 = vsel %vm340, %v720, 0
      %752 = vmatpush.msra.mxu0 0.0
      %753 = vmatpush.msra.mxu0 0.0
      %754 = vmatpush.msra.mxu0 0.0
      %755 = vmatpush.msra.mxu0 0.0
      %756 = vmatpush.msra.mxu0 0.0
      %757 = vmatpush.msra.mxu0 0.0
      %758 = vmatpush.msra.mxu0 0.0
      %759 = vmatpush.msra.mxu0 0.0
      %760 = vmatpush.msra.mxu0 0.0
      %761 = vmatpush.msra.mxu0 0.0
      %762 = vmatpush.msra.mxu0 0.0
      %763 = vmatpush.msra.mxu0 0.0
      %764 = vmatpush.msra.mxu0 0.0
      %765 = vmatpush.msra.mxu0 0.0
      %766 = vmatpush.msra.mxu0 %v735
      %767 = vmatpush.msra.mxu0 %v721
      %768 = vmatmul.f32.gmra.mxu0 %v750
      %v769 = vpop.f32.mrf.mxu0
      %v770 = vadd.f32 0.0, %v769
      %771 = vdwg.mxu0
      %772 = vmatpush.msra.mxu0 0.0
      %773 = vmatpush.msra.mxu0 0.0
      %774 = vmatpush.msra.mxu0 0.0
      %775 = vmatpush.msra.mxu0 0.0
      %776 = vmatpush.msra.mxu0 0.0
      %777 = vmatpush.msra.mxu0 0.0
      %778 = vmatpush.msra.mxu0 0.0
      %779 = vmatpush.msra.mxu0 0.0
      %780 = vmatpush.msra.mxu0 0.0
      %781 = vmatpush.msra.mxu0 0.0
      %782 = vmatpush.msra.mxu0 0.0
      %783 = vmatpush.msra.mxu0 0.0
      %784 = vmatpush.msra.mxu0 0.0
      %785 = vmatpush.msra.mxu0 0.0
      %786 = vmatpush.msra.mxu0 %v736
      %787 = vmatpush.msra.mxu0 %v722
      %788 = vmatmul.f32.gmra.mxu0 %v750
      %v789 = vpop.f32.mrf.mxu0
      %v790 = vadd.f32 0.0, %v789
      %791 = vdwg.mxu0
      %792 = vmatpush.msra.mxu0 0.0
      %793 = vmatpush.msra.mxu0 0.0
      %794 = vmatpush.msra.mxu0 0.0
      %795 = vmatpush.msra.mxu0 0.0
      %796 = vmatpush.msra.mxu0 0.0
      %797 = vmatpush.msra.mxu0 0.0
      %798 = vmatpush.msra.mxu0 0.0
      %799 = vmatpush.msra.mxu0 0.0
      %800 = vmatpush.msra.mxu0 0.0
      %801 = vmatpush.msra.mxu0 0.0
      %802 = vmatpush.msra.mxu0 0.0
      %803 = vmatpush.msra.mxu0 0.0
      %804 = vmatpush.msra.mxu0 0.0
      %805 = vmatpush.msra.mxu0 0.0
      %806 = vmatpush.msra.mxu0 %v737
      %807 = vmatpush.msra.mxu0 %v723
      %808 = vmatmul.f32.gmra.mxu0 %v750
      %v809 = vpop.f32.mrf.mxu0
      %v810 = vadd.f32 0.0, %v809
      %811 = vdwg.mxu0
      %812 = vmatpush.msra.mxu0 0.0
      %813 = vmatpush.msra.mxu0 0.0
      %814 = vmatpush.msra.mxu0 0.0
      %815 = vmatpush.msra.mxu0 0.0
      %816 = vmatpush.msra.mxu0 0.0
      %817 = vmatpush.msra.mxu0 0.0
      %818 = vmatpush.msra.mxu0 0.0
      %819 = vmatpush.msra.mxu0 0.0
      %820 = vmatpush.msra.mxu0 0.0
      %821 = vmatpush.msra.mxu0 0.0
      %822 = vmatpush.msra.mxu0 0.0
      %823 = vmatpush.msra.mxu0 0.0
      %824 = vmatpush.msra.mxu0 0.0
      %825 = vmatpush.msra.mxu0 0.0
      %826 = vmatpush.msra.mxu0 %v738
      %827 = vmatpush.msra.mxu0 %v724
      %828 = vmatmul.f32.gmra.mxu0 %v750
      %v829 = vpop.f32.mrf.mxu0
      %v830 = vadd.f32 0.0, %v829
      %831 = vdwg.mxu0
      %832 = vmatpush.msra.mxu0 0.0
      %833 = vmatpush.msra.mxu0 0.0
      %834 = vmatpush.msra.mxu0 0.0
      %835 = vmatpush.msra.mxu0 0.0
      %836 = vmatpush.msra.mxu0 0.0
      %837 = vmatpush.msra.mxu0 0.0
      %838 = vmatpush.msra.mxu0 0.0
      %839 = vmatpush.msra.mxu0 0.0
      %840 = vmatpush.msra.mxu0 0.0
      %841 = vmatpush.msra.mxu0 0.0
      %842 = vmatpush.msra.mxu0 0.0
      %843 = vmatpush.msra.mxu0 0.0
      %844 = vmatpush.msra.mxu0 0.0
      %845 = vmatpush.msra.mxu0 0.0
      %846 = vmatpush.msra.mxu0 %v739
      %847 = vmatpush.msra.mxu0 %v725
      %848 = vmatmul.f32.gmra.mxu0 %v750
      %v849 = vpop.f32.mrf.mxu0
      %v850 = vadd.f32 0.0, %v849
      %851 = vdwg.mxu0
      %852 = vmatpush.msra.mxu0 0.0
      %853 = vmatpush.msra.mxu0 0.0
      %854 = vmatpush.msra.mxu0 0.0
      %855 = vmatpush.msra.mxu0 0.0
      %856 = vmatpush.msra.mxu0 0.0
      %857 = vmatpush.msra.mxu0 0.0
      %858 = vmatpush.msra.mxu0 0.0
      %859 = vmatpush.msra.mxu0 0.0
      %860 = vmatpush.msra.mxu0 0.0
      %861 = vmatpush.msra.mxu0 0.0
      %862 = vmatpush.msra.mxu0 0.0
      %863 = vmatpush.msra.mxu0 0.0
      %864 = vmatpush.msra.mxu0 0.0
      %865 = vmatpush.msra.mxu0 0.0
      %866 = vmatpush.msra.mxu0 %v740
      %867 = vmatpush.msra.mxu0 %v726
      %868 = vmatmul.f32.gmra.mxu0 %v750
      %v869 = vpop.f32.mrf.mxu0
      %v870 = vadd.f32 0.0, %v869
      %871 = vdwg.mxu0
      %872 = vmatpush.msra.mxu0 0.0
      %873 = vmatpush.msra.mxu0 0.0
      %874 = vmatpush.msra.mxu0 0.0
      %875 = vmatpush.msra.mxu0 0.0
      %876 = vmatpush.msra.mxu0 0.0
      %877 = vmatpush.msra.mxu0 0.0
      %878 = vmatpush.msra.mxu0 0.0
      %879 = vmatpush.msra.mxu0 0.0
      %880 = vmatpush.msra.mxu0 0.0
      %881 = vmatpush.msra.mxu0 0.0
      %882 = vmatpush.msra.mxu0 0.0
      %883 = vmatpush.msra.mxu0 0.0
      %884 = vmatpush.msra.mxu0 0.0
      %885 = vmatpush.msra.mxu0 0.0
      %886 = vmatpush.msra.mxu0 %v741
      %887 = vmatpush.msra.mxu0 %v727
      %888 = vmatmul.f32.gmra.mxu0 %v750
      %v889 = vpop.f32.mrf.mxu0
      %v890 = vadd.f32 0.0, %v889
      %891 = vdwg.mxu0
      %892 = vmatpush.msra.mxu0 0.0
      %893 = vmatpush.msra.mxu0 0.0
      %894 = vmatpush.msra.mxu0 0.0
      %895 = vmatpush.msra.mxu0 0.0
      %896 = vmatpush.msra.mxu0 0.0
      %897 = vmatpush.msra.mxu0 0.0
      %898 = vmatpush.msra.mxu0 0.0
      %899 = vmatpush.msra.mxu0 0.0
      %900 = vmatpush.msra.mxu0 0.0
      %901 = vmatpush.msra.mxu0 0.0
      %902 = vmatpush.msra.mxu0 0.0
      %903 = vmatpush.msra.mxu0 0.0
      %904 = vmatpush.msra.mxu0 0.0
      %905 = vmatpush.msra.mxu0 0.0
      %906 = vmatpush.msra.mxu0 %v742
      %907 = vmatpush.msra.mxu0 %v728
      %908 = vmatmul.f32.gmra.mxu0 %v750
      %v909 = vpop.f32.mrf.mxu0
      %v910 = vadd.f32 0.0, %v909
      %911 = vdwg.mxu0
      %912 = vmatpush.msra.mxu0 0.0
      %913 = vmatpush.msra.mxu0 0.0
      %914 = vmatpush.msra.mxu0 0.0
      %915 = vmatpush.msra.mxu0 0.0
      %916 = vmatpush.msra.mxu0 0.0
      %917 = vmatpush.msra.mxu0 0.0
      %918 = vmatpush.msra.mxu0 0.0
      %919 = vmatpush.msra.mxu0 0.0
      %920 = vmatpush.msra.mxu0 0.0
      %921 = vmatpush.msra.mxu0 0.0
      %922 = vmatpush.msra.mxu0 0.0
      %923 = vmatpush.msra.mxu0 0.0
      %924 = vmatpush.msra.mxu0 0.0
      %925 = vmatpush.msra.mxu0 0.0
      %926 = vmatpush.msra.mxu0 %v743
      %927 = vmatpush.msra.mxu0 %v729
      %928 = vmatmul.f32.gmra.mxu0 %v750
      %v929 = vpop.f32.mrf.mxu0
      %v930 = vadd.f32 0.0, %v929
      %931 = vdwg.mxu0
      %932 = vmatpush.msra.mxu0 0.0
      %933 = vmatpush.msra.mxu0 0.0
      %934 = vmatpush.msra.mxu0 0.0
      %935 = vmatpush.msra.mxu0 0.0
      %936 = vmatpush.msra.mxu0 0.0
      %937 = vmatpush.msra.mxu0 0.0
      %938 = vmatpush.msra.mxu0 0.0
      %939 = vmatpush.msra.mxu0 0.0
      %940 = vmatpush.msra.mxu0 0.0
      %941 = vmatpush.msra.mxu0 0.0
      %942 = vmatpush.msra.mxu0 0.0
      %943 = vmatpush.msra.mxu0 0.0
      %944 = vmatpush.msra.mxu0 0.0
      %945 = vmatpush.msra.mxu0 0.0
      %946 = vmatpush.msra.mxu0 %v744
      %947 = vmatpush.msra.mxu0 %v730
      %948 = vmatmul.f32.gmra.mxu0 %v750
      %v949 = vpop.f32.mrf.mxu0
      %v950 = vadd.f32 0.0, %v949
      %951 = vdwg.mxu0
      %952 = vmatpush.msra.mxu0 0.0
      %953 = vmatpush.msra.mxu0 0.0
      %954 = vmatpush.msra.mxu0 0.0
      %955 = vmatpush.msra.mxu0 0.0
      %956 = vmatpush.msra.mxu0 0.0
      %957 = vmatpush.msra.mxu0 0.0
      %958 = vmatpush.msra.mxu0 0.0
      %959 = vmatpush.msra.mxu0 0.0
      %960 = vmatpush.msra.mxu0 0.0
      %961 = vmatpush.msra.mxu0 0.0
      %962 = vmatpush.msra.mxu0 0.0
      %963 = vmatpush.msra.mxu0 0.0
      %964 = vmatpush.msra.mxu0 0.0
      %965 = vmatpush.msra.mxu0 0.0
      %966 = vmatpush.msra.mxu0 %v745
      %967 = vmatpush.msra.mxu0 %v731
      %968 = vmatmul.f32.gmra.mxu0 %v750
      %v969 = vpop.f32.mrf.mxu0
      %v970 = vadd.f32 0.0, %v969
      %971 = vdwg.mxu0
      %972 = vmatpush.msra.mxu0 0.0
      %973 = vmatpush.msra.mxu0 0.0
      %974 = vmatpush.msra.mxu0 0.0
      %975 = vmatpush.msra.mxu0 0.0
      %976 = vmatpush.msra.mxu0 0.0
      %977 = vmatpush.msra.mxu0 0.0
      %978 = vmatpush.msra.mxu0 0.0
      %979 = vmatpush.msra.mxu0 0.0
      %980 = vmatpush.msra.mxu0 0.0
      %981 = vmatpush.msra.mxu0 0.0
      %982 = vmatpush.msra.mxu0 0.0
      %983 = vmatpush.msra.mxu0 0.0
      %984 = vmatpush.msra.mxu0 0.0
      %985 = vmatpush.msra.mxu0 0.0
      %986 = vmatpush.msra.mxu0 %v746
      %987 = vmatpush.msra.mxu0 %v732
      %988 = vmatmul.f32.gmra.mxu0 %v750
      %v989 = vpop.f32.mrf.mxu0
      %v990 = vadd.f32 0.0, %v989
      %991 = vdwg.mxu0
      %992 = vmatpush.msra.mxu0 0.0
      %993 = vmatpush.msra.mxu0 0.0
      %994 = vmatpush.msra.mxu0 0.0
      %995 = vmatpush.msra.mxu0 0.0
      %996 = vmatpush.msra.mxu0 0.0
      %997 = vmatpush.msra.mxu0 0.0
      %998 = vmatpush.msra.mxu0 0.0
      %999 = vmatpush.msra.mxu0 0.0
      %1000 = vmatpush.msra.mxu0 0.0
      %1001 = vmatpush.msra.mxu0 0.0
      %1002 = vmatpush.msra.mxu0 0.0
      %1003 = vmatpush.msra.mxu0 0.0
      %1004 = vmatpush.msra.mxu0 0.0
      %1005 = vmatpush.msra.mxu0 0.0
      %1006 = vmatpush.msra.mxu0 %v747
      %1007 = vmatpush.msra.mxu0 %v733
      %1008 = vmatmul.f32.gmra.mxu0 %v750
      %v1009 = vpop.f32.mrf.mxu0
      %v1010 = vadd.f32 0.0, %v1009
      %1011 = vdwg.mxu0
      %1012 = vmatpush.msra.mxu0 0.0
      %1013 = vmatpush.msra.mxu0 0.0
      %1014 = vmatpush.msra.mxu0 0.0
      %1015 = vmatpush.msra.mxu0 0.0
      %1016 = vmatpush.msra.mxu0 0.0
      %1017 = vmatpush.msra.mxu0 0.0
      %1018 = vmatpush.msra.mxu0 0.0
      %1019 = vmatpush.msra.mxu0 0.0
      %1020 = vmatpush.msra.mxu0 0.0
      %1021 = vmatpush.msra.mxu0 0.0
      %1022 = vmatpush.msra.mxu0 0.0
      %1023 = vmatpush.msra.mxu0 0.0
      %1024 = vmatpush.msra.mxu0 0.0
      %1025 = vmatpush.msra.mxu0 0.0
      %1026 = vmatpush.msra.mxu0 %v748
      %1027 = vmatpush.msra.mxu0 %v734
      %1028 = vmatmul.f32.gmra.mxu0 %v750
      %v1029 = vpop.f32.mrf.mxu0
      %v1030 = vadd.f32 0.0, %v1029
      %1031 = vdwg.mxu0
      %v1046 = vrot.slane %v790, 4
      %v1047 = vrot.slane %v830, 4
      %v1048 = vrot.slane %v870, 4
      %v1049 = vrot.slane %v910, 4
      %v1050 = vrot.slane %v950, 4
      %v1051 = vrot.slane %v990, 4
      %v1052 = vrot.slane %v1030, 4
      %v1053 = vsel %vm688, %v770, %v1046
      %v1054 = vsel %vm688, %v810, %v1047
      %v1055 = vsel %vm688, %v850, %v1048
      %v1056 = vsel %vm688, %v890, %v1049
      %v1057 = vsel %vm688, %v930, %v1050
      %v1058 = vsel %vm688, %v970, %v1051
      %v1059 = vsel %vm688, %v1010, %v1052
      %v1067 = vadd.f32 %v713, %v1053
      %v1068 = vadd.f32 %v714, %v1054
      %v1069 = vadd.f32 %v715, %v1055
      %v1070 = vadd.f32 %v716, %v1056
      %v1071 = vadd.f32 %v717, %v1057
      %v1072 = vadd.f32 %v718, %v1058
      %v1073 = vadd.f32 %v719, %v1059
      %1074 = vst [vmem:[#allocation2 + $0x8] sm:$0xff] %v1067
      %1075 = vst [vmem:[#allocation2 + $0x10] sm:$0xff] %v1068
      %1076 = vst [vmem:[#allocation2 + $0x18] sm:$0xff] %v1069
      %1077 = vst [vmem:[#allocation2 + $0x20] sm:$0xff] %v1070
      %1078 = vst [vmem:[#allocation2 + $0x28] sm:$0xff] %v1071
      %1079 = vst [vmem:[#allocation2 + $0x30] sm:$0xff] %v1072
      %1080 = vst [vmem:[#allocation2 + $0x38] sm:$0xff] %v1073
      %v1081 = vld [vmem:[#allocation2] sm:$0xff]
      %v1082 = vld [vmem:[#allocation2 + $0x8] sm:$0xff]
      %v1083 = vld [vmem:[#allocation2 + $0x10] sm:$0xff]
      %v1084 = vld [vmem:[#allocation2 + $0x18] sm:$0xff]
      %v1085 = vld [vmem:[#allocation2 + $0x20] sm:$0xff]
      %v1086 = vld [vmem:[#allocation2 + $0x28] sm:$0xff]
      %v1087 = vld [vmem:[#allocation2 + $0x30] sm:$0xff]
      %s1088 = scalar_lea.vmem %s1, 8
      %v1089 = vld [vmem:[%s1088] sm:$0xf]
      %v1090 = vld [vmem:[%s300 + $0x10] sm:$0xff]
      %v1091 = vld [vmem:[%s300 + $0x18] sm:$0xff]
      %v1092 = vld [vmem:[%s300 + $0x20] sm:$0xff]
      %v1093 = vld [vmem:[%s300 + $0x28] sm:$0xff]
      %v1094 = vld [vmem:[%s300 + $0x30] sm:$0xff]
      %v1095 = vld [vmem:[%s300 + $0x38] sm:$0xff]
      %v1096 = vld [vmem:[%s300 + $0x40] sm:$0xff]
      %v1097 = vld [vmem:[%s300 + $0x48] sm:$0xff]
      %v1098 = vld [vmem:[%s300 + $0x50] sm:$0xff]
      %v1099 = vld [vmem:[%s300 + $0x58] sm:$0xff]
      %v1100 = vld [vmem:[%s300 + $0x60] sm:$0xff]
      %v1101 = vld [vmem:[%s300 + $0x68] sm:$0xff]
      %v1102 = vld [vmem:[%s300 + $0x70] sm:$0xff]
      %v1103 = vld [vmem:[%s300 + $0x78] sm:$0xff]
      %v1104 = vld [vmem:[%s300 + $0x90] sm:$0xff]
      %v1105 = vld [vmem:[%s300 + $0x98] sm:$0xff]
      %v1106 = vld [vmem:[%s300 + $0xa0] sm:$0xff]
      %v1107 = vld [vmem:[%s300 + $0xa8] sm:$0xff]
      %v1108 = vld [vmem:[%s300 + $0xb0] sm:$0xff]
      %v1109 = vld [vmem:[%s300 + $0xb8] sm:$0xff]
      %v1110 = vld [vmem:[%s300 + $0xc0] sm:$0xff]
      %v1111 = vld [vmem:[%s300 + $0xc8] sm:$0xff]
      %v1112 = vld [vmem:[%s300 + $0xd0] sm:$0xff]
      %v1113 = vld [vmem:[%s300 + $0xd8] sm:$0xff]
      %v1114 = vld [vmem:[%s300 + $0xe0] sm:$0xff]
      %v1115 = vld [vmem:[%s300 + $0xe8] sm:$0xff]
      %v1116 = vld [vmem:[%s300 + $0xf0] sm:$0xff]
      %v1117 = vld [vmem:[%s300 + $0xf8] sm:$0xff]
      %v1119 = vsel %vm340, %v1089, 0
      %1121 = vmatpush.msra.mxu0 0.0
      %1122 = vmatpush.msra.mxu0 0.0
      %1123 = vmatpush.msra.mxu0 0.0
      %1124 = vmatpush.msra.mxu0 0.0
      %1125 = vmatpush.msra.mxu0 0.0
      %1126 = vmatpush.msra.mxu0 0.0
      %1127 = vmatpush.msra.mxu0 0.0
      %1128 = vmatpush.msra.mxu0 0.0
      %1129 = vmatpush.msra.mxu0 0.0
      %1130 = vmatpush.msra.mxu0 0.0
      %1131 = vmatpush.msra.mxu0 0.0
      %1132 = vmatpush.msra.mxu0 0.0
      %1133 = vmatpush.msra.mxu0 0.0
      %1134 = vmatpush.msra.mxu0 0.0
      %1135 = vmatpush.msra.mxu0 %v1104
      %1136 = vmatpush.msra.mxu0 %v1090
      %1137 = vmatmul.f32.gmra.mxu0 %v1119
      %v1138 = vpop.f32.mrf.mxu0
      %v1139 = vadd.f32 0.0, %v1138
      %1140 = vdwg.mxu0
      %1141 = vmatpush.msra.mxu0 0.0
      %1142 = vmatpush.msra.mxu0 0.0
      %1143 = vmatpush.msra.mxu0 0.0
      %1144 = vmatpush.msra.mxu0 0.0
      %1145 = vmatpush.msra.mxu0 0.0
      %1146 = vmatpush.msra.mxu0 0.0
      %1147 = vmatpush.msra.mxu0 0.0
      %1148 = vmatpush.msra.mxu0 0.0
      %1149 = vmatpush.msra.mxu0 0.0
      %1150 = vmatpush.msra.mxu0 0.0
      %1151 = vmatpush.msra.mxu0 0.0
      %1152 = vmatpush.msra.mxu0 0.0
      %1153 = vmatpush.msra.mxu0 0.0
      %1154 = vmatpush.msra.mxu0 0.0
      %1155 = vmatpush.msra.mxu0 %v1105
      %1156 = vmatpush.msra.mxu0 %v1091
      %1157 = vmatmul.f32.gmra.mxu0 %v1119
      %v1158 = vpop.f32.mrf.mxu0
      %v1159 = vadd.f32 0.0, %v1158
      %1160 = vdwg.mxu0
      %1161 = vmatpush.msra.mxu0 0.0
      %1162 = vmatpush.msra.mxu0 0.0
      %1163 = vmatpush.msra.mxu0 0.0
      %1164 = vmatpush.msra.mxu0 0.0
      %1165 = vmatpush.msra.mxu0 0.0
      %1166 = vmatpush.msra.mxu0 0.0
      %1167 = vmatpush.msra.mxu0 0.0
      %1168 = vmatpush.msra.mxu0 0.0
      %1169 = vmatpush.msra.mxu0 0.0
      %1170 = vmatpush.msra.mxu0 0.0
      %1171 = vmatpush.msra.mxu0 0.0
      %1172 = vmatpush.msra.mxu0 0.0
      %1173 = vmatpush.msra.mxu0 0.0
      %1174 = vmatpush.msra.mxu0 0.0
      %1175 = vmatpush.msra.mxu0 %v1106
      %1176 = vmatpush.msra.mxu0 %v1092
      %1177 = vmatmul.f32.gmra.mxu0 %v1119
      %v1178 = vpop.f32.mrf.mxu0
      %v1179 = vadd.f32 0.0, %v1178
      %1180 = vdwg.mxu0
      %1181 = vmatpush.msra.mxu0 0.0
      %1182 = vmatpush.msra.mxu0 0.0
      %1183 = vmatpush.msra.mxu0 0.0
      %1184 = vmatpush.msra.mxu0 0.0
      %1185 = vmatpush.msra.mxu0 0.0
      %1186 = vmatpush.msra.mxu0 0.0
      %1187 = vmatpush.msra.mxu0 0.0
      %1188 = vmatpush.msra.mxu0 0.0
      %1189 = vmatpush.msra.mxu0 0.0
      %1190 = vmatpush.msra.mxu0 0.0
      %1191 = vmatpush.msra.mxu0 0.0
      %1192 = vmatpush.msra.mxu0 0.0
      %1193 = vmatpush.msra.mxu0 0.0
      %1194 = vmatpush.msra.mxu0 0.0
      %1195 = vmatpush.msra.mxu0 %v1107
      %1196 = vmatpush.msra.mxu0 %v1093
      %1197 = vmatmul.f32.gmra.mxu0 %v1119
      %v1198 = vpop.f32.mrf.mxu0
      %v1199 = vadd.f32 0.0, %v1198
      %1200 = vdwg.mxu0
      %1201 = vmatpush.msra.mxu0 0.0
      %1202 = vmatpush.msra.mxu0 0.0
      %1203 = vmatpush.msra.mxu0 0.0
      %1204 = vmatpush.msra.mxu0 0.0
      %1205 = vmatpush.msra.mxu0 0.0
      %1206 = vmatpush.msra.mxu0 0.0
      %1207 = vmatpush.msra.mxu0 0.0
      %1208 = vmatpush.msra.mxu0 0.0
      %1209 = vmatpush.msra.mxu0 0.0
      %1210 = vmatpush.msra.mxu0 0.0
      %1211 = vmatpush.msra.mxu0 0.0
      %1212 = vmatpush.msra.mxu0 0.0
      %1213 = vmatpush.msra.mxu0 0.0
      %1214 = vmatpush.msra.mxu0 0.0
      %1215 = vmatpush.msra.mxu0 %v1108
      %1216 = vmatpush.msra.mxu0 %v1094
      %1217 = vmatmul.f32.gmra.mxu0 %v1119
      %v1218 = vpop.f32.mrf.mxu0
      %v1219 = vadd.f32 0.0, %v1218
      %1220 = vdwg.mxu0
      %1221 = vmatpush.msra.mxu0 0.0
      %1222 = vmatpush.msra.mxu0 0.0
      %1223 = vmatpush.msra.mxu0 0.0
      %1224 = vmatpush.msra.mxu0 0.0
      %1225 = vmatpush.msra.mxu0 0.0
      %1226 = vmatpush.msra.mxu0 0.0
      %1227 = vmatpush.msra.mxu0 0.0
      %1228 = vmatpush.msra.mxu0 0.0
      %1229 = vmatpush.msra.mxu0 0.0
      %1230 = vmatpush.msra.mxu0 0.0
      %1231 = vmatpush.msra.mxu0 0.0
      %1232 = vmatpush.msra.mxu0 0.0
      %1233 = vmatpush.msra.mxu0 0.0
      %1234 = vmatpush.msra.mxu0 0.0
      %1235 = vmatpush.msra.mxu0 %v1109
      %1236 = vmatpush.msra.mxu0 %v1095
      %1237 = vmatmul.f32.gmra.mxu0 %v1119
      %v1238 = vpop.f32.mrf.mxu0
      %v1239 = vadd.f32 0.0, %v1238
      %1240 = vdwg.mxu0
      %1241 = vmatpush.msra.mxu0 0.0
      %1242 = vmatpush.msra.mxu0 0.0
      %1243 = vmatpush.msra.mxu0 0.0
      %1244 = vmatpush.msra.mxu0 0.0
      %1245 = vmatpush.msra.mxu0 0.0
      %1246 = vmatpush.msra.mxu0 0.0
      %1247 = vmatpush.msra.mxu0 0.0
      %1248 = vmatpush.msra.mxu0 0.0
      %1249 = vmatpush.msra.mxu0 0.0
      %1250 = vmatpush.msra.mxu0 0.0
      %1251 = vmatpush.msra.mxu0 0.0
      %1252 = vmatpush.msra.mxu0 0.0
      %1253 = vmatpush.msra.mxu0 0.0
      %1254 = vmatpush.msra.mxu0 0.0
      %1255 = vmatpush.msra.mxu0 %v1110
      %1256 = vmatpush.msra.mxu0 %v1096
      %1257 = vmatmul.f32.gmra.mxu0 %v1119
      %v1258 = vpop.f32.mrf.mxu0
      %v1259 = vadd.f32 0.0, %v1258
      %1260 = vdwg.mxu0
      %1261 = vmatpush.msra.mxu0 0.0
      %1262 = vmatpush.msra.mxu0 0.0
      %1263 = vmatpush.msra.mxu0 0.0
      %1264 = vmatpush.msra.mxu0 0.0
      %1265 = vmatpush.msra.mxu0 0.0
      %1266 = vmatpush.msra.mxu0 0.0
      %1267 = vmatpush.msra.mxu0 0.0
      %1268 = vmatpush.msra.mxu0 0.0
      %1269 = vmatpush.msra.mxu0 0.0
      %1270 = vmatpush.msra.mxu0 0.0
      %1271 = vmatpush.msra.mxu0 0.0
      %1272 = vmatpush.msra.mxu0 0.0
      %1273 = vmatpush.msra.mxu0 0.0
      %1274 = vmatpush.msra.mxu0 0.0
      %1275 = vmatpush.msra.mxu0 %v1111
      %1276 = vmatpush.msra.mxu0 %v1097
      %1277 = vmatmul.f32.gmra.mxu0 %v1119
      %v1278 = vpop.f32.mrf.mxu0
      %v1279 = vadd.f32 0.0, %v1278
      %1280 = vdwg.mxu0
      %1281 = vmatpush.msra.mxu0 0.0
      %1282 = vmatpush.msra.mxu0 0.0
      %1283 = vmatpush.msra.mxu0 0.0
      %1284 = vmatpush.msra.mxu0 0.0
      %1285 = vmatpush.msra.mxu0 0.0
      %1286 = vmatpush.msra.mxu0 0.0
      %1287 = vmatpush.msra.mxu0 0.0
      %1288 = vmatpush.msra.mxu0 0.0
      %1289 = vmatpush.msra.mxu0 0.0
      %1290 = vmatpush.msra.mxu0 0.0
      %1291 = vmatpush.msra.mxu0 0.0
      %1292 = vmatpush.msra.mxu0 0.0
      %1293 = vmatpush.msra.mxu0 0.0
      %1294 = vmatpush.msra.mxu0 0.0
      %1295 = vmatpush.msra.mxu0 %v1112
      %1296 = vmatpush.msra.mxu0 %v1098
      %1297 = vmatmul.f32.gmra.mxu0 %v1119
      %v1298 = vpop.f32.mrf.mxu0
      %v1299 = vadd.f32 0.0, %v1298
      %1300 = vdwg.mxu0
      %1301 = vmatpush.msra.mxu0 0.0
      %1302 = vmatpush.msra.mxu0 0.0
      %1303 = vmatpush.msra.mxu0 0.0
      %1304 = vmatpush.msra.mxu0 0.0
      %1305 = vmatpush.msra.mxu0 0.0
      %1306 = vmatpush.msra.mxu0 0.0
      %1307 = vmatpush.msra.mxu0 0.0
      %1308 = vmatpush.msra.mxu0 0.0
      %1309 = vmatpush.msra.mxu0 0.0
      %1310 = vmatpush.msra.mxu0 0.0
      %1311 = vmatpush.msra.mxu0 0.0
      %1312 = vmatpush.msra.mxu0 0.0
      %1313 = vmatpush.msra.mxu0 0.0
      %1314 = vmatpush.msra.mxu0 0.0
      %1315 = vmatpush.msra.mxu0 %v1113
      %1316 = vmatpush.msra.mxu0 %v1099
      %1317 = vmatmul.f32.gmra.mxu0 %v1119
      %v1318 = vpop.f32.mrf.mxu0
      %v1319 = vadd.f32 0.0, %v1318
      %1320 = vdwg.mxu0
      %1321 = vmatpush.msra.mxu0 0.0
      %1322 = vmatpush.msra.mxu0 0.0
      %1323 = vmatpush.msra.mxu0 0.0
      %1324 = vmatpush.msra.mxu0 0.0
      %1325 = vmatpush.msra.mxu0 0.0
      %1326 = vmatpush.msra.mxu0 0.0
      %1327 = vmatpush.msra.mxu0 0.0
      %1328 = vmatpush.msra.mxu0 0.0
      %1329 = vmatpush.msra.mxu0 0.0
      %1330 = vmatpush.msra.mxu0 0.0
      %1331 = vmatpush.msra.mxu0 0.0
      %1332 = vmatpush.msra.mxu0 0.0
      %1333 = vmatpush.msra.mxu0 0.0
      %1334 = vmatpush.msra.mxu0 0.0
      %1335 = vmatpush.msra.mxu0 %v1114
      %1336 = vmatpush.msra.mxu0 %v1100
      %1337 = vmatmul.f32.gmra.mxu0 %v1119
      %v1338 = vpop.f32.mrf.mxu0
      %v1339 = vadd.f32 0.0, %v1338
      %1340 = vdwg.mxu0
      %1341 = vmatpush.msra.mxu0 0.0
      %1342 = vmatpush.msra.mxu0 0.0
      %1343 = vmatpush.msra.mxu0 0.0
      %1344 = vmatpush.msra.mxu0 0.0
      %1345 = vmatpush.msra.mxu0 0.0
      %1346 = vmatpush.msra.mxu0 0.0
      %1347 = vmatpush.msra.mxu0 0.0
      %1348 = vmatpush.msra.mxu0 0.0
      %1349 = vmatpush.msra.mxu0 0.0
      %1350 = vmatpush.msra.mxu0 0.0
      %1351 = vmatpush.msra.mxu0 0.0
      %1352 = vmatpush.msra.mxu0 0.0
      %1353 = vmatpush.msra.mxu0 0.0
      %1354 = vmatpush.msra.mxu0 0.0
      %1355 = vmatpush.msra.mxu0 %v1115
      %1356 = vmatpush.msra.mxu0 %v1101
      %1357 = vmatmul.f32.gmra.mxu0 %v1119
      %v1358 = vpop.f32.mrf.mxu0
      %v1359 = vadd.f32 0.0, %v1358
      %1360 = vdwg.mxu0
      %1361 = vmatpush.msra.mxu0 0.0
      %1362 = vmatpush.msra.mxu0 0.0
      %1363 = vmatpush.msra.mxu0 0.0
      %1364 = vmatpush.msra.mxu0 0.0
      %1365 = vmatpush.msra.mxu0 0.0
      %1366 = vmatpush.msra.mxu0 0.0
      %1367 = vmatpush.msra.mxu0 0.0
      %1368 = vmatpush.msra.mxu0 0.0
      %1369 = vmatpush.msra.mxu0 0.0
      %1370 = vmatpush.msra.mxu0 0.0
      %1371 = vmatpush.msra.mxu0 0.0
      %1372 = vmatpush.msra.mxu0 0.0
      %1373 = vmatpush.msra.mxu0 0.0
      %1374 = vmatpush.msra.mxu0 0.0
      %1375 = vmatpush.msra.mxu0 %v1116
      %1376 = vmatpush.msra.mxu0 %v1102
      %1377 = vmatmul.f32.gmra.mxu0 %v1119
      %v1378 = vpop.f32.mrf.mxu0
      %v1379 = vadd.f32 0.0, %v1378
      %1380 = vdwg.mxu0
      %1381 = vmatpush.msra.mxu0 0.0
      %1382 = vmatpush.msra.mxu0 0.0
      %1383 = vmatpush.msra.mxu0 0.0
      %1384 = vmatpush.msra.mxu0 0.0
      %1385 = vmatpush.msra.mxu0 0.0
      %1386 = vmatpush.msra.mxu0 0.0
      %1387 = vmatpush.msra.mxu0 0.0
      %1388 = vmatpush.msra.mxu0 0.0
      %1389 = vmatpush.msra.mxu0 0.0
      %1390 = vmatpush.msra.mxu0 0.0
      %1391 = vmatpush.msra.mxu0 0.0
      %1392 = vmatpush.msra.mxu0 0.0
      %1393 = vmatpush.msra.mxu0 0.0
      %1394 = vmatpush.msra.mxu0 0.0
      %1395 = vmatpush.msra.mxu0 %v1117
      %1396 = vmatpush.msra.mxu0 %v1103
      %1397 = vmatmul.f32.gmra.mxu0 %v1119
      %v1398 = vpop.f32.mrf.mxu0
      %v1399 = vadd.f32 0.0, %v1398
      %1400 = vdwg.mxu0
      %v1415 = vrot.slane %v1159, 4
      %v1416 = vrot.slane %v1199, 4
      %v1417 = vrot.slane %v1239, 4
      %v1418 = vrot.slane %v1279, 4
      %v1419 = vrot.slane %v1319, 4
      %v1420 = vrot.slane %v1359, 4
      %v1421 = vrot.slane %v1399, 4
      %v1422 = vsel %vm688, %v1139, %v1415
      %v1423 = vsel %vm688, %v1179, %v1416
      %v1424 = vsel %vm688, %v1219, %v1417
      %v1425 = vsel %vm688, %v1259, %v1418
      %v1426 = vsel %vm688, %v1299, %v1419
      %v1427 = vsel %vm688, %v1339, %v1420
      %v1428 = vsel %vm688, %v1379, %v1421
      %v1436 = vadd.f32 %v1081, %v1422
      %v1437 = vadd.f32 %v1082, %v1423
      %v1438 = vadd.f32 %v1083, %v1424
      %v1439 = vadd.f32 %v1084, %v1425
      %v1440 = vadd.f32 %v1085, %v1426
      %v1441 = vadd.f32 %v1086, %v1427
      %v1442 = vadd.f32 %v1087, %v1428
      %1443 = vst [vmem:[#allocation2] sm:$0xff] %v1436
      %1444 = vst [vmem:[#allocation2 + $0x8] sm:$0xff] %v1437
      %1445 = vst [vmem:[#allocation2 + $0x10] sm:$0xff] %v1438
      %1446 = vst [vmem:[#allocation2 + $0x18] sm:$0xff] %v1439
      %1447 = vst [vmem:[#allocation2 + $0x20] sm:$0xff] %v1440
      %1448 = vst [vmem:[#allocation2 + $0x28] sm:$0xff] %v1441
      %1449 = vst [vmem:[#allocation2 + $0x30] sm:$0xff] %v1442
      %v1450 = vld [vmem:[#allocation2] sm:$0xff]
      %v1451 = vld [vmem:[#allocation2 + $0x8] sm:$0xff]
      %v1452 = vld [vmem:[#allocation2 + $0x10] sm:$0xff]
      %v1453 = vld [vmem:[#allocation2 + $0x18] sm:$0xff]
      %v1454 = vld [vmem:[#allocation2 + $0x20] sm:$0xff]
      %v1455 = vld [vmem:[#allocation2 + $0x28] sm:$0xff]
      %v1456 = vld [vmem:[#allocation2 + $0x30] sm:$0xff]
      %v1457 = vld [vmem:[#allocation2 + $0x38] sm:$0xff]
      %v1458 = vld [vmem:[%s2] sm:$0xf]
      %1460 = vset.pattern.permute.xlu0 0
      %1461 = vperm.xlu0 %1460, %v1458
      %v1462 = vpop.permute.xlu0 %1461
      %v1464 = vunpack.c.l.s4 839922192
      %v1465 = vunpack.c.0.s8 %v1464
      %v1466 = vperm.slane %v1462, %v1465
      %v1468 = vadd.f32 %v1450, %v1466
      %v1469 = vadd.f32 %v1451, %v1466
      %v1470 = vadd.f32 %v1452, %v1466
      %v1471 = vadd.f32 %v1453, %v1466
      %v1472 = vadd.f32 %v1454, %v1466
      %v1473 = vadd.f32 %v1455, %v1466
      %v1474 = vadd.f32 %v1456, %v1466
      %v1475 = vadd.f32 %v1457, %v1466
      %v1476 = vmax.f32 %v1468, 0.0
      %v1477 = vmax.f32 %v1469, 0.0
      %v1478 = vmax.f32 %v1470, 0.0
      %v1479 = vmax.f32 %v1471, 0.0
      %v1480 = vmax.f32 %v1472, 0.0
      %v1481 = vmax.f32 %v1473, 0.0
      %v1482 = vmax.f32 %v1474, 0.0
      %v1483 = vmax.f32 %v1475, 0.0
      %1492 = vst [vmem:[#allocation1] ss:$2 sm:$0xff] %v1476
      %s1493 = scalar_lea.vmem [#allocation1], 16
      %1494 = vst [vmem:[%s1493] ss:$2 sm:$0xff] %v1477
      %s1495 = scalar_lea.vmem [#allocation1], 32
      %1496 = vst [vmem:[%s1495] ss:$2 sm:$0xff] %v1478
      %s1497 = scalar_lea.vmem [#allocation1], 48
      %1498 = vst [vmem:[%s1497] ss:$2 sm:$0xff] %v1479
      %v1499 = vld.sshfl [vmem:[#allocation1] sm:$0xff pattern:$0x75316420]
      %v1500 = vld.sshfl [vmem:[#allocation1 + $0x8] sm:$0xff pattern:$0x75316420]
      %v1501 = vld.sshfl [vmem:[#allocation1 + $0x10] sm:$0xff pattern:$0x75316420]
      %v1502 = vld.sshfl [vmem:[#allocation1 + $0x18] sm:$0xff pattern:$0x75316420]
      %v1503 = vld.sshfl [vmem:[#allocation1 + $0x20] sm:$0xff pattern:$0x75316420]
      %v1504 = vld.sshfl [vmem:[#allocation1 + $0x28] sm:$0xff pattern:$0x75316420]
      %v1505 = vld.sshfl [vmem:[#allocation1 + $0x30] sm:$0xff pattern:$0x75316420]
      %v1506 = vld.sshfl [vmem:[#allocation1 + $0x38] sm:$0xff pattern:$0x75316420]
      %1507 = vst [vmem:[#allocation1] ss:$2 sm:$0xff] %v1480
      %1508 = vst [vmem:[%s1493] ss:$2 sm:$0xff] %v1481
      %1509 = vst [vmem:[%s1495] ss:$2 sm:$0xff] %v1482
      %1510 = vst [vmem:[%s1497] ss:$2 sm:$0xff] %v1483
      %v1511 = vld.sshfl [vmem:[#allocation1] sm:$0xff pattern:$0x75316420]
      %v1512 = vld.sshfl [vmem:[#allocation1 + $0x8] sm:$0xff pattern:$0x75316420]
      %v1513 = vld.sshfl [vmem:[#allocation1 + $0x10] sm:$0xff pattern:$0x75316420]
      %v1514 = vld.sshfl [vmem:[#allocation1 + $0x18] sm:$0xff pattern:$0x75316420]
      %v1515 = vld.sshfl [vmem:[#allocation1 + $0x20] sm:$0xff pattern:$0x75316420]
      %v1516 = vld.sshfl [vmem:[#allocation1 + $0x28] sm:$0xff pattern:$0x75316420]
      %v1517 = vld.sshfl [vmem:[#allocation1 + $0x30] sm:$0xff pattern:$0x75316420]
      %v1518 = vld.sshfl [vmem:[#allocation1 + $0x38] sm:$0xff pattern:$0x75316420]
      %1535 = vrot.lane.b32.xlu0 %v1499, 17
      %v1536 = vpop.permute.xlu0 %1535
      %1537 = vrot.lane.b32.xlu0 %v1500, 17
      %v1538 = vpop.permute.xlu0 %1537
      %1539 = vrot.lane.b32.xlu0 %v1501, 17
      %v1540 = vpop.permute.xlu0 %1539
      %1541 = vrot.lane.b32.xlu0 %v1502, 17
      %v1542 = vpop.permute.xlu0 %1541
      %1543 = vrot.lane.b32.xlu0 %v1503, 17
      %v1544 = vpop.permute.xlu0 %1543
      %1545 = vrot.lane.b32.xlu0 %v1504, 17
      %v1546 = vpop.permute.xlu0 %1545
      %1547 = vrot.lane.b32.xlu0 %v1505, 17
      %v1548 = vpop.permute.xlu0 %1547
      %1549 = vrot.lane.b32.xlu0 %v1506, 17
      %v1550 = vpop.permute.xlu0 %1549
      %1551 = vrot.lane.b32.xlu0 %v1511, 17
      %v1552 = vpop.permute.xlu0 %1551
      %1553 = vrot.lane.b32.xlu0 %v1512, 17
      %v1554 = vpop.permute.xlu0 %1553
      %1555 = vrot.lane.b32.xlu0 %v1513, 17
      %v1556 = vpop.permute.xlu0 %1555
      %1557 = vrot.lane.b32.xlu0 %v1514, 17
      %v1558 = vpop.permute.xlu0 %1557
      %1559 = vrot.lane.b32.xlu0 %v1515, 17
      %v1560 = vpop.permute.xlu0 %1559
      %1561 = vrot.lane.b32.xlu0 %v1516, 17
      %v1562 = vpop.permute.xlu0 %1561
      %1563 = vrot.lane.b32.xlu0 %v1517, 17
      %v1564 = vpop.permute.xlu0 %1563
      %1565 = vrot.lane.b32.xlu0 %v1518, 17
      %v1566 = vpop.permute.xlu0 %1565
      %v1567 = vlaneseq
      %v1568 = vand.u32 %v1567, 127
      %vm1569 = vcmp.lt.s32.totalorder %v1568, 17
      %v1570 = vsel %vm1569, %v1564, %v1566
      %v1571 = vsel %vm1569, %v1562, %v1564
      %v1572 = vsel %vm1569, %v1560, %v1562
      %v1573 = vsel %vm1569, %v1558, %v1560
      %v1574 = vsel %vm1569, %v1556, %v1558
      %v1575 = vsel %vm1569, %v1554, %v1556
      %v1576 = vsel %vm1569, %v1552, %v1554
      %v1577 = vsel %vm1569, %v1550, %v1552
      %v1578 = vsel %vm1569, %v1548, %v1550
      %v1579 = vsel %vm1569, %v1546, %v1548
      %v1580 = vsel %vm1569, %v1544, %v1546
      %v1581 = vsel %vm1569, %v1542, %v1544
      %v1582 = vsel %vm1569, %v1540, %v1542
      %v1583 = vsel %vm1569, %v1538, %v1540
      %v1584 = vsel %vm1569, %v1536, %v1538
      %v1585 = vsel %vm1569, %v1566, %v1536
      %v1586 = vld [vmem:[%s7] sm:$0xff]
      %v1587 = vld [vmem:[%s7 + $0x8] sm:$0xff]
      %v1590 = vperm.slane %v1586, 0
      %v1591 = vperm.slane %v1586, 1
      %v1592 = vperm.slane %v1586, 2
      %v1593 = vperm.slane %v1586, 3
      %v1594 = vperm.slane %v1586, 4
      %v1595 = vperm.slane %v1586, 5
      %v1596 = vperm.slane %v1586, 6
      %v1597 = vperm.slane %v1586, 7
      %v1598 = vperm.slane %v1587, 0
      %v1599 = vperm.slane %v1587, 1
      %v1600 = vperm.slane %v1587, 2
      %v1601 = vperm.slane %v1587, 3
      %v1602 = vperm.slane %v1587, 4
      %v1603 = vperm.slane %v1587, 5
      %v1604 = vperm.slane %v1587, 6
      %v1605 = vperm.slane %v1587, 7
      %v1622 = vmul.f32 %v1585, %v1590
      %v1623 = vmul.f32 %v1584, %v1591
      %v1624 = vmul.f32 %v1583, %v1592
      %v1625 = vmul.f32 %v1582, %v1593
      %v1626 = vmul.f32 %v1581, %v1594
      %v1627 = vmul.f32 %v1580, %v1595
      %v1628 = vmul.f32 %v1579, %v1596
      %v1629 = vmul.f32 %v1578, %v1597
      %v1630 = vmul.f32 %v1577, %v1598
      %v1631 = vmul.f32 %v1576, %v1599
      %v1632 = vmul.f32 %v1575, %v1600
      %v1633 = vmul.f32 %v1574, %v1601
      %v1634 = vmul.f32 %v1573, %v1602
      %v1635 = vmul.f32 %v1572, %v1603
      %v1636 = vmul.f32 %v1571, %v1604
      %v1637 = vmul.f32 %v1570, %v1605
      %v1638 = vld [vmem:[%s3] sm:$0xf]
      %1639 = vst [vmem:[#allocation1] ss:$2 sm:$0xff] %v1476
      %s1640 = scalar_lea.vmem [#allocation1], 16
      %1641 = vst [vmem:[%s1640] ss:$2 sm:$0xff] %v1477
      %s1642 = scalar_lea.vmem [#allocation1], 32
      %1643 = vst [vmem:[%s1642] ss:$2 sm:$0xff] %v1478
      %s1644 = scalar_lea.vmem [#allocation1], 48
      %1645 = vst [vmem:[%s1644] ss:$2 sm:$0xff] %v1479
      %v1646 = vld.sshfl [vmem:[#allocation1] sm:$0xff pattern:$0x75316420]
      %v1647 = vld.sshfl [vmem:[#allocation1 + $0x8] sm:$0xff pattern:$0x75316420]
      %v1648 = vld.sshfl [vmem:[#allocation1 + $0x10] sm:$0xff pattern:$0x75316420]
      %v1649 = vld.sshfl [vmem:[#allocation1 + $0x18] sm:$0xff pattern:$0x75316420]
      %v1650 = vld.sshfl [vmem:[#allocation1 + $0x20] sm:$0xff pattern:$0x75316420]
      %v1651 = vld.sshfl [vmem:[#allocation1 + $0x28] sm:$0xff pattern:$0x75316420]
      %v1652 = vld.sshfl [vmem:[#allocation1 + $0x30] sm:$0xff pattern:$0x75316420]
      %v1653 = vld.sshfl [vmem:[#allocation1 + $0x38] sm:$0xff pattern:$0x75316420]
      %1654 = vst [vmem:[#allocation1] ss:$2 sm:$0xff] %v1480
      %1655 = vst [vmem:[%s1640] ss:$2 sm:$0xff] %v1481
      %1656 = vst [vmem:[%s1642] ss:$2 sm:$0xff] %v1482
      %1657 = vst [vmem:[%s1644] ss:$2 sm:$0xff] %v1483
      %v1658 = vld.sshfl [vmem:[#allocation1] sm:$0xff pattern:$0x75316420]
      %v1659 = vld.sshfl [vmem:[#allocation1 + $0x8] sm:$0xff pattern:$0x75316420]
      %v1660 = vld.sshfl [vmem:[#allocation1 + $0x10] sm:$0xff pattern:$0x75316420]
      %v1661 = vld.sshfl [vmem:[#allocation1 + $0x18] sm:$0xff pattern:$0x75316420]
      %v1662 = vld.sshfl [vmem:[#allocation1 + $0x20] sm:$0xff pattern:$0x75316420]
      %v1663 = vld.sshfl [vmem:[#allocation1 + $0x28] sm:$0xff pattern:$0x75316420]
      %v1664 = vld.sshfl [vmem:[#allocation1 + $0x30] sm:$0xff pattern:$0x75316420]
      %v1665 = vld.sshfl [vmem:[#allocation1 + $0x38] sm:$0xff pattern:$0x75316420]
      %1682 = vrot.lane.b32.xlu0 %v1646, 16
      %v1683 = vpop.permute.xlu0 %1682
      %1684 = vrot.lane.b32.xlu0 %v1647, 16
      %v1685 = vpop.permute.xlu0 %1684
      %1686 = vrot.lane.b32.xlu0 %v1648, 16
      %v1687 = vpop.permute.xlu0 %1686
      %1688 = vrot.lane.b32.xlu0 %v1649, 16
      %v1689 = vpop.permute.xlu0 %1688
      %1690 = vrot.lane.b32.xlu0 %v1650, 16
      %v1691 = vpop.permute.xlu0 %1690
      %1692 = vrot.lane.b32.xlu0 %v1651, 16
      %v1693 = vpop.permute.xlu0 %1692
      %1694 = vrot.lane.b32.xlu0 %v1652, 16
      %v1695 = vpop.permute.xlu0 %1694
      %1696 = vrot.lane.b32.xlu0 %v1653, 16
      %v1697 = vpop.permute.xlu0 %1696
      %1698 = vrot.lane.b32.xlu0 %v1658, 16
      %v1699 = vpop.permute.xlu0 %1698
      %1700 = vrot.lane.b32.xlu0 %v1659, 16
      %v1701 = vpop.permute.xlu0 %1700
      %1702 = vrot.lane.b32.xlu0 %v1660, 16
      %v1703 = vpop.permute.xlu0 %1702
      %1704 = vrot.lane.b32.xlu0 %v1661, 16
      %v1705 = vpop.permute.xlu0 %1704
      %1706 = vrot.lane.b32.xlu0 %v1662, 16
      %v1707 = vpop.permute.xlu0 %1706
      %1708 = vrot.lane.b32.xlu0 %v1663, 16
      %v1709 = vpop.permute.xlu0 %1708
      %1710 = vrot.lane.b32.xlu0 %v1664, 16
      %v1711 = vpop.permute.xlu0 %1710
      %1712 = vrot.lane.b32.xlu0 %v1665, 16
      %v1713 = vpop.permute.xlu0 %1712
      %vm1714 = vcmp.lt.s32.totalorder %v1568, 16
      %v1715 = vsel %vm1714, %v1711, %v1713
      %v1716 = vsel %vm1714, %v1709, %v1711
      %v1717 = vsel %vm1714, %v1707, %v1709
      %v1718 = vsel %vm1714, %v1705, %v1707
      %v1719 = vsel %vm1714, %v1703, %v1705
      %v1720 = vsel %vm1714, %v1701, %v1703
      %v1721 = vsel %vm1714, %v1699, %v1701
      %v1722 = vsel %vm1714, %v1697, %v1699
      %v1723 = vsel %vm1714, %v1695, %v1697
      %v1724 = vsel %vm1714, %v1693, %v1695
      %v1725 = vsel %vm1714, %v1691, %v1693
      %v1726 = vsel %vm1714, %v1689, %v1691
      %v1727 = vsel %vm1714, %v1687, %v1689
      %v1728 = vsel %vm1714, %v1685, %v1687
      %v1729 = vsel %vm1714, %v1683, %v1685
      %v1730 = vsel %vm1714, %v1713, %v1683
      %s1731 = scalar_lea.vmem %s7, 16
      %v1732 = vld [vmem:[%s1731] sm:$0xff]
      %v1733 = vld [vmem:[%s1731 + $0x8] sm:$0xff]
      %v1736 = vperm.slane %v1732, 0
      %v1737 = vperm.slane %v1732, 1
      %v1738 = vperm.slane %v1732, 2
      %v1739 = vperm.slane %v1732, 3
      %v1740 = vperm.slane %v1732, 4
      %v1741 = vperm.slane %v1732, 5
      %v1742 = vperm.slane %v1732, 6
      %v1743 = vperm.slane %v1732, 7
      %v1744 = vperm.slane %v1733, 0
      %v1745 = vperm.slane %v1733, 1
      %v1746 = vperm.slane %v1733, 2
      %v1747 = vperm.slane %v1733, 3
      %v1748 = vperm.slane %v1733, 4
      %v1749 = vperm.slane %v1733, 5
      %v1750 = vperm.slane %v1733, 6
      %v1751 = vperm.slane %v1733, 7
      %v1768 = vmul.f32 %v1730, %v1736
      %v1769 = vmul.f32 %v1729, %v1737
      %v1770 = vmul.f32 %v1728, %v1738
      %v1771 = vmul.f32 %v1727, %v1739
      %v1772 = vmul.f32 %v1726, %v1740
      %v1773 = vmul.f32 %v1725, %v1741
      %v1774 = vmul.f32 %v1724, %v1742
      %v1775 = vmul.f32 %v1723, %v1743
      %v1776 = vmul.f32 %v1722, %v1744
      %v1777 = vmul.f32 %v1721, %v1745
      %v1778 = vmul.f32 %v1720, %v1746
      %v1779 = vmul.f32 %v1719, %v1747
      %v1780 = vmul.f32 %v1718, %v1748
      %v1781 = vmul.f32 %v1717, %v1749
      %v1782 = vmul.f32 %v1716, %v1750
      %v1783 = vmul.f32 %v1715, %v1751
      %s1784 = scalar_lea.vmem %s3, 4
      %v1785 = vld [vmem:[%s1784] sm:$0xf]
      %vm1786 = vcmask 31744
      %v1788 = vsel %vm1786, %v1785, 0
      %v1791 = vsel %vm688, %v1768, 0
      %v1794 = vsel %vm688, %v1769, 0
      %v1797 = vsel %vm688, %v1770, 0
      %v1800 = vsel %vm688, %v1771, 0
      %v1803 = vsel %vm688, %v1772, 0
      %v1806 = vsel %vm688, %v1773, 0
      %v1809 = vsel %vm688, %v1774, 0
      %v1812 = vsel %vm688, %v1775, 0
      %v1815 = vsel %vm688, %v1776, 0
      %v1818 = vsel %vm688, %v1777, 0
      %v1821 = vsel %vm688, %v1778, 0
      %v1824 = vsel %vm688, %v1779, 0
      %v1827 = vsel %vm688, %v1780, 0
      %v1830 = vsel %vm688, %v1781, 0
      %v1833 = vsel %vm688, %v1782, 0
      %v1836 = vsel %vm688, %v1783, 0
      %1838 = vmatpush.msra.mxu0 0.0
      %1839 = vmatpush.msra.mxu0 0.0
      %1840 = vmatpush.msra.mxu0 0.0
      %1841 = vmatpush.msra.mxu0 0.0
      %1842 = vmatpush.msra.mxu0 0.0
      %1843 = vmatpush.msra.mxu0 0.0
      %1844 = vmatpush.msra.mxu0 0.0
      %1845 = vmatpush.msra.mxu0 0.0
      %1846 = vmatpush.msra.mxu0 0.0
      %1847 = vmatpush.msra.mxu0 0.0
      %1848 = vmatpush.msra.mxu0 0.0
      %1849 = vmatpush.msra.mxu0 0.0
      %1850 = vmatpush.msra.mxu0 0.0
      %1851 = vmatpush.msra.mxu0 0.0
      %1852 = vmatpush.msra.mxu0 0.0
      %1853 = vmatpush.msra.mxu0 %v1791
      %1854 = vmatmul.f32.gmra.mxu0 %v1788
      %v1855 = vpop.f32.mrf.mxu0
      %v1856 = vadd.f32 0.0, %v1855
      %1857 = vdwg.mxu0
      %1858 = vmatpush.msra.mxu0 0.0
      %1859 = vmatpush.msra.mxu0 0.0
      %1860 = vmatpush.msra.mxu0 0.0
      %1861 = vmatpush.msra.mxu0 0.0
      %1862 = vmatpush.msra.mxu0 0.0
      %1863 = vmatpush.msra.mxu0 0.0
      %1864 = vmatpush.msra.mxu0 0.0
      %1865 = vmatpush.msra.mxu0 0.0
      %1866 = vmatpush.msra.mxu0 0.0
      %1867 = vmatpush.msra.mxu0 0.0
      %1868 = vmatpush.msra.mxu0 0.0
      %1869 = vmatpush.msra.mxu0 0.0
      %1870 = vmatpush.msra.mxu0 0.0
      %1871 = vmatpush.msra.mxu0 0.0
      %1872 = vmatpush.msra.mxu0 0.0
      %1873 = vmatpush.msra.mxu0 %v1794
      %1874 = vmatmul.f32.gmra.mxu0 %v1788
      %v1875 = vpop.f32.mrf.mxu0
      %v1876 = vadd.f32 0.0, %v1875
      %1877 = vdwg.mxu0
      %1878 = vmatpush.msra.mxu0 0.0
      %1879 = vmatpush.msra.mxu0 0.0
      %1880 = vmatpush.msra.mxu0 0.0
      %1881 = vmatpush.msra.mxu0 0.0
      %1882 = vmatpush.msra.mxu0 0.0
      %1883 = vmatpush.msra.mxu0 0.0
      %1884 = vmatpush.msra.mxu0 0.0
      %1885 = vmatpush.msra.mxu0 0.0
      %1886 = vmatpush.msra.mxu0 0.0
      %1887 = vmatpush.msra.mxu0 0.0
      %1888 = vmatpush.msra.mxu0 0.0
      %1889 = vmatpush.msra.mxu0 0.0
      %1890 = vmatpush.msra.mxu0 0.0
      %1891 = vmatpush.msra.mxu0 0.0
      %1892 = vmatpush.msra.mxu0 0.0
      %1893 = vmatpush.msra.mxu0 %v1797
      %1894 = vmatmul.f32.gmra.mxu0 %v1788
      %v1895 = vpop.f32.mrf.mxu0
      %v1896 = vadd.f32 0.0, %v1895
      %1897 = vdwg.mxu0
      %1898 = vmatpush.msra.mxu0 0.0
      %1899 = vmatpush.msra.mxu0 0.0
      %1900 = vmatpush.msra.mxu0 0.0
      %1901 = vmatpush.msra.mxu0 0.0
      %1902 = vmatpush.msra.mxu0 0.0
      %1903 = vmatpush.msra.mxu0 0.0
      %1904 = vmatpush.msra.mxu0 0.0
      %1905 = vmatpush.msra.mxu0 0.0
      %1906 = vmatpush.msra.mxu0 0.0
      %1907 = vmatpush.msra.mxu0 0.0
      %1908 = vmatpush.msra.mxu0 0.0
      %1909 = vmatpush.msra.mxu0 0.0
      %1910 = vmatpush.msra.mxu0 0.0
      %1911 = vmatpush.msra.mxu0 0.0
      %1912 = vmatpush.msra.mxu0 0.0
      %1913 = vmatpush.msra.mxu0 %v1800
      %1914 = vmatmul.f32.gmra.mxu0 %v1788
      %v1915 = vpop.f32.mrf.mxu0
      %v1916 = vadd.f32 0.0, %v1915
      %1917 = vdwg.mxu0
      %1918 = vmatpush.msra.mxu0 0.0
      %1919 = vmatpush.msra.mxu0 0.0
      %1920 = vmatpush.msra.mxu0 0.0
      %1921 = vmatpush.msra.mxu0 0.0
      %1922 = vmatpush.msra.mxu0 0.0
      %1923 = vmatpush.msra.mxu0 0.0
      %1924 = vmatpush.msra.mxu0 0.0
      %1925 = vmatpush.msra.mxu0 0.0
      %1926 = vmatpush.msra.mxu0 0.0
      %1927 = vmatpush.msra.mxu0 0.0
      %1928 = vmatpush.msra.mxu0 0.0
      %1929 = vmatpush.msra.mxu0 0.0
      %1930 = vmatpush.msra.mxu0 0.0
      %1931 = vmatpush.msra.mxu0 0.0
      %1932 = vmatpush.msra.mxu0 0.0
      %1933 = vmatpush.msra.mxu0 %v1803
      %1934 = vmatmul.f32.gmra.mxu0 %v1788
      %v1935 = vpop.f32.mrf.mxu0
      %v1936 = vadd.f32 0.0, %v1935
      %1937 = vdwg.mxu0
      %1938 = vmatpush.msra.mxu0 0.0
      %1939 = vmatpush.msra.mxu0 0.0
      %1940 = vmatpush.msra.mxu0 0.0
      %1941 = vmatpush.msra.mxu0 0.0
      %1942 = vmatpush.msra.mxu0 0.0
      %1943 = vmatpush.msra.mxu0 0.0
      %1944 = vmatpush.msra.mxu0 0.0
      %1945 = vmatpush.msra.mxu0 0.0
      %1946 = vmatpush.msra.mxu0 0.0
      %1947 = vmatpush.msra.mxu0 0.0
      %1948 = vmatpush.msra.mxu0 0.0
      %1949 = vmatpush.msra.mxu0 0.0
      %1950 = vmatpush.msra.mxu0 0.0
      %1951 = vmatpush.msra.mxu0 0.0
      %1952 = vmatpush.msra.mxu0 0.0
      %1953 = vmatpush.msra.mxu0 %v1806
      %1954 = vmatmul.f32.gmra.mxu0 %v1788
      %v1955 = vpop.f32.mrf.mxu0
      %v1956 = vadd.f32 0.0, %v1955
      %1957 = vdwg.mxu0
      %1958 = vmatpush.msra.mxu0 0.0
      %1959 = vmatpush.msra.mxu0 0.0
      %1960 = vmatpush.msra.mxu0 0.0
      %1961 = vmatpush.msra.mxu0 0.0
      %1962 = vmatpush.msra.mxu0 0.0
      %1963 = vmatpush.msra.mxu0 0.0
      %1964 = vmatpush.msra.mxu0 0.0
      %1965 = vmatpush.msra.mxu0 0.0
      %1966 = vmatpush.msra.mxu0 0.0
      %1967 = vmatpush.msra.mxu0 0.0
      %1968 = vmatpush.msra.mxu0 0.0
      %1969 = vmatpush.msra.mxu0 0.0
      %1970 = vmatpush.msra.mxu0 0.0
      %1971 = vmatpush.msra.mxu0 0.0
      %1972 = vmatpush.msra.mxu0 0.0
      %1973 = vmatpush.msra.mxu0 %v1809
      %1974 = vmatmul.f32.gmra.mxu0 %v1788
      %v1975 = vpop.f32.mrf.mxu0
      %v1976 = vadd.f32 0.0, %v1975
      %1977 = vdwg.mxu0
      %1978 = vmatpush.msra.mxu0 0.0
      %1979 = vmatpush.msra.mxu0 0.0
      %1980 = vmatpush.msra.mxu0 0.0
      %1981 = vmatpush.msra.mxu0 0.0
      %1982 = vmatpush.msra.mxu0 0.0
      %1983 = vmatpush.msra.mxu0 0.0
      %1984 = vmatpush.msra.mxu0 0.0
      %1985 = vmatpush.msra.mxu0 0.0
      %1986 = vmatpush.msra.mxu0 0.0
      %1987 = vmatpush.msra.mxu0 0.0
      %1988 = vmatpush.msra.mxu0 0.0
      %1989 = vmatpush.msra.mxu0 0.0
      %1990 = vmatpush.msra.mxu0 0.0
      %1991 = vmatpush.msra.mxu0 0.0
      %1992 = vmatpush.msra.mxu0 0.0
      %1993 = vmatpush.msra.mxu0 %v1812
      %1994 = vmatmul.f32.gmra.mxu0 %v1788
      %v1995 = vpop.f32.mrf.mxu0
      %v1996 = vadd.f32 0.0, %v1995
      %1997 = vdwg.mxu0
      %1998 = vmatpush.msra.mxu0 0.0
      %1999 = vmatpush.msra.mxu0 0.0
      %2000 = vmatpush.msra.mxu0 0.0
      %2001 = vmatpush.msra.mxu0 0.0
      %2002 = vmatpush.msra.mxu0 0.0
      %2003 = vmatpush.msra.mxu0 0.0
      %2004 = vmatpush.msra.mxu0 0.0
      %2005 = vmatpush.msra.mxu0 0.0
      %2006 = vmatpush.msra.mxu0 0.0
      %2007 = vmatpush.msra.mxu0 0.0
      %2008 = vmatpush.msra.mxu0 0.0
      %2009 = vmatpush.msra.mxu0 0.0
      %2010 = vmatpush.msra.mxu0 0.0
      %2011 = vmatpush.msra.mxu0 0.0
      %2012 = vmatpush.msra.mxu0 0.0
      %2013 = vmatpush.msra.mxu0 %v1815
      %2014 = vmatmul.f32.gmra.mxu0 %v1788
      %v2015 = vpop.f32.mrf.mxu0
      %v2016 = vadd.f32 0.0, %v2015
      %2017 = vdwg.mxu0
      %2018 = vmatpush.msra.mxu0 0.0
      %2019 = vmatpush.msra.mxu0 0.0
      %2020 = vmatpush.msra.mxu0 0.0
      %2021 = vmatpush.msra.mxu0 0.0
      %2022 = vmatpush.msra.mxu0 0.0
      %2023 = vmatpush.msra.mxu0 0.0
      %2024 = vmatpush.msra.mxu0 0.0
      %2025 = vmatpush.msra.mxu0 0.0
      %2026 = vmatpush.msra.mxu0 0.0
      %2027 = vmatpush.msra.mxu0 0.0
      %2028 = vmatpush.msra.mxu0 0.0
      %2029 = vmatpush.msra.mxu0 0.0
      %2030 = vmatpush.msra.mxu0 0.0
      %2031 = vmatpush.msra.mxu0 0.0
      %2032 = vmatpush.msra.mxu0 0.0
      %2033 = vmatpush.msra.mxu0 %v1818
      %2034 = vmatmul.f32.gmra.mxu0 %v1788
      %v2035 = vpop.f32.mrf.mxu0
      %v2036 = vadd.f32 0.0, %v2035
      %2037 = vdwg.mxu0
      %2038 = vmatpush.msra.mxu0 0.0
      %2039 = vmatpush.msra.mxu0 0.0
      %2040 = vmatpush.msra.mxu0 0.0
      %2041 = vmatpush.msra.mxu0 0.0
      %2042 = vmatpush.msra.mxu0 0.0
      %2043 = vmatpush.msra.mxu0 0.0
      %2044 = vmatpush.msra.mxu0 0.0
      %2045 = vmatpush.msra.mxu0 0.0
      %2046 = vmatpush.msra.mxu0 0.0
      %2047 = vmatpush.msra.mxu0 0.0
      %2048 = vmatpush.msra.mxu0 0.0
      %2049 = vmatpush.msra.mxu0 0.0
      %2050 = vmatpush.msra.mxu0 0.0
      %2051 = vmatpush.msra.mxu0 0.0
      %2052 = vmatpush.msra.mxu0 0.0
      %2053 = vmatpush.msra.mxu0 %v1821
      %2054 = vmatmul.f32.gmra.mxu0 %v1788
      %v2055 = vpop.f32.mrf.mxu0
      %v2056 = vadd.f32 0.0, %v2055
      %2057 = vdwg.mxu0
      %2058 = vmatpush.msra.mxu0 0.0
      %2059 = vmatpush.msra.mxu0 0.0
      %2060 = vmatpush.msra.mxu0 0.0
      %2061 = vmatpush.msra.mxu0 0.0
      %2062 = vmatpush.msra.mxu0 0.0
      %2063 = vmatpush.msra.mxu0 0.0
      %2064 = vmatpush.msra.mxu0 0.0
      %2065 = vmatpush.msra.mxu0 0.0
      %2066 = vmatpush.msra.mxu0 0.0
      %2067 = vmatpush.msra.mxu0 0.0
      %2068 = vmatpush.msra.mxu0 0.0
      %2069 = vmatpush.msra.mxu0 0.0
      %2070 = vmatpush.msra.mxu0 0.0
      %2071 = vmatpush.msra.mxu0 0.0
      %2072 = vmatpush.msra.mxu0 0.0
      %2073 = vmatpush.msra.mxu0 %v1824
      %2074 = vmatmul.f32.gmra.mxu0 %v1788
      %v2075 = vpop.f32.mrf.mxu0
      %v2076 = vadd.f32 0.0, %v2075
      %2077 = vdwg.mxu0
      %2078 = vmatpush.msra.mxu0 0.0
      %2079 = vmatpush.msra.mxu0 0.0
      %2080 = vmatpush.msra.mxu0 0.0
      %2081 = vmatpush.msra.mxu0 0.0
      %2082 = vmatpush.msra.mxu0 0.0
      %2083 = vmatpush.msra.mxu0 0.0
      %2084 = vmatpush.msra.mxu0 0.0
      %2085 = vmatpush.msra.mxu0 0.0
      %2086 = vmatpush.msra.mxu0 0.0
      %2087 = vmatpush.msra.mxu0 0.0
      %2088 = vmatpush.msra.mxu0 0.0
      %2089 = vmatpush.msra.mxu0 0.0
      %2090 = vmatpush.msra.mxu0 0.0
      %2091 = vmatpush.msra.mxu0 0.0
      %2092 = vmatpush.msra.mxu0 0.0
      %2093 = vmatpush.msra.mxu0 %v1827
      %2094 = vmatmul.f32.gmra.mxu0 %v1788
      %v2095 = vpop.f32.mrf.mxu0
      %v2096 = vadd.f32 0.0, %v2095
      %2097 = vdwg.mxu0
      %2098 = vmatpush.msra.mxu0 0.0
      %2099 = vmatpush.msra.mxu0 0.0
      %2100 = vmatpush.msra.mxu0 0.0
      %2101 = vmatpush.msra.mxu0 0.0
      %2102 = vmatpush.msra.mxu0 0.0
      %2103 = vmatpush.msra.mxu0 0.0
      %2104 = vmatpush.msra.mxu0 0.0
      %2105 = vmatpush.msra.mxu0 0.0
      %2106 = vmatpush.msra.mxu0 0.0
      %2107 = vmatpush.msra.mxu0 0.0
      %2108 = vmatpush.msra.mxu0 0.0
      %2109 = vmatpush.msra.mxu0 0.0
      %2110 = vmatpush.msra.mxu0 0.0
      %2111 = vmatpush.msra.mxu0 0.0
      %2112 = vmatpush.msra.mxu0 0.0
      %2113 = vmatpush.msra.mxu0 %v1830
      %2114 = vmatmul.f32.gmra.mxu0 %v1788
      %v2115 = vpop.f32.mrf.mxu0
      %v2116 = vadd.f32 0.0, %v2115
      %2117 = vdwg.mxu0
      %2118 = vmatpush.msra.mxu0 0.0
      %2119 = vmatpush.msra.mxu0 0.0
      %2120 = vmatpush.msra.mxu0 0.0
      %2121 = vmatpush.msra.mxu0 0.0
      %2122 = vmatpush.msra.mxu0 0.0
      %2123 = vmatpush.msra.mxu0 0.0
      %2124 = vmatpush.msra.mxu0 0.0
      %2125 = vmatpush.msra.mxu0 0.0
      %2126 = vmatpush.msra.mxu0 0.0
      %2127 = vmatpush.msra.mxu0 0.0
      %2128 = vmatpush.msra.mxu0 0.0
      %2129 = vmatpush.msra.mxu0 0.0
      %2130 = vmatpush.msra.mxu0 0.0
      %2131 = vmatpush.msra.mxu0 0.0
      %2132 = vmatpush.msra.mxu0 0.0
      %2133 = vmatpush.msra.mxu0 %v1833
      %2134 = vmatmul.f32.gmra.mxu0 %v1788
      %v2135 = vpop.f32.mrf.mxu0
      %v2136 = vadd.f32 0.0, %v2135
      %2137 = vdwg.mxu0
      %2138 = vmatpush.msra.mxu0 0.0
      %2139 = vmatpush.msra.mxu0 0.0
      %2140 = vmatpush.msra.mxu0 0.0
      %2141 = vmatpush.msra.mxu0 0.0
      %2142 = vmatpush.msra.mxu0 0.0
      %2143 = vmatpush.msra.mxu0 0.0
      %2144 = vmatpush.msra.mxu0 0.0
      %2145 = vmatpush.msra.mxu0 0.0
      %2146 = vmatpush.msra.mxu0 0.0
      %2147 = vmatpush.msra.mxu0 0.0
      %2148 = vmatpush.msra.mxu0 0.0
      %2149 = vmatpush.msra.mxu0 0.0
      %2150 = vmatpush.msra.mxu0 0.0
      %2151 = vmatpush.msra.mxu0 0.0
      %2152 = vmatpush.msra.mxu0 0.0
      %2153 = vmatpush.msra.mxu0 %v1836
      %2154 = vmatmul.f32.gmra.mxu0 %v1788
      %v2155 = vpop.f32.mrf.mxu0
      %v2156 = vadd.f32 0.0, %v2155
      %2157 = vdwg.mxu0
      %v2159 = vsel %vm1786, %v1638, 0
      %v2162 = vsel %vm688, %v1622, 0
      %v2165 = vsel %vm688, %v1623, 0
      %v2168 = vsel %vm688, %v1624, 0
      %v2171 = vsel %vm688, %v1625, 0
      %v2174 = vsel %vm688, %v1626, 0
      %v2177 = vsel %vm688, %v1627, 0
      %v2180 = vsel %vm688, %v1628, 0
      %v2183 = vsel %vm688, %v1629, 0
      %v2186 = vsel %vm688, %v1630, 0
      %v2189 = vsel %vm688, %v1631, 0
      %v2192 = vsel %vm688, %v1632, 0
      %v2195 = vsel %vm688, %v1633, 0
      %v2198 = vsel %vm688, %v1634, 0
      %v2201 = vsel %vm688, %v1635, 0
      %v2204 = vsel %vm688, %v1636, 0
      %v2207 = vsel %vm688, %v1637, 0
      %2209 = vmatpush.msra.mxu0 0.0
      %2210 = vmatpush.msra.mxu0 0.0
      %2211 = vmatpush.msra.mxu0 0.0
      %2212 = vmatpush.msra.mxu0 0.0
      %2213 = vmatpush.msra.mxu0 0.0
      %2214 = vmatpush.msra.mxu0 0.0
      %2215 = vmatpush.msra.mxu0 0.0
      %2216 = vmatpush.msra.mxu0 0.0
      %2217 = vmatpush.msra.mxu0 0.0
      %2218 = vmatpush.msra.mxu0 0.0
      %2219 = vmatpush.msra.mxu0 0.0
      %2220 = vmatpush.msra.mxu0 0.0
      %2221 = vmatpush.msra.mxu0 0.0
      %2222 = vmatpush.msra.mxu0 0.0
      %2223 = vmatpush.msra.mxu0 0.0
      %2224 = vmatpush.msra.mxu0 %v2162
      %2225 = vmatmul.f32.gmra.mxu0 %v2159
      %v2226 = vpop.f32.mrf.mxu0
      %v2227 = vadd.f32 %v1856, %v2226
      %2228 = vdwg.mxu0
      %2229 = vmatpush.msra.mxu0 0.0
      %2230 = vmatpush.msra.mxu0 0.0
      %2231 = vmatpush.msra.mxu0 0.0
      %2232 = vmatpush.msra.mxu0 0.0
      %2233 = vmatpush.msra.mxu0 0.0
      %2234 = vmatpush.msra.mxu0 0.0
      %2235 = vmatpush.msra.mxu0 0.0
      %2236 = vmatpush.msra.mxu0 0.0
      %2237 = vmatpush.msra.mxu0 0.0
      %2238 = vmatpush.msra.mxu0 0.0
      %2239 = vmatpush.msra.mxu0 0.0
      %2240 = vmatpush.msra.mxu0 0.0
      %2241 = vmatpush.msra.mxu0 0.0
      %2242 = vmatpush.msra.mxu0 0.0
      %2243 = vmatpush.msra.mxu0 0.0
      %2244 = vmatpush.msra.mxu0 %v2165
      %2245 = vmatmul.f32.gmra.mxu0 %v2159
      %v2246 = vpop.f32.mrf.mxu0
      %v2247 = vadd.f32 %v1876, %v2246
      %2248 = vdwg.mxu0
      %2249 = vmatpush.msra.mxu0 0.0
      %2250 = vmatpush.msra.mxu0 0.0
      %2251 = vmatpush.msra.mxu0 0.0
      %2252 = vmatpush.msra.mxu0 0.0
      %2253 = vmatpush.msra.mxu0 0.0
      %2254 = vmatpush.msra.mxu0 0.0
      %2255 = vmatpush.msra.mxu0 0.0
      %2256 = vmatpush.msra.mxu0 0.0
      %2257 = vmatpush.msra.mxu0 0.0
      %2258 = vmatpush.msra.mxu0 0.0
      %2259 = vmatpush.msra.mxu0 0.0
      %2260 = vmatpush.msra.mxu0 0.0
      %2261 = vmatpush.msra.mxu0 0.0
      %2262 = vmatpush.msra.mxu0 0.0
      %2263 = vmatpush.msra.mxu0 0.0
      %2264 = vmatpush.msra.mxu0 %v2168
      %2265 = vmatmul.f32.gmra.mxu0 %v2159
      %v2266 = vpop.f32.mrf.mxu0
      %v2267 = vadd.f32 %v1896, %v2266
      %2268 = vdwg.mxu0
      %2269 = vmatpush.msra.mxu0 0.0
      %2270 = vmatpush.msra.mxu0 0.0
      %2271 = vmatpush.msra.mxu0 0.0
      %2272 = vmatpush.msra.mxu0 0.0
      %2273 = vmatpush.msra.mxu0 0.0
      %2274 = vmatpush.msra.mxu0 0.0
      %2275 = vmatpush.msra.mxu0 0.0
      %2276 = vmatpush.msra.mxu0 0.0
      %2277 = vmatpush.msra.mxu0 0.0
      %2278 = vmatpush.msra.mxu0 0.0
      %2279 = vmatpush.msra.mxu0 0.0
      %2280 = vmatpush.msra.mxu0 0.0
      %2281 = vmatpush.msra.mxu0 0.0
      %2282 = vmatpush.msra.mxu0 0.0
      %2283 = vmatpush.msra.mxu0 0.0
      %2284 = vmatpush.msra.mxu0 %v2171
      %2285 = vmatmul.f32.gmra.mxu0 %v2159
      %v2286 = vpop.f32.mrf.mxu0
      %v2287 = vadd.f32 %v1916, %v2286
      %2288 = vdwg.mxu0
      %2289 = vmatpush.msra.mxu0 0.0
      %2290 = vmatpush.msra.mxu0 0.0
      %2291 = vmatpush.msra.mxu0 0.0
      %2292 = vmatpush.msra.mxu0 0.0
      %2293 = vmatpush.msra.mxu0 0.0
      %2294 = vmatpush.msra.mxu0 0.0
      %2295 = vmatpush.msra.mxu0 0.0
      %2296 = vmatpush.msra.mxu0 0.0
      %2297 = vmatpush.msra.mxu0 0.0
      %2298 = vmatpush.msra.mxu0 0.0
      %2299 = vmatpush.msra.mxu0 0.0
      %2300 = vmatpush.msra.mxu0 0.0
      %2301 = vmatpush.msra.mxu0 0.0
      %2302 = vmatpush.msra.mxu0 0.0
      %2303 = vmatpush.msra.mxu0 0.0
      %2304 = vmatpush.msra.mxu0 %v2174
      %2305 = vmatmul.f32.gmra.mxu0 %v2159
      %v2306 = vpop.f32.mrf.mxu0
      %v2307 = vadd.f32 %v1936, %v2306
      %2308 = vdwg.mxu0
      %2309 = vmatpush.msra.mxu0 0.0
      %2310 = vmatpush.msra.mxu0 0.0
      %2311 = vmatpush.msra.mxu0 0.0
      %2312 = vmatpush.msra.mxu0 0.0
      %2313 = vmatpush.msra.mxu0 0.0
      %2314 = vmatpush.msra.mxu0 0.0
      %2315 = vmatpush.msra.mxu0 0.0
      %2316 = vmatpush.msra.mxu0 0.0
      %2317 = vmatpush.msra.mxu0 0.0
      %2318 = vmatpush.msra.mxu0 0.0
      %2319 = vmatpush.msra.mxu0 0.0
      %2320 = vmatpush.msra.mxu0 0.0
      %2321 = vmatpush.msra.mxu0 0.0
      %2322 = vmatpush.msra.mxu0 0.0
      %2323 = vmatpush.msra.mxu0 0.0
      %2324 = vmatpush.msra.mxu0 %v2177
      %2325 = vmatmul.f32.gmra.mxu0 %v2159
      %v2326 = vpop.f32.mrf.mxu0
      %v2327 = vadd.f32 %v1956, %v2326
      %2328 = vdwg.mxu0
      %2329 = vmatpush.msra.mxu0 0.0
      %2330 = vmatpush.msra.mxu0 0.0
      %2331 = vmatpush.msra.mxu0 0.0
      %2332 = vmatpush.msra.mxu0 0.0
      %2333 = vmatpush.msra.mxu0 0.0
      %2334 = vmatpush.msra.mxu0 0.0
      %2335 = vmatpush.msra.mxu0 0.0
      %2336 = vmatpush.msra.mxu0 0.0
      %2337 = vmatpush.msra.mxu0 0.0
      %2338 = vmatpush.msra.mxu0 0.0
      %2339 = vmatpush.msra.mxu0 0.0
      %2340 = vmatpush.msra.mxu0 0.0
      %2341 = vmatpush.msra.mxu0 0.0
      %2342 = vmatpush.msra.mxu0 0.0
      %2343 = vmatpush.msra.mxu0 0.0
      %2344 = vmatpush.msra.mxu0 %v2180
      %2345 = vmatmul.f32.gmra.mxu0 %v2159
      %v2346 = vpop.f32.mrf.mxu0
      %v2347 = vadd.f32 %v1976, %v2346
      %2348 = vdwg.mxu0
      %2349 = vmatpush.msra.mxu0 0.0
      %2350 = vmatpush.msra.mxu0 0.0
      %2351 = vmatpush.msra.mxu0 0.0
      %2352 = vmatpush.msra.mxu0 0.0
      %2353 = vmatpush.msra.mxu0 0.0
      %2354 = vmatpush.msra.mxu0 0.0
      %2355 = vmatpush.msra.mxu0 0.0
      %2356 = vmatpush.msra.mxu0 0.0
      %2357 = vmatpush.msra.mxu0 0.0
      %2358 = vmatpush.msra.mxu0 0.0
      %2359 = vmatpush.msra.mxu0 0.0
      %2360 = vmatpush.msra.mxu0 0.0
      %2361 = vmatpush.msra.mxu0 0.0
      %2362 = vmatpush.msra.mxu0 0.0
      %2363 = vmatpush.msra.mxu0 0.0
      %2364 = vmatpush.msra.mxu0 %v2183
      %2365 = vmatmul.f32.gmra.mxu0 %v2159
      %v2366 = vpop.f32.mrf.mxu0
      %v2367 = vadd.f32 %v1996, %v2366
      %2368 = vdwg.mxu0
      %2369 = vmatpush.msra.mxu0 0.0
      %2370 = vmatpush.msra.mxu0 0.0
      %2371 = vmatpush.msra.mxu0 0.0
      %2372 = vmatpush.msra.mxu0 0.0
      %2373 = vmatpush.msra.mxu0 0.0
      %2374 = vmatpush.msra.mxu0 0.0
      %2375 = vmatpush.msra.mxu0 0.0
      %2376 = vmatpush.msra.mxu0 0.0
      %2377 = vmatpush.msra.mxu0 0.0
      %2378 = vmatpush.msra.mxu0 0.0
      %2379 = vmatpush.msra.mxu0 0.0
      %2380 = vmatpush.msra.mxu0 0.0
      %2381 = vmatpush.msra.mxu0 0.0
      %2382 = vmatpush.msra.mxu0 0.0
      %2383 = vmatpush.msra.mxu0 0.0
      %2384 = vmatpush.msra.mxu0 %v2186
      %2385 = vmatmul.f32.gmra.mxu0 %v2159
      %v2386 = vpop.f32.mrf.mxu0
      %v2387 = vadd.f32 %v2016, %v2386
      %2388 = vdwg.mxu0
      %2389 = vmatpush.msra.mxu0 0.0
      %2390 = vmatpush.msra.mxu0 0.0
      %2391 = vmatpush.msra.mxu0 0.0
      %2392 = vmatpush.msra.mxu0 0.0
      %2393 = vmatpush.msra.mxu0 0.0
      %2394 = vmatpush.msra.mxu0 0.0
      %2395 = vmatpush.msra.mxu0 0.0
      %2396 = vmatpush.msra.mxu0 0.0
      %2397 = vmatpush.msra.mxu0 0.0
      %2398 = vmatpush.msra.mxu0 0.0
      %2399 = vmatpush.msra.mxu0 0.0
      %2400 = vmatpush.msra.mxu0 0.0
      %2401 = vmatpush.msra.mxu0 0.0
      %2402 = vmatpush.msra.mxu0 0.0
      %2403 = vmatpush.msra.mxu0 0.0
      %2404 = vmatpush.msra.mxu0 %v2189
      %2405 = vmatmul.f32.gmra.mxu0 %v2159
      %v2406 = vpop.f32.mrf.mxu0
      %v2407 = vadd.f32 %v2036, %v2406
      %2408 = vdwg.mxu0
      %2409 = vmatpush.msra.mxu0 0.0
      %2410 = vmatpush.msra.mxu0 0.0
      %2411 = vmatpush.msra.mxu0 0.0
      %2412 = vmatpush.msra.mxu0 0.0
      %2413 = vmatpush.msra.mxu0 0.0
      %2414 = vmatpush.msra.mxu0 0.0
      %2415 = vmatpush.msra.mxu0 0.0
      %2416 = vmatpush.msra.mxu0 0.0
      %2417 = vmatpush.msra.mxu0 0.0
      %2418 = vmatpush.msra.mxu0 0.0
      %2419 = vmatpush.msra.mxu0 0.0
      %2420 = vmatpush.msra.mxu0 0.0
      %2421 = vmatpush.msra.mxu0 0.0
      %2422 = vmatpush.msra.mxu0 0.0
      %2423 = vmatpush.msra.mxu0 0.0
      %2424 = vmatpush.msra.mxu0 %v2192
      %2425 = vmatmul.f32.gmra.mxu0 %v2159
      %v2426 = vpop.f32.mrf.mxu0
      %v2427 = vadd.f32 %v2056, %v2426
      %2428 = vdwg.mxu0
      %2429 = vmatpush.msra.mxu0 0.0
      %2430 = vmatpush.msra.mxu0 0.0
      %2431 = vmatpush.msra.mxu0 0.0
      %2432 = vmatpush.msra.mxu0 0.0
      %2433 = vmatpush.msra.mxu0 0.0
      %2434 = vmatpush.msra.mxu0 0.0
      %2435 = vmatpush.msra.mxu0 0.0
      %2436 = vmatpush.msra.mxu0 0.0
      %2437 = vmatpush.msra.mxu0 0.0
      %2438 = vmatpush.msra.mxu0 0.0
      %2439 = vmatpush.msra.mxu0 0.0
      %2440 = vmatpush.msra.mxu0 0.0
      %2441 = vmatpush.msra.mxu0 0.0
      %2442 = vmatpush.msra.mxu0 0.0
      %2443 = vmatpush.msra.mxu0 0.0
      %2444 = vmatpush.msra.mxu0 %v2195
      %2445 = vmatmul.f32.gmra.mxu0 %v2159
      %v2446 = vpop.f32.mrf.mxu0
      %v2447 = vadd.f32 %v2076, %v2446
      %2448 = vdwg.mxu0
      %2449 = vmatpush.msra.mxu0 0.0
      %2450 = vmatpush.msra.mxu0 0.0
      %2451 = vmatpush.msra.mxu0 0.0
      %2452 = vmatpush.msra.mxu0 0.0
      %2453 = vmatpush.msra.mxu0 0.0
      %2454 = vmatpush.msra.mxu0 0.0
      %2455 = vmatpush.msra.mxu0 0.0
      %2456 = vmatpush.msra.mxu0 0.0
      %2457 = vmatpush.msra.mxu0 0.0
      %2458 = vmatpush.msra.mxu0 0.0
      %2459 = vmatpush.msra.mxu0 0.0
      %2460 = vmatpush.msra.mxu0 0.0
      %2461 = vmatpush.msra.mxu0 0.0
      %2462 = vmatpush.msra.mxu0 0.0
      %2463 = vmatpush.msra.mxu0 0.0
      %2464 = vmatpush.msra.mxu0 %v2198
      %2465 = vmatmul.f32.gmra.mxu0 %v2159
      %v2466 = vpop.f32.mrf.mxu0
      %v2467 = vadd.f32 %v2096, %v2466
      %2468 = vdwg.mxu0
      %2469 = vmatpush.msra.mxu0 0.0
      %2470 = vmatpush.msra.mxu0 0.0
      %2471 = vmatpush.msra.mxu0 0.0
      %2472 = vmatpush.msra.mxu0 0.0
      %2473 = vmatpush.msra.mxu0 0.0
      %2474 = vmatpush.msra.mxu0 0.0
      %2475 = vmatpush.msra.mxu0 0.0
      %2476 = vmatpush.msra.mxu0 0.0
      %2477 = vmatpush.msra.mxu0 0.0
      %2478 = vmatpush.msra.mxu0 0.0
      %2479 = vmatpush.msra.mxu0 0.0
      %2480 = vmatpush.msra.mxu0 0.0
      %2481 = vmatpush.msra.mxu0 0.0
      %2482 = vmatpush.msra.mxu0 0.0
      %2483 = vmatpush.msra.mxu0 0.0
      %2484 = vmatpush.msra.mxu0 %v2201
      %2485 = vmatmul.f32.gmra.mxu0 %v2159
      %v2486 = vpop.f32.mrf.mxu0
      %v2487 = vadd.f32 %v2116, %v2486
      %2488 = vdwg.mxu0
      %2489 = vmatpush.msra.mxu0 0.0
      %2490 = vmatpush.msra.mxu0 0.0
      %2491 = vmatpush.msra.mxu0 0.0
      %2492 = vmatpush.msra.mxu0 0.0
      %2493 = vmatpush.msra.mxu0 0.0
      %2494 = vmatpush.msra.mxu0 0.0
      %2495 = vmatpush.msra.mxu0 0.0
      %2496 = vmatpush.msra.mxu0 0.0
      %2497 = vmatpush.msra.mxu0 0.0
      %2498 = vmatpush.msra.mxu0 0.0
      %2499 = vmatpush.msra.mxu0 0.0
      %2500 = vmatpush.msra.mxu0 0.0
      %2501 = vmatpush.msra.mxu0 0.0
      %2502 = vmatpush.msra.mxu0 0.0
      %2503 = vmatpush.msra.mxu0 0.0
      %2504 = vmatpush.msra.mxu0 %v2204
      %2505 = vmatmul.f32.gmra.mxu0 %v2159
      %v2506 = vpop.f32.mrf.mxu0
      %v2507 = vadd.f32 %v2136, %v2506
      %2508 = vdwg.mxu0
      %2509 = vmatpush.msra.mxu0 0.0
      %2510 = vmatpush.msra.mxu0 0.0
      %2511 = vmatpush.msra.mxu0 0.0
      %2512 = vmatpush.msra.mxu0 0.0
      %2513 = vmatpush.msra.mxu0 0.0
      %2514 = vmatpush.msra.mxu0 0.0
      %2515 = vmatpush.msra.mxu0 0.0
      %2516 = vmatpush.msra.mxu0 0.0
      %2517 = vmatpush.msra.mxu0 0.0
      %2518 = vmatpush.msra.mxu0 0.0
      %2519 = vmatpush.msra.mxu0 0.0
      %2520 = vmatpush.msra.mxu0 0.0
      %2521 = vmatpush.msra.mxu0 0.0
      %2522 = vmatpush.msra.mxu0 0.0
      %2523 = vmatpush.msra.mxu0 0.0
      %2524 = vmatpush.msra.mxu0 %v2207
      %2525 = vmatmul.f32.gmra.mxu0 %v2159
      %v2526 = vpop.f32.mrf.mxu0
      %v2527 = vadd.f32 %v2156, %v2526
      %2528 = vdwg.mxu0
      %2529 = vst [vmem:[#allocation1] ss:$2 sm:$0xff] %v1476
      %s2530 = scalar_lea.vmem [#allocation1], 16
      %2531 = vst [vmem:[%s2530] ss:$2 sm:$0xff] %v1477
      %s2532 = scalar_lea.vmem [#allocation1], 32
      %2533 = vst [vmem:[%s2532] ss:$2 sm:$0xff] %v1478
      %s2534 = scalar_lea.vmem [#allocation1], 48
      %2535 = vst [vmem:[%s2534] ss:$2 sm:$0xff] %v1479
      %v2536 = vld.sshfl [vmem:[#allocation1] sm:$0xff pattern:$0x75316420]
      %v2537 = vld.sshfl [vmem:[#allocation1 + $0x8] sm:$0xff pattern:$0x75316420]
      %v2538 = vld.sshfl [vmem:[#allocation1 + $0x10] sm:$0xff pattern:$0x75316420]
      %v2539 = vld.sshfl [vmem:[#allocation1 + $0x18] sm:$0xff pattern:$0x75316420]
      %v2540 = vld.sshfl [vmem:[#allocation1 + $0x20] sm:$0xff pattern:$0x75316420]
      %v2541 = vld.sshfl [vmem:[#allocation1 + $0x28] sm:$0xff pattern:$0x75316420]
      %v2542 = vld.sshfl [vmem:[#allocation1 + $0x30] sm:$0xff pattern:$0x75316420]
      %v2543 = vld.sshfl [vmem:[#allocation1 + $0x38] sm:$0xff pattern:$0x75316420]
      %2544 = vst [vmem:[#allocation1] ss:$2 sm:$0xff] %v1480
      %2545 = vst [vmem:[%s2530] ss:$2 sm:$0xff] %v1481
      %2546 = vst [vmem:[%s2532] ss:$2 sm:$0xff] %v1482
      %2547 = vst [vmem:[%s2534] ss:$2 sm:$0xff] %v1483
      %v2548 = vld.sshfl [vmem:[#allocation1] sm:$0xff pattern:$0x75316420]
      %v2549 = vld.sshfl [vmem:[#allocation1 + $0x8] sm:$0xff pattern:$0x75316420]
      %v2550 = vld.sshfl [vmem:[#allocation1 + $0x10] sm:$0xff pattern:$0x75316420]
      %v2551 = vld.sshfl [vmem:[#allocation1 + $0x18] sm:$0xff pattern:$0x75316420]
      %v2552 = vld.sshfl [vmem:[#allocation1 + $0x20] sm:$0xff pattern:$0x75316420]
      %v2553 = vld.sshfl [vmem:[#allocation1 + $0x28] sm:$0xff pattern:$0x75316420]
      %v2554 = vld.sshfl [vmem:[#allocation1 + $0x30] sm:$0xff pattern:$0x75316420]
      %v2555 = vld.sshfl [vmem:[#allocation1 + $0x38] sm:$0xff pattern:$0x75316420]
      %2572 = vrot.lane.b32.xlu0 %v2536, 15
      %v2573 = vpop.permute.xlu0 %2572
      %2574 = vrot.lane.b32.xlu0 %v2537, 15
      %v2575 = vpop.permute.xlu0 %2574
      %2576 = vrot.lane.b32.xlu0 %v2538, 15
      %v2577 = vpop.permute.xlu0 %2576
      %2578 = vrot.lane.b32.xlu0 %v2539, 15
      %v2579 = vpop.permute.xlu0 %2578
      %2580 = vrot.lane.b32.xlu0 %v2540, 15
      %v2581 = vpop.permute.xlu0 %2580
      %2582 = vrot.lane.b32.xlu0 %v2541, 15
      %v2583 = vpop.permute.xlu0 %2582
      %2584 = vrot.lane.b32.xlu0 %v2542, 15
      %v2585 = vpop.permute.xlu0 %2584
      %2586 = vrot.lane.b32.xlu0 %v2543, 15
      %v2587 = vpop.permute.xlu0 %2586
      %2588 = vrot.lane.b32.xlu0 %v2548, 15
      %v2589 = vpop.permute.xlu0 %2588
      %2590 = vrot.lane.b32.xlu0 %v2549, 15
      %v2591 = vpop.permute.xlu0 %2590
      %2592 = vrot.lane.b32.xlu0 %v2550, 15
      %v2593 = vpop.permute.xlu0 %2592
      %2594 = vrot.lane.b32.xlu0 %v2551, 15
      %v2595 = vpop.permute.xlu0 %2594
      %2596 = vrot.lane.b32.xlu0 %v2552, 15
      %v2597 = vpop.permute.xlu0 %2596
      %2598 = vrot.lane.b32.xlu0 %v2553, 15
      %v2599 = vpop.permute.xlu0 %2598
      %2600 = vrot.lane.b32.xlu0 %v2554, 15
      %v2601 = vpop.permute.xlu0 %2600
      %2602 = vrot.lane.b32.xlu0 %v2555, 15
      %v2603 = vpop.permute.xlu0 %2602
      %vm2604 = vcmp.lt.s32.totalorder %v1568, 15
      %v2605 = vsel %vm2604, %v2601, %v2603
      %v2606 = vsel %vm2604, %v2599, %v2601
      %v2607 = vsel %vm2604, %v2597, %v2599
      %v2608 = vsel %vm2604, %v2595, %v2597
      %v2609 = vsel %vm2604, %v2593, %v2595
      %v2610 = vsel %vm2604, %v2591, %v2593
      %v2611 = vsel %vm2604, %v2589, %v2591
      %v2612 = vsel %vm2604, %v2587, %v2589
      %v2613 = vsel %vm2604, %v2585, %v2587
      %v2614 = vsel %vm2604, %v2583, %v2585
      %v2615 = vsel %vm2604, %v2581, %v2583
      %v2616 = vsel %vm2604, %v2579, %v2581
      %v2617 = vsel %vm2604, %v2577, %v2579
      %v2618 = vsel %vm2604, %v2575, %v2577
      %v2619 = vsel %vm2604, %v2573, %v2575
      %v2620 = vsel %vm2604, %v2603, %v2573
      %s2621 = scalar_lea.vmem %s7, 32
      %v2622 = vld [vmem:[%s2621] sm:$0xff]
      %v2623 = vld [vmem:[%s2621 + $0x8] sm:$0xff]
      %v2626 = vperm.slane %v2622, 0
      %v2627 = vperm.slane %v2622, 1
      %v2628 = vperm.slane %v2622, 2
      %v2629 = vperm.slane %v2622, 3
      %v2630 = vperm.slane %v2622, 4
      %v2631 = vperm.slane %v2622, 5
      %v2632 = vperm.slane %v2622, 6
      %v2633 = vperm.slane %v2622, 7
      %v2634 = vperm.slane %v2623, 0
      %v2635 = vperm.slane %v2623, 1
      %v2636 = vperm.slane %v2623, 2
      %v2637 = vperm.slane %v2623, 3
      %v2638 = vperm.slane %v2623, 4
      %v2639 = vperm.slane %v2623, 5
      %v2640 = vperm.slane %v2623, 6
      %v2641 = vperm.slane %v2623, 7
      %v2658 = vmul.f32 %v2620, %v2626
      %v2659 = vmul.f32 %v2619, %v2627
      %v2660 = vmul.f32 %v2618, %v2628
      %v2661 = vmul.f32 %v2617, %v2629
      %v2662 = vmul.f32 %v2616, %v2630
      %v2663 = vmul.f32 %v2615, %v2631
      %v2664 = vmul.f32 %v2614, %v2632
      %v2665 = vmul.f32 %v2613, %v2633
      %v2666 = vmul.f32 %v2612, %v2634
      %v2667 = vmul.f32 %v2611, %v2635
      %v2668 = vmul.f32 %v2610, %v2636
      %v2669 = vmul.f32 %v2609, %v2637
      %v2670 = vmul.f32 %v2608, %v2638
      %v2671 = vmul.f32 %v2607, %v2639
      %v2672 = vmul.f32 %v2606, %v2640
      %v2673 = vmul.f32 %v2605, %v2641
      %s2674 = scalar_lea.vmem %s3, 8
      %v2675 = vld [vmem:[%s2674] sm:$0xf]
      %v2677 = vsel %vm1786, %v2675, 0
      %v2680 = vsel %vm688, %v2658, 0
      %v2683 = vsel %vm688, %v2659, 0
      %v2686 = vsel %vm688, %v2660, 0
      %v2689 = vsel %vm688, %v2661, 0
      %v2692 = vsel %vm688, %v2662, 0
      %v2695 = vsel %vm688, %v2663, 0
      %v2698 = vsel %vm688, %v2664, 0
      %v2701 = vsel %vm688, %v2665, 0
      %v2704 = vsel %vm688, %v2666, 0
      %v2707 = vsel %vm688, %v2667, 0
      %v2710 = vsel %vm688, %v2668, 0
      %v2713 = vsel %vm688, %v2669, 0
      %v2716 = vsel %vm688, %v2670, 0
      %v2719 = vsel %vm688, %v2671, 0
      %v2722 = vsel %vm688, %v2672, 0
      %v2725 = vsel %vm688, %v2673, 0
      %2727 = vmatpush.msra.mxu0 0.0
      %2728 = vmatpush.msra.mxu0 0.0
      %2729 = vmatpush.msra.mxu0 0.0
      %2730 = vmatpush.msra.mxu0 0.0
      %2731 = vmatpush.msra.mxu0 0.0
      %2732 = vmatpush.msra.mxu0 0.0
      %2733 = vmatpush.msra.mxu0 0.0
      %2734 = vmatpush.msra.mxu0 0.0
      %2735 = vmatpush.msra.mxu0 0.0
      %2736 = vmatpush.msra.mxu0 0.0
      %2737 = vmatpush.msra.mxu0 0.0
      %2738 = vmatpush.msra.mxu0 0.0
      %2739 = vmatpush.msra.mxu0 0.0
      %2740 = vmatpush.msra.mxu0 0.0
      %2741 = vmatpush.msra.mxu0 0.0
      %2742 = vmatpush.msra.mxu0 %v2680
      %2743 = vmatmul.f32.gmra.mxu0 %v2677
      %v2744 = vpop.f32.mrf.mxu0
      %v2745 = vadd.f32 0.0, %v2744
      %2746 = vdwg.mxu0
      %2747 = vmatpush.msra.mxu0 0.0
      %2748 = vmatpush.msra.mxu0 0.0
      %2749 = vmatpush.msra.mxu0 0.0
      %2750 = vmatpush.msra.mxu0 0.0
      %2751 = vmatpush.msra.mxu0 0.0
      %2752 = vmatpush.msra.mxu0 0.0
      %2753 = vmatpush.msra.mxu0 0.0
      %2754 = vmatpush.msra.mxu0 0.0
      %2755 = vmatpush.msra.mxu0 0.0
      %2756 = vmatpush.msra.mxu0 0.0
      %2757 = vmatpush.msra.mxu0 0.0
      %2758 = vmatpush.msra.mxu0 0.0
      %2759 = vmatpush.msra.mxu0 0.0
      %2760 = vmatpush.msra.mxu0 0.0
      %2761 = vmatpush.msra.mxu0 0.0
      %2762 = vmatpush.msra.mxu0 %v2683
      %2763 = vmatmul.f32.gmra.mxu0 %v2677
      %v2764 = vpop.f32.mrf.mxu0
      %v2765 = vadd.f32 0.0, %v2764
      %2766 = vdwg.mxu0
      %2767 = vmatpush.msra.mxu0 0.0
      %2768 = vmatpush.msra.mxu0 0.0
      %2769 = vmatpush.msra.mxu0 0.0
      %2770 = vmatpush.msra.mxu0 0.0
      %2771 = vmatpush.msra.mxu0 0.0
      %2772 = vmatpush.msra.mxu0 0.0
      %2773 = vmatpush.msra.mxu0 0.0
      %2774 = vmatpush.msra.mxu0 0.0
      %2775 = vmatpush.msra.mxu0 0.0
      %2776 = vmatpush.msra.mxu0 0.0
      %2777 = vmatpush.msra.mxu0 0.0
      %2778 = vmatpush.msra.mxu0 0.0
      %2779 = vmatpush.msra.mxu0 0.0
      %2780 = vmatpush.msra.mxu0 0.0
      %2781 = vmatpush.msra.mxu0 0.0
      %2782 = vmatpush.msra.mxu0 %v2686
      %2783 = vmatmul.f32.gmra.mxu0 %v2677
      %v2784 = vpop.f32.mrf.mxu0
      %v2785 = vadd.f32 0.0, %v2784
      %2786 = vdwg.mxu0
      %2787 = vmatpush.msra.mxu0 0.0
      %2788 = vmatpush.msra.mxu0 0.0
      %2789 = vmatpush.msra.mxu0 0.0
      %2790 = vmatpush.msra.mxu0 0.0
      %2791 = vmatpush.msra.mxu0 0.0
      %2792 = vmatpush.msra.mxu0 0.0
      %2793 = vmatpush.msra.mxu0 0.0
      %2794 = vmatpush.msra.mxu0 0.0
      %2795 = vmatpush.msra.mxu0 0.0
      %2796 = vmatpush.msra.mxu0 0.0
      %2797 = vmatpush.msra.mxu0 0.0
      %2798 = vmatpush.msra.mxu0 0.0
      %2799 = vmatpush.msra.mxu0 0.0
      %2800 = vmatpush.msra.mxu0 0.0
      %2801 = vmatpush.msra.mxu0 0.0
      %2802 = vmatpush.msra.mxu0 %v2689
      %2803 = vmatmul.f32.gmra.mxu0 %v2677
      %v2804 = vpop.f32.mrf.mxu0
      %v2805 = vadd.f32 0.0, %v2804
      %2806 = vdwg.mxu0
      %2807 = vmatpush.msra.mxu0 0.0
      %2808 = vmatpush.msra.mxu0 0.0
      %2809 = vmatpush.msra.mxu0 0.0
      %2810 = vmatpush.msra.mxu0 0.0
      %2811 = vmatpush.msra.mxu0 0.0
      %2812 = vmatpush.msra.mxu0 0.0
      %2813 = vmatpush.msra.mxu0 0.0
      %2814 = vmatpush.msra.mxu0 0.0
      %2815 = vmatpush.msra.mxu0 0.0
      %2816 = vmatpush.msra.mxu0 0.0
      %2817 = vmatpush.msra.mxu0 0.0
      %2818 = vmatpush.msra.mxu0 0.0
      %2819 = vmatpush.msra.mxu0 0.0
      %2820 = vmatpush.msra.mxu0 0.0
      %2821 = vmatpush.msra.mxu0 0.0
      %2822 = vmatpush.msra.mxu0 %v2692
      %2823 = vmatmul.f32.gmra.mxu0 %v2677
      %v2824 = vpop.f32.mrf.mxu0
      %v2825 = vadd.f32 0.0, %v2824
      %2826 = vdwg.mxu0
      %2827 = vmatpush.msra.mxu0 0.0
      %2828 = vmatpush.msra.mxu0 0.0
      %2829 = vmatpush.msra.mxu0 0.0
      %2830 = vmatpush.msra.mxu0 0.0
      %2831 = vmatpush.msra.mxu0 0.0
      %2832 = vmatpush.msra.mxu0 0.0
      %2833 = vmatpush.msra.mxu0 0.0
      %2834 = vmatpush.msra.mxu0 0.0
      %2835 = vmatpush.msra.mxu0 0.0
      %2836 = vmatpush.msra.mxu0 0.0
      %2837 = vmatpush.msra.mxu0 0.0
      %2838 = vmatpush.msra.mxu0 0.0
      %2839 = vmatpush.msra.mxu0 0.0
      %2840 = vmatpush.msra.mxu0 0.0
      %2841 = vmatpush.msra.mxu0 0.0
      %2842 = vmatpush.msra.mxu0 %v2695
      %2843 = vmatmul.f32.gmra.mxu0 %v2677
      %v2844 = vpop.f32.mrf.mxu0
      %v2845 = vadd.f32 0.0, %v2844
      %2846 = vdwg.mxu0
      %2847 = vmatpush.msra.mxu0 0.0
      %2848 = vmatpush.msra.mxu0 0.0
      %2849 = vmatpush.msra.mxu0 0.0
      %2850 = vmatpush.msra.mxu0 0.0
      %2851 = vmatpush.msra.mxu0 0.0
      %2852 = vmatpush.msra.mxu0 0.0
      %2853 = vmatpush.msra.mxu0 0.0
      %2854 = vmatpush.msra.mxu0 0.0
      %2855 = vmatpush.msra.mxu0 0.0
      %2856 = vmatpush.msra.mxu0 0.0
      %2857 = vmatpush.msra.mxu0 0.0
      %2858 = vmatpush.msra.mxu0 0.0
      %2859 = vmatpush.msra.mxu0 0.0
      %2860 = vmatpush.msra.mxu0 0.0
      %2861 = vmatpush.msra.mxu0 0.0
      %2862 = vmatpush.msra.mxu0 %v2698
      %2863 = vmatmul.f32.gmra.mxu0 %v2677
      %v2864 = vpop.f32.mrf.mxu0
      %v2865 = vadd.f32 0.0, %v2864
      %2866 = vdwg.mxu0
      %2867 = vmatpush.msra.mxu0 0.0
      %2868 = vmatpush.msra.mxu0 0.0
      %2869 = vmatpush.msra.mxu0 0.0
      %2870 = vmatpush.msra.mxu0 0.0
      %2871 = vmatpush.msra.mxu0 0.0
      %2872 = vmatpush.msra.mxu0 0.0
      %2873 = vmatpush.msra.mxu0 0.0
      %2874 = vmatpush.msra.mxu0 0.0
      %2875 = vmatpush.msra.mxu0 0.0
      %2876 = vmatpush.msra.mxu0 0.0
      %2877 = vmatpush.msra.mxu0 0.0
      %2878 = vmatpush.msra.mxu0 0.0
      %2879 = vmatpush.msra.mxu0 0.0
      %2880 = vmatpush.msra.mxu0 0.0
      %2881 = vmatpush.msra.mxu0 0.0
      %2882 = vmatpush.msra.mxu0 %v2701
      %2883 = vmatmul.f32.gmra.mxu0 %v2677
      %v2884 = vpop.f32.mrf.mxu0
      %v2885 = vadd.f32 0.0, %v2884
      %2886 = vdwg.mxu0
      %2887 = vmatpush.msra.mxu0 0.0
      %2888 = vmatpush.msra.mxu0 0.0
      %2889 = vmatpush.msra.mxu0 0.0
      %2890 = vmatpush.msra.mxu0 0.0
      %2891 = vmatpush.msra.mxu0 0.0
      %2892 = vmatpush.msra.mxu0 0.0
      %2893 = vmatpush.msra.mxu0 0.0
      %2894 = vmatpush.msra.mxu0 0.0
      %2895 = vmatpush.msra.mxu0 0.0
      %2896 = vmatpush.msra.mxu0 0.0
      %2897 = vmatpush.msra.mxu0 0.0
      %2898 = vmatpush.msra.mxu0 0.0
      %2899 = vmatpush.msra.mxu0 0.0
      %2900 = vmatpush.msra.mxu0 0.0
      %2901 = vmatpush.msra.mxu0 0.0
      %2902 = vmatpush.msra.mxu0 %v2704
      %2903 = vmatmul.f32.gmra.mxu0 %v2677
      %v2904 = vpop.f32.mrf.mxu0
      %v2905 = vadd.f32 0.0, %v2904
      %2906 = vdwg.mxu0
      %2907 = vmatpush.msra.mxu0 0.0
      %2908 = vmatpush.msra.mxu0 0.0
      %2909 = vmatpush.msra.mxu0 0.0
      %2910 = vmatpush.msra.mxu0 0.0
      %2911 = vmatpush.msra.mxu0 0.0
      %2912 = vmatpush.msra.mxu0 0.0
      %2913 = vmatpush.msra.mxu0 0.0
      %2914 = vmatpush.msra.mxu0 0.0
      %2915 = vmatpush.msra.mxu0 0.0
      %2916 = vmatpush.msra.mxu0 0.0
      %2917 = vmatpush.msra.mxu0 0.0
      %2918 = vmatpush.msra.mxu0 0.0
      %2919 = vmatpush.msra.mxu0 0.0
      %2920 = vmatpush.msra.mxu0 0.0
      %2921 = vmatpush.msra.mxu0 0.0
      %2922 = vmatpush.msra.mxu0 %v2707
      %2923 = vmatmul.f32.gmra.mxu0 %v2677
      %v2924 = vpop.f32.mrf.mxu0
      %v2925 = vadd.f32 0.0, %v2924
      %2926 = vdwg.mxu0
      %2927 = vmatpush.msra.mxu0 0.0
      %2928 = vmatpush.msra.mxu0 0.0
      %2929 = vmatpush.msra.mxu0 0.0
      %2930 = vmatpush.msra.mxu0 0.0
      %2931 = vmatpush.msra.mxu0 0.0
      %2932 = vmatpush.msra.mxu0 0.0
      %2933 = vmatpush.msra.mxu0 0.0
      %2934 = vmatpush.msra.mxu0 0.0
      %2935 = vmatpush.msra.mxu0 0.0
      %2936 = vmatpush.msra.mxu0 0.0
      %2937 = vmatpush.msra.mxu0 0.0
      %2938 = vmatpush.msra.mxu0 0.0
      %2939 = vmatpush.msra.mxu0 0.0
      %2940 = vmatpush.msra.mxu0 0.0
      %2941 = vmatpush.msra.mxu0 0.0
      %2942 = vmatpush.msra.mxu0 %v2710
      %2943 = vmatmul.f32.gmra.mxu0 %v2677
      %v2944 = vpop.f32.mrf.mxu0
      %v2945 = vadd.f32 0.0, %v2944
      %2946 = vdwg.mxu0
      %2947 = vmatpush.msra.mxu0 0.0
      %2948 = vmatpush.msra.mxu0 0.0
      %2949 = vmatpush.msra.mxu0 0.0
      %2950 = vmatpush.msra.mxu0 0.0
      %2951 = vmatpush.msra.mxu0 0.0
      %2952 = vmatpush.msra.mxu0 0.0
      %2953 = vmatpush.msra.mxu0 0.0
      %2954 = vmatpush.msra.mxu0 0.0
      %2955 = vmatpush.msra.mxu0 0.0
      %2956 = vmatpush.msra.mxu0 0.0
      %2957 = vmatpush.msra.mxu0 0.0
      %2958 = vmatpush.msra.mxu0 0.0
      %2959 = vmatpush.msra.mxu0 0.0
      %2960 = vmatpush.msra.mxu0 0.0
      %2961 = vmatpush.msra.mxu0 0.0
      %2962 = vmatpush.msra.mxu0 %v2713
      %2963 = vmatmul.f32.gmra.mxu0 %v2677
      %v2964 = vpop.f32.mrf.mxu0
      %v2965 = vadd.f32 0.0, %v2964
      %2966 = vdwg.mxu0
      %2967 = vmatpush.msra.mxu0 0.0
      %2968 = vmatpush.msra.mxu0 0.0
      %2969 = vmatpush.msra.mxu0 0.0
      %2970 = vmatpush.msra.mxu0 0.0
      %2971 = vmatpush.msra.mxu0 0.0
      %2972 = vmatpush.msra.mxu0 0.0
      %2973 = vmatpush.msra.mxu0 0.0
      %2974 = vmatpush.msra.mxu0 0.0
      %2975 = vmatpush.msra.mxu0 0.0
      %2976 = vmatpush.msra.mxu0 0.0
      %2977 = vmatpush.msra.mxu0 0.0
      %2978 = vmatpush.msra.mxu0 0.0
      %2979 = vmatpush.msra.mxu0 0.0
      %2980 = vmatpush.msra.mxu0 0.0
      %2981 = vmatpush.msra.mxu0 0.0
      %2982 = vmatpush.msra.mxu0 %v2716
      %2983 = vmatmul.f32.gmra.mxu0 %v2677
      %v2984 = vpop.f32.mrf.mxu0
      %v2985 = vadd.f32 0.0, %v2984
      %2986 = vdwg.mxu0
      %2987 = vmatpush.msra.mxu0 0.0
      %2988 = vmatpush.msra.mxu0 0.0
      %2989 = vmatpush.msra.mxu0 0.0
      %2990 = vmatpush.msra.mxu0 0.0
      %2991 = vmatpush.msra.mxu0 0.0
      %2992 = vmatpush.msra.mxu0 0.0
      %2993 = vmatpush.msra.mxu0 0.0
      %2994 = vmatpush.msra.mxu0 0.0
      %2995 = vmatpush.msra.mxu0 0.0
      %2996 = vmatpush.msra.mxu0 0.0
      %2997 = vmatpush.msra.mxu0 0.0
      %2998 = vmatpush.msra.mxu0 0.0
      %2999 = vmatpush.msra.mxu0 0.0
      %3000 = vmatpush.msra.mxu0 0.0
      %3001 = vmatpush.msra.mxu0 0.0
      %3002 = vmatpush.msra.mxu0 %v2719
      %3003 = vmatmul.f32.gmra.mxu0 %v2677
      %v3004 = vpop.f32.mrf.mxu0
      %v3005 = vadd.f32 0.0, %v3004
      %3006 = vdwg.mxu0
      %3007 = vmatpush.msra.mxu0 0.0
      %3008 = vmatpush.msra.mxu0 0.0
      %3009 = vmatpush.msra.mxu0 0.0
      %3010 = vmatpush.msra.mxu0 0.0
      %3011 = vmatpush.msra.mxu0 0.0
      %3012 = vmatpush.msra.mxu0 0.0
      %3013 = vmatpush.msra.mxu0 0.0
      %3014 = vmatpush.msra.mxu0 0.0
      %3015 = vmatpush.msra.mxu0 0.0
      %3016 = vmatpush.msra.mxu0 0.0
      %3017 = vmatpush.msra.mxu0 0.0
      %3018 = vmatpush.msra.mxu0 0.0
      %3019 = vmatpush.msra.mxu0 0.0
      %3020 = vmatpush.msra.mxu0 0.0
      %3021 = vmatpush.msra.mxu0 0.0
      %3022 = vmatpush.msra.mxu0 %v2722
      %3023 = vmatmul.f32.gmra.mxu0 %v2677
      %v3024 = vpop.f32.mrf.mxu0
      %v3025 = vadd.f32 0.0, %v3024
      %3026 = vdwg.mxu0
      %3027 = vmatpush.msra.mxu0 0.0
      %3028 = vmatpush.msra.mxu0 0.0
      %3029 = vmatpush.msra.mxu0 0.0
      %3030 = vmatpush.msra.mxu0 0.0
      %3031 = vmatpush.msra.mxu0 0.0
      %3032 = vmatpush.msra.mxu0 0.0
      %3033 = vmatpush.msra.mxu0 0.0
      %3034 = vmatpush.msra.mxu0 0.0
      %3035 = vmatpush.msra.mxu0 0.0
      %3036 = vmatpush.msra.mxu0 0.0
      %3037 = vmatpush.msra.mxu0 0.0
      %3038 = vmatpush.msra.mxu0 0.0
      %3039 = vmatpush.msra.mxu0 0.0
      %3040 = vmatpush.msra.mxu0 0.0
      %3041 = vmatpush.msra.mxu0 0.0
      %3042 = vmatpush.msra.mxu0 %v2725
      %3043 = vmatmul.f32.gmra.mxu0 %v2677
      %v3044 = vpop.f32.mrf.mxu0
      %v3045 = vadd.f32 0.0, %v3044
      %3046 = vdwg.mxu0
      %v3047 = vadd.f32 %v2227, %v2745
      %v3048 = vadd.f32 %v2247, %v2765
      %v3049 = vadd.f32 %v2267, %v2785
      %v3050 = vadd.f32 %v2287, %v2805
      %v3051 = vadd.f32 %v2307, %v2825
      %v3052 = vadd.f32 %v2327, %v2845
      %v3053 = vadd.f32 %v2347, %v2865
      %v3054 = vadd.f32 %v2367, %v2885
      %v3055 = vadd.f32 %v2387, %v2905
      %v3056 = vadd.f32 %v2407, %v2925
      %v3057 = vadd.f32 %v2427, %v2945
      %v3058 = vadd.f32 %v2447, %v2965
      %v3059 = vadd.f32 %v2467, %v2985
      %v3060 = vadd.f32 %v2487, %v3005
      %v3061 = vadd.f32 %v2507, %v3025
      %v3062 = vadd.f32 %v2527, %v3045
      %3063 = vst [vmem:[#allocation1] ss:$2 sm:$0xff] %v1476
      %s3064 = scalar_lea.vmem [#allocation1], 16
      %3065 = vst [vmem:[%s3064] ss:$2 sm:$0xff] %v1477
      %s3066 = scalar_lea.vmem [#allocation1], 32
      %3067 = vst [vmem:[%s3066] ss:$2 sm:$0xff] %v1478
      %s3068 = scalar_lea.vmem [#allocation1], 48
      %3069 = vst [vmem:[%s3068] ss:$2 sm:$0xff] %v1479
      %v3070 = vld.sshfl [vmem:[#allocation1] sm:$0xff pattern:$0x75316420]
      %v3071 = vld.sshfl [vmem:[#allocation1 + $0x8] sm:$0xff pattern:$0x75316420]
      %v3072 = vld.sshfl [vmem:[#allocation1 + $0x10] sm:$0xff pattern:$0x75316420]
      %v3073 = vld.sshfl [vmem:[#allocation1 + $0x18] sm:$0xff pattern:$0x75316420]
      %v3074 = vld.sshfl [vmem:[#allocation1 + $0x20] sm:$0xff pattern:$0x75316420]
      %v3075 = vld.sshfl [vmem:[#allocation1 + $0x28] sm:$0xff pattern:$0x75316420]
      %v3076 = vld.sshfl [vmem:[#allocation1 + $0x30] sm:$0xff pattern:$0x75316420]
      %v3077 = vld.sshfl [vmem:[#allocation1 + $0x38] sm:$0xff pattern:$0x75316420]
      %3078 = vst [vmem:[#allocation1] ss:$2 sm:$0xff] %v1480
      %3079 = vst [vmem:[%s3064] ss:$2 sm:$0xff] %v1481
      %3080 = vst [vmem:[%s3066] ss:$2 sm:$0xff] %v1482
      %3081 = vst [vmem:[%s3068] ss:$2 sm:$0xff] %v1483
      %v3082 = vld.sshfl [vmem:[#allocation1] sm:$0xff pattern:$0x75316420]
      %v3083 = vld.sshfl [vmem:[#allocation1 + $0x8] sm:$0xff pattern:$0x75316420]
      %v3084 = vld.sshfl [vmem:[#allocation1 + $0x10] sm:$0xff pattern:$0x75316420]
      %v3085 = vld.sshfl [vmem:[#allocation1 + $0x18] sm:$0xff pattern:$0x75316420]
      %v3086 = vld.sshfl [vmem:[#allocation1 + $0x20] sm:$0xff pattern:$0x75316420]
      %v3087 = vld.sshfl [vmem:[#allocation1 + $0x28] sm:$0xff pattern:$0x75316420]
      %v3088 = vld.sshfl [vmem:[#allocation1 + $0x30] sm:$0xff pattern:$0x75316420]
      %v3089 = vld.sshfl [vmem:[#allocation1 + $0x38] sm:$0xff pattern:$0x75316420]
      %3106 = vrot.lane.b32.xlu0 %v3070, 1
      %v3107 = vpop.permute.xlu0 %3106
      %3108 = vrot.lane.b32.xlu0 %v3071, 1
      %v3109 = vpop.permute.xlu0 %3108
      %3110 = vrot.lane.b32.xlu0 %v3072, 1
      %v3111 = vpop.permute.xlu0 %3110
      %3112 = vrot.lane.b32.xlu0 %v3073, 1
      %v3113 = vpop.permute.xlu0 %3112
      %3114 = vrot.lane.b32.xlu0 %v3074, 1
      %v3115 = vpop.permute.xlu0 %3114
      %3116 = vrot.lane.b32.xlu0 %v3075, 1
      %v3117 = vpop.permute.xlu0 %3116
      %3118 = vrot.lane.b32.xlu0 %v3076, 1
      %v3119 = vpop.permute.xlu0 %3118
      %3120 = vrot.lane.b32.xlu0 %v3077, 1
      %v3121 = vpop.permute.xlu0 %3120
      %3122 = vrot.lane.b32.xlu0 %v3082, 1
      %v3123 = vpop.permute.xlu0 %3122
      %3124 = vrot.lane.b32.xlu0 %v3083, 1
      %v3125 = vpop.permute.xlu0 %3124
      %3126 = vrot.lane.b32.xlu0 %v3084, 1
      %v3127 = vpop.permute.xlu0 %3126
      %3128 = vrot.lane.b32.xlu0 %v3085, 1
      %v3129 = vpop.permute.xlu0 %3128
      %3130 = vrot.lane.b32.xlu0 %v3086, 1
      %v3131 = vpop.permute.xlu0 %3130
      %3132 = vrot.lane.b32.xlu0 %v3087, 1
      %v3133 = vpop.permute.xlu0 %3132
      %3134 = vrot.lane.b32.xlu0 %v3088, 1
      %v3135 = vpop.permute.xlu0 %3134
      %3136 = vrot.lane.b32.xlu0 %v3089, 1
      %v3137 = vpop.permute.xlu0 %3136
      %vm3138 = vcmp.lt.s32.totalorder %v1568, 1
      %v3139 = vsel %vm3138, %v3135, %v3137
      %v3140 = vsel %vm3138, %v3133, %v3135
      %v3141 = vsel %vm3138, %v3131, %v3133
      %v3142 = vsel %vm3138, %v3129, %v3131
      %v3143 = vsel %vm3138, %v3127, %v3129
      %v3144 = vsel %vm3138, %v3125, %v3127
      %v3145 = vsel %vm3138, %v3123, %v3125
      %v3146 = vsel %vm3138, %v3121, %v3123
      %v3147 = vsel %vm3138, %v3119, %v3121
      %v3148 = vsel %vm3138, %v3117, %v3119
      %v3149 = vsel %vm3138, %v3115, %v3117
      %v3150 = vsel %vm3138, %v3113, %v3115
      %v3151 = vsel %vm3138, %v3111, %v3113
      %v3152 = vsel %vm3138, %v3109, %v3111
      %v3153 = vsel %vm3138, %v3107, %v3109
      %v3154 = vsel %vm3138, %v3137, %v3107
      %s3155 = scalar_lea.vmem %s7, 48
      %v3156 = vld [vmem:[%s3155] sm:$0xff]
      %v3157 = vld [vmem:[%s3155 + $0x8] sm:$0xff]
      %v3160 = vperm.slane %v3156, 0
      %v3161 = vperm.slane %v3156, 1
      %v3162 = vperm.slane %v3156, 2
      %v3163 = vperm.slane %v3156, 3
      %v3164 = vperm.slane %v3156, 4
      %v3165 = vperm.slane %v3156, 5
      %v3166 = vperm.slane %v3156, 6
      %v3167 = vperm.slane %v3156, 7
      %v3168 = vperm.slane %v3157, 0
      %v3169 = vperm.slane %v3157, 1
      %v3170 = vperm.slane %v3157, 2
      %v3171 = vperm.slane %v3157, 3
      %v3172 = vperm.slane %v3157, 4
      %v3173 = vperm.slane %v3157, 5
      %v3174 = vperm.slane %v3157, 6
      %v3175 = vperm.slane %v3157, 7
      %v3192 = vmul.f32 %v3154, %v3160
      %v3193 = vmul.f32 %v3153, %v3161
      %v3194 = vmul.f32 %v3152, %v3162
      %v3195 = vmul.f32 %v3151, %v3163
      %v3196 = vmul.f32 %v3150, %v3164
      %v3197 = vmul.f32 %v3149, %v3165
      %v3198 = vmul.f32 %v3148, %v3166
      %v3199 = vmul.f32 %v3147, %v3167
      %v3200 = vmul.f32 %v3146, %v3168
      %v3201 = vmul.f32 %v3145, %v3169
      %v3202 = vmul.f32 %v3144, %v3170
      %v3203 = vmul.f32 %v3143, %v3171
      %v3204 = vmul.f32 %v3142, %v3172
      %v3205 = vmul.f32 %v3141, %v3173
      %v3206 = vmul.f32 %v3140, %v3174
      %v3207 = vmul.f32 %v3139, %v3175
      %s3208 = scalar_lea.vmem %s3, 12
      %v3209 = vld [vmem:[%s3208] sm:$0xf]
      %v3211 = vsel %vm1786, %v3209, 0
      %v3214 = vsel %vm688, %v3192, 0
      %v3217 = vsel %vm688, %v3193, 0
      %v3220 = vsel %vm688, %v3194, 0
      %v3223 = vsel %vm688, %v3195, 0
      %v3226 = vsel %vm688, %v3196, 0
      %v3229 = vsel %vm688, %v3197, 0
      %v3232 = vsel %vm688, %v3198, 0
      %v3235 = vsel %vm688, %v3199, 0
      %v3238 = vsel %vm688, %v3200, 0
      %v3241 = vsel %vm688, %v3201, 0
      %v3244 = vsel %vm688, %v3202, 0
      %v3247 = vsel %vm688, %v3203, 0
      %v3250 = vsel %vm688, %v3204, 0
      %v3253 = vsel %vm688, %v3205, 0
      %v3256 = vsel %vm688, %v3206, 0
      %v3259 = vsel %vm688, %v3207, 0
      %3261 = vmatpush.msra.mxu0 0.0
      %3262 = vmatpush.msra.mxu0 0.0
      %3263 = vmatpush.msra.mxu0 0.0
      %3264 = vmatpush.msra.mxu0 0.0
      %3265 = vmatpush.msra.mxu0 0.0
      %3266 = vmatpush.msra.mxu0 0.0
      %3267 = vmatpush.msra.mxu0 0.0
      %3268 = vmatpush.msra.mxu0 0.0
      %3269 = vmatpush.msra.mxu0 0.0
      %3270 = vmatpush.msra.mxu0 0.0
      %3271 = vmatpush.msra.mxu0 0.0
      %3272 = vmatpush.msra.mxu0 0.0
      %3273 = vmatpush.msra.mxu0 0.0
      %3274 = vmatpush.msra.mxu0 0.0
      %3275 = vmatpush.msra.mxu0 0.0
      %3276 = vmatpush.msra.mxu0 %v3214
      %3277 = vmatmul.f32.gmra.mxu0 %v3211
      %v3278 = vpop.f32.mrf.mxu0
      %v3279 = vadd.f32 0.0, %v3278
      %3280 = vdwg.mxu0
      %3281 = vmatpush.msra.mxu0 0.0
      %3282 = vmatpush.msra.mxu0 0.0
      %3283 = vmatpush.msra.mxu0 0.0
      %3284 = vmatpush.msra.mxu0 0.0
      %3285 = vmatpush.msra.mxu0 0.0
      %3286 = vmatpush.msra.mxu0 0.0
      %3287 = vmatpush.msra.mxu0 0.0
      %3288 = vmatpush.msra.mxu0 0.0
      %3289 = vmatpush.msra.mxu0 0.0
      %3290 = vmatpush.msra.mxu0 0.0
      %3291 = vmatpush.msra.mxu0 0.0
      %3292 = vmatpush.msra.mxu0 0.0
      %3293 = vmatpush.msra.mxu0 0.0
      %3294 = vmatpush.msra.mxu0 0.0
      %3295 = vmatpush.msra.mxu0 0.0
      %3296 = vmatpush.msra.mxu0 %v3217
      %3297 = vmatmul.f32.gmra.mxu0 %v3211
      %v3298 = vpop.f32.mrf.mxu0
      %v3299 = vadd.f32 0.0, %v3298
      %3300 = vdwg.mxu0
      %3301 = vmatpush.msra.mxu0 0.0
      %3302 = vmatpush.msra.mxu0 0.0
      %3303 = vmatpush.msra.mxu0 0.0
      %3304 = vmatpush.msra.mxu0 0.0
      %3305 = vmatpush.msra.mxu0 0.0
      %3306 = vmatpush.msra.mxu0 0.0
      %3307 = vmatpush.msra.mxu0 0.0
      %3308 = vmatpush.msra.mxu0 0.0
      %3309 = vmatpush.msra.mxu0 0.0
      %3310 = vmatpush.msra.mxu0 0.0
      %3311 = vmatpush.msra.mxu0 0.0
      %3312 = vmatpush.msra.mxu0 0.0
      %3313 = vmatpush.msra.mxu0 0.0
      %3314 = vmatpush.msra.mxu0 0.0
      %3315 = vmatpush.msra.mxu0 0.0
      %3316 = vmatpush.msra.mxu0 %v3220
      %3317 = vmatmul.f32.gmra.mxu0 %v3211
      %v3318 = vpop.f32.mrf.mxu0
      %v3319 = vadd.f32 0.0, %v3318
      %3320 = vdwg.mxu0
      %3321 = vmatpush.msra.mxu0 0.0
      %3322 = vmatpush.msra.mxu0 0.0
      %3323 = vmatpush.msra.mxu0 0.0
      %3324 = vmatpush.msra.mxu0 0.0
      %3325 = vmatpush.msra.mxu0 0.0
      %3326 = vmatpush.msra.mxu0 0.0
      %3327 = vmatpush.msra.mxu0 0.0
      %3328 = vmatpush.msra.mxu0 0.0
      %3329 = vmatpush.msra.mxu0 0.0
      %3330 = vmatpush.msra.mxu0 0.0
      %3331 = vmatpush.msra.mxu0 0.0
      %3332 = vmatpush.msra.mxu0 0.0
      %3333 = vmatpush.msra.mxu0 0.0
      %3334 = vmatpush.msra.mxu0 0.0
      %3335 = vmatpush.msra.mxu0 0.0
      %3336 = vmatpush.msra.mxu0 %v3223
      %3337 = vmatmul.f32.gmra.mxu0 %v3211
      %v3338 = vpop.f32.mrf.mxu0
      %v3339 = vadd.f32 0.0, %v3338
      %3340 = vdwg.mxu0
      %3341 = vmatpush.msra.mxu0 0.0
      %3342 = vmatpush.msra.mxu0 0.0
      %3343 = vmatpush.msra.mxu0 0.0
      %3344 = vmatpush.msra.mxu0 0.0
      %3345 = vmatpush.msra.mxu0 0.0
      %3346 = vmatpush.msra.mxu0 0.0
      %3347 = vmatpush.msra.mxu0 0.0
      %3348 = vmatpush.msra.mxu0 0.0
      %3349 = vmatpush.msra.mxu0 0.0
      %3350 = vmatpush.msra.mxu0 0.0
      %3351 = vmatpush.msra.mxu0 0.0
      %3352 = vmatpush.msra.mxu0 0.0
      %3353 = vmatpush.msra.mxu0 0.0
      %3354 = vmatpush.msra.mxu0 0.0
      %3355 = vmatpush.msra.mxu0 0.0
      %3356 = vmatpush.msra.mxu0 %v3226
      %3357 = vmatmul.f32.gmra.mxu0 %v3211
      %v3358 = vpop.f32.mrf.mxu0
      %v3359 = vadd.f32 0.0, %v3358
      %3360 = vdwg.mxu0
      %3361 = vmatpush.msra.mxu0 0.0
      %3362 = vmatpush.msra.mxu0 0.0
      %3363 = vmatpush.msra.mxu0 0.0
      %3364 = vmatpush.msra.mxu0 0.0
      %3365 = vmatpush.msra.mxu0 0.0
      %3366 = vmatpush.msra.mxu0 0.0
      %3367 = vmatpush.msra.mxu0 0.0
      %3368 = vmatpush.msra.mxu0 0.0
      %3369 = vmatpush.msra.mxu0 0.0
      %3370 = vmatpush.msra.mxu0 0.0
      %3371 = vmatpush.msra.mxu0 0.0
      %3372 = vmatpush.msra.mxu0 0.0
      %3373 = vmatpush.msra.mxu0 0.0
      %3374 = vmatpush.msra.mxu0 0.0
      %3375 = vmatpush.msra.mxu0 0.0
      %3376 = vmatpush.msra.mxu0 %v3229
      %3377 = vmatmul.f32.gmra.mxu0 %v3211
      %v3378 = vpop.f32.mrf.mxu0
      %v3379 = vadd.f32 0.0, %v3378
      %3380 = vdwg.mxu0
      %3381 = vmatpush.msra.mxu0 0.0
      %3382 = vmatpush.msra.mxu0 0.0
      %3383 = vmatpush.msra.mxu0 0.0
      %3384 = vmatpush.msra.mxu0 0.0
      %3385 = vmatpush.msra.mxu0 0.0
      %3386 = vmatpush.msra.mxu0 0.0
      %3387 = vmatpush.msra.mxu0 0.0
      %3388 = vmatpush.msra.mxu0 0.0
      %3389 = vmatpush.msra.mxu0 0.0
      %3390 = vmatpush.msra.mxu0 0.0
      %3391 = vmatpush.msra.mxu0 0.0
      %3392 = vmatpush.msra.mxu0 0.0
      %3393 = vmatpush.msra.mxu0 0.0
      %3394 = vmatpush.msra.mxu0 0.0
      %3395 = vmatpush.msra.mxu0 0.0
      %3396 = vmatpush.msra.mxu0 %v3232
      %3397 = vmatmul.f32.gmra.mxu0 %v3211
      %v3398 = vpop.f32.mrf.mxu0
      %v3399 = vadd.f32 0.0, %v3398
      %3400 = vdwg.mxu0
      %3401 = vmatpush.msra.mxu0 0.0
      %3402 = vmatpush.msra.mxu0 0.0
      %3403 = vmatpush.msra.mxu0 0.0
      %3404 = vmatpush.msra.mxu0 0.0
      %3405 = vmatpush.msra.mxu0 0.0
      %3406 = vmatpush.msra.mxu0 0.0
      %3407 = vmatpush.msra.mxu0 0.0
      %3408 = vmatpush.msra.mxu0 0.0
      %3409 = vmatpush.msra.mxu0 0.0
      %3410 = vmatpush.msra.mxu0 0.0
      %3411 = vmatpush.msra.mxu0 0.0
      %3412 = vmatpush.msra.mxu0 0.0
      %3413 = vmatpush.msra.mxu0 0.0
      %3414 = vmatpush.msra.mxu0 0.0
      %3415 = vmatpush.msra.mxu0 0.0
      %3416 = vmatpush.msra.mxu0 %v3235
      %3417 = vmatmul.f32.gmra.mxu0 %v3211
      %v3418 = vpop.f32.mrf.mxu0
      %v3419 = vadd.f32 0.0, %v3418
      %3420 = vdwg.mxu0
      %3421 = vmatpush.msra.mxu0 0.0
      %3422 = vmatpush.msra.mxu0 0.0
      %3423 = vmatpush.msra.mxu0 0.0
      %3424 = vmatpush.msra.mxu0 0.0
      %3425 = vmatpush.msra.mxu0 0.0
      %3426 = vmatpush.msra.mxu0 0.0
      %3427 = vmatpush.msra.mxu0 0.0
      %3428 = vmatpush.msra.mxu0 0.0
      %3429 = vmatpush.msra.mxu0 0.0
      %3430 = vmatpush.msra.mxu0 0.0
      %3431 = vmatpush.msra.mxu0 0.0
      %3432 = vmatpush.msra.mxu0 0.0
      %3433 = vmatpush.msra.mxu0 0.0
      %3434 = vmatpush.msra.mxu0 0.0
      %3435 = vmatpush.msra.mxu0 0.0
      %3436 = vmatpush.msra.mxu0 %v3238
      %3437 = vmatmul.f32.gmra.mxu0 %v3211
      %v3438 = vpop.f32.mrf.mxu0
      %v3439 = vadd.f32 0.0, %v3438
      %3440 = vdwg.mxu0
      %3441 = vmatpush.msra.mxu0 0.0
      %3442 = vmatpush.msra.mxu0 0.0
      %3443 = vmatpush.msra.mxu0 0.0
      %3444 = vmatpush.msra.mxu0 0.0
      %3445 = vmatpush.msra.mxu0 0.0
      %3446 = vmatpush.msra.mxu0 0.0
      %3447 = vmatpush.msra.mxu0 0.0
      %3448 = vmatpush.msra.mxu0 0.0
      %3449 = vmatpush.msra.mxu0 0.0
      %3450 = vmatpush.msra.mxu0 0.0
      %3451 = vmatpush.msra.mxu0 0.0
      %3452 = vmatpush.msra.mxu0 0.0
      %3453 = vmatpush.msra.mxu0 0.0
      %3454 = vmatpush.msra.mxu0 0.0
      %3455 = vmatpush.msra.mxu0 0.0
      %3456 = vmatpush.msra.mxu0 %v3241
      %3457 = vmatmul.f32.gmra.mxu0 %v3211
      %v3458 = vpop.f32.mrf.mxu0
      %v3459 = vadd.f32 0.0, %v3458
      %3460 = vdwg.mxu0
      %3461 = vmatpush.msra.mxu0 0.0
      %3462 = vmatpush.msra.mxu0 0.0
      %3463 = vmatpush.msra.mxu0 0.0
      %3464 = vmatpush.msra.mxu0 0.0
      %3465 = vmatpush.msra.mxu0 0.0
      %3466 = vmatpush.msra.mxu0 0.0
      %3467 = vmatpush.msra.mxu0 0.0
      %3468 = vmatpush.msra.mxu0 0.0
      %3469 = vmatpush.msra.mxu0 0.0
      %3470 = vmatpush.msra.mxu0 0.0
      %3471 = vmatpush.msra.mxu0 0.0
      %3472 = vmatpush.msra.mxu0 0.0
      %3473 = vmatpush.msra.mxu0 0.0
      %3474 = vmatpush.msra.mxu0 0.0
      %3475 = vmatpush.msra.mxu0 0.0
      %3476 = vmatpush.msra.mxu0 %v3244
      %3477 = vmatmul.f32.gmra.mxu0 %v3211
      %v3478 = vpop.f32.mrf.mxu0
      %v3479 = vadd.f32 0.0, %v3478
      %3480 = vdwg.mxu0
      %3481 = vmatpush.msra.mxu0 0.0
      %3482 = vmatpush.msra.mxu0 0.0
      %3483 = vmatpush.msra.mxu0 0.0
      %3484 = vmatpush.msra.mxu0 0.0
      %3485 = vmatpush.msra.mxu0 0.0
      %3486 = vmatpush.msra.mxu0 0.0
      %3487 = vmatpush.msra.mxu0 0.0
      %3488 = vmatpush.msra.mxu0 0.0
      %3489 = vmatpush.msra.mxu0 0.0
      %3490 = vmatpush.msra.mxu0 0.0
      %3491 = vmatpush.msra.mxu0 0.0
      %3492 = vmatpush.msra.mxu0 0.0
      %3493 = vmatpush.msra.mxu0 0.0
      %3494 = vmatpush.msra.mxu0 0.0
      %3495 = vmatpush.msra.mxu0 0.0
      %3496 = vmatpush.msra.mxu0 %v3247
      %3497 = vmatmul.f32.gmra.mxu0 %v3211
      %v3498 = vpop.f32.mrf.mxu0
      %v3499 = vadd.f32 0.0, %v3498
      %3500 = vdwg.mxu0
      %3501 = vmatpush.msra.mxu0 0.0
      %3502 = vmatpush.msra.mxu0 0.0
      %3503 = vmatpush.msra.mxu0 0.0
      %3504 = vmatpush.msra.mxu0 0.0
      %3505 = vmatpush.msra.mxu0 0.0
      %3506 = vmatpush.msra.mxu0 0.0
      %3507 = vmatpush.msra.mxu0 0.0
      %3508 = vmatpush.msra.mxu0 0.0
      %3509 = vmatpush.msra.mxu0 0.0
      %3510 = vmatpush.msra.mxu0 0.0
      %3511 = vmatpush.msra.mxu0 0.0
      %3512 = vmatpush.msra.mxu0 0.0
      %3513 = vmatpush.msra.mxu0 0.0
      %3514 = vmatpush.msra.mxu0 0.0
      %3515 = vmatpush.msra.mxu0 0.0
      %3516 = vmatpush.msra.mxu0 %v3250
      %3517 = vmatmul.f32.gmra.mxu0 %v3211
      %v3518 = vpop.f32.mrf.mxu0
      %v3519 = vadd.f32 0.0, %v3518
      %3520 = vdwg.mxu0
      %3521 = vmatpush.msra.mxu0 0.0
      %3522 = vmatpush.msra.mxu0 0.0
      %3523 = vmatpush.msra.mxu0 0.0
      %3524 = vmatpush.msra.mxu0 0.0
      %3525 = vmatpush.msra.mxu0 0.0
      %3526 = vmatpush.msra.mxu0 0.0
      %3527 = vmatpush.msra.mxu0 0.0
      %3528 = vmatpush.msra.mxu0 0.0
      %3529 = vmatpush.msra.mxu0 0.0
      %3530 = vmatpush.msra.mxu0 0.0
      %3531 = vmatpush.msra.mxu0 0.0
      %3532 = vmatpush.msra.mxu0 0.0
      %3533 = vmatpush.msra.mxu0 0.0
      %3534 = vmatpush.msra.mxu0 0.0
      %3535 = vmatpush.msra.mxu0 0.0
      %3536 = vmatpush.msra.mxu0 %v3253
      %3537 = vmatmul.f32.gmra.mxu0 %v3211
      %v3538 = vpop.f32.mrf.mxu0
      %v3539 = vadd.f32 0.0, %v3538
      %3540 = vdwg.mxu0
      %3541 = vmatpush.msra.mxu0 0.0
      %3542 = vmatpush.msra.mxu0 0.0
      %3543 = vmatpush.msra.mxu0 0.0
      %3544 = vmatpush.msra.mxu0 0.0
      %3545 = vmatpush.msra.mxu0 0.0
      %3546 = vmatpush.msra.mxu0 0.0
      %3547 = vmatpush.msra.mxu0 0.0
      %3548 = vmatpush.msra.mxu0 0.0
      %3549 = vmatpush.msra.mxu0 0.0
      %3550 = vmatpush.msra.mxu0 0.0
      %3551 = vmatpush.msra.mxu0 0.0
      %3552 = vmatpush.msra.mxu0 0.0
      %3553 = vmatpush.msra.mxu0 0.0
      %3554 = vmatpush.msra.mxu0 0.0
      %3555 = vmatpush.msra.mxu0 0.0
      %3556 = vmatpush.msra.mxu0 %v3256
      %3557 = vmatmul.f32.gmra.mxu0 %v3211
      %v3558 = vpop.f32.mrf.mxu0
      %v3559 = vadd.f32 0.0, %v3558
      %3560 = vdwg.mxu0
      %3561 = vmatpush.msra.mxu0 0.0
      %3562 = vmatpush.msra.mxu0 0.0
      %3563 = vmatpush.msra.mxu0 0.0
      %3564 = vmatpush.msra.mxu0 0.0
      %3565 = vmatpush.msra.mxu0 0.0
      %3566 = vmatpush.msra.mxu0 0.0
      %3567 = vmatpush.msra.mxu0 0.0
      %3568 = vmatpush.msra.mxu0 0.0
      %3569 = vmatpush.msra.mxu0 0.0
      %3570 = vmatpush.msra.mxu0 0.0
      %3571 = vmatpush.msra.mxu0 0.0
      %3572 = vmatpush.msra.mxu0 0.0
      %3573 = vmatpush.msra.mxu0 0.0
      %3574 = vmatpush.msra.mxu0 0.0
      %3575 = vmatpush.msra.mxu0 0.0
      %3576 = vmatpush.msra.mxu0 %v3259
      %3577 = vmatmul.f32.gmra.mxu0 %v3211
      %v3578 = vpop.f32.mrf.mxu0
      %v3579 = vadd.f32 0.0, %v3578
      %3580 = vdwg.mxu0
      %v3581 = vadd.f32 %v3047, %v3279
      %v3582 = vadd.f32 %v3048, %v3299
      %v3583 = vadd.f32 %v3049, %v3319
      %v3584 = vadd.f32 %v3050, %v3339
      %v3585 = vadd.f32 %v3051, %v3359
      %v3586 = vadd.f32 %v3052, %v3379
      %v3587 = vadd.f32 %v3053, %v3399
      %v3588 = vadd.f32 %v3054, %v3419
      %v3589 = vadd.f32 %v3055, %v3439
      %v3590 = vadd.f32 %v3056, %v3459
      %v3591 = vadd.f32 %v3057, %v3479
      %v3592 = vadd.f32 %v3058, %v3499
      %v3593 = vadd.f32 %v3059, %v3519
      %v3594 = vadd.f32 %v3060, %v3539
      %v3595 = vadd.f32 %v3061, %v3559
      %v3596 = vadd.f32 %v3062, %v3579
      %s3597 = scalar_lea.vmem %s3, 16
      %v3598 = vld [vmem:[%s3597] sm:$0xf]
      %3599 = vst [vmem:[#allocation1] ss:$2 sm:$0xff] %v1476
      %s3600 = scalar_lea.vmem [#allocation1], 16
      %3601 = vst [vmem:[%s3600] ss:$2 sm:$0xff] %v1477
      %s3602 = scalar_lea.vmem [#allocation1], 32
      %3603 = vst [vmem:[%s3602] ss:$2 sm:$0xff] %v1478
      %s3604 = scalar_lea.vmem [#allocation1], 48
      %3605 = vst [vmem:[%s3604] ss:$2 sm:$0xff] %v1479
      %v3606 = vld.sshfl [vmem:[#allocation1] sm:$0xff pattern:$0x75316420]
      %v3607 = vld.sshfl [vmem:[#allocation1 + $0x8] sm:$0xff pattern:$0x75316420]
      %v3608 = vld.sshfl [vmem:[#allocation1 + $0x10] sm:$0xff pattern:$0x75316420]
      %v3609 = vld.sshfl [vmem:[#allocation1 + $0x18] sm:$0xff pattern:$0x75316420]
      %v3610 = vld.sshfl [vmem:[#allocation1 + $0x20] sm:$0xff pattern:$0x75316420]
      %v3611 = vld.sshfl [vmem:[#allocation1 + $0x28] sm:$0xff pattern:$0x75316420]
      %v3612 = vld.sshfl [vmem:[#allocation1 + $0x30] sm:$0xff pattern:$0x75316420]
      %v3613 = vld.sshfl [vmem:[#allocation1 + $0x38] sm:$0xff pattern:$0x75316420]
      %3614 = vst [vmem:[#allocation1] ss:$2 sm:$0xff] %v1480
      %3615 = vst [vmem:[%s3600] ss:$2 sm:$0xff] %v1481
      %3616 = vst [vmem:[%s3602] ss:$2 sm:$0xff] %v1482
      %3617 = vst [vmem:[%s3604] ss:$2 sm:$0xff] %v1483
      %v3618 = vld.sshfl [vmem:[#allocation1] sm:$0xff pattern:$0x75316420]
      %v3619 = vld.sshfl [vmem:[#allocation1 + $0x8] sm:$0xff pattern:$0x75316420]
      %v3620 = vld.sshfl [vmem:[#allocation1 + $0x10] sm:$0xff pattern:$0x75316420]
      %v3621 = vld.sshfl [vmem:[#allocation1 + $0x18] sm:$0xff pattern:$0x75316420]
      %v3622 = vld.sshfl [vmem:[#allocation1 + $0x20] sm:$0xff pattern:$0x75316420]
      %v3623 = vld.sshfl [vmem:[#allocation1 + $0x28] sm:$0xff pattern:$0x75316420]
      %v3624 = vld.sshfl [vmem:[#allocation1 + $0x30] sm:$0xff pattern:$0x75316420]
      %v3625 = vld.sshfl [vmem:[#allocation1 + $0x38] sm:$0xff pattern:$0x75316420]
      %v3627 = vsel %vm1786, %v3598, 0
      %v3629 = vsel %vm688, %v3606, 0
      %v3631 = vsel %vm688, %v3607, 0
      %v3633 = vsel %vm688, %v3608, 0
      %v3635 = vsel %vm688, %v3609, 0
      %v3637 = vsel %vm688, %v3610, 0
      %v3639 = vsel %vm688, %v3611, 0
      %v3641 = vsel %vm688, %v3612, 0
      %v3643 = vsel %vm688, %v3613, 0
      %v3645 = vsel %vm688, %v3618, 0
      %v3647 = vsel %vm688, %v3619, 0
      %v3649 = vsel %vm688, %v3620, 0
      %v3651 = vsel %vm688, %v3621, 0
      %v3653 = vsel %vm688, %v3622, 0
      %v3655 = vsel %vm688, %v3623, 0
      %v3657 = vsel %vm688, %v3624, 0
      %v3659 = vsel %vm688, %v3625, 0
      %3661 = vmatpush.msra.mxu0 0.0
      %3662 = vmatpush.msra.mxu0 0.0
      %3663 = vmatpush.msra.mxu0 0.0
      %3664 = vmatpush.msra.mxu0 0.0
      %3665 = vmatpush.msra.mxu0 0.0
      %3666 = vmatpush.msra.mxu0 0.0
      %3667 = vmatpush.msra.mxu0 0.0
      %3668 = vmatpush.msra.mxu0 0.0
      %3669 = vmatpush.msra.mxu0 0.0
      %3670 = vmatpush.msra.mxu0 0.0
      %3671 = vmatpush.msra.mxu0 0.0
      %3672 = vmatpush.msra.mxu0 0.0
      %3673 = vmatpush.msra.mxu0 0.0
      %3674 = vmatpush.msra.mxu0 0.0
      %3675 = vmatpush.msra.mxu0 0.0
      %3676 = vmatpush.msra.mxu0 %v3629
      %3677 = vmatmul.f32.gmra.mxu0 %v3627
      %v3678 = vpop.f32.mrf.mxu0
      %v3679 = vadd.f32 0.0, %v3678
      %3680 = vdwg.mxu0
      %3681 = vmatpush.msra.mxu0 0.0
      %3682 = vmatpush.msra.mxu0 0.0
      %3683 = vmatpush.msra.mxu0 0.0
      %3684 = vmatpush.msra.mxu0 0.0
      %3685 = vmatpush.msra.mxu0 0.0
      %3686 = vmatpush.msra.mxu0 0.0
      %3687 = vmatpush.msra.mxu0 0.0
      %3688 = vmatpush.msra.mxu0 0.0
      %3689 = vmatpush.msra.mxu0 0.0
      %3690 = vmatpush.msra.mxu0 0.0
      %3691 = vmatpush.msra.mxu0 0.0
      %3692 = vmatpush.msra.mxu0 0.0
      %3693 = vmatpush.msra.mxu0 0.0
      %3694 = vmatpush.msra.mxu0 0.0
      %3695 = vmatpush.msra.mxu0 0.0
      %3696 = vmatpush.msra.mxu0 %v3631
      %3697 = vmatmul.f32.gmra.mxu0 %v3627
      %v3698 = vpop.f32.mrf.mxu0
      %v3699 = vadd.f32 0.0, %v3698
      %3700 = vdwg.mxu0
      %3701 = vmatpush.msra.mxu0 0.0
      %3702 = vmatpush.msra.mxu0 0.0
      %3703 = vmatpush.msra.mxu0 0.0
      %3704 = vmatpush.msra.mxu0 0.0
      %3705 = vmatpush.msra.mxu0 0.0
      %3706 = vmatpush.msra.mxu0 0.0
      %3707 = vmatpush.msra.mxu0 0.0
      %3708 = vmatpush.msra.mxu0 0.0
      %3709 = vmatpush.msra.mxu0 0.0
      %3710 = vmatpush.msra.mxu0 0.0
      %3711 = vmatpush.msra.mxu0 0.0
      %3712 = vmatpush.msra.mxu0 0.0
      %3713 = vmatpush.msra.mxu0 0.0
      %3714 = vmatpush.msra.mxu0 0.0
      %3715 = vmatpush.msra.mxu0 0.0
      %3716 = vmatpush.msra.mxu0 %v3633
      %3717 = vmatmul.f32.gmra.mxu0 %v3627
      %v3718 = vpop.f32.mrf.mxu0
      %v3719 = vadd.f32 0.0, %v3718
      %3720 = vdwg.mxu0
      %3721 = vmatpush.msra.mxu0 0.0
      %3722 = vmatpush.msra.mxu0 0.0
      %3723 = vmatpush.msra.mxu0 0.0
      %3724 = vmatpush.msra.mxu0 0.0
      %3725 = vmatpush.msra.mxu0 0.0
      %3726 = vmatpush.msra.mxu0 0.0
      %3727 = vmatpush.msra.mxu0 0.0
      %3728 = vmatpush.msra.mxu0 0.0
      %3729 = vmatpush.msra.mxu0 0.0
      %3730 = vmatpush.msra.mxu0 0.0
      %3731 = vmatpush.msra.mxu0 0.0
      %3732 = vmatpush.msra.mxu0 0.0
      %3733 = vmatpush.msra.mxu0 0.0
      %3734 = vmatpush.msra.mxu0 0.0
      %3735 = vmatpush.msra.mxu0 0.0
      %3736 = vmatpush.msra.mxu0 %v3635
      %3737 = vmatmul.f32.gmra.mxu0 %v3627
      %v3738 = vpop.f32.mrf.mxu0
      %v3739 = vadd.f32 0.0, %v3738
      %3740 = vdwg.mxu0
      %3741 = vmatpush.msra.mxu0 0.0
      %3742 = vmatpush.msra.mxu0 0.0
      %3743 = vmatpush.msra.mxu0 0.0
      %3744 = vmatpush.msra.mxu0 0.0
      %3745 = vmatpush.msra.mxu0 0.0
      %3746 = vmatpush.msra.mxu0 0.0
      %3747 = vmatpush.msra.mxu0 0.0
      %3748 = vmatpush.msra.mxu0 0.0
      %3749 = vmatpush.msra.mxu0 0.0
      %3750 = vmatpush.msra.mxu0 0.0
      %3751 = vmatpush.msra.mxu0 0.0
      %3752 = vmatpush.msra.mxu0 0.0
      %3753 = vmatpush.msra.mxu0 0.0
      %3754 = vmatpush.msra.mxu0 0.0
      %3755 = vmatpush.msra.mxu0 0.0
      %3756 = vmatpush.msra.mxu0 %v3637
      %3757 = vmatmul.f32.gmra.mxu0 %v3627
      %v3758 = vpop.f32.mrf.mxu0
      %v3759 = vadd.f32 0.0, %v3758
      %3760 = vdwg.mxu0
      %3761 = vmatpush.msra.mxu0 0.0
      %3762 = vmatpush.msra.mxu0 0.0
      %3763 = vmatpush.msra.mxu0 0.0
      %3764 = vmatpush.msra.mxu0 0.0
      %3765 = vmatpush.msra.mxu0 0.0
      %3766 = vmatpush.msra.mxu0 0.0
      %3767 = vmatpush.msra.mxu0 0.0
      %3768 = vmatpush.msra.mxu0 0.0
      %3769 = vmatpush.msra.mxu0 0.0
      %3770 = vmatpush.msra.mxu0 0.0
      %3771 = vmatpush.msra.mxu0 0.0
      %3772 = vmatpush.msra.mxu0 0.0
      %3773 = vmatpush.msra.mxu0 0.0
      %3774 = vmatpush.msra.mxu0 0.0
      %3775 = vmatpush.msra.mxu0 0.0
      %3776 = vmatpush.msra.mxu0 %v3639
      %3777 = vmatmul.f32.gmra.mxu0 %v3627
      %v3778 = vpop.f32.mrf.mxu0
      %v3779 = vadd.f32 0.0, %v3778
      %3780 = vdwg.mxu0
      %3781 = vmatpush.msra.mxu0 0.0
      %3782 = vmatpush.msra.mxu0 0.0
      %3783 = vmatpush.msra.mxu0 0.0
      %3784 = vmatpush.msra.mxu0 0.0
      %3785 = vmatpush.msra.mxu0 0.0
      %3786 = vmatpush.msra.mxu0 0.0
      %3787 = vmatpush.msra.mxu0 0.0
      %3788 = vmatpush.msra.mxu0 0.0
      %3789 = vmatpush.msra.mxu0 0.0
      %3790 = vmatpush.msra.mxu0 0.0
      %3791 = vmatpush.msra.mxu0 0.0
      %3792 = vmatpush.msra.mxu0 0.0
      %3793 = vmatpush.msra.mxu0 0.0
      %3794 = vmatpush.msra.mxu0 0.0
      %3795 = vmatpush.msra.mxu0 0.0
      %3796 = vmatpush.msra.mxu0 %v3641
      %3797 = vmatmul.f32.gmra.mxu0 %v3627
      %v3798 = vpop.f32.mrf.mxu0
      %v3799 = vadd.f32 0.0, %v3798
      %3800 = vdwg.mxu0
      %3801 = vmatpush.msra.mxu0 0.0
      %3802 = vmatpush.msra.mxu0 0.0
      %3803 = vmatpush.msra.mxu0 0.0
      %3804 = vmatpush.msra.mxu0 0.0
      %3805 = vmatpush.msra.mxu0 0.0
      %3806 = vmatpush.msra.mxu0 0.0
      %3807 = vmatpush.msra.mxu0 0.0
      %3808 = vmatpush.msra.mxu0 0.0
      %3809 = vmatpush.msra.mxu0 0.0
      %3810 = vmatpush.msra.mxu0 0.0
      %3811 = vmatpush.msra.mxu0 0.0
      %3812 = vmatpush.msra.mxu0 0.0
      %3813 = vmatpush.msra.mxu0 0.0
      %3814 = vmatpush.msra.mxu0 0.0
      %3815 = vmatpush.msra.mxu0 0.0
      %3816 = vmatpush.msra.mxu0 %v3643
      %3817 = vmatmul.f32.gmra.mxu0 %v3627
      %v3818 = vpop.f32.mrf.mxu0
      %v3819 = vadd.f32 0.0, %v3818
      %3820 = vdwg.mxu0
      %3821 = vmatpush.msra.mxu0 0.0
      %3822 = vmatpush.msra.mxu0 0.0
      %3823 = vmatpush.msra.mxu0 0.0
      %3824 = vmatpush.msra.mxu0 0.0
      %3825 = vmatpush.msra.mxu0 0.0
      %3826 = vmatpush.msra.mxu0 0.0
      %3827 = vmatpush.msra.mxu0 0.0
      %3828 = vmatpush.msra.mxu0 0.0
      %3829 = vmatpush.msra.mxu0 0.0
      %3830 = vmatpush.msra.mxu0 0.0
      %3831 = vmatpush.msra.mxu0 0.0
      %3832 = vmatpush.msra.mxu0 0.0
      %3833 = vmatpush.msra.mxu0 0.0
      %3834 = vmatpush.msra.mxu0 0.0
      %3835 = vmatpush.msra.mxu0 0.0
      %3836 = vmatpush.msra.mxu0 %v3645
      %3837 = vmatmul.f32.gmra.mxu0 %v3627
      %v3838 = vpop.f32.mrf.mxu0
      %v3839 = vadd.f32 0.0, %v3838
      %3840 = vdwg.mxu0
      %3841 = vmatpush.msra.mxu0 0.0
      %3842 = vmatpush.msra.mxu0 0.0
      %3843 = vmatpush.msra.mxu0 0.0
      %3844 = vmatpush.msra.mxu0 0.0
      %3845 = vmatpush.msra.mxu0 0.0
      %3846 = vmatpush.msra.mxu0 0.0
      %3847 = vmatpush.msra.mxu0 0.0
      %3848 = vmatpush.msra.mxu0 0.0
      %3849 = vmatpush.msra.mxu0 0.0
      %3850 = vmatpush.msra.mxu0 0.0
      %3851 = vmatpush.msra.mxu0 0.0
      %3852 = vmatpush.msra.mxu0 0.0
      %3853 = vmatpush.msra.mxu0 0.0
      %3854 = vmatpush.msra.mxu0 0.0
      %3855 = vmatpush.msra.mxu0 0.0
      %3856 = vmatpush.msra.mxu0 %v3647
      %3857 = vmatmul.f32.gmra.mxu0 %v3627
      %v3858 = vpop.f32.mrf.mxu0
      %v3859 = vadd.f32 0.0, %v3858
      %3860 = vdwg.mxu0
      %3861 = vmatpush.msra.mxu0 0.0
      %3862 = vmatpush.msra.mxu0 0.0
      %3863 = vmatpush.msra.mxu0 0.0
      %3864 = vmatpush.msra.mxu0 0.0
      %3865 = vmatpush.msra.mxu0 0.0
      %3866 = vmatpush.msra.mxu0 0.0
      %3867 = vmatpush.msra.mxu0 0.0
      %3868 = vmatpush.msra.mxu0 0.0
      %3869 = vmatpush.msra.mxu0 0.0
      %3870 = vmatpush.msra.mxu0 0.0
      %3871 = vmatpush.msra.mxu0 0.0
      %3872 = vmatpush.msra.mxu0 0.0
      %3873 = vmatpush.msra.mxu0 0.0
      %3874 = vmatpush.msra.mxu0 0.0
      %3875 = vmatpush.msra.mxu0 0.0
      %3876 = vmatpush.msra.mxu0 %v3649
      %3877 = vmatmul.f32.gmra.mxu0 %v3627
      %v3878 = vpop.f32.mrf.mxu0
      %v3879 = vadd.f32 0.0, %v3878
      %3880 = vdwg.mxu0
      %3881 = vmatpush.msra.mxu0 0.0
      %3882 = vmatpush.msra.mxu0 0.0
      %3883 = vmatpush.msra.mxu0 0.0
      %3884 = vmatpush.msra.mxu0 0.0
      %3885 = vmatpush.msra.mxu0 0.0
      %3886 = vmatpush.msra.mxu0 0.0
      %3887 = vmatpush.msra.mxu0 0.0
      %3888 = vmatpush.msra.mxu0 0.0
      %3889 = vmatpush.msra.mxu0 0.0
      %3890 = vmatpush.msra.mxu0 0.0
      %3891 = vmatpush.msra.mxu0 0.0
      %3892 = vmatpush.msra.mxu0 0.0
      %3893 = vmatpush.msra.mxu0 0.0
      %3894 = vmatpush.msra.mxu0 0.0
      %3895 = vmatpush.msra.mxu0 0.0
      %3896 = vmatpush.msra.mxu0 %v3651
      %3897 = vmatmul.f32.gmra.mxu0 %v3627
      %v3898 = vpop.f32.mrf.mxu0
      %v3899 = vadd.f32 0.0, %v3898
      %3900 = vdwg.mxu0
      %3901 = vmatpush.msra.mxu0 0.0
      %3902 = vmatpush.msra.mxu0 0.0
      %3903 = vmatpush.msra.mxu0 0.0
      %3904 = vmatpush.msra.mxu0 0.0
      %3905 = vmatpush.msra.mxu0 0.0
      %3906 = vmatpush.msra.mxu0 0.0
      %3907 = vmatpush.msra.mxu0 0.0
      %3908 = vmatpush.msra.mxu0 0.0
      %3909 = vmatpush.msra.mxu0 0.0
      %3910 = vmatpush.msra.mxu0 0.0
      %3911 = vmatpush.msra.mxu0 0.0
      %3912 = vmatpush.msra.mxu0 0.0
      %3913 = vmatpush.msra.mxu0 0.0
      %3914 = vmatpush.msra.mxu0 0.0
      %3915 = vmatpush.msra.mxu0 0.0
      %3916 = vmatpush.msra.mxu0 %v3653
      %3917 = vmatmul.f32.gmra.mxu0 %v3627
      %v3918 = vpop.f32.mrf.mxu0
      %v3919 = vadd.f32 0.0, %v3918
      %3920 = vdwg.mxu0
      %3921 = vmatpush.msra.mxu0 0.0
      %3922 = vmatpush.msra.mxu0 0.0
      %3923 = vmatpush.msra.mxu0 0.0
      %3924 = vmatpush.msra.mxu0 0.0
      %3925 = vmatpush.msra.mxu0 0.0
      %3926 = vmatpush.msra.mxu0 0.0
      %3927 = vmatpush.msra.mxu0 0.0
      %3928 = vmatpush.msra.mxu0 0.0
      %3929 = vmatpush.msra.mxu0 0.0
      %3930 = vmatpush.msra.mxu0 0.0
      %3931 = vmatpush.msra.mxu0 0.0
      %3932 = vmatpush.msra.mxu0 0.0
      %3933 = vmatpush.msra.mxu0 0.0
      %3934 = vmatpush.msra.mxu0 0.0
      %3935 = vmatpush.msra.mxu0 0.0
      %3936 = vmatpush.msra.mxu0 %v3655
      %3937 = vmatmul.f32.gmra.mxu0 %v3627
      %v3938 = vpop.f32.mrf.mxu0
      %v3939 = vadd.f32 0.0, %v3938
      %3940 = vdwg.mxu0
      %3941 = vmatpush.msra.mxu0 0.0
      %3942 = vmatpush.msra.mxu0 0.0
      %3943 = vmatpush.msra.mxu0 0.0
      %3944 = vmatpush.msra.mxu0 0.0
      %3945 = vmatpush.msra.mxu0 0.0
      %3946 = vmatpush.msra.mxu0 0.0
      %3947 = vmatpush.msra.mxu0 0.0
      %3948 = vmatpush.msra.mxu0 0.0
      %3949 = vmatpush.msra.mxu0 0.0
      %3950 = vmatpush.msra.mxu0 0.0
      %3951 = vmatpush.msra.mxu0 0.0
      %3952 = vmatpush.msra.mxu0 0.0
      %3953 = vmatpush.msra.mxu0 0.0
      %3954 = vmatpush.msra.mxu0 0.0
      %3955 = vmatpush.msra.mxu0 0.0
      %3956 = vmatpush.msra.mxu0 %v3657
      %3957 = vmatmul.f32.gmra.mxu0 %v3627
      %v3958 = vpop.f32.mrf.mxu0
      %v3959 = vadd.f32 0.0, %v3958
      %3960 = vdwg.mxu0
      %3961 = vmatpush.msra.mxu0 0.0
      %3962 = vmatpush.msra.mxu0 0.0
      %3963 = vmatpush.msra.mxu0 0.0
      %3964 = vmatpush.msra.mxu0 0.0
      %3965 = vmatpush.msra.mxu0 0.0
      %3966 = vmatpush.msra.mxu0 0.0
      %3967 = vmatpush.msra.mxu0 0.0
      %3968 = vmatpush.msra.mxu0 0.0
      %3969 = vmatpush.msra.mxu0 0.0
      %3970 = vmatpush.msra.mxu0 0.0
      %3971 = vmatpush.msra.mxu0 0.0
      %3972 = vmatpush.msra.mxu0 0.0
      %3973 = vmatpush.msra.mxu0 0.0
      %3974 = vmatpush.msra.mxu0 0.0
      %3975 = vmatpush.msra.mxu0 0.0
      %3976 = vmatpush.msra.mxu0 %v3659
      %3977 = vmatmul.f32.gmra.mxu0 %v3627
      %v3978 = vpop.f32.mrf.mxu0
      %v3979 = vadd.f32 0.0, %v3978
      %3980 = vdwg.mxu0
      %v3981 = vadd.f32 %v3581, %v3679
      %v3982 = vadd.f32 %v3582, %v3699
      %v3983 = vadd.f32 %v3583, %v3719
      %v3984 = vadd.f32 %v3584, %v3739
      %v3985 = vadd.f32 %v3585, %v3759
      %v3986 = vadd.f32 %v3586, %v3779
      %v3987 = vadd.f32 %v3587, %v3799
      %v3988 = vadd.f32 %v3588, %v3819
      %v3989 = vadd.f32 %v3589, %v3839
      %v3990 = vadd.f32 %v3590, %v3859
      %v3991 = vadd.f32 %v3591, %v3879
      %v3992 = vadd.f32 %v3592, %v3899
      %v3993 = vadd.f32 %v3593, %v3919
      %v3994 = vadd.f32 %v3594, %v3939
      %v3995 = vadd.f32 %v3595, %v3959
      %v3996 = vadd.f32 %v3596, %v3979
      %3997 = vst [vmem:[#allocation1] ss:$2 sm:$0xff] %v1476
      %s3998 = scalar_lea.vmem [#allocation1], 16
      %3999 = vst [vmem:[%s3998] ss:$2 sm:$0xff] %v1477
      %s4000 = scalar_lea.vmem [#allocation1], 32
      %4001 = vst [vmem:[%s4000] ss:$2 sm:$0xff] %v1478
      %s4002 = scalar_lea.vmem [#allocation1], 48
      %4003 = vst [vmem:[%s4002] ss:$2 sm:$0xff] %v1479
      %v4004 = vld.sshfl [vmem:[#allocation1] sm:$0xff pattern:$0x75316420]
      %v4005 = vld.sshfl [vmem:[#allocation1 + $0x8] sm:$0xff pattern:$0x75316420]
      %v4006 = vld.sshfl [vmem:[#allocation1 + $0x10] sm:$0xff pattern:$0x75316420]
      %v4007 = vld.sshfl [vmem:[#allocation1 + $0x18] sm:$0xff pattern:$0x75316420]
      %v4008 = vld.sshfl [vmem:[#allocation1 + $0x20] sm:$0xff pattern:$0x75316420]
      %v4009 = vld.sshfl [vmem:[#allocation1 + $0x28] sm:$0xff pattern:$0x75316420]
      %v4010 = vld.sshfl [vmem:[#allocation1 + $0x30] sm:$0xff pattern:$0x75316420]
      %v4011 = vld.sshfl [vmem:[#allocation1 + $0x38] sm:$0xff pattern:$0x75316420]
      %4012 = vst [vmem:[#allocation1] ss:$2 sm:$0xff] %v1480
      %4013 = vst [vmem:[%s3998] ss:$2 sm:$0xff] %v1481
      %4014 = vst [vmem:[%s4000] ss:$2 sm:$0xff] %v1482
      %4015 = vst [vmem:[%s4002] ss:$2 sm:$0xff] %v1483
      %v4016 = vld.sshfl [vmem:[#allocation1] sm:$0xff pattern:$0x75316420]
      %v4017 = vld.sshfl [vmem:[#allocation1 + $0x8] sm:$0xff pattern:$0x75316420]
      %v4018 = vld.sshfl [vmem:[#allocation1 + $0x10] sm:$0xff pattern:$0x75316420]
      %v4019 = vld.sshfl [vmem:[#allocation1 + $0x18] sm:$0xff pattern:$0x75316420]
      %v4020 = vld.sshfl [vmem:[#allocation1 + $0x20] sm:$0xff pattern:$0x75316420]
      %v4021 = vld.sshfl [vmem:[#allocation1 + $0x28] sm:$0xff pattern:$0x75316420]
      %v4022 = vld.sshfl [vmem:[#allocation1 + $0x30] sm:$0xff pattern:$0x75316420]
      %v4023 = vld.sshfl [vmem:[#allocation1 + $0x38] sm:$0xff pattern:$0x75316420]
      %4040 = vrot.lane.b32.xlu0 %v4004, 127
      %v4041 = vpop.permute.xlu0 %4040
      %4042 = vrot.lane.b32.xlu0 %v4005, 127
      %v4043 = vpop.permute.xlu0 %4042
      %4044 = vrot.lane.b32.xlu0 %v4006, 127
      %v4045 = vpop.permute.xlu0 %4044
      %4046 = vrot.lane.b32.xlu0 %v4007, 127
      %v4047 = vpop.permute.xlu0 %4046
      %4048 = vrot.lane.b32.xlu0 %v4008, 127
      %v4049 = vpop.permute.xlu0 %4048
      %4050 = vrot.lane.b32.xlu0 %v4009, 127
      %v4051 = vpop.permute.xlu0 %4050
      %4052 = vrot.lane.b32.xlu0 %v4010, 127
      %v4053 = vpop.permute.xlu0 %4052
      %4054 = vrot.lane.b32.xlu0 %v4011, 127
      %v4055 = vpop.permute.xlu0 %4054
      %4056 = vrot.lane.b32.xlu0 %v4016, 127
      %v4057 = vpop.permute.xlu0 %4056
      %4058 = vrot.lane.b32.xlu0 %v4017, 127
      %v4059 = vpop.permute.xlu0 %4058
      %4060 = vrot.lane.b32.xlu0 %v4018, 127
      %v4061 = vpop.permute.xlu0 %4060
      %4062 = vrot.lane.b32.xlu0 %v4019, 127
      %v4063 = vpop.permute.xlu0 %4062
      %4064 = vrot.lane.b32.xlu0 %v4020, 127
      %v4065 = vpop.permute.xlu0 %4064
      %4066 = vrot.lane.b32.xlu0 %v4021, 127
      %v4067 = vpop.permute.xlu0 %4066
      %4068 = vrot.lane.b32.xlu0 %v4022, 127
      %v4069 = vpop.permute.xlu0 %4068
      %4070 = vrot.lane.b32.xlu0 %v4023, 127
      %v4071 = vpop.permute.xlu0 %4070
      %vm4072 = vcmp.lt.s32.totalorder %v1568, 127
      %v4073 = vsel %vm4072, %v4069, %v4071
      %v4074 = vsel %vm4072, %v4067, %v4069
      %v4075 = vsel %vm4072, %v4065, %v4067
      %v4076 = vsel %vm4072, %v4063, %v4065
      %v4077 = vsel %vm4072, %v4061, %v4063
      %v4078 = vsel %vm4072, %v4059, %v4061
      %v4079 = vsel %vm4072, %v4057, %v4059
      %v4080 = vsel %vm4072, %v4055, %v4057
      %v4081 = vsel %vm4072, %v4053, %v4055
      %v4082 = vsel %vm4072, %v4051, %v4053
      %v4083 = vsel %vm4072, %v4049, %v4051
      %v4084 = vsel %vm4072, %v4047, %v4049
      %v4085 = vsel %vm4072, %v4045, %v4047
      %v4086 = vsel %vm4072, %v4043, %v4045
      %v4087 = vsel %vm4072, %v4041, %v4043
      %v4088 = vsel %vm4072, %v4071, %v4041
      %s4089 = scalar_lea.vmem %s7, 80
      %v4090 = vld [vmem:[%s4089] sm:$0xff]
      %v4091 = vld [vmem:[%s4089 + $0x8] sm:$0xff]
      %v4094 = vperm.slane %v4090, 0
      %v4095 = vperm.slane %v4090, 1
      %v4096 = vperm.slane %v4090, 2
      %v4097 = vperm.slane %v4090, 3
      %v4098 = vperm.slane %v4090, 4
      %v4099 = vperm.slane %v4090, 5
      %v4100 = vperm.slane %v4090, 6
      %v4101 = vperm.slane %v4090, 7
      %v4102 = vperm.slane %v4091, 0
      %v4103 = vperm.slane %v4091, 1
      %v4104 = vperm.slane %v4091, 2
      %v4105 = vperm.slane %v4091, 3
      %v4106 = vperm.slane %v4091, 4
      %v4107 = vperm.slane %v4091, 5
      %v4108 = vperm.slane %v4091, 6
      %v4109 = vperm.slane %v4091, 7
      %v4126 = vmul.f32 %v4087, %v4094
      %v4127 = vmul.f32 %v4086, %v4095
      %v4128 = vmul.f32 %v4085, %v4096
      %v4129 = vmul.f32 %v4084, %v4097
      %v4130 = vmul.f32 %v4083, %v4098
      %v4131 = vmul.f32 %v4082, %v4099
      %v4132 = vmul.f32 %v4081, %v4100
      %v4133 = vmul.f32 %v4080, %v4101
      %v4134 = vmul.f32 %v4079, %v4102
      %v4135 = vmul.f32 %v4078, %v4103
      %v4136 = vmul.f32 %v4077, %v4104
      %v4137 = vmul.f32 %v4076, %v4105
      %v4138 = vmul.f32 %v4075, %v4106
      %v4139 = vmul.f32 %v4074, %v4107
      %v4140 = vmul.f32 %v4073, %v4108
      %v4141 = vmul.f32 %v4088, %v4109
      %s4142 = scalar_lea.vmem %s3, 20
      %v4143 = vld [vmem:[%s4142] sm:$0xf]
      %v4145 = vsel %vm1786, %v4143, 0
      %v4148 = vsel %vm688, %v4126, 0
      %v4151 = vsel %vm688, %v4127, 0
      %v4154 = vsel %vm688, %v4128, 0
      %v4157 = vsel %vm688, %v4129, 0
      %v4160 = vsel %vm688, %v4130, 0
      %v4163 = vsel %vm688, %v4131, 0
      %v4166 = vsel %vm688, %v4132, 0
      %v4169 = vsel %vm688, %v4133, 0
      %v4172 = vsel %vm688, %v4134, 0
      %v4175 = vsel %vm688, %v4135, 0
      %v4178 = vsel %vm688, %v4136, 0
      %v4181 = vsel %vm688, %v4137, 0
      %v4184 = vsel %vm688, %v4138, 0
      %v4187 = vsel %vm688, %v4139, 0
      %v4190 = vsel %vm688, %v4140, 0
      %v4193 = vsel %vm688, %v4141, 0
      %4195 = vmatpush.msra.mxu0 0.0
      %4196 = vmatpush.msra.mxu0 0.0
      %4197 = vmatpush.msra.mxu0 0.0
      %4198 = vmatpush.msra.mxu0 0.0
      %4199 = vmatpush.msra.mxu0 0.0
      %4200 = vmatpush.msra.mxu0 0.0
      %4201 = vmatpush.msra.mxu0 0.0
      %4202 = vmatpush.msra.mxu0 0.0
      %4203 = vmatpush.msra.mxu0 0.0
      %4204 = vmatpush.msra.mxu0 0.0
      %4205 = vmatpush.msra.mxu0 0.0
      %4206 = vmatpush.msra.mxu0 0.0
      %4207 = vmatpush.msra.mxu0 0.0
      %4208 = vmatpush.msra.mxu0 0.0
      %4209 = vmatpush.msra.mxu0 0.0
      %4210 = vmatpush.msra.mxu0 %v4148
      %4211 = vmatmul.f32.gmra.mxu0 %v4145
      %v4212 = vpop.f32.mrf.mxu0
      %v4213 = vadd.f32 0.0, %v4212
      %4214 = vdwg.mxu0
      %4215 = vmatpush.msra.mxu0 0.0
      %4216 = vmatpush.msra.mxu0 0.0
      %4217 = vmatpush.msra.mxu0 0.0
      %4218 = vmatpush.msra.mxu0 0.0
      %4219 = vmatpush.msra.mxu0 0.0
      %4220 = vmatpush.msra.mxu0 0.0
      %4221 = vmatpush.msra.mxu0 0.0
      %4222 = vmatpush.msra.mxu0 0.0
      %4223 = vmatpush.msra.mxu0 0.0
      %4224 = vmatpush.msra.mxu0 0.0
      %4225 = vmatpush.msra.mxu0 0.0
      %4226 = vmatpush.msra.mxu0 0.0
      %4227 = vmatpush.msra.mxu0 0.0
      %4228 = vmatpush.msra.mxu0 0.0
      %4229 = vmatpush.msra.mxu0 0.0
      %4230 = vmatpush.msra.mxu0 %v4151
      %4231 = vmatmul.f32.gmra.mxu0 %v4145
      %v4232 = vpop.f32.mrf.mxu0
      %v4233 = vadd.f32 0.0, %v4232
      %4234 = vdwg.mxu0
      %4235 = vmatpush.msra.mxu0 0.0
      %4236 = vmatpush.msra.mxu0 0.0
      %4237 = vmatpush.msra.mxu0 0.0
      %4238 = vmatpush.msra.mxu0 0.0
      %4239 = vmatpush.msra.mxu0 0.0
      %4240 = vmatpush.msra.mxu0 0.0
      %4241 = vmatpush.msra.mxu0 0.0
      %4242 = vmatpush.msra.mxu0 0.0
      %4243 = vmatpush.msra.mxu0 0.0
      %4244 = vmatpush.msra.mxu0 0.0
      %4245 = vmatpush.msra.mxu0 0.0
      %4246 = vmatpush.msra.mxu0 0.0
      %4247 = vmatpush.msra.mxu0 0.0
      %4248 = vmatpush.msra.mxu0 0.0
      %4249 = vmatpush.msra.mxu0 0.0
      %4250 = vmatpush.msra.mxu0 %v4154
      %4251 = vmatmul.f32.gmra.mxu0 %v4145
      %v4252 = vpop.f32.mrf.mxu0
      %v4253 = vadd.f32 0.0, %v4252
      %4254 = vdwg.mxu0
      %4255 = vmatpush.msra.mxu0 0.0
      %4256 = vmatpush.msra.mxu0 0.0
      %4257 = vmatpush.msra.mxu0 0.0
      %4258 = vmatpush.msra.mxu0 0.0
      %4259 = vmatpush.msra.mxu0 0.0
      %4260 = vmatpush.msra.mxu0 0.0
      %4261 = vmatpush.msra.mxu0 0.0
      %4262 = vmatpush.msra.mxu0 0.0
      %4263 = vmatpush.msra.mxu0 0.0
      %4264 = vmatpush.msra.mxu0 0.0
      %4265 = vmatpush.msra.mxu0 0.0
      %4266 = vmatpush.msra.mxu0 0.0
      %4267 = vmatpush.msra.mxu0 0.0
      %4268 = vmatpush.msra.mxu0 0.0
      %4269 = vmatpush.msra.mxu0 0.0
      %4270 = vmatpush.msra.mxu0 %v4157
      %4271 = vmatmul.f32.gmra.mxu0 %v4145
      %v4272 = vpop.f32.mrf.mxu0
      %v4273 = vadd.f32 0.0, %v4272
      %4274 = vdwg.mxu0
      %4275 = vmatpush.msra.mxu0 0.0
      %4276 = vmatpush.msra.mxu0 0.0
      %4277 = vmatpush.msra.mxu0 0.0
      %4278 = vmatpush.msra.mxu0 0.0
      %4279 = vmatpush.msra.mxu0 0.0
      %4280 = vmatpush.msra.mxu0 0.0
      %4281 = vmatpush.msra.mxu0 0.0
      %4282 = vmatpush.msra.mxu0 0.0
      %4283 = vmatpush.msra.mxu0 0.0
      %4284 = vmatpush.msra.mxu0 0.0
      %4285 = vmatpush.msra.mxu0 0.0
      %4286 = vmatpush.msra.mxu0 0.0
      %4287 = vmatpush.msra.mxu0 0.0
      %4288 = vmatpush.msra.mxu0 0.0
      %4289 = vmatpush.msra.mxu0 0.0
      %4290 = vmatpush.msra.mxu0 %v4160
      %4291 = vmatmul.f32.gmra.mxu0 %v4145
      %v4292 = vpop.f32.mrf.mxu0
      %v4293 = vadd.f32 0.0, %v4292
      %4294 = vdwg.mxu0
      %4295 = vmatpush.msra.mxu0 0.0
      %4296 = vmatpush.msra.mxu0 0.0
      %4297 = vmatpush.msra.mxu0 0.0
      %4298 = vmatpush.msra.mxu0 0.0
      %4299 = vmatpush.msra.mxu0 0.0
      %4300 = vmatpush.msra.mxu0 0.0
      %4301 = vmatpush.msra.mxu0 0.0
      %4302 = vmatpush.msra.mxu0 0.0
      %4303 = vmatpush.msra.mxu0 0.0
      %4304 = vmatpush.msra.mxu0 0.0
      %4305 = vmatpush.msra.mxu0 0.0
      %4306 = vmatpush.msra.mxu0 0.0
      %4307 = vmatpush.msra.mxu0 0.0
      %4308 = vmatpush.msra.mxu0 0.0
      %4309 = vmatpush.msra.mxu0 0.0
      %4310 = vmatpush.msra.mxu0 %v4163
      %4311 = vmatmul.f32.gmra.mxu0 %v4145
      %v4312 = vpop.f32.mrf.mxu0
      %v4313 = vadd.f32 0.0, %v4312
      %4314 = vdwg.mxu0
      %4315 = vmatpush.msra.mxu0 0.0
      %4316 = vmatpush.msra.mxu0 0.0
      %4317 = vmatpush.msra.mxu0 0.0
      %4318 = vmatpush.msra.mxu0 0.0
      %4319 = vmatpush.msra.mxu0 0.0
      %4320 = vmatpush.msra.mxu0 0.0
      %4321 = vmatpush.msra.mxu0 0.0
      %4322 = vmatpush.msra.mxu0 0.0
      %4323 = vmatpush.msra.mxu0 0.0
      %4324 = vmatpush.msra.mxu0 0.0
      %4325 = vmatpush.msra.mxu0 0.0
      %4326 = vmatpush.msra.mxu0 0.0
      %4327 = vmatpush.msra.mxu0 0.0
      %4328 = vmatpush.msra.mxu0 0.0
      %4329 = vmatpush.msra.mxu0 0.0
      %4330 = vmatpush.msra.mxu0 %v4166
      %4331 = vmatmul.f32.gmra.mxu0 %v4145
      %v4332 = vpop.f32.mrf.mxu0
      %v4333 = vadd.f32 0.0, %v4332
      %4334 = vdwg.mxu0
      %4335 = vmatpush.msra.mxu0 0.0
      %4336 = vmatpush.msra.mxu0 0.0
      %4337 = vmatpush.msra.mxu0 0.0
      %4338 = vmatpush.msra.mxu0 0.0
      %4339 = vmatpush.msra.mxu0 0.0
      %4340 = vmatpush.msra.mxu0 0.0
      %4341 = vmatpush.msra.mxu0 0.0
      %4342 = vmatpush.msra.mxu0 0.0
      %4343 = vmatpush.msra.mxu0 0.0
      %4344 = vmatpush.msra.mxu0 0.0
      %4345 = vmatpush.msra.mxu0 0.0
      %4346 = vmatpush.msra.mxu0 0.0
      %4347 = vmatpush.msra.mxu0 0.0
      %4348 = vmatpush.msra.mxu0 0.0
      %4349 = vmatpush.msra.mxu0 0.0
      %4350 = vmatpush.msra.mxu0 %v4169
      %4351 = vmatmul.f32.gmra.mxu0 %v4145
      %v4352 = vpop.f32.mrf.mxu0
      %v4353 = vadd.f32 0.0, %v4352
      %4354 = vdwg.mxu0
      %4355 = vmatpush.msra.mxu0 0.0
      %4356 = vmatpush.msra.mxu0 0.0
      %4357 = vmatpush.msra.mxu0 0.0
      %4358 = vmatpush.msra.mxu0 0.0
      %4359 = vmatpush.msra.mxu0 0.0
      %4360 = vmatpush.msra.mxu0 0.0
      %4361 = vmatpush.msra.mxu0 0.0
      %4362 = vmatpush.msra.mxu0 0.0
      %4363 = vmatpush.msra.mxu0 0.0
      %4364 = vmatpush.msra.mxu0 0.0
      %4365 = vmatpush.msra.mxu0 0.0
      %4366 = vmatpush.msra.mxu0 0.0
      %4367 = vmatpush.msra.mxu0 0.0
      %4368 = vmatpush.msra.mxu0 0.0
      %4369 = vmatpush.msra.mxu0 0.0
      %4370 = vmatpush.msra.mxu0 %v4172
      %4371 = vmatmul.f32.gmra.mxu0 %v4145
      %v4372 = vpop.f32.mrf.mxu0
      %v4373 = vadd.f32 0.0, %v4372
      %4374 = vdwg.mxu0
      %4375 = vmatpush.msra.mxu0 0.0
      %4376 = vmatpush.msra.mxu0 0.0
      %4377 = vmatpush.msra.mxu0 0.0
      %4378 = vmatpush.msra.mxu0 0.0
      %4379 = vmatpush.msra.mxu0 0.0
      %4380 = vmatpush.msra.mxu0 0.0
      %4381 = vmatpush.msra.mxu0 0.0
      %4382 = vmatpush.msra.mxu0 0.0
      %4383 = vmatpush.msra.mxu0 0.0
      %4384 = vmatpush.msra.mxu0 0.0
      %4385 = vmatpush.msra.mxu0 0.0
      %4386 = vmatpush.msra.mxu0 0.0
      %4387 = vmatpush.msra.mxu0 0.0
      %4388 = vmatpush.msra.mxu0 0.0
      %4389 = vmatpush.msra.mxu0 0.0
      %4390 = vmatpush.msra.mxu0 %v4175
      %4391 = vmatmul.f32.gmra.mxu0 %v4145
      %v4392 = vpop.f32.mrf.mxu0
      %v4393 = vadd.f32 0.0, %v4392
      %4394 = vdwg.mxu0
      %4395 = vmatpush.msra.mxu0 0.0
      %4396 = vmatpush.msra.mxu0 0.0
      %4397 = vmatpush.msra.mxu0 0.0
      %4398 = vmatpush.msra.mxu0 0.0
      %4399 = vmatpush.msra.mxu0 0.0
      %4400 = vmatpush.msra.mxu0 0.0
      %4401 = vmatpush.msra.mxu0 0.0
      %4402 = vmatpush.msra.mxu0 0.0
      %4403 = vmatpush.msra.mxu0 0.0
      %4404 = vmatpush.msra.mxu0 0.0
      %4405 = vmatpush.msra.mxu0 0.0
      %4406 = vmatpush.msra.mxu0 0.0
      %4407 = vmatpush.msra.mxu0 0.0
      %4408 = vmatpush.msra.mxu0 0.0
      %4409 = vmatpush.msra.mxu0 0.0
      %4410 = vmatpush.msra.mxu0 %v4178
      %4411 = vmatmul.f32.gmra.mxu0 %v4145
      %v4412 = vpop.f32.mrf.mxu0
      %v4413 = vadd.f32 0.0, %v4412
      %4414 = vdwg.mxu0
      %4415 = vmatpush.msra.mxu0 0.0
      %4416 = vmatpush.msra.mxu0 0.0
      %4417 = vmatpush.msra.mxu0 0.0
      %4418 = vmatpush.msra.mxu0 0.0
      %4419 = vmatpush.msra.mxu0 0.0
      %4420 = vmatpush.msra.mxu0 0.0
      %4421 = vmatpush.msra.mxu0 0.0
      %4422 = vmatpush.msra.mxu0 0.0
      %4423 = vmatpush.msra.mxu0 0.0
      %4424 = vmatpush.msra.mxu0 0.0
      %4425 = vmatpush.msra.mxu0 0.0
      %4426 = vmatpush.msra.mxu0 0.0
      %4427 = vmatpush.msra.mxu0 0.0
      %4428 = vmatpush.msra.mxu0 0.0
      %4429 = vmatpush.msra.mxu0 0.0
      %4430 = vmatpush.msra.mxu0 %v4181
      %4431 = vmatmul.f32.gmra.mxu0 %v4145
      %v4432 = vpop.f32.mrf.mxu0
      %v4433 = vadd.f32 0.0, %v4432
      %4434 = vdwg.mxu0
      %4435 = vmatpush.msra.mxu0 0.0
      %4436 = vmatpush.msra.mxu0 0.0
      %4437 = vmatpush.msra.mxu0 0.0
      %4438 = vmatpush.msra.mxu0 0.0
      %4439 = vmatpush.msra.mxu0 0.0
      %4440 = vmatpush.msra.mxu0 0.0
      %4441 = vmatpush.msra.mxu0 0.0
      %4442 = vmatpush.msra.mxu0 0.0
      %4443 = vmatpush.msra.mxu0 0.0
      %4444 = vmatpush.msra.mxu0 0.0
      %4445 = vmatpush.msra.mxu0 0.0
      %4446 = vmatpush.msra.mxu0 0.0
      %4447 = vmatpush.msra.mxu0 0.0
      %4448 = vmatpush.msra.mxu0 0.0
      %4449 = vmatpush.msra.mxu0 0.0
      %4450 = vmatpush.msra.mxu0 %v4184
      %4451 = vmatmul.f32.gmra.mxu0 %v4145
      %v4452 = vpop.f32.mrf.mxu0
      %v4453 = vadd.f32 0.0, %v4452
      %4454 = vdwg.mxu0
      %4455 = vmatpush.msra.mxu0 0.0
      %4456 = vmatpush.msra.mxu0 0.0
      %4457 = vmatpush.msra.mxu0 0.0
      %4458 = vmatpush.msra.mxu0 0.0
      %4459 = vmatpush.msra.mxu0 0.0
      %4460 = vmatpush.msra.mxu0 0.0
      %4461 = vmatpush.msra.mxu0 0.0
      %4462 = vmatpush.msra.mxu0 0.0
      %4463 = vmatpush.msra.mxu0 0.0
      %4464 = vmatpush.msra.mxu0 0.0
      %4465 = vmatpush.msra.mxu0 0.0
      %4466 = vmatpush.msra.mxu0 0.0
      %4467 = vmatpush.msra.mxu0 0.0
      %4468 = vmatpush.msra.mxu0 0.0
      %4469 = vmatpush.msra.mxu0 0.0
      %4470 = vmatpush.msra.mxu0 %v4187
      %4471 = vmatmul.f32.gmra.mxu0 %v4145
      %v4472 = vpop.f32.mrf.mxu0
      %v4473 = vadd.f32 0.0, %v4472
      %4474 = vdwg.mxu0
      %4475 = vmatpush.msra.mxu0 0.0
      %4476 = vmatpush.msra.mxu0 0.0
      %4477 = vmatpush.msra.mxu0 0.0
      %4478 = vmatpush.msra.mxu0 0.0
      %4479 = vmatpush.msra.mxu0 0.0
      %4480 = vmatpush.msra.mxu0 0.0
      %4481 = vmatpush.msra.mxu0 0.0
      %4482 = vmatpush.msra.mxu0 0.0
      %4483 = vmatpush.msra.mxu0 0.0
      %4484 = vmatpush.msra.mxu0 0.0
      %4485 = vmatpush.msra.mxu0 0.0
      %4486 = vmatpush.msra.mxu0 0.0
      %4487 = vmatpush.msra.mxu0 0.0
      %4488 = vmatpush.msra.mxu0 0.0
      %4489 = vmatpush.msra.mxu0 0.0
      %4490 = vmatpush.msra.mxu0 %v4190
      %4491 = vmatmul.f32.gmra.mxu0 %v4145
      %v4492 = vpop.f32.mrf.mxu0
      %v4493 = vadd.f32 0.0, %v4492
      %4494 = vdwg.mxu0
      %4495 = vmatpush.msra.mxu0 0.0
      %4496 = vmatpush.msra.mxu0 0.0
      %4497 = vmatpush.msra.mxu0 0.0
      %4498 = vmatpush.msra.mxu0 0.0
      %4499 = vmatpush.msra.mxu0 0.0
      %4500 = vmatpush.msra.mxu0 0.0
      %4501 = vmatpush.msra.mxu0 0.0
      %4502 = vmatpush.msra.mxu0 0.0
      %4503 = vmatpush.msra.mxu0 0.0
      %4504 = vmatpush.msra.mxu0 0.0
      %4505 = vmatpush.msra.mxu0 0.0
      %4506 = vmatpush.msra.mxu0 0.0
      %4507 = vmatpush.msra.mxu0 0.0
      %4508 = vmatpush.msra.mxu0 0.0
      %4509 = vmatpush.msra.mxu0 0.0
      %4510 = vmatpush.msra.mxu0 %v4193
      %4511 = vmatmul.f32.gmra.mxu0 %v4145
      %v4512 = vpop.f32.mrf.mxu0
      %v4513 = vadd.f32 0.0, %v4512
      %4514 = vdwg.mxu0
      %v4515 = vadd.f32 %v3981, %v4213
      %v4516 = vadd.f32 %v3982, %v4233
      %v4517 = vadd.f32 %v3983, %v4253
      %v4518 = vadd.f32 %v3984, %v4273
      %v4519 = vadd.f32 %v3985, %v4293
      %v4520 = vadd.f32 %v3986, %v4313
      %v4521 = vadd.f32 %v3987, %v4333
      %v4522 = vadd.f32 %v3988, %v4353
      %v4523 = vadd.f32 %v3989, %v4373
      %v4524 = vadd.f32 %v3990, %v4393
      %v4525 = vadd.f32 %v3991, %v4413
      %v4526 = vadd.f32 %v3992, %v4433
      %v4527 = vadd.f32 %v3993, %v4453
      %v4528 = vadd.f32 %v3994, %v4473
      %v4529 = vadd.f32 %v3995, %v4493
      %v4530 = vadd.f32 %v3996, %v4513
      %4531 = vst [vmem:[#allocation1] ss:$2 sm:$0xff] %v1476
      %s4532 = scalar_lea.vmem [#allocation1], 16
      %4533 = vst [vmem:[%s4532] ss:$2 sm:$0xff] %v1477
      %s4534 = scalar_lea.vmem [#allocation1], 32
      %4535 = vst [vmem:[%s4534] ss:$2 sm:$0xff] %v1478
      %s4536 = scalar_lea.vmem [#allocation1], 48
      %4537 = vst [vmem:[%s4536] ss:$2 sm:$0xff] %v1479
      %v4538 = vld.sshfl [vmem:[#allocation1] sm:$0xff pattern:$0x75316420]
      %v4539 = vld.sshfl [vmem:[#allocation1 + $0x8] sm:$0xff pattern:$0x75316420]
      %v4540 = vld.sshfl [vmem:[#allocation1 + $0x10] sm:$0xff pattern:$0x75316420]
      %v4541 = vld.sshfl [vmem:[#allocation1 + $0x18] sm:$0xff pattern:$0x75316420]
      %v4542 = vld.sshfl [vmem:[#allocation1 + $0x20] sm:$0xff pattern:$0x75316420]
      %v4543 = vld.sshfl [vmem:[#allocation1 + $0x28] sm:$0xff pattern:$0x75316420]
      %v4544 = vld.sshfl [vmem:[#allocation1 + $0x30] sm:$0xff pattern:$0x75316420]
      %v4545 = vld.sshfl [vmem:[#allocation1 + $0x38] sm:$0xff pattern:$0x75316420]
      %4546 = vst [vmem:[#allocation1] ss:$2 sm:$0xff] %v1480
      %4547 = vst [vmem:[%s4532] ss:$2 sm:$0xff] %v1481
      %4548 = vst [vmem:[%s4534] ss:$2 sm:$0xff] %v1482
      %4549 = vst [vmem:[%s4536] ss:$2 sm:$0xff] %v1483
      %v4550 = vld.sshfl [vmem:[#allocation1] sm:$0xff pattern:$0x75316420]
      %v4551 = vld.sshfl [vmem:[#allocation1 + $0x8] sm:$0xff pattern:$0x75316420]
      %v4552 = vld.sshfl [vmem:[#allocation1 + $0x10] sm:$0xff pattern:$0x75316420]
      %v4553 = vld.sshfl [vmem:[#allocation1 + $0x18] sm:$0xff pattern:$0x75316420]
      %v4554 = vld.sshfl [vmem:[#allocation1 + $0x20] sm:$0xff pattern:$0x75316420]
      %v4555 = vld.sshfl [vmem:[#allocation1 + $0x28] sm:$0xff pattern:$0x75316420]
      %v4556 = vld.sshfl [vmem:[#allocation1 + $0x30] sm:$0xff pattern:$0x75316420]
      %v4557 = vld.sshfl [vmem:[#allocation1 + $0x38] sm:$0xff pattern:$0x75316420]
      %4574 = vrot.lane.b32.xlu0 %v4538, 113
      %v4575 = vpop.permute.xlu0 %4574
      %4576 = vrot.lane.b32.xlu0 %v4539, 113
      %v4577 = vpop.permute.xlu0 %4576
      %4578 = vrot.lane.b32.xlu0 %v4540, 113
      %v4579 = vpop.permute.xlu0 %4578
      %4580 = vrot.lane.b32.xlu0 %v4541, 113
      %v4581 = vpop.permute.xlu0 %4580
      %4582 = vrot.lane.b32.xlu0 %v4542, 113
      %v4583 = vpop.permute.xlu0 %4582
      %4584 = vrot.lane.b32.xlu0 %v4543, 113
      %v4585 = vpop.permute.xlu0 %4584
      %4586 = vrot.lane.b32.xlu0 %v4544, 113
      %v4587 = vpop.permute.xlu0 %4586
      %4588 = vrot.lane.b32.xlu0 %v4545, 113
      %v4589 = vpop.permute.xlu0 %4588
      %4590 = vrot.lane.b32.xlu0 %v4550, 113
      %v4591 = vpop.permute.xlu0 %4590
      %4592 = vrot.lane.b32.xlu0 %v4551, 113
      %v4593 = vpop.permute.xlu0 %4592
      %4594 = vrot.lane.b32.xlu0 %v4552, 113
      %v4595 = vpop.permute.xlu0 %4594
      %4596 = vrot.lane.b32.xlu0 %v4553, 113
      %v4597 = vpop.permute.xlu0 %4596
      %4598 = vrot.lane.b32.xlu0 %v4554, 113
      %v4599 = vpop.permute.xlu0 %4598
      %4600 = vrot.lane.b32.xlu0 %v4555, 113
      %v4601 = vpop.permute.xlu0 %4600
      %4602 = vrot.lane.b32.xlu0 %v4556, 113
      %v4603 = vpop.permute.xlu0 %4602
      %4604 = vrot.lane.b32.xlu0 %v4557, 113
      %v4605 = vpop.permute.xlu0 %4604
      %vm4606 = vcmp.lt.s32.totalorder %v1568, 113
      %v4607 = vsel %vm4606, %v4603, %v4605
      %v4608 = vsel %vm4606, %v4601, %v4603
      %v4609 = vsel %vm4606, %v4599, %v4601
      %v4610 = vsel %vm4606, %v4597, %v4599
      %v4611 = vsel %vm4606, %v4595, %v4597
      %v4612 = vsel %vm4606, %v4593, %v4595
      %v4613 = vsel %vm4606, %v4591, %v4593
      %v4614 = vsel %vm4606, %v4589, %v4591
      %v4615 = vsel %vm4606, %v4587, %v4589
      %v4616 = vsel %vm4606, %v4585, %v4587
      %v4617 = vsel %vm4606, %v4583, %v4585
      %v4618 = vsel %vm4606, %v4581, %v4583
      %v4619 = vsel %vm4606, %v4579, %v4581
      %v4620 = vsel %vm4606, %v4577, %v4579
      %v4621 = vsel %vm4606, %v4575, %v4577
      %v4622 = vsel %vm4606, %v4605, %v4575
      %s4623 = scalar_lea.vmem %s7, 96
      %v4624 = vld [vmem:[%s4623] sm:$0xff]
      %v4625 = vld [vmem:[%s4623 + $0x8] sm:$0xff]
      %v4628 = vperm.slane %v4624, 0
      %v4629 = vperm.slane %v4624, 1
      %v4630 = vperm.slane %v4624, 2
      %v4631 = vperm.slane %v4624, 3
      %v4632 = vperm.slane %v4624, 4
      %v4633 = vperm.slane %v4624, 5
      %v4634 = vperm.slane %v4624, 6
      %v4635 = vperm.slane %v4624, 7
      %v4636 = vperm.slane %v4625, 0
      %v4637 = vperm.slane %v4625, 1
      %v4638 = vperm.slane %v4625, 2
      %v4639 = vperm.slane %v4625, 3
      %v4640 = vperm.slane %v4625, 4
      %v4641 = vperm.slane %v4625, 5
      %v4642 = vperm.slane %v4625, 6
      %v4643 = vperm.slane %v4625, 7
      %v4660 = vmul.f32 %v4621, %v4628
      %v4661 = vmul.f32 %v4620, %v4629
      %v4662 = vmul.f32 %v4619, %v4630
      %v4663 = vmul.f32 %v4618, %v4631
      %v4664 = vmul.f32 %v4617, %v4632
      %v4665 = vmul.f32 %v4616, %v4633
      %v4666 = vmul.f32 %v4615, %v4634
      %v4667 = vmul.f32 %v4614, %v4635
      %v4668 = vmul.f32 %v4613, %v4636
      %v4669 = vmul.f32 %v4612, %v4637
      %v4670 = vmul.f32 %v4611, %v4638
      %v4671 = vmul.f32 %v4610, %v4639
      %v4672 = vmul.f32 %v4609, %v4640
      %v4673 = vmul.f32 %v4608, %v4641
      %v4674 = vmul.f32 %v4607, %v4642
      %v4675 = vmul.f32 %v4622, %v4643
      %s4676 = scalar_lea.vmem %s3, 24
      %v4677 = vld [vmem:[%s4676] sm:$0xf]
      %v4679 = vsel %vm1786, %v4677, 0
      %v4682 = vsel %vm688, %v4660, 0
      %v4685 = vsel %vm688, %v4661, 0
      %v4688 = vsel %vm688, %v4662, 0
      %v4691 = vsel %vm688, %v4663, 0
      %v4694 = vsel %vm688, %v4664, 0
      %v4697 = vsel %vm688, %v4665, 0
      %v4700 = vsel %vm688, %v4666, 0
      %v4703 = vsel %vm688, %v4667, 0
      %v4706 = vsel %vm688, %v4668, 0
      %v4709 = vsel %vm688, %v4669, 0
      %v4712 = vsel %vm688, %v4670, 0
      %v4715 = vsel %vm688, %v4671, 0
      %v4718 = vsel %vm688, %v4672, 0
      %v4721 = vsel %vm688, %v4673, 0
      %v4724 = vsel %vm688, %v4674, 0
      %v4727 = vsel %vm688, %v4675, 0
      %4729 = vmatpush.msra.mxu0 0.0
      %4730 = vmatpush.msra.mxu0 0.0
      %4731 = vmatpush.msra.mxu0 0.0
      %4732 = vmatpush.msra.mxu0 0.0
      %4733 = vmatpush.msra.mxu0 0.0
      %4734 = vmatpush.msra.mxu0 0.0
      %4735 = vmatpush.msra.mxu0 0.0
      %4736 = vmatpush.msra.mxu0 0.0
      %4737 = vmatpush.msra.mxu0 0.0
      %4738 = vmatpush.msra.mxu0 0.0
      %4739 = vmatpush.msra.mxu0 0.0
      %4740 = vmatpush.msra.mxu0 0.0
      %4741 = vmatpush.msra.mxu0 0.0
      %4742 = vmatpush.msra.mxu0 0.0
      %4743 = vmatpush.msra.mxu0 0.0
      %4744 = vmatpush.msra.mxu0 %v4682
      %4745 = vmatmul.f32.gmra.mxu0 %v4679
      %v4746 = vpop.f32.mrf.mxu0
      %v4747 = vadd.f32 0.0, %v4746
      %4748 = vdwg.mxu0
      %4749 = vmatpush.msra.mxu0 0.0
      %4750 = vmatpush.msra.mxu0 0.0
      %4751 = vmatpush.msra.mxu0 0.0
      %4752 = vmatpush.msra.mxu0 0.0
      %4753 = vmatpush.msra.mxu0 0.0
      %4754 = vmatpush.msra.mxu0 0.0
      %4755 = vmatpush.msra.mxu0 0.0
      %4756 = vmatpush.msra.mxu0 0.0
      %4757 = vmatpush.msra.mxu0 0.0
      %4758 = vmatpush.msra.mxu0 0.0
      %4759 = vmatpush.msra.mxu0 0.0
      %4760 = vmatpush.msra.mxu0 0.0
      %4761 = vmatpush.msra.mxu0 0.0
      %4762 = vmatpush.msra.mxu0 0.0
      %4763 = vmatpush.msra.mxu0 0.0
      %4764 = vmatpush.msra.mxu0 %v4685
      %4765 = vmatmul.f32.gmra.mxu0 %v4679
      %v4766 = vpop.f32.mrf.mxu0
      %v4767 = vadd.f32 0.0, %v4766
      %4768 = vdwg.mxu0
      %4769 = vmatpush.msra.mxu0 0.0
      %4770 = vmatpush.msra.mxu0 0.0
      %4771 = vmatpush.msra.mxu0 0.0
      %4772 = vmatpush.msra.mxu0 0.0
      %4773 = vmatpush.msra.mxu0 0.0
      %4774 = vmatpush.msra.mxu0 0.0
      %4775 = vmatpush.msra.mxu0 0.0
      %4776 = vmatpush.msra.mxu0 0.0
      %4777 = vmatpush.msra.mxu0 0.0
      %4778 = vmatpush.msra.mxu0 0.0
      %4779 = vmatpush.msra.mxu0 0.0
      %4780 = vmatpush.msra.mxu0 0.0
      %4781 = vmatpush.msra.mxu0 0.0
      %4782 = vmatpush.msra.mxu0 0.0
      %4783 = vmatpush.msra.mxu0 0.0
      %4784 = vmatpush.msra.mxu0 %v4688
      %4785 = vmatmul.f32.gmra.mxu0 %v4679
      %v4786 = vpop.f32.mrf.mxu0
      %v4787 = vadd.f32 0.0, %v4786
      %4788 = vdwg.mxu0
      %4789 = vmatpush.msra.mxu0 0.0
      %4790 = vmatpush.msra.mxu0 0.0
      %4791 = vmatpush.msra.mxu0 0.0
      %4792 = vmatpush.msra.mxu0 0.0
      %4793 = vmatpush.msra.mxu0 0.0
      %4794 = vmatpush.msra.mxu0 0.0
      %4795 = vmatpush.msra.mxu0 0.0
      %4796 = vmatpush.msra.mxu0 0.0
      %4797 = vmatpush.msra.mxu0 0.0
      %4798 = vmatpush.msra.mxu0 0.0
      %4799 = vmatpush.msra.mxu0 0.0
      %4800 = vmatpush.msra.mxu0 0.0
      %4801 = vmatpush.msra.mxu0 0.0
      %4802 = vmatpush.msra.mxu0 0.0
      %4803 = vmatpush.msra.mxu0 0.0
      %4804 = vmatpush.msra.mxu0 %v4691
      %4805 = vmatmul.f32.gmra.mxu0 %v4679
      %v4806 = vpop.f32.mrf.mxu0
      %v4807 = vadd.f32 0.0, %v4806
      %4808 = vdwg.mxu0
      %4809 = vmatpush.msra.mxu0 0.0
      %4810 = vmatpush.msra.mxu0 0.0
      %4811 = vmatpush.msra.mxu0 0.0
      %4812 = vmatpush.msra.mxu0 0.0
      %4813 = vmatpush.msra.mxu0 0.0
      %4814 = vmatpush.msra.mxu0 0.0
      %4815 = vmatpush.msra.mxu0 0.0
      %4816 = vmatpush.msra.mxu0 0.0
      %4817 = vmatpush.msra.mxu0 0.0
      %4818 = vmatpush.msra.mxu0 0.0
      %4819 = vmatpush.msra.mxu0 0.0
      %4820 = vmatpush.msra.mxu0 0.0
      %4821 = vmatpush.msra.mxu0 0.0
      %4822 = vmatpush.msra.mxu0 0.0
      %4823 = vmatpush.msra.mxu0 0.0
      %4824 = vmatpush.msra.mxu0 %v4694
      %4825 = vmatmul.f32.gmra.mxu0 %v4679
      %v4826 = vpop.f32.mrf.mxu0
      %v4827 = vadd.f32 0.0, %v4826
      %4828 = vdwg.mxu0
      %4829 = vmatpush.msra.mxu0 0.0
      %4830 = vmatpush.msra.mxu0 0.0
      %4831 = vmatpush.msra.mxu0 0.0
      %4832 = vmatpush.msra.mxu0 0.0
      %4833 = vmatpush.msra.mxu0 0.0
      %4834 = vmatpush.msra.mxu0 0.0
      %4835 = vmatpush.msra.mxu0 0.0
      %4836 = vmatpush.msra.mxu0 0.0
      %4837 = vmatpush.msra.mxu0 0.0
      %4838 = vmatpush.msra.mxu0 0.0
      %4839 = vmatpush.msra.mxu0 0.0
      %4840 = vmatpush.msra.mxu0 0.0
      %4841 = vmatpush.msra.mxu0 0.0
      %4842 = vmatpush.msra.mxu0 0.0
      %4843 = vmatpush.msra.mxu0 0.0
      %4844 = vmatpush.msra.mxu0 %v4697
      %4845 = vmatmul.f32.gmra.mxu0 %v4679
      %v4846 = vpop.f32.mrf.mxu0
      %v4847 = vadd.f32 0.0, %v4846
      %4848 = vdwg.mxu0
      %4849 = vmatpush.msra.mxu0 0.0
      %4850 = vmatpush.msra.mxu0 0.0
      %4851 = vmatpush.msra.mxu0 0.0
      %4852 = vmatpush.msra.mxu0 0.0
      %4853 = vmatpush.msra.mxu0 0.0
      %4854 = vmatpush.msra.mxu0 0.0
      %4855 = vmatpush.msra.mxu0 0.0
      %4856 = vmatpush.msra.mxu0 0.0
      %4857 = vmatpush.msra.mxu0 0.0
      %4858 = vmatpush.msra.mxu0 0.0
      %4859 = vmatpush.msra.mxu0 0.0
      %4860 = vmatpush.msra.mxu0 0.0
      %4861 = vmatpush.msra.mxu0 0.0
      %4862 = vmatpush.msra.mxu0 0.0
      %4863 = vmatpush.msra.mxu0 0.0
      %4864 = vmatpush.msra.mxu0 %v4700
      %4865 = vmatmul.f32.gmra.mxu0 %v4679
      %v4866 = vpop.f32.mrf.mxu0
      %v4867 = vadd.f32 0.0, %v4866
      %4868 = vdwg.mxu0
      %4869 = vmatpush.msra.mxu0 0.0
      %4870 = vmatpush.msra.mxu0 0.0
      %4871 = vmatpush.msra.mxu0 0.0
      %4872 = vmatpush.msra.mxu0 0.0
      %4873 = vmatpush.msra.mxu0 0.0
      %4874 = vmatpush.msra.mxu0 0.0
      %4875 = vmatpush.msra.mxu0 0.0
      %4876 = vmatpush.msra.mxu0 0.0
      %4877 = vmatpush.msra.mxu0 0.0
      %4878 = vmatpush.msra.mxu0 0.0
      %4879 = vmatpush.msra.mxu0 0.0
      %4880 = vmatpush.msra.mxu0 0.0
      %4881 = vmatpush.msra.mxu0 0.0
      %4882 = vmatpush.msra.mxu0 0.0
      %4883 = vmatpush.msra.mxu0 0.0
      %4884 = vmatpush.msra.mxu0 %v4703
      %4885 = vmatmul.f32.gmra.mxu0 %v4679
      %v4886 = vpop.f32.mrf.mxu0
      %v4887 = vadd.f32 0.0, %v4886
      %4888 = vdwg.mxu0
      %4889 = vmatpush.msra.mxu0 0.0
      %4890 = vmatpush.msra.mxu0 0.0
      %4891 = vmatpush.msra.mxu0 0.0
      %4892 = vmatpush.msra.mxu0 0.0
      %4893 = vmatpush.msra.mxu0 0.0
      %4894 = vmatpush.msra.mxu0 0.0
      %4895 = vmatpush.msra.mxu0 0.0
      %4896 = vmatpush.msra.mxu0 0.0
      %4897 = vmatpush.msra.mxu0 0.0
      %4898 = vmatpush.msra.mxu0 0.0
      %4899 = vmatpush.msra.mxu0 0.0
      %4900 = vmatpush.msra.mxu0 0.0
      %4901 = vmatpush.msra.mxu0 0.0
      %4902 = vmatpush.msra.mxu0 0.0
      %4903 = vmatpush.msra.mxu0 0.0
      %4904 = vmatpush.msra.mxu0 %v4706
      %4905 = vmatmul.f32.gmra.mxu0 %v4679
      %v4906 = vpop.f32.mrf.mxu0
      %v4907 = vadd.f32 0.0, %v4906
      %4908 = vdwg.mxu0
      %4909 = vmatpush.msra.mxu0 0.0
      %4910 = vmatpush.msra.mxu0 0.0
      %4911 = vmatpush.msra.mxu0 0.0
      %4912 = vmatpush.msra.mxu0 0.0
      %4913 = vmatpush.msra.mxu0 0.0
      %4914 = vmatpush.msra.mxu0 0.0
      %4915 = vmatpush.msra.mxu0 0.0
      %4916 = vmatpush.msra.mxu0 0.0
      %4917 = vmatpush.msra.mxu0 0.0
      %4918 = vmatpush.msra.mxu0 0.0
      %4919 = vmatpush.msra.mxu0 0.0
      %4920 = vmatpush.msra.mxu0 0.0
      %4921 = vmatpush.msra.mxu0 0.0
      %4922 = vmatpush.msra.mxu0 0.0
      %4923 = vmatpush.msra.mxu0 0.0
      %4924 = vmatpush.msra.mxu0 %v4709
      %4925 = vmatmul.f32.gmra.mxu0 %v4679
      %v4926 = vpop.f32.mrf.mxu0
      %v4927 = vadd.f32 0.0, %v4926
      %4928 = vdwg.mxu0
      %4929 = vmatpush.msra.mxu0 0.0
      %4930 = vmatpush.msra.mxu0 0.0
      %4931 = vmatpush.msra.mxu0 0.0
      %4932 = vmatpush.msra.mxu0 0.0
      %4933 = vmatpush.msra.mxu0 0.0
      %4934 = vmatpush.msra.mxu0 0.0
      %4935 = vmatpush.msra.mxu0 0.0
      %4936 = vmatpush.msra.mxu0 0.0
      %4937 = vmatpush.msra.mxu0 0.0
      %4938 = vmatpush.msra.mxu0 0.0
      %4939 = vmatpush.msra.mxu0 0.0
      %4940 = vmatpush.msra.mxu0 0.0
      %4941 = vmatpush.msra.mxu0 0.0
      %4942 = vmatpush.msra.mxu0 0.0
      %4943 = vmatpush.msra.mxu0 0.0
      %4944 = vmatpush.msra.mxu0 %v4712
      %4945 = vmatmul.f32.gmra.mxu0 %v4679
      %v4946 = vpop.f32.mrf.mxu0
      %v4947 = vadd.f32 0.0, %v4946
      %4948 = vdwg.mxu0
      %4949 = vmatpush.msra.mxu0 0.0
      %4950 = vmatpush.msra.mxu0 0.0
      %4951 = vmatpush.msra.mxu0 0.0
      %4952 = vmatpush.msra.mxu0 0.0
      %4953 = vmatpush.msra.mxu0 0.0
      %4954 = vmatpush.msra.mxu0 0.0
      %4955 = vmatpush.msra.mxu0 0.0
      %4956 = vmatpush.msra.mxu0 0.0
      %4957 = vmatpush.msra.mxu0 0.0
      %4958 = vmatpush.msra.mxu0 0.0
      %4959 = vmatpush.msra.mxu0 0.0
      %4960 = vmatpush.msra.mxu0 0.0
      %4961 = vmatpush.msra.mxu0 0.0
      %4962 = vmatpush.msra.mxu0 0.0
      %4963 = vmatpush.msra.mxu0 0.0
      %4964 = vmatpush.msra.mxu0 %v4715
      %4965 = vmatmul.f32.gmra.mxu0 %v4679
      %v4966 = vpop.f32.mrf.mxu0
      %v4967 = vadd.f32 0.0, %v4966
      %4968 = vdwg.mxu0
      %4969 = vmatpush.msra.mxu0 0.0
      %4970 = vmatpush.msra.mxu0 0.0
      %4971 = vmatpush.msra.mxu0 0.0
      %4972 = vmatpush.msra.mxu0 0.0
      %4973 = vmatpush.msra.mxu0 0.0
      %4974 = vmatpush.msra.mxu0 0.0
      %4975 = vmatpush.msra.mxu0 0.0
      %4976 = vmatpush.msra.mxu0 0.0
      %4977 = vmatpush.msra.mxu0 0.0
      %4978 = vmatpush.msra.mxu0 0.0
      %4979 = vmatpush.msra.mxu0 0.0
      %4980 = vmatpush.msra.mxu0 0.0
      %4981 = vmatpush.msra.mxu0 0.0
      %4982 = vmatpush.msra.mxu0 0.0
      %4983 = vmatpush.msra.mxu0 0.0
      %4984 = vmatpush.msra.mxu0 %v4718
      %4985 = vmatmul.f32.gmra.mxu0 %v4679
      %v4986 = vpop.f32.mrf.mxu0
      %v4987 = vadd.f32 0.0, %v4986
      %4988 = vdwg.mxu0
      %4989 = vmatpush.msra.mxu0 0.0
      %4990 = vmatpush.msra.mxu0 0.0
      %4991 = vmatpush.msra.mxu0 0.0
      %4992 = vmatpush.msra.mxu0 0.0
      %4993 = vmatpush.msra.mxu0 0.0
      %4994 = vmatpush.msra.mxu0 0.0
      %4995 = vmatpush.msra.mxu0 0.0
      %4996 = vmatpush.msra.mxu0 0.0
      %4997 = vmatpush.msra.mxu0 0.0
      %4998 = vmatpush.msra.mxu0 0.0
      %4999 = vmatpush.msra.mxu0 0.0
      %5000 = vmatpush.msra.mxu0 0.0
      %5001 = vmatpush.msra.mxu0 0.0
      %5002 = vmatpush.msra.mxu0 0.0
      %5003 = vmatpush.msra.mxu0 0.0
      %5004 = vmatpush.msra.mxu0 %v4721
      %5005 = vmatmul.f32.gmra.mxu0 %v4679
      %v5006 = vpop.f32.mrf.mxu0
      %v5007 = vadd.f32 0.0, %v5006
      %5008 = vdwg.mxu0
      %5009 = vmatpush.msra.mxu0 0.0
      %5010 = vmatpush.msra.mxu0 0.0
      %5011 = vmatpush.msra.mxu0 0.0
      %5012 = vmatpush.msra.mxu0 0.0
      %5013 = vmatpush.msra.mxu0 0.0
      %5014 = vmatpush.msra.mxu0 0.0
      %5015 = vmatpush.msra.mxu0 0.0
      %5016 = vmatpush.msra.mxu0 0.0
      %5017 = vmatpush.msra.mxu0 0.0
      %5018 = vmatpush.msra.mxu0 0.0
      %5019 = vmatpush.msra.mxu0 0.0
      %5020 = vmatpush.msra.mxu0 0.0
      %5021 = vmatpush.msra.mxu0 0.0
      %5022 = vmatpush.msra.mxu0 0.0
      %5023 = vmatpush.msra.mxu0 0.0
      %5024 = vmatpush.msra.mxu0 %v4724
      %5025 = vmatmul.f32.gmra.mxu0 %v4679
      %v5026 = vpop.f32.mrf.mxu0
      %v5027 = vadd.f32 0.0, %v5026
      %5028 = vdwg.mxu0
      %5029 = vmatpush.msra.mxu0 0.0
      %5030 = vmatpush.msra.mxu0 0.0
      %5031 = vmatpush.msra.mxu0 0.0
      %5032 = vmatpush.msra.mxu0 0.0
      %5033 = vmatpush.msra.mxu0 0.0
      %5034 = vmatpush.msra.mxu0 0.0
      %5035 = vmatpush.msra.mxu0 0.0
      %5036 = vmatpush.msra.mxu0 0.0
      %5037 = vmatpush.msra.mxu0 0.0
      %5038 = vmatpush.msra.mxu0 0.0
      %5039 = vmatpush.msra.mxu0 0.0
      %5040 = vmatpush.msra.mxu0 0.0
      %5041 = vmatpush.msra.mxu0 0.0
      %5042 = vmatpush.msra.mxu0 0.0
      %5043 = vmatpush.msra.mxu0 0.0
      %5044 = vmatpush.msra.mxu0 %v4727
      %5045 = vmatmul.f32.gmra.mxu0 %v4679
      %v5046 = vpop.f32.mrf.mxu0
      %v5047 = vadd.f32 0.0, %v5046
      %5048 = vdwg.mxu0
      %v5049 = vadd.f32 %v4515, %v4747
      %v5050 = vadd.f32 %v4516, %v4767
      %v5051 = vadd.f32 %v4517, %v4787
      %v5052 = vadd.f32 %v4518, %v4807
      %v5053 = vadd.f32 %v4519, %v4827
      %v5054 = vadd.f32 %v4520, %v4847
      %v5055 = vadd.f32 %v4521, %v4867
      %v5056 = vadd.f32 %v4522, %v4887
      %v5057 = vadd.f32 %v4523, %v4907
      %v5058 = vadd.f32 %v4524, %v4927
      %v5059 = vadd.f32 %v4525, %v4947
      %v5060 = vadd.f32 %v4526, %v4967
      %v5061 = vadd.f32 %v4527, %v4987
      %v5062 = vadd.f32 %v4528, %v5007
      %v5063 = vadd.f32 %v4529, %v5027
      %v5064 = vadd.f32 %v4530, %v5047
      %5065 = vst [vmem:[#allocation1] ss:$2 sm:$0xff] %v1476
      %s5066 = scalar_lea.vmem [#allocation1], 16
      %5067 = vst [vmem:[%s5066] ss:$2 sm:$0xff] %v1477
      %s5068 = scalar_lea.vmem [#allocation1], 32
      %5069 = vst [vmem:[%s5068] ss:$2 sm:$0xff] %v1478
      %s5070 = scalar_lea.vmem [#allocation1], 48
      %5071 = vst [vmem:[%s5070] ss:$2 sm:$0xff] %v1479
      %v5072 = vld.sshfl [vmem:[#allocation1] sm:$0xff pattern:$0x75316420]
      %v5073 = vld.sshfl [vmem:[#allocation1 + $0x8] sm:$0xff pattern:$0x75316420]
      %v5074 = vld.sshfl [vmem:[#allocation1 + $0x10] sm:$0xff pattern:$0x75316420]
      %v5075 = vld.sshfl [vmem:[#allocation1 + $0x18] sm:$0xff pattern:$0x75316420]
      %v5076 = vld.sshfl [vmem:[#allocation1 + $0x20] sm:$0xff pattern:$0x75316420]
      %v5077 = vld.sshfl [vmem:[#allocation1 + $0x28] sm:$0xff pattern:$0x75316420]
      %v5078 = vld.sshfl [vmem:[#allocation1 + $0x30] sm:$0xff pattern:$0x75316420]
      %v5079 = vld.sshfl [vmem:[#allocation1 + $0x38] sm:$0xff pattern:$0x75316420]
      %5080 = vst [vmem:[#allocation1] ss:$2 sm:$0xff] %v1480
      %5081 = vst [vmem:[%s5066] ss:$2 sm:$0xff] %v1481
      %5082 = vst [vmem:[%s5068] ss:$2 sm:$0xff] %v1482
      %5083 = vst [vmem:[%s5070] ss:$2 sm:$0xff] %v1483
      %v5084 = vld.sshfl [vmem:[#allocation1] sm:$0xff pattern:$0x75316420]
      %v5085 = vld.sshfl [vmem:[#allocation1 + $0x8] sm:$0xff pattern:$0x75316420]
      %v5086 = vld.sshfl [vmem:[#allocation1 + $0x10] sm:$0xff pattern:$0x75316420]
      %v5087 = vld.sshfl [vmem:[#allocation1 + $0x18] sm:$0xff pattern:$0x75316420]
      %v5088 = vld.sshfl [vmem:[#allocation1 + $0x20] sm:$0xff pattern:$0x75316420]
      %v5089 = vld.sshfl [vmem:[#allocation1 + $0x28] sm:$0xff pattern:$0x75316420]
      %v5090 = vld.sshfl [vmem:[#allocation1 + $0x30] sm:$0xff pattern:$0x75316420]
      %v5091 = vld.sshfl [vmem:[#allocation1 + $0x38] sm:$0xff pattern:$0x75316420]
      %5108 = vrot.lane.b32.xlu0 %v5072, 112
      %v5109 = vpop.permute.xlu0 %5108
      %5110 = vrot.lane.b32.xlu0 %v5073, 112
      %v5111 = vpop.permute.xlu0 %5110
      %5112 = vrot.lane.b32.xlu0 %v5074, 112
      %v5113 = vpop.permute.xlu0 %5112
      %5114 = vrot.lane.b32.xlu0 %v5075, 112
      %v5115 = vpop.permute.xlu0 %5114
      %5116 = vrot.lane.b32.xlu0 %v5076, 112
      %v5117 = vpop.permute.xlu0 %5116
      %5118 = vrot.lane.b32.xlu0 %v5077, 112
      %v5119 = vpop.permute.xlu0 %5118
      %5120 = vrot.lane.b32.xlu0 %v5078, 112
      %v5121 = vpop.permute.xlu0 %5120
      %5122 = vrot.lane.b32.xlu0 %v5079, 112
      %v5123 = vpop.permute.xlu0 %5122
      %5124 = vrot.lane.b32.xlu0 %v5084, 112
      %v5125 = vpop.permute.xlu0 %5124
      %5126 = vrot.lane.b32.xlu0 %v5085, 112
      %v5127 = vpop.permute.xlu0 %5126
      %5128 = vrot.lane.b32.xlu0 %v5086, 112
      %v5129 = vpop.permute.xlu0 %5128
      %5130 = vrot.lane.b32.xlu0 %v5087, 112
      %v5131 = vpop.permute.xlu0 %5130
      %5132 = vrot.lane.b32.xlu0 %v5088, 112
      %v5133 = vpop.permute.xlu0 %5132
      %5134 = vrot.lane.b32.xlu0 %v5089, 112
      %v5135 = vpop.permute.xlu0 %5134
      %5136 = vrot.lane.b32.xlu0 %v5090, 112
      %v5137 = vpop.permute.xlu0 %5136
      %5138 = vrot.lane.b32.xlu0 %v5091, 112
      %v5139 = vpop.permute.xlu0 %5138
      %vm5140 = vcmp.lt.s32.totalorder %v1568, 112
      %v5141 = vsel %vm5140, %v5137, %v5139
      %v5142 = vsel %vm5140, %v5135, %v5137
      %v5143 = vsel %vm5140, %v5133, %v5135
      %v5144 = vsel %vm5140, %v5131, %v5133
      %v5145 = vsel %vm5140, %v5129, %v5131
      %v5146 = vsel %vm5140, %v5127, %v5129
      %v5147 = vsel %vm5140, %v5125, %v5127
      %v5148 = vsel %vm5140, %v5123, %v5125
      %v5149 = vsel %vm5140, %v5121, %v5123
      %v5150 = vsel %vm5140, %v5119, %v5121
      %v5151 = vsel %vm5140, %v5117, %v5119
      %v5152 = vsel %vm5140, %v5115, %v5117
      %v5153 = vsel %vm5140, %v5113, %v5115
      %v5154 = vsel %vm5140, %v5111, %v5113
      %v5155 = vsel %vm5140, %v5109, %v5111
      %v5156 = vsel %vm5140, %v5139, %v5109
      %s5157 = scalar_lea.vmem %s7, 112
      %v5158 = vld [vmem:[%s5157] sm:$0xff]
      %v5159 = vld [vmem:[%s5157 + $0x8] sm:$0xff]
      %v5162 = vperm.slane %v5158, 0
      %v5163 = vperm.slane %v5158, 1
      %v5164 = vperm.slane %v5158, 2
      %v5165 = vperm.slane %v5158, 3
      %v5166 = vperm.slane %v5158, 4
      %v5167 = vperm.slane %v5158, 5
      %v5168 = vperm.slane %v5158, 6
      %v5169 = vperm.slane %v5158, 7
      %v5170 = vperm.slane %v5159, 0
      %v5171 = vperm.slane %v5159, 1
      %v5172 = vperm.slane %v5159, 2
      %v5173 = vperm.slane %v5159, 3
      %v5174 = vperm.slane %v5159, 4
      %v5175 = vperm.slane %v5159, 5
      %v5176 = vperm.slane %v5159, 6
      %v5177 = vperm.slane %v5159, 7
      %v5194 = vmul.f32 %v5155, %v5162
      %v5195 = vmul.f32 %v5154, %v5163
      %v5196 = vmul.f32 %v5153, %v5164
      %v5197 = vmul.f32 %v5152, %v5165
      %v5198 = vmul.f32 %v5151, %v5166
      %v5199 = vmul.f32 %v5150, %v5167
      %v5200 = vmul.f32 %v5149, %v5168
      %v5201 = vmul.f32 %v5148, %v5169
      %v5202 = vmul.f32 %v5147, %v5170
      %v5203 = vmul.f32 %v5146, %v5171
      %v5204 = vmul.f32 %v5145, %v5172
      %v5205 = vmul.f32 %v5144, %v5173
      %v5206 = vmul.f32 %v5143, %v5174
      %v5207 = vmul.f32 %v5142, %v5175
      %v5208 = vmul.f32 %v5141, %v5176
      %v5209 = vmul.f32 %v5156, %v5177
      %s5210 = scalar_lea.vmem %s3, 28
      %v5211 = vld [vmem:[%s5210] sm:$0xf]
      %v5213 = vsel %vm1786, %v5211, 0
      %v5216 = vsel %vm688, %v5194, 0
      %v5219 = vsel %vm688, %v5195, 0
      %v5222 = vsel %vm688, %v5196, 0
      %v5225 = vsel %vm688, %v5197, 0
      %v5228 = vsel %vm688, %v5198, 0
      %v5231 = vsel %vm688, %v5199, 0
      %v5234 = vsel %vm688, %v5200, 0
      %v5237 = vsel %vm688, %v5201, 0
      %v5240 = vsel %vm688, %v5202, 0
      %v5243 = vsel %vm688, %v5203, 0
      %v5246 = vsel %vm688, %v5204, 0
      %v5249 = vsel %vm688, %v5205, 0
      %v5252 = vsel %vm688, %v5206, 0
      %v5255 = vsel %vm688, %v5207, 0
      %v5258 = vsel %vm688, %v5208, 0
      %v5261 = vsel %vm688, %v5209, 0
      %5263 = vmatpush.msra.mxu0 0.0
      %5264 = vmatpush.msra.mxu0 0.0
      %5265 = vmatpush.msra.mxu0 0.0
      %5266 = vmatpush.msra.mxu0 0.0
      %5267 = vmatpush.msra.mxu0 0.0
      %5268 = vmatpush.msra.mxu0 0.0
      %5269 = vmatpush.msra.mxu0 0.0
      %5270 = vmatpush.msra.mxu0 0.0
      %5271 = vmatpush.msra.mxu0 0.0
      %5272 = vmatpush.msra.mxu0 0.0
      %5273 = vmatpush.msra.mxu0 0.0
      %5274 = vmatpush.msra.mxu0 0.0
      %5275 = vmatpush.msra.mxu0 0.0
      %5276 = vmatpush.msra.mxu0 0.0
      %5277 = vmatpush.msra.mxu0 0.0
      %5278 = vmatpush.msra.mxu0 %v5216
      %5279 = vmatmul.f32.gmra.mxu0 %v5213
      %v5280 = vpop.f32.mrf.mxu0
      %v5281 = vadd.f32 0.0, %v5280
      %5282 = vdwg.mxu0
      %5283 = vmatpush.msra.mxu0 0.0
      %5284 = vmatpush.msra.mxu0 0.0
      %5285 = vmatpush.msra.mxu0 0.0
      %5286 = vmatpush.msra.mxu0 0.0
      %5287 = vmatpush.msra.mxu0 0.0
      %5288 = vmatpush.msra.mxu0 0.0
      %5289 = vmatpush.msra.mxu0 0.0
      %5290 = vmatpush.msra.mxu0 0.0
      %5291 = vmatpush.msra.mxu0 0.0
      %5292 = vmatpush.msra.mxu0 0.0
      %5293 = vmatpush.msra.mxu0 0.0
      %5294 = vmatpush.msra.mxu0 0.0
      %5295 = vmatpush.msra.mxu0 0.0
      %5296 = vmatpush.msra.mxu0 0.0
      %5297 = vmatpush.msra.mxu0 0.0
      %5298 = vmatpush.msra.mxu0 %v5219
      %5299 = vmatmul.f32.gmra.mxu0 %v5213
      %v5300 = vpop.f32.mrf.mxu0
      %v5301 = vadd.f32 0.0, %v5300
      %5302 = vdwg.mxu0
      %5303 = vmatpush.msra.mxu0 0.0
      %5304 = vmatpush.msra.mxu0 0.0
      %5305 = vmatpush.msra.mxu0 0.0
      %5306 = vmatpush.msra.mxu0 0.0
      %5307 = vmatpush.msra.mxu0 0.0
      %5308 = vmatpush.msra.mxu0 0.0
      %5309 = vmatpush.msra.mxu0 0.0
      %5310 = vmatpush.msra.mxu0 0.0
      %5311 = vmatpush.msra.mxu0 0.0
      %5312 = vmatpush.msra.mxu0 0.0
      %5313 = vmatpush.msra.mxu0 0.0
      %5314 = vmatpush.msra.mxu0 0.0
      %5315 = vmatpush.msra.mxu0 0.0
      %5316 = vmatpush.msra.mxu0 0.0
      %5317 = vmatpush.msra.mxu0 0.0
      %5318 = vmatpush.msra.mxu0 %v5222
      %5319 = vmatmul.f32.gmra.mxu0 %v5213
      %v5320 = vpop.f32.mrf.mxu0
      %v5321 = vadd.f32 0.0, %v5320
      %5322 = vdwg.mxu0
      %5323 = vmatpush.msra.mxu0 0.0
      %5324 = vmatpush.msra.mxu0 0.0
      %5325 = vmatpush.msra.mxu0 0.0
      %5326 = vmatpush.msra.mxu0 0.0
      %5327 = vmatpush.msra.mxu0 0.0
      %5328 = vmatpush.msra.mxu0 0.0
      %5329 = vmatpush.msra.mxu0 0.0
      %5330 = vmatpush.msra.mxu0 0.0
      %5331 = vmatpush.msra.mxu0 0.0
      %5332 = vmatpush.msra.mxu0 0.0
      %5333 = vmatpush.msra.mxu0 0.0
      %5334 = vmatpush.msra.mxu0 0.0
      %5335 = vmatpush.msra.mxu0 0.0
      %5336 = vmatpush.msra.mxu0 0.0
      %5337 = vmatpush.msra.mxu0 0.0
      %5338 = vmatpush.msra.mxu0 %v5225
      %5339 = vmatmul.f32.gmra.mxu0 %v5213
      %v5340 = vpop.f32.mrf.mxu0
      %v5341 = vadd.f32 0.0, %v5340
      %5342 = vdwg.mxu0
      %5343 = vmatpush.msra.mxu0 0.0
      %5344 = vmatpush.msra.mxu0 0.0
      %5345 = vmatpush.msra.mxu0 0.0
      %5346 = vmatpush.msra.mxu0 0.0
      %5347 = vmatpush.msra.mxu0 0.0
      %5348 = vmatpush.msra.mxu0 0.0
      %5349 = vmatpush.msra.mxu0 0.0
      %5350 = vmatpush.msra.mxu0 0.0
      %5351 = vmatpush.msra.mxu0 0.0
      %5352 = vmatpush.msra.mxu0 0.0
      %5353 = vmatpush.msra.mxu0 0.0
      %5354 = vmatpush.msra.mxu0 0.0
      %5355 = vmatpush.msra.mxu0 0.0
      %5356 = vmatpush.msra.mxu0 0.0
      %5357 = vmatpush.msra.mxu0 0.0
      %5358 = vmatpush.msra.mxu0 %v5228
      %5359 = vmatmul.f32.gmra.mxu0 %v5213
      %v5360 = vpop.f32.mrf.mxu0
      %v5361 = vadd.f32 0.0, %v5360
      %5362 = vdwg.mxu0
      %5363 = vmatpush.msra.mxu0 0.0
      %5364 = vmatpush.msra.mxu0 0.0
      %5365 = vmatpush.msra.mxu0 0.0
      %5366 = vmatpush.msra.mxu0 0.0
      %5367 = vmatpush.msra.mxu0 0.0
      %5368 = vmatpush.msra.mxu0 0.0
      %5369 = vmatpush.msra.mxu0 0.0
      %5370 = vmatpush.msra.mxu0 0.0
      %5371 = vmatpush.msra.mxu0 0.0
      %5372 = vmatpush.msra.mxu0 0.0
      %5373 = vmatpush.msra.mxu0 0.0
      %5374 = vmatpush.msra.mxu0 0.0
      %5375 = vmatpush.msra.mxu0 0.0
      %5376 = vmatpush.msra.mxu0 0.0
      %5377 = vmatpush.msra.mxu0 0.0
      %5378 = vmatpush.msra.mxu0 %v5231
      %5379 = vmatmul.f32.gmra.mxu0 %v5213
      %v5380 = vpop.f32.mrf.mxu0
      %v5381 = vadd.f32 0.0, %v5380
      %5382 = vdwg.mxu0
      %5383 = vmatpush.msra.mxu0 0.0
      %5384 = vmatpush.msra.mxu0 0.0
      %5385 = vmatpush.msra.mxu0 0.0
      %5386 = vmatpush.msra.mxu0 0.0
      %5387 = vmatpush.msra.mxu0 0.0
      %5388 = vmatpush.msra.mxu0 0.0
      %5389 = vmatpush.msra.mxu0 0.0
      %5390 = vmatpush.msra.mxu0 0.0
      %5391 = vmatpush.msra.mxu0 0.0
      %5392 = vmatpush.msra.mxu0 0.0
      %5393 = vmatpush.msra.mxu0 0.0
      %5394 = vmatpush.msra.mxu0 0.0
      %5395 = vmatpush.msra.mxu0 0.0
      %5396 = vmatpush.msra.mxu0 0.0
      %5397 = vmatpush.msra.mxu0 0.0
      %5398 = vmatpush.msra.mxu0 %v5234
      %5399 = vmatmul.f32.gmra.mxu0 %v5213
      %v5400 = vpop.f32.mrf.mxu0
      %v5401 = vadd.f32 0.0, %v5400
      %5402 = vdwg.mxu0
      %5403 = vmatpush.msra.mxu0 0.0
      %5404 = vmatpush.msra.mxu0 0.0
      %5405 = vmatpush.msra.mxu0 0.0
      %5406 = vmatpush.msra.mxu0 0.0
      %5407 = vmatpush.msra.mxu0 0.0
      %5408 = vmatpush.msra.mxu0 0.0
      %5409 = vmatpush.msra.mxu0 0.0
      %5410 = vmatpush.msra.mxu0 0.0
      %5411 = vmatpush.msra.mxu0 0.0
      %5412 = vmatpush.msra.mxu0 0.0
      %5413 = vmatpush.msra.mxu0 0.0
      %5414 = vmatpush.msra.mxu0 0.0
      %5415 = vmatpush.msra.mxu0 0.0
      %5416 = vmatpush.msra.mxu0 0.0
      %5417 = vmatpush.msra.mxu0 0.0
      %5418 = vmatpush.msra.mxu0 %v5237
      %5419 = vmatmul.f32.gmra.mxu0 %v5213
      %v5420 = vpop.f32.mrf.mxu0
      %v5421 = vadd.f32 0.0, %v5420
      %5422 = vdwg.mxu0
      %5423 = vmatpush.msra.mxu0 0.0
      %5424 = vmatpush.msra.mxu0 0.0
      %5425 = vmatpush.msra.mxu0 0.0
      %5426 = vmatpush.msra.mxu0 0.0
      %5427 = vmatpush.msra.mxu0 0.0
      %5428 = vmatpush.msra.mxu0 0.0
      %5429 = vmatpush.msra.mxu0 0.0
      %5430 = vmatpush.msra.mxu0 0.0
      %5431 = vmatpush.msra.mxu0 0.0
      %5432 = vmatpush.msra.mxu0 0.0
      %5433 = vmatpush.msra.mxu0 0.0
      %5434 = vmatpush.msra.mxu0 0.0
      %5435 = vmatpush.msra.mxu0 0.0
      %5436 = vmatpush.msra.mxu0 0.0
      %5437 = vmatpush.msra.mxu0 0.0
      %5438 = vmatpush.msra.mxu0 %v5240
      %5439 = vmatmul.f32.gmra.mxu0 %v5213
      %v5440 = vpop.f32.mrf.mxu0
      %v5441 = vadd.f32 0.0, %v5440
      %5442 = vdwg.mxu0
      %5443 = vmatpush.msra.mxu0 0.0
      %5444 = vmatpush.msra.mxu0 0.0
      %5445 = vmatpush.msra.mxu0 0.0
      %5446 = vmatpush.msra.mxu0 0.0
      %5447 = vmatpush.msra.mxu0 0.0
      %5448 = vmatpush.msra.mxu0 0.0
      %5449 = vmatpush.msra.mxu0 0.0
      %5450 = vmatpush.msra.mxu0 0.0
      %5451 = vmatpush.msra.mxu0 0.0
      %5452 = vmatpush.msra.mxu0 0.0
      %5453 = vmatpush.msra.mxu0 0.0
      %5454 = vmatpush.msra.mxu0 0.0
      %5455 = vmatpush.msra.mxu0 0.0
      %5456 = vmatpush.msra.mxu0 0.0
      %5457 = vmatpush.msra.mxu0 0.0
      %5458 = vmatpush.msra.mxu0 %v5243
      %5459 = vmatmul.f32.gmra.mxu0 %v5213
      %v5460 = vpop.f32.mrf.mxu0
      %v5461 = vadd.f32 0.0, %v5460
      %5462 = vdwg.mxu0
      %5463 = vmatpush.msra.mxu0 0.0
      %5464 = vmatpush.msra.mxu0 0.0
      %5465 = vmatpush.msra.mxu0 0.0
      %5466 = vmatpush.msra.mxu0 0.0
      %5467 = vmatpush.msra.mxu0 0.0
      %5468 = vmatpush.msra.mxu0 0.0
      %5469 = vmatpush.msra.mxu0 0.0
      %5470 = vmatpush.msra.mxu0 0.0
      %5471 = vmatpush.msra.mxu0 0.0
      %5472 = vmatpush.msra.mxu0 0.0
      %5473 = vmatpush.msra.mxu0 0.0
      %5474 = vmatpush.msra.mxu0 0.0
      %5475 = vmatpush.msra.mxu0 0.0
      %5476 = vmatpush.msra.mxu0 0.0
      %5477 = vmatpush.msra.mxu0 0.0
      %5478 = vmatpush.msra.mxu0 %v5246
      %5479 = vmatmul.f32.gmra.mxu0 %v5213
      %v5480 = vpop.f32.mrf.mxu0
      %v5481 = vadd.f32 0.0, %v5480
      %5482 = vdwg.mxu0
      %5483 = vmatpush.msra.mxu0 0.0
      %5484 = vmatpush.msra.mxu0 0.0
      %5485 = vmatpush.msra.mxu0 0.0
      %5486 = vmatpush.msra.mxu0 0.0
      %5487 = vmatpush.msra.mxu0 0.0
      %5488 = vmatpush.msra.mxu0 0.0
      %5489 = vmatpush.msra.mxu0 0.0
      %5490 = vmatpush.msra.mxu0 0.0
      %5491 = vmatpush.msra.mxu0 0.0
      %5492 = vmatpush.msra.mxu0 0.0
      %5493 = vmatpush.msra.mxu0 0.0
      %5494 = vmatpush.msra.mxu0 0.0
      %5495 = vmatpush.msra.mxu0 0.0
      %5496 = vmatpush.msra.mxu0 0.0
      %5497 = vmatpush.msra.mxu0 0.0
      %5498 = vmatpush.msra.mxu0 %v5249
      %5499 = vmatmul.f32.gmra.mxu0 %v5213
      %v5500 = vpop.f32.mrf.mxu0
      %v5501 = vadd.f32 0.0, %v5500
      %5502 = vdwg.mxu0
      %5503 = vmatpush.msra.mxu0 0.0
      %5504 = vmatpush.msra.mxu0 0.0
      %5505 = vmatpush.msra.mxu0 0.0
      %5506 = vmatpush.msra.mxu0 0.0
      %5507 = vmatpush.msra.mxu0 0.0
      %5508 = vmatpush.msra.mxu0 0.0
      %5509 = vmatpush.msra.mxu0 0.0
      %5510 = vmatpush.msra.mxu0 0.0
      %5511 = vmatpush.msra.mxu0 0.0
      %5512 = vmatpush.msra.mxu0 0.0
      %5513 = vmatpush.msra.mxu0 0.0
      %5514 = vmatpush.msra.mxu0 0.0
      %5515 = vmatpush.msra.mxu0 0.0
      %5516 = vmatpush.msra.mxu0 0.0
      %5517 = vmatpush.msra.mxu0 0.0
      %5518 = vmatpush.msra.mxu0 %v5252
      %5519 = vmatmul.f32.gmra.mxu0 %v5213
      %v5520 = vpop.f32.mrf.mxu0
      %v5521 = vadd.f32 0.0, %v5520
      %5522 = vdwg.mxu0
      %5523 = vmatpush.msra.mxu0 0.0
      %5524 = vmatpush.msra.mxu0 0.0
      %5525 = vmatpush.msra.mxu0 0.0
      %5526 = vmatpush.msra.mxu0 0.0
      %5527 = vmatpush.msra.mxu0 0.0
      %5528 = vmatpush.msra.mxu0 0.0
      %5529 = vmatpush.msra.mxu0 0.0
      %5530 = vmatpush.msra.mxu0 0.0
      %5531 = vmatpush.msra.mxu0 0.0
      %5532 = vmatpush.msra.mxu0 0.0
      %5533 = vmatpush.msra.mxu0 0.0
      %5534 = vmatpush.msra.mxu0 0.0
      %5535 = vmatpush.msra.mxu0 0.0
      %5536 = vmatpush.msra.mxu0 0.0
      %5537 = vmatpush.msra.mxu0 0.0
      %5538 = vmatpush.msra.mxu0 %v5255
      %5539 = vmatmul.f32.gmra.mxu0 %v5213
      %v5540 = vpop.f32.mrf.mxu0
      %v5541 = vadd.f32 0.0, %v5540
      %5542 = vdwg.mxu0
      %5543 = vmatpush.msra.mxu0 0.0
      %5544 = vmatpush.msra.mxu0 0.0
      %5545 = vmatpush.msra.mxu0 0.0
      %5546 = vmatpush.msra.mxu0 0.0
      %5547 = vmatpush.msra.mxu0 0.0
      %5548 = vmatpush.msra.mxu0 0.0
      %5549 = vmatpush.msra.mxu0 0.0
      %5550 = vmatpush.msra.mxu0 0.0
      %5551 = vmatpush.msra.mxu0 0.0
      %5552 = vmatpush.msra.mxu0 0.0
      %5553 = vmatpush.msra.mxu0 0.0
      %5554 = vmatpush.msra.mxu0 0.0
      %5555 = vmatpush.msra.mxu0 0.0
      %5556 = vmatpush.msra.mxu0 0.0
      %5557 = vmatpush.msra.mxu0 0.0
      %5558 = vmatpush.msra.mxu0 %v5258
      %5559 = vmatmul.f32.gmra.mxu0 %v5213
      %v5560 = vpop.f32.mrf.mxu0
      %v5561 = vadd.f32 0.0, %v5560
      %5562 = vdwg.mxu0
      %5563 = vmatpush.msra.mxu0 0.0
      %5564 = vmatpush.msra.mxu0 0.0
      %5565 = vmatpush.msra.mxu0 0.0
      %5566 = vmatpush.msra.mxu0 0.0
      %5567 = vmatpush.msra.mxu0 0.0
      %5568 = vmatpush.msra.mxu0 0.0
      %5569 = vmatpush.msra.mxu0 0.0
      %5570 = vmatpush.msra.mxu0 0.0
      %5571 = vmatpush.msra.mxu0 0.0
      %5572 = vmatpush.msra.mxu0 0.0
      %5573 = vmatpush.msra.mxu0 0.0
      %5574 = vmatpush.msra.mxu0 0.0
      %5575 = vmatpush.msra.mxu0 0.0
      %5576 = vmatpush.msra.mxu0 0.0
      %5577 = vmatpush.msra.mxu0 0.0
      %5578 = vmatpush.msra.mxu0 %v5261
      %5579 = vmatmul.f32.gmra.mxu0 %v5213
      %v5580 = vpop.f32.mrf.mxu0
      %v5581 = vadd.f32 0.0, %v5580
      %5582 = vdwg.mxu0
      %v5583 = vadd.f32 %v5049, %v5281
      %v5584 = vadd.f32 %v5050, %v5301
      %v5585 = vadd.f32 %v5051, %v5321
      %v5586 = vadd.f32 %v5052, %v5341
      %v5587 = vadd.f32 %v5053, %v5361
      %v5588 = vadd.f32 %v5054, %v5381
      %v5589 = vadd.f32 %v5055, %v5401
      %v5590 = vadd.f32 %v5056, %v5421
      %v5591 = vadd.f32 %v5057, %v5441
      %v5592 = vadd.f32 %v5058, %v5461
      %v5593 = vadd.f32 %v5059, %v5481
      %v5594 = vadd.f32 %v5060, %v5501
      %v5595 = vadd.f32 %v5061, %v5521
      %v5596 = vadd.f32 %v5062, %v5541
      %v5597 = vadd.f32 %v5063, %v5561
      %v5598 = vadd.f32 %v5064, %v5581
      %5599 = vst [vmem:[#allocation1] ss:$2 sm:$0xff] %v1476
      %s5600 = scalar_lea.vmem [#allocation1], 16
      %5601 = vst [vmem:[%s5600] ss:$2 sm:$0xff] %v1477
      %s5602 = scalar_lea.vmem [#allocation1], 32
      %5603 = vst [vmem:[%s5602] ss:$2 sm:$0xff] %v1478
      %s5604 = scalar_lea.vmem [#allocation1], 48
      %5605 = vst [vmem:[%s5604] ss:$2 sm:$0xff] %v1479
      %v5606 = vld.sshfl [vmem:[#allocation1] sm:$0xff pattern:$0x75316420]
      %v5607 = vld.sshfl [vmem:[#allocation1 + $0x8] sm:$0xff pattern:$0x75316420]
      %v5608 = vld.sshfl [vmem:[#allocation1 + $0x10] sm:$0xff pattern:$0x75316420]
      %v5609 = vld.sshfl [vmem:[#allocation1 + $0x18] sm:$0xff pattern:$0x75316420]
      %v5610 = vld.sshfl [vmem:[#allocation1 + $0x20] sm:$0xff pattern:$0x75316420]
      %v5611 = vld.sshfl [vmem:[#allocation1 + $0x28] sm:$0xff pattern:$0x75316420]
      %v5612 = vld.sshfl [vmem:[#allocation1 + $0x30] sm:$0xff pattern:$0x75316420]
      %v5613 = vld.sshfl [vmem:[#allocation1 + $0x38] sm:$0xff pattern:$0x75316420]
      %5614 = vst [vmem:[#allocation1] ss:$2 sm:$0xff] %v1480
      %5615 = vst [vmem:[%s5600] ss:$2 sm:$0xff] %v1481
      %5616 = vst [vmem:[%s5602] ss:$2 sm:$0xff] %v1482
      %5617 = vst [vmem:[%s5604] ss:$2 sm:$0xff] %v1483
      %v5618 = vld.sshfl [vmem:[#allocation1] sm:$0xff pattern:$0x75316420]
      %v5619 = vld.sshfl [vmem:[#allocation1 + $0x8] sm:$0xff pattern:$0x75316420]
      %v5620 = vld.sshfl [vmem:[#allocation1 + $0x10] sm:$0xff pattern:$0x75316420]
      %v5621 = vld.sshfl [vmem:[#allocation1 + $0x18] sm:$0xff pattern:$0x75316420]
      %v5622 = vld.sshfl [vmem:[#allocation1 + $0x20] sm:$0xff pattern:$0x75316420]
      %v5623 = vld.sshfl [vmem:[#allocation1 + $0x28] sm:$0xff pattern:$0x75316420]
      %v5624 = vld.sshfl [vmem:[#allocation1 + $0x30] sm:$0xff pattern:$0x75316420]
      %v5625 = vld.sshfl [vmem:[#allocation1 + $0x38] sm:$0xff pattern:$0x75316420]
      %5642 = vrot.lane.b32.xlu0 %v5606, 111
      %v5643 = vpop.permute.xlu0 %5642
      %5644 = vrot.lane.b32.xlu0 %v5607, 111
      %v5645 = vpop.permute.xlu0 %5644
      %5646 = vrot.lane.b32.xlu0 %v5608, 111
      %v5647 = vpop.permute.xlu0 %5646
      %5648 = vrot.lane.b32.xlu0 %v5609, 111
      %v5649 = vpop.permute.xlu0 %5648
      %5650 = vrot.lane.b32.xlu0 %v5610, 111
      %v5651 = vpop.permute.xlu0 %5650
      %5652 = vrot.lane.b32.xlu0 %v5611, 111
      %v5653 = vpop.permute.xlu0 %5652
      %5654 = vrot.lane.b32.xlu0 %v5612, 111
      %v5655 = vpop.permute.xlu0 %5654
      %5656 = vrot.lane.b32.xlu0 %v5613, 111
      %v5657 = vpop.permute.xlu0 %5656
      %5658 = vrot.lane.b32.xlu0 %v5618, 111
      %v5659 = vpop.permute.xlu0 %5658
      %5660 = vrot.lane.b32.xlu0 %v5619, 111
      %v5661 = vpop.permute.xlu0 %5660
      %5662 = vrot.lane.b32.xlu0 %v5620, 111
      %v5663 = vpop.permute.xlu0 %5662
      %5664 = vrot.lane.b32.xlu0 %v5621, 111
      %v5665 = vpop.permute.xlu0 %5664
      %5666 = vrot.lane.b32.xlu0 %v5622, 111
      %v5667 = vpop.permute.xlu0 %5666
      %5668 = vrot.lane.b32.xlu0 %v5623, 111
      %v5669 = vpop.permute.xlu0 %5668
      %5670 = vrot.lane.b32.xlu0 %v5624, 111
      %v5671 = vpop.permute.xlu0 %5670
      %5672 = vrot.lane.b32.xlu0 %v5625, 111
      %v5673 = vpop.permute.xlu0 %5672
      %vm5674 = vcmp.lt.s32.totalorder %v1568, 111
      %v5675 = vsel %vm5674, %v5671, %v5673
      %v5676 = vsel %vm5674, %v5669, %v5671
      %v5677 = vsel %vm5674, %v5667, %v5669
      %v5678 = vsel %vm5674, %v5665, %v5667
      %v5679 = vsel %vm5674, %v5663, %v5665
      %v5680 = vsel %vm5674, %v5661, %v5663
      %v5681 = vsel %vm5674, %v5659, %v5661
      %v5682 = vsel %vm5674, %v5657, %v5659
      %v5683 = vsel %vm5674, %v5655, %v5657
      %v5684 = vsel %vm5674, %v5653, %v5655
      %v5685 = vsel %vm5674, %v5651, %v5653
      %v5686 = vsel %vm5674, %v5649, %v5651
      %v5687 = vsel %vm5674, %v5647, %v5649
      %v5688 = vsel %vm5674, %v5645, %v5647
      %v5689 = vsel %vm5674, %v5643, %v5645
      %v5690 = vsel %vm5674, %v5673, %v5643
      %s5691 = scalar_lea.vmem %s7, 128
      %v5692 = vld [vmem:[%s5691] sm:$0xff]
      %v5693 = vld [vmem:[%s5691 + $0x8] sm:$0xff]
      %v5696 = vperm.slane %v5692, 0
      %v5697 = vperm.slane %v5692, 1
      %v5698 = vperm.slane %v5692, 2
      %v5699 = vperm.slane %v5692, 3
      %v5700 = vperm.slane %v5692, 4
      %v5701 = vperm.slane %v5692, 5
      %v5702 = vperm.slane %v5692, 6
      %v5703 = vperm.slane %v5692, 7
      %v5704 = vperm.slane %v5693, 0
      %v5705 = vperm.slane %v5693, 1
      %v5706 = vperm.slane %v5693, 2
      %v5707 = vperm.slane %v5693, 3
      %v5708 = vperm.slane %v5693, 4
      %v5709 = vperm.slane %v5693, 5
      %v5710 = vperm.slane %v5693, 6
      %v5711 = vperm.slane %v5693, 7
      %v5728 = vmul.f32 %v5689, %v5696
      %v5729 = vmul.f32 %v5688, %v5697
      %v5730 = vmul.f32 %v5687, %v5698
      %v5731 = vmul.f32 %v5686, %v5699
      %v5732 = vmul.f32 %v5685, %v5700
      %v5733 = vmul.f32 %v5684, %v5701
      %v5734 = vmul.f32 %v5683, %v5702
      %v5735 = vmul.f32 %v5682, %v5703
      %v5736 = vmul.f32 %v5681, %v5704
      %v5737 = vmul.f32 %v5680, %v5705
      %v5738 = vmul.f32 %v5679, %v5706
      %v5739 = vmul.f32 %v5678, %v5707
      %v5740 = vmul.f32 %v5677, %v5708
      %v5741 = vmul.f32 %v5676, %v5709
      %v5742 = vmul.f32 %v5675, %v5710
      %v5743 = vmul.f32 %v5690, %v5711
      %s5744 = scalar_lea.vmem %s3, 32
      %v5745 = vld [vmem:[%s5744] sm:$0xf]
      %v5747 = vsel %vm1786, %v5745, 0
      %v5750 = vsel %vm688, %v5728, 0
      %v5753 = vsel %vm688, %v5729, 0
      %v5756 = vsel %vm688, %v5730, 0
      %v5759 = vsel %vm688, %v5731, 0
      %v5762 = vsel %vm688, %v5732, 0
      %v5765 = vsel %vm688, %v5733, 0
      %v5768 = vsel %vm688, %v5734, 0
      %v5771 = vsel %vm688, %v5735, 0
      %v5774 = vsel %vm688, %v5736, 0
      %v5777 = vsel %vm688, %v5737, 0
      %v5780 = vsel %vm688, %v5738, 0
      %v5783 = vsel %vm688, %v5739, 0
      %v5786 = vsel %vm688, %v5740, 0
      %v5789 = vsel %vm688, %v5741, 0
      %v5792 = vsel %vm688, %v5742, 0
      %v5795 = vsel %vm688, %v5743, 0
      %5797 = vmatpush.msra.mxu0 0.0
      %5798 = vmatpush.msra.mxu0 0.0
      %5799 = vmatpush.msra.mxu0 0.0
      %5800 = vmatpush.msra.mxu0 0.0
      %5801 = vmatpush.msra.mxu0 0.0
      %5802 = vmatpush.msra.mxu0 0.0
      %5803 = vmatpush.msra.mxu0 0.0
      %5804 = vmatpush.msra.mxu0 0.0
      %5805 = vmatpush.msra.mxu0 0.0
      %5806 = vmatpush.msra.mxu0 0.0
      %5807 = vmatpush.msra.mxu0 0.0
      %5808 = vmatpush.msra.mxu0 0.0
      %5809 = vmatpush.msra.mxu0 0.0
      %5810 = vmatpush.msra.mxu0 0.0
      %5811 = vmatpush.msra.mxu0 0.0
      %5812 = vmatpush.msra.mxu0 %v5750
      %5813 = vmatmul.f32.gmra.mxu0 %v5747
      %v5814 = vpop.f32.mrf.mxu0
      %v5815 = vadd.f32 0.0, %v5814
      %5816 = vdwg.mxu0
      %5817 = vmatpush.msra.mxu0 0.0
      %5818 = vmatpush.msra.mxu0 0.0
      %5819 = vmatpush.msra.mxu0 0.0
      %5820 = vmatpush.msra.mxu0 0.0
      %5821 = vmatpush.msra.mxu0 0.0
      %5822 = vmatpush.msra.mxu0 0.0
      %5823 = vmatpush.msra.mxu0 0.0
      %5824 = vmatpush.msra.mxu0 0.0
      %5825 = vmatpush.msra.mxu0 0.0
      %5826 = vmatpush.msra.mxu0 0.0
      %5827 = vmatpush.msra.mxu0 0.0
      %5828 = vmatpush.msra.mxu0 0.0
      %5829 = vmatpush.msra.mxu0 0.0
      %5830 = vmatpush.msra.mxu0 0.0
      %5831 = vmatpush.msra.mxu0 0.0
      %5832 = vmatpush.msra.mxu0 %v5753
      %5833 = vmatmul.f32.gmra.mxu0 %v5747
      %v5834 = vpop.f32.mrf.mxu0
      %v5835 = vadd.f32 0.0, %v5834
      %5836 = vdwg.mxu0
      %5837 = vmatpush.msra.mxu0 0.0
      %5838 = vmatpush.msra.mxu0 0.0
      %5839 = vmatpush.msra.mxu0 0.0
      %5840 = vmatpush.msra.mxu0 0.0
      %5841 = vmatpush.msra.mxu0 0.0
      %5842 = vmatpush.msra.mxu0 0.0
      %5843 = vmatpush.msra.mxu0 0.0
      %5844 = vmatpush.msra.mxu0 0.0
      %5845 = vmatpush.msra.mxu0 0.0
      %5846 = vmatpush.msra.mxu0 0.0
      %5847 = vmatpush.msra.mxu0 0.0
      %5848 = vmatpush.msra.mxu0 0.0
      %5849 = vmatpush.msra.mxu0 0.0
      %5850 = vmatpush.msra.mxu0 0.0
      %5851 = vmatpush.msra.mxu0 0.0
      %5852 = vmatpush.msra.mxu0 %v5756
      %5853 = vmatmul.f32.gmra.mxu0 %v5747
      %v5854 = vpop.f32.mrf.mxu0
      %v5855 = vadd.f32 0.0, %v5854
      %5856 = vdwg.mxu0
      %5857 = vmatpush.msra.mxu0 0.0
      %5858 = vmatpush.msra.mxu0 0.0
      %5859 = vmatpush.msra.mxu0 0.0
      %5860 = vmatpush.msra.mxu0 0.0
      %5861 = vmatpush.msra.mxu0 0.0
      %5862 = vmatpush.msra.mxu0 0.0
      %5863 = vmatpush.msra.mxu0 0.0
      %5864 = vmatpush.msra.mxu0 0.0
      %5865 = vmatpush.msra.mxu0 0.0
      %5866 = vmatpush.msra.mxu0 0.0
      %5867 = vmatpush.msra.mxu0 0.0
      %5868 = vmatpush.msra.mxu0 0.0
      %5869 = vmatpush.msra.mxu0 0.0
      %5870 = vmatpush.msra.mxu0 0.0
      %5871 = vmatpush.msra.mxu0 0.0
      %5872 = vmatpush.msra.mxu0 %v5759
      %5873 = vmatmul.f32.gmra.mxu0 %v5747
      %v5874 = vpop.f32.mrf.mxu0
      %v5875 = vadd.f32 0.0, %v5874
      %5876 = vdwg.mxu0
      %5877 = vmatpush.msra.mxu0 0.0
      %5878 = vmatpush.msra.mxu0 0.0
      %5879 = vmatpush.msra.mxu0 0.0
      %5880 = vmatpush.msra.mxu0 0.0
      %5881 = vmatpush.msra.mxu0 0.0
      %5882 = vmatpush.msra.mxu0 0.0
      %5883 = vmatpush.msra.mxu0 0.0
      %5884 = vmatpush.msra.mxu0 0.0
      %5885 = vmatpush.msra.mxu0 0.0
      %5886 = vmatpush.msra.mxu0 0.0
      %5887 = vmatpush.msra.mxu0 0.0
      %5888 = vmatpush.msra.mxu0 0.0
      %5889 = vmatpush.msra.mxu0 0.0
      %5890 = vmatpush.msra.mxu0 0.0
      %5891 = vmatpush.msra.mxu0 0.0
      %5892 = vmatpush.msra.mxu0 %v5762
      %5893 = vmatmul.f32.gmra.mxu0 %v5747
      %v5894 = vpop.f32.mrf.mxu0
      %v5895 = vadd.f32 0.0, %v5894
      %5896 = vdwg.mxu0
      %5897 = vmatpush.msra.mxu0 0.0
      %5898 = vmatpush.msra.mxu0 0.0
      %5899 = vmatpush.msra.mxu0 0.0
      %5900 = vmatpush.msra.mxu0 0.0
      %5901 = vmatpush.msra.mxu0 0.0
      %5902 = vmatpush.msra.mxu0 0.0
      %5903 = vmatpush.msra.mxu0 0.0
      %5904 = vmatpush.msra.mxu0 0.0
      %5905 = vmatpush.msra.mxu0 0.0
      %5906 = vmatpush.msra.mxu0 0.0
      %5907 = vmatpush.msra.mxu0 0.0
      %5908 = vmatpush.msra.mxu0 0.0
      %5909 = vmatpush.msra.mxu0 0.0
      %5910 = vmatpush.msra.mxu0 0.0
      %5911 = vmatpush.msra.mxu0 0.0
      %5912 = vmatpush.msra.mxu0 %v5765
      %5913 = vmatmul.f32.gmra.mxu0 %v5747
      %v5914 = vpop.f32.mrf.mxu0
      %v5915 = vadd.f32 0.0, %v5914
      %5916 = vdwg.mxu0
      %5917 = vmatpush.msra.mxu0 0.0
      %5918 = vmatpush.msra.mxu0 0.0
      %5919 = vmatpush.msra.mxu0 0.0
      %5920 = vmatpush.msra.mxu0 0.0
      %5921 = vmatpush.msra.mxu0 0.0
      %5922 = vmatpush.msra.mxu0 0.0
      %5923 = vmatpush.msra.mxu0 0.0
      %5924 = vmatpush.msra.mxu0 0.0
      %5925 = vmatpush.msra.mxu0 0.0
      %5926 = vmatpush.msra.mxu0 0.0
      %5927 = vmatpush.msra.mxu0 0.0
      %5928 = vmatpush.msra.mxu0 0.0
      %5929 = vmatpush.msra.mxu0 0.0
      %5930 = vmatpush.msra.mxu0 0.0
      %5931 = vmatpush.msra.mxu0 0.0
      %5932 = vmatpush.msra.mxu0 %v5768
      %5933 = vmatmul.f32.gmra.mxu0 %v5747
      %v5934 = vpop.f32.mrf.mxu0
      %v5935 = vadd.f32 0.0, %v5934
      %5936 = vdwg.mxu0
      %5937 = vmatpush.msra.mxu0 0.0
      %5938 = vmatpush.msra.mxu0 0.0
      %5939 = vmatpush.msra.mxu0 0.0
      %5940 = vmatpush.msra.mxu0 0.0
      %5941 = vmatpush.msra.mxu0 0.0
      %5942 = vmatpush.msra.mxu0 0.0
      %5943 = vmatpush.msra.mxu0 0.0
      %5944 = vmatpush.msra.mxu0 0.0
      %5945 = vmatpush.msra.mxu0 0.0
      %5946 = vmatpush.msra.mxu0 0.0
      %5947 = vmatpush.msra.mxu0 0.0
      %5948 = vmatpush.msra.mxu0 0.0
      %5949 = vmatpush.msra.mxu0 0.0
      %5950 = vmatpush.msra.mxu0 0.0
      %5951 = vmatpush.msra.mxu0 0.0
      %5952 = vmatpush.msra.mxu0 %v5771
      %5953 = vmatmul.f32.gmra.mxu0 %v5747
      %v5954 = vpop.f32.mrf.mxu0
      %v5955 = vadd.f32 0.0, %v5954
      %5956 = vdwg.mxu0
      %5957 = vmatpush.msra.mxu0 0.0
      %5958 = vmatpush.msra.mxu0 0.0
      %5959 = vmatpush.msra.mxu0 0.0
      %5960 = vmatpush.msra.mxu0 0.0
      %5961 = vmatpush.msra.mxu0 0.0
      %5962 = vmatpush.msra.mxu0 0.0
      %5963 = vmatpush.msra.mxu0 0.0
      %5964 = vmatpush.msra.mxu0 0.0
      %5965 = vmatpush.msra.mxu0 0.0
      %5966 = vmatpush.msra.mxu0 0.0
      %5967 = vmatpush.msra.mxu0 0.0
      %5968 = vmatpush.msra.mxu0 0.0
      %5969 = vmatpush.msra.mxu0 0.0
      %5970 = vmatpush.msra.mxu0 0.0
      %5971 = vmatpush.msra.mxu0 0.0
      %5972 = vmatpush.msra.mxu0 %v5774
      %5973 = vmatmul.f32.gmra.mxu0 %v5747
      %v5974 = vpop.f32.mrf.mxu0
      %v5975 = vadd.f32 0.0, %v5974
      %5976 = vdwg.mxu0
      %5977 = vmatpush.msra.mxu0 0.0
      %5978 = vmatpush.msra.mxu0 0.0
      %5979 = vmatpush.msra.mxu0 0.0
      %5980 = vmatpush.msra.mxu0 0.0
      %5981 = vmatpush.msra.mxu0 0.0
      %5982 = vmatpush.msra.mxu0 0.0
      %5983 = vmatpush.msra.mxu0 0.0
      %5984 = vmatpush.msra.mxu0 0.0
      %5985 = vmatpush.msra.mxu0 0.0
      %5986 = vmatpush.msra.mxu0 0.0
      %5987 = vmatpush.msra.mxu0 0.0
      %5988 = vmatpush.msra.mxu0 0.0
      %5989 = vmatpush.msra.mxu0 0.0
      %5990 = vmatpush.msra.mxu0 0.0
      %5991 = vmatpush.msra.mxu0 0.0
      %5992 = vmatpush.msra.mxu0 %v5777
      %5993 = vmatmul.f32.gmra.mxu0 %v5747
      %v5994 = vpop.f32.mrf.mxu0
      %v5995 = vadd.f32 0.0, %v5994
      %5996 = vdwg.mxu0
      %5997 = vmatpush.msra.mxu0 0.0
      %5998 = vmatpush.msra.mxu0 0.0
      %5999 = vmatpush.msra.mxu0 0.0
      %6000 = vmatpush.msra.mxu0 0.0
      %6001 = vmatpush.msra.mxu0 0.0
      %6002 = vmatpush.msra.mxu0 0.0
      %6003 = vmatpush.msra.mxu0 0.0
      %6004 = vmatpush.msra.mxu0 0.0
      %6005 = vmatpush.msra.mxu0 0.0
      %6006 = vmatpush.msra.mxu0 0.0
      %6007 = vmatpush.msra.mxu0 0.0
      %6008 = vmatpush.msra.mxu0 0.0
      %6009 = vmatpush.msra.mxu0 0.0
      %6010 = vmatpush.msra.mxu0 0.0
      %6011 = vmatpush.msra.mxu0 0.0
      %6012 = vmatpush.msra.mxu0 %v5780
      %6013 = vmatmul.f32.gmra.mxu0 %v5747
      %v6014 = vpop.f32.mrf.mxu0
      %v6015 = vadd.f32 0.0, %v6014
      %6016 = vdwg.mxu0
      %6017 = vmatpush.msra.mxu0 0.0
      %6018 = vmatpush.msra.mxu0 0.0
      %6019 = vmatpush.msra.mxu0 0.0
      %6020 = vmatpush.msra.mxu0 0.0
      %6021 = vmatpush.msra.mxu0 0.0
      %6022 = vmatpush.msra.mxu0 0.0
      %6023 = vmatpush.msra.mxu0 0.0
      %6024 = vmatpush.msra.mxu0 0.0
      %6025 = vmatpush.msra.mxu0 0.0
      %6026 = vmatpush.msra.mxu0 0.0
      %6027 = vmatpush.msra.mxu0 0.0
      %6028 = vmatpush.msra.mxu0 0.0
      %6029 = vmatpush.msra.mxu0 0.0
      %6030 = vmatpush.msra.mxu0 0.0
      %6031 = vmatpush.msra.mxu0 0.0
      %6032 = vmatpush.msra.mxu0 %v5783
      %6033 = vmatmul.f32.gmra.mxu0 %v5747
      %v6034 = vpop.f32.mrf.mxu0
      %v6035 = vadd.f32 0.0, %v6034
      %6036 = vdwg.mxu0
      %6037 = vmatpush.msra.mxu0 0.0
      %6038 = vmatpush.msra.mxu0 0.0
      %6039 = vmatpush.msra.mxu0 0.0
      %6040 = vmatpush.msra.mxu0 0.0
      %6041 = vmatpush.msra.mxu0 0.0
      %6042 = vmatpush.msra.mxu0 0.0
      %6043 = vmatpush.msra.mxu0 0.0
      %6044 = vmatpush.msra.mxu0 0.0
      %6045 = vmatpush.msra.mxu0 0.0
      %6046 = vmatpush.msra.mxu0 0.0
      %6047 = vmatpush.msra.mxu0 0.0
      %6048 = vmatpush.msra.mxu0 0.0
      %6049 = vmatpush.msra.mxu0 0.0
      %6050 = vmatpush.msra.mxu0 0.0
      %6051 = vmatpush.msra.mxu0 0.0
      %6052 = vmatpush.msra.mxu0 %v5786
      %6053 = vmatmul.f32.gmra.mxu0 %v5747
      %v6054 = vpop.f32.mrf.mxu0
      %v6055 = vadd.f32 0.0, %v6054
      %6056 = vdwg.mxu0
      %6057 = vmatpush.msra.mxu0 0.0
      %6058 = vmatpush.msra.mxu0 0.0
      %6059 = vmatpush.msra.mxu0 0.0
      %6060 = vmatpush.msra.mxu0 0.0
      %6061 = vmatpush.msra.mxu0 0.0
      %6062 = vmatpush.msra.mxu0 0.0
      %6063 = vmatpush.msra.mxu0 0.0
      %6064 = vmatpush.msra.mxu0 0.0
      %6065 = vmatpush.msra.mxu0 0.0
      %6066 = vmatpush.msra.mxu0 0.0
      %6067 = vmatpush.msra.mxu0 0.0
      %6068 = vmatpush.msra.mxu0 0.0
      %6069 = vmatpush.msra.mxu0 0.0
      %6070 = vmatpush.msra.mxu0 0.0
      %6071 = vmatpush.msra.mxu0 0.0
      %6072 = vmatpush.msra.mxu0 %v5789
      %6073 = vmatmul.f32.gmra.mxu0 %v5747
      %v6074 = vpop.f32.mrf.mxu0
      %v6075 = vadd.f32 0.0, %v6074
      %6076 = vdwg.mxu0
      %6077 = vmatpush.msra.mxu0 0.0
      %6078 = vmatpush.msra.mxu0 0.0
      %6079 = vmatpush.msra.mxu0 0.0
      %6080 = vmatpush.msra.mxu0 0.0
      %6081 = vmatpush.msra.mxu0 0.0
      %6082 = vmatpush.msra.mxu0 0.0
      %6083 = vmatpush.msra.mxu0 0.0
      %6084 = vmatpush.msra.mxu0 0.0
      %6085 = vmatpush.msra.mxu0 0.0
      %6086 = vmatpush.msra.mxu0 0.0
      %6087 = vmatpush.msra.mxu0 0.0
      %6088 = vmatpush.msra.mxu0 0.0
      %6089 = vmatpush.msra.mxu0 0.0
      %6090 = vmatpush.msra.mxu0 0.0
      %6091 = vmatpush.msra.mxu0 0.0
      %6092 = vmatpush.msra.mxu0 %v5792
      %6093 = vmatmul.f32.gmra.mxu0 %v5747
      %v6094 = vpop.f32.mrf.mxu0
      %v6095 = vadd.f32 0.0, %v6094
      %6096 = vdwg.mxu0
      %6097 = vmatpush.msra.mxu0 0.0
      %6098 = vmatpush.msra.mxu0 0.0
      %6099 = vmatpush.msra.mxu0 0.0
      %6100 = vmatpush.msra.mxu0 0.0
      %6101 = vmatpush.msra.mxu0 0.0
      %6102 = vmatpush.msra.mxu0 0.0
      %6103 = vmatpush.msra.mxu0 0.0
      %6104 = vmatpush.msra.mxu0 0.0
      %6105 = vmatpush.msra.mxu0 0.0
      %6106 = vmatpush.msra.mxu0 0.0
      %6107 = vmatpush.msra.mxu0 0.0
      %6108 = vmatpush.msra.mxu0 0.0
      %6109 = vmatpush.msra.mxu0 0.0
      %6110 = vmatpush.msra.mxu0 0.0
      %6111 = vmatpush.msra.mxu0 0.0
      %6112 = vmatpush.msra.mxu0 %v5795
      %6113 = vmatmul.f32.gmra.mxu0 %v5747
      %v6114 = vpop.f32.mrf.mxu0
      %v6115 = vadd.f32 0.0, %v6114
      %6116 = vdwg.mxu0
      %v6117 = vadd.f32 %v5583, %v5815
      %v6118 = vadd.f32 %v5584, %v5835
      %v6119 = vadd.f32 %v5585, %v5855
      %v6120 = vadd.f32 %v5586, %v5875
      %v6121 = vadd.f32 %v5587, %v5895
      %v6122 = vadd.f32 %v5588, %v5915
      %v6123 = vadd.f32 %v5589, %v5935
      %v6124 = vadd.f32 %v5590, %v5955
      %v6125 = vadd.f32 %v5591, %v5975
      %v6126 = vadd.f32 %v5592, %v5995
      %v6127 = vadd.f32 %v5593, %v6015
      %v6128 = vadd.f32 %v5594, %v6035
      %v6129 = vadd.f32 %v5595, %v6055
      %v6130 = vadd.f32 %v5596, %v6075
      %v6131 = vadd.f32 %v5597, %v6095
      %v6132 = vadd.f32 %v5598, %v6115
      %v6133 = vld [vmem:[%s4] sm:$0xf]
      %6135 = vset.pattern.permute.xlu0 0
      %6136 = vperm.xlu0 %6135, %v6133
      %v6137 = vpop.permute.xlu0 %6136
      %v6139 = vadd.f32 %v6117, %v6137
      %v6140 = vadd.f32 %v6118, %v6137
      %v6141 = vadd.f32 %v6119, %v6137
      %v6142 = vadd.f32 %v6120, %v6137
      %v6143 = vadd.f32 %v6121, %v6137
      %v6144 = vadd.f32 %v6122, %v6137
      %v6145 = vadd.f32 %v6123, %v6137
      %v6146 = vadd.f32 %v6124, %v6137
      %v6147 = vadd.f32 %v6125, %v6137
      %v6148 = vadd.f32 %v6126, %v6137
      %v6149 = vadd.f32 %v6127, %v6137
      %v6150 = vadd.f32 %v6128, %v6137
      %v6151 = vadd.f32 %v6129, %v6137
      %v6152 = vadd.f32 %v6130, %v6137
      %v6153 = vadd.f32 %v6131, %v6137
      %v6154 = vadd.f32 %v6132, %v6137
      %v6155 = vmax.f32 %v6139, 0.0
      %v6156 = vmax.f32 %v6140, 0.0
      %v6157 = vmax.f32 %v6141, 0.0
      %v6158 = vmax.f32 %v6142, 0.0
      %v6159 = vmax.f32 %v6143, 0.0
      %v6160 = vmax.f32 %v6144, 0.0
      %v6161 = vmax.f32 %v6145, 0.0
      %v6162 = vmax.f32 %v6146, 0.0
      %v6163 = vmax.f32 %v6147, 0.0
      %v6164 = vmax.f32 %v6148, 0.0
      %v6165 = vmax.f32 %v6149, 0.0
      %v6166 = vmax.f32 %v6150, 0.0
      %v6167 = vmax.f32 %v6151, 0.0
      %v6168 = vmax.f32 %v6152, 0.0
      %v6169 = vmax.f32 %v6153, 0.0
      %v6170 = vmax.f32 %v6154, 0.0
      %v6171 = vld [vmem:[%s5] sm:$0xff]
      %v6172 = vld [vmem:[%s5 + $0x8] sm:$0xff]
      %v6173 = vld [vmem:[%s6] sm:$0xff]
      %v6174 = vld [vmem:[%s6 + $0x8] sm:$0xff]
      %6176 = vset.pattern.permute.xlu0 0
      %6177 = vperm.xlu0 %6176, %v6173
      %v6178 = vpop.permute.xlu0 %6177
      %6181 = vset.pattern.permute.xlu0 0
      %6182 = vperm.xlu0 %6181, %v6174
      %v6183 = vpop.permute.xlu0 %6182
      %v6186 = vsel %vm1786, %v6171, 0
      %v6189 = vsel %vm1786, %v6172, 0
      %v6192 = vsel %vm688, %v6155, 0
      %v6195 = vsel %vm688, %v6156, 0
      %v6198 = vsel %vm688, %v6157, 0
      %v6201 = vsel %vm688, %v6158, 0
      %v6204 = vsel %vm688, %v6159, 0
      %v6207 = vsel %vm688, %v6160, 0
      %v6210 = vsel %vm688, %v6161, 0
      %v6213 = vsel %vm688, %v6162, 0
      %v6216 = vsel %vm688, %v6163, 0
      %v6219 = vsel %vm688, %v6164, 0
      %v6222 = vsel %vm688, %v6165, 0
      %v6225 = vsel %vm688, %v6166, 0
      %v6228 = vsel %vm688, %v6167, 0
      %v6231 = vsel %vm688, %v6168, 0
      %v6234 = vsel %vm688, %v6169, 0
      %v6237 = vsel %vm688, %v6170, 0
      %6239 = vmatpush.msra.mxu0 0.0
      %6240 = vmatpush.msra.mxu0 0.0
      %6241 = vmatpush.msra.mxu0 0.0
      %6242 = vmatpush.msra.mxu0 0.0
      %6243 = vmatpush.msra.mxu0 0.0
      %6244 = vmatpush.msra.mxu0 0.0
      %6245 = vmatpush.msra.mxu0 0.0
      %6246 = vmatpush.msra.mxu0 0.0
      %6247 = vmatpush.msra.mxu0 0.0
      %6248 = vmatpush.msra.mxu0 0.0
      %6249 = vmatpush.msra.mxu0 0.0
      %6250 = vmatpush.msra.mxu0 0.0
      %6251 = vmatpush.msra.mxu0 0.0
      %6252 = vmatpush.msra.mxu0 0.0
      %6253 = vmatpush.msra.mxu0 0.0
      %6254 = vmatpush.msra.mxu0 %v6192
      %6255 = vmatmul.f32.gmra.mxu0 %v6186
      %v6256 = vpop.f32.mrf.mxu0
      %v6257 = vadd.f32 %v6178, %v6256
      %6258 = vmatmul.f32.gmra.mxu0 %v6189
      %v6259 = vpop.f32.mrf.mxu0
      %v6260 = vadd.f32 %v6183, %v6259
      %6261 = vdwg.mxu0
      %6262 = vmatpush.msra.mxu0 0.0
      %6263 = vmatpush.msra.mxu0 0.0
      %6264 = vmatpush.msra.mxu0 0.0
      %6265 = vmatpush.msra.mxu0 0.0
      %6266 = vmatpush.msra.mxu0 0.0
      %6267 = vmatpush.msra.mxu0 0.0
      %6268 = vmatpush.msra.mxu0 0.0
      %6269 = vmatpush.msra.mxu0 0.0
      %6270 = vmatpush.msra.mxu0 0.0
      %6271 = vmatpush.msra.mxu0 0.0
      %6272 = vmatpush.msra.mxu0 0.0
      %6273 = vmatpush.msra.mxu0 0.0
      %6274 = vmatpush.msra.mxu0 0.0
      %6275 = vmatpush.msra.mxu0 0.0
      %6276 = vmatpush.msra.mxu0 0.0
      %6277 = vmatpush.msra.mxu0 %v6195
      %6278 = vmatmul.f32.gmra.mxu0 %v6186
      %v6279 = vpop.f32.mrf.mxu0
      %v6280 = vadd.f32 %v6178, %v6279
      %6281 = vmatmul.f32.gmra.mxu0 %v6189
      %v6282 = vpop.f32.mrf.mxu0
      %v6283 = vadd.f32 %v6183, %v6282
      %6284 = vdwg.mxu0
      %6285 = vmatpush.msra.mxu0 0.0
      %6286 = vmatpush.msra.mxu0 0.0
      %6287 = vmatpush.msra.mxu0 0.0
      %6288 = vmatpush.msra.mxu0 0.0
      %6289 = vmatpush.msra.mxu0 0.0
      %6290 = vmatpush.msra.mxu0 0.0
      %6291 = vmatpush.msra.mxu0 0.0
      %6292 = vmatpush.msra.mxu0 0.0
      %6293 = vmatpush.msra.mxu0 0.0
      %6294 = vmatpush.msra.mxu0 0.0
      %6295 = vmatpush.msra.mxu0 0.0
      %6296 = vmatpush.msra.mxu0 0.0
      %6297 = vmatpush.msra.mxu0 0.0
      %6298 = vmatpush.msra.mxu0 0.0
      %6299 = vmatpush.msra.mxu0 0.0
      %6300 = vmatpush.msra.mxu0 %v6198
      %6301 = vmatmul.f32.gmra.mxu0 %v6186
      %v6302 = vpop.f32.mrf.mxu0
      %v6303 = vadd.f32 %v6178, %v6302
      %6304 = vmatmul.f32.gmra.mxu0 %v6189
      %v6305 = vpop.f32.mrf.mxu0
      %v6306 = vadd.f32 %v6183, %v6305
      %6307 = vdwg.mxu0
      %6308 = vmatpush.msra.mxu0 0.0
      %6309 = vmatpush.msra.mxu0 0.0
      %6310 = vmatpush.msra.mxu0 0.0
      %6311 = vmatpush.msra.mxu0 0.0
      %6312 = vmatpush.msra.mxu0 0.0
      %6313 = vmatpush.msra.mxu0 0.0
      %6314 = vmatpush.msra.mxu0 0.0
      %6315 = vmatpush.msra.mxu0 0.0
      %6316 = vmatpush.msra.mxu0 0.0
      %6317 = vmatpush.msra.mxu0 0.0
      %6318 = vmatpush.msra.mxu0 0.0
      %6319 = vmatpush.msra.mxu0 0.0
      %6320 = vmatpush.msra.mxu0 0.0
      %6321 = vmatpush.msra.mxu0 0.0
      %6322 = vmatpush.msra.mxu0 0.0
      %6323 = vmatpush.msra.mxu0 %v6201
      %6324 = vmatmul.f32.gmra.mxu0 %v6186
      %v6325 = vpop.f32.mrf.mxu0
      %v6326 = vadd.f32 %v6178, %v6325
      %6327 = vmatmul.f32.gmra.mxu0 %v6189
      %v6328 = vpop.f32.mrf.mxu0
      %v6329 = vadd.f32 %v6183, %v6328
      %6330 = vdwg.mxu0
      %6331 = vmatpush.msra.mxu0 0.0
      %6332 = vmatpush.msra.mxu0 0.0
      %6333 = vmatpush.msra.mxu0 0.0
      %6334 = vmatpush.msra.mxu0 0.0
      %6335 = vmatpush.msra.mxu0 0.0
      %6336 = vmatpush.msra.mxu0 0.0
      %6337 = vmatpush.msra.mxu0 0.0
      %6338 = vmatpush.msra.mxu0 0.0
      %6339 = vmatpush.msra.mxu0 0.0
      %6340 = vmatpush.msra.mxu0 0.0
      %6341 = vmatpush.msra.mxu0 0.0
      %6342 = vmatpush.msra.mxu0 0.0
      %6343 = vmatpush.msra.mxu0 0.0
      %6344 = vmatpush.msra.mxu0 0.0
      %6345 = vmatpush.msra.mxu0 0.0
      %6346 = vmatpush.msra.mxu0 %v6204
      %6347 = vmatmul.f32.gmra.mxu0 %v6186
      %v6348 = vpop.f32.mrf.mxu0
      %v6349 = vadd.f32 %v6178, %v6348
      %6350 = vmatmul.f32.gmra.mxu0 %v6189
      %v6351 = vpop.f32.mrf.mxu0
      %v6352 = vadd.f32 %v6183, %v6351
      %6353 = vdwg.mxu0
      %6354 = vmatpush.msra.mxu0 0.0
      %6355 = vmatpush.msra.mxu0 0.0
      %6356 = vmatpush.msra.mxu0 0.0
      %6357 = vmatpush.msra.mxu0 0.0
      %6358 = vmatpush.msra.mxu0 0.0
      %6359 = vmatpush.msra.mxu0 0.0
      %6360 = vmatpush.msra.mxu0 0.0
      %6361 = vmatpush.msra.mxu0 0.0
      %6362 = vmatpush.msra.mxu0 0.0
      %6363 = vmatpush.msra.mxu0 0.0
      %6364 = vmatpush.msra.mxu0 0.0
      %6365 = vmatpush.msra.mxu0 0.0
      %6366 = vmatpush.msra.mxu0 0.0
      %6367 = vmatpush.msra.mxu0 0.0
      %6368 = vmatpush.msra.mxu0 0.0
      %6369 = vmatpush.msra.mxu0 %v6207
      %6370 = vmatmul.f32.gmra.mxu0 %v6186
      %v6371 = vpop.f32.mrf.mxu0
      %v6372 = vadd.f32 %v6178, %v6371
      %6373 = vmatmul.f32.gmra.mxu0 %v6189
      %v6374 = vpop.f32.mrf.mxu0
      %v6375 = vadd.f32 %v6183, %v6374
      %6376 = vdwg.mxu0
      %6377 = vmatpush.msra.mxu0 0.0
      %6378 = vmatpush.msra.mxu0 0.0
      %6379 = vmatpush.msra.mxu0 0.0
      %6380 = vmatpush.msra.mxu0 0.0
      %6381 = vmatpush.msra.mxu0 0.0
      %6382 = vmatpush.msra.mxu0 0.0
      %6383 = vmatpush.msra.mxu0 0.0
      %6384 = vmatpush.msra.mxu0 0.0
      %6385 = vmatpush.msra.mxu0 0.0
      %6386 = vmatpush.msra.mxu0 0.0
      %6387 = vmatpush.msra.mxu0 0.0
      %6388 = vmatpush.msra.mxu0 0.0
      %6389 = vmatpush.msra.mxu0 0.0
      %6390 = vmatpush.msra.mxu0 0.0
      %6391 = vmatpush.msra.mxu0 0.0
      %6392 = vmatpush.msra.mxu0 %v6210
      %6393 = vmatmul.f32.gmra.mxu0 %v6186
      %v6394 = vpop.f32.mrf.mxu0
      %v6395 = vadd.f32 %v6178, %v6394
      %6396 = vmatmul.f32.gmra.mxu0 %v6189
      %v6397 = vpop.f32.mrf.mxu0
      %v6398 = vadd.f32 %v6183, %v6397
      %6399 = vdwg.mxu0
      %6400 = vmatpush.msra.mxu0 0.0
      %6401 = vmatpush.msra.mxu0 0.0
      %6402 = vmatpush.msra.mxu0 0.0
      %6403 = vmatpush.msra.mxu0 0.0
      %6404 = vmatpush.msra.mxu0 0.0
      %6405 = vmatpush.msra.mxu0 0.0
      %6406 = vmatpush.msra.mxu0 0.0
      %6407 = vmatpush.msra.mxu0 0.0
      %6408 = vmatpush.msra.mxu0 0.0
      %6409 = vmatpush.msra.mxu0 0.0
      %6410 = vmatpush.msra.mxu0 0.0
      %6411 = vmatpush.msra.mxu0 0.0
      %6412 = vmatpush.msra.mxu0 0.0
      %6413 = vmatpush.msra.mxu0 0.0
      %6414 = vmatpush.msra.mxu0 0.0
      %6415 = vmatpush.msra.mxu0 %v6213
      %6416 = vmatmul.f32.gmra.mxu0 %v6186
      %v6417 = vpop.f32.mrf.mxu0
      %v6418 = vadd.f32 %v6178, %v6417
      %6419 = vmatmul.f32.gmra.mxu0 %v6189
      %v6420 = vpop.f32.mrf.mxu0
      %v6421 = vadd.f32 %v6183, %v6420
      %6422 = vdwg.mxu0
      %6423 = vmatpush.msra.mxu0 0.0
      %6424 = vmatpush.msra.mxu0 0.0
      %6425 = vmatpush.msra.mxu0 0.0
      %6426 = vmatpush.msra.mxu0 0.0
      %6427 = vmatpush.msra.mxu0 0.0
      %6428 = vmatpush.msra.mxu0 0.0
      %6429 = vmatpush.msra.mxu0 0.0
      %6430 = vmatpush.msra.mxu0 0.0
      %6431 = vmatpush.msra.mxu0 0.0
      %6432 = vmatpush.msra.mxu0 0.0
      %6433 = vmatpush.msra.mxu0 0.0
      %6434 = vmatpush.msra.mxu0 0.0
      %6435 = vmatpush.msra.mxu0 0.0
      %6436 = vmatpush.msra.mxu0 0.0
      %6437 = vmatpush.msra.mxu0 0.0
      %6438 = vmatpush.msra.mxu0 %v6216
      %6439 = vmatmul.f32.gmra.mxu0 %v6186
      %v6440 = vpop.f32.mrf.mxu0
      %v6441 = vadd.f32 %v6178, %v6440
      %6442 = vmatmul.f32.gmra.mxu0 %v6189
      %v6443 = vpop.f32.mrf.mxu0
      %v6444 = vadd.f32 %v6183, %v6443
      %6445 = vdwg.mxu0
      %6446 = vmatpush.msra.mxu0 0.0
      %6447 = vmatpush.msra.mxu0 0.0
      %6448 = vmatpush.msra.mxu0 0.0
      %6449 = vmatpush.msra.mxu0 0.0
      %6450 = vmatpush.msra.mxu0 0.0
      %6451 = vmatpush.msra.mxu0 0.0
      %6452 = vmatpush.msra.mxu0 0.0
      %6453 = vmatpush.msra.mxu0 0.0
      %6454 = vmatpush.msra.mxu0 0.0
      %6455 = vmatpush.msra.mxu0 0.0
      %6456 = vmatpush.msra.mxu0 0.0
      %6457 = vmatpush.msra.mxu0 0.0
      %6458 = vmatpush.msra.mxu0 0.0
      %6459 = vmatpush.msra.mxu0 0.0
      %6460 = vmatpush.msra.mxu0 0.0
      %6461 = vmatpush.msra.mxu0 %v6219
      %6462 = vmatmul.f32.gmra.mxu0 %v6186
      %v6463 = vpop.f32.mrf.mxu0
      %v6464 = vadd.f32 %v6178, %v6463
      %6465 = vmatmul.f32.gmra.mxu0 %v6189
      %v6466 = vpop.f32.mrf.mxu0
      %v6467 = vadd.f32 %v6183, %v6466
      %6468 = vdwg.mxu0
      %6469 = vmatpush.msra.mxu0 0.0
      %6470 = vmatpush.msra.mxu0 0.0
      %6471 = vmatpush.msra.mxu0 0.0
      %6472 = vmatpush.msra.mxu0 0.0
      %6473 = vmatpush.msra.mxu0 0.0
      %6474 = vmatpush.msra.mxu0 0.0
      %6475 = vmatpush.msra.mxu0 0.0
      %6476 = vmatpush.msra.mxu0 0.0
      %6477 = vmatpush.msra.mxu0 0.0
      %6478 = vmatpush.msra.mxu0 0.0
      %6479 = vmatpush.msra.mxu0 0.0
      %6480 = vmatpush.msra.mxu0 0.0
      %6481 = vmatpush.msra.mxu0 0.0
      %6482 = vmatpush.msra.mxu0 0.0
      %6483 = vmatpush.msra.mxu0 0.0
      %6484 = vmatpush.msra.mxu0 %v6222
      %6485 = vmatmul.f32.gmra.mxu0 %v6186
      %v6486 = vpop.f32.mrf.mxu0
      %v6487 = vadd.f32 %v6178, %v6486
      %6488 = vmatmul.f32.gmra.mxu0 %v6189
      %v6489 = vpop.f32.mrf.mxu0
      %v6490 = vadd.f32 %v6183, %v6489
      %6491 = vdwg.mxu0
      %6492 = vmatpush.msra.mxu0 0.0
      %6493 = vmatpush.msra.mxu0 0.0
      %6494 = vmatpush.msra.mxu0 0.0
      %6495 = vmatpush.msra.mxu0 0.0
      %6496 = vmatpush.msra.mxu0 0.0
      %6497 = vmatpush.msra.mxu0 0.0
      %6498 = vmatpush.msra.mxu0 0.0
      %6499 = vmatpush.msra.mxu0 0.0
      %6500 = vmatpush.msra.mxu0 0.0
      %6501 = vmatpush.msra.mxu0 0.0
      %6502 = vmatpush.msra.mxu0 0.0
      %6503 = vmatpush.msra.mxu0 0.0
      %6504 = vmatpush.msra.mxu0 0.0
      %6505 = vmatpush.msra.mxu0 0.0
      %6506 = vmatpush.msra.mxu0 0.0
      %6507 = vmatpush.msra.mxu0 %v6225
      %6508 = vmatmul.f32.gmra.mxu0 %v6186
      %v6509 = vpop.f32.mrf.mxu0
      %v6510 = vadd.f32 %v6178, %v6509
      %6511 = vmatmul.f32.gmra.mxu0 %v6189
      %v6512 = vpop.f32.mrf.mxu0
      %v6513 = vadd.f32 %v6183, %v6512
      %6514 = vdwg.mxu0
      %6515 = vmatpush.msra.mxu0 0.0
      %6516 = vmatpush.msra.mxu0 0.0
      %6517 = vmatpush.msra.mxu0 0.0
      %6518 = vmatpush.msra.mxu0 0.0
      %6519 = vmatpush.msra.mxu0 0.0
      %6520 = vmatpush.msra.mxu0 0.0
      %6521 = vmatpush.msra.mxu0 0.0
      %6522 = vmatpush.msra.mxu0 0.0
      %6523 = vmatpush.msra.mxu0 0.0
      %6524 = vmatpush.msra.mxu0 0.0
      %6525 = vmatpush.msra.mxu0 0.0
      %6526 = vmatpush.msra.mxu0 0.0
      %6527 = vmatpush.msra.mxu0 0.0
      %6528 = vmatpush.msra.mxu0 0.0
      %6529 = vmatpush.msra.mxu0 0.0
      %6530 = vmatpush.msra.mxu0 %v6228
      %6531 = vmatmul.f32.gmra.mxu0 %v6186
      %v6532 = vpop.f32.mrf.mxu0
      %v6533 = vadd.f32 %v6178, %v6532
      %6534 = vmatmul.f32.gmra.mxu0 %v6189
      %v6535 = vpop.f32.mrf.mxu0
      %v6536 = vadd.f32 %v6183, %v6535
      %6537 = vdwg.mxu0
      %6538 = vmatpush.msra.mxu0 0.0
      %6539 = vmatpush.msra.mxu0 0.0
      %6540 = vmatpush.msra.mxu0 0.0
      %6541 = vmatpush.msra.mxu0 0.0
      %6542 = vmatpush.msra.mxu0 0.0
      %6543 = vmatpush.msra.mxu0 0.0
      %6544 = vmatpush.msra.mxu0 0.0
      %6545 = vmatpush.msra.mxu0 0.0
      %6546 = vmatpush.msra.mxu0 0.0
      %6547 = vmatpush.msra.mxu0 0.0
      %6548 = vmatpush.msra.mxu0 0.0
      %6549 = vmatpush.msra.mxu0 0.0
      %6550 = vmatpush.msra.mxu0 0.0
      %6551 = vmatpush.msra.mxu0 0.0
      %6552 = vmatpush.msra.mxu0 0.0
      %6553 = vmatpush.msra.mxu0 %v6231
      %6554 = vmatmul.f32.gmra.mxu0 %v6186
      %v6555 = vpop.f32.mrf.mxu0
      %v6556 = vadd.f32 %v6178, %v6555
      %6557 = vmatmul.f32.gmra.mxu0 %v6189
      %v6558 = vpop.f32.mrf.mxu0
      %v6559 = vadd.f32 %v6183, %v6558
      %6560 = vdwg.mxu0
      %6561 = vmatpush.msra.mxu0 0.0
      %6562 = vmatpush.msra.mxu0 0.0
      %6563 = vmatpush.msra.mxu0 0.0
      %6564 = vmatpush.msra.mxu0 0.0
      %6565 = vmatpush.msra.mxu0 0.0
      %6566 = vmatpush.msra.mxu0 0.0
      %6567 = vmatpush.msra.mxu0 0.0
      %6568 = vmatpush.msra.mxu0 0.0
      %6569 = vmatpush.msra.mxu0 0.0
      %6570 = vmatpush.msra.mxu0 0.0
      %6571 = vmatpush.msra.mxu0 0.0
      %6572 = vmatpush.msra.mxu0 0.0
      %6573 = vmatpush.msra.mxu0 0.0
      %6574 = vmatpush.msra.mxu0 0.0
      %6575 = vmatpush.msra.mxu0 0.0
      %6576 = vmatpush.msra.mxu0 %v6234
      %6577 = vmatmul.f32.gmra.mxu0 %v6186
      %v6578 = vpop.f32.mrf.mxu0
      %v6579 = vadd.f32 %v6178, %v6578
      %6580 = vmatmul.f32.gmra.mxu0 %v6189
      %v6581 = vpop.f32.mrf.mxu0
      %v6582 = vadd.f32 %v6183, %v6581
      %6583 = vdwg.mxu0
      %6584 = vmatpush.msra.mxu0 0.0
      %6585 = vmatpush.msra.mxu0 0.0
      %6586 = vmatpush.msra.mxu0 0.0
      %6587 = vmatpush.msra.mxu0 0.0
      %6588 = vmatpush.msra.mxu0 0.0
      %6589 = vmatpush.msra.mxu0 0.0
      %6590 = vmatpush.msra.mxu0 0.0
      %6591 = vmatpush.msra.mxu0 0.0
      %6592 = vmatpush.msra.mxu0 0.0
      %6593 = vmatpush.msra.mxu0 0.0
      %6594 = vmatpush.msra.mxu0 0.0
      %6595 = vmatpush.msra.mxu0 0.0
      %6596 = vmatpush.msra.mxu0 0.0
      %6597 = vmatpush.msra.mxu0 0.0
      %6598 = vmatpush.msra.mxu0 0.0
      %6599 = vmatpush.msra.mxu0 %v6237
      %6600 = vmatmul.f32.gmra.mxu0 %v6186
      %v6601 = vpop.f32.mrf.mxu0
      %v6602 = vadd.f32 %v6178, %v6601
      %6603 = vmatmul.f32.gmra.mxu0 %v6189
      %v6604 = vpop.f32.mrf.mxu0
      %v6605 = vadd.f32 %v6183, %v6604
      %6606 = vdwg.mxu0
      %v6607 = vld [vmem:[%s300] sm:$0xff]
      %v6608 = vld [vmem:[%s300 + $0x8] sm:$0xff]
      %v6609 = vld [vmem:[%s300 + $0x10] sm:$0xff]
      %v6610 = vld [vmem:[%s300 + $0x18] sm:$0xff]
      %v6611 = vld [vmem:[%s300 + $0x20] sm:$0xff]
      %v6612 = vld [vmem:[%s300 + $0x28] sm:$0xff]
      %v6613 = vld [vmem:[%s300 + $0x30] sm:$0xff]
      %v6614 = vld [vmem:[%s300 + $0x38] sm:$0xff]
      %v6615 = vld [vmem:[%s300 + $0x40] sm:$0xff]
      %v6616 = vld [vmem:[%s300 + $0x48] sm:$0xff]
      %v6617 = vld [vmem:[%s300 + $0x50] sm:$0xff]
      %v6618 = vld [vmem:[%s300 + $0x58] sm:$0xff]
      %v6619 = vld [vmem:[%s300 + $0x60] sm:$0xff]
      %v6620 = vld [vmem:[%s300 + $0x68] sm:$0xff]
      %v6621 = vld [vmem:[%s300 + $0x70] sm:$0xff]
      %v6622 = vld [vmem:[%s300 + $0x78] sm:$0xff]
      %v6623 = vld [vmem:[%s300 + $0x80] sm:$0xff]
      %v6624 = vld [vmem:[%s300 + $0x88] sm:$0xff]
      %v6625 = vld [vmem:[%s300 + $0x90] sm:$0xff]
      %v6626 = vld [vmem:[%s300 + $0x98] sm:$0xff]
      %v6627 = vld [vmem:[%s300 + $0xa0] sm:$0xff]
      %v6628 = vld [vmem:[%s300 + $0xa8] sm:$0xff]
      %v6629 = vld [vmem:[%s300 + $0xb0] sm:$0xff]
      %v6630 = vld [vmem:[%s300 + $0xb8] sm:$0xff]
      %v6631 = vld [vmem:[%s300 + $0xc0] sm:$0xff]
      %v6632 = vld [vmem:[%s300 + $0xc8] sm:$0xff]
      %v6633 = vld [vmem:[%s300 + $0xd0] sm:$0xff]
      %v6634 = vld [vmem:[%s300 + $0xd8] sm:$0xff]
      %v6635 = vld [vmem:[%s300 + $0xe0] sm:$0xff]
      %v6636 = vld [vmem:[%s300 + $0xe8] sm:$0xff]
      %v6637 = vld [vmem:[%s300 + $0xf0] sm:$0xff]
      %v6638 = vld [vmem:[%s300 + $0xf8] sm:$0xff]
      %v6639 = vadd.f32 %v6257, %v6607
      %v6640 = vadd.f32 %v6280, %v6608
      %v6641 = vadd.f32 %v6303, %v6609
      %v6642 = vadd.f32 %v6326, %v6610
      %v6643 = vadd.f32 %v6349, %v6611
      %v6644 = vadd.f32 %v6372, %v6612
      %v6645 = vadd.f32 %v6395, %v6613
      %v6646 = vadd.f32 %v6418, %v6614
      %v6647 = vadd.f32 %v6441, %v6615
      %v6648 = vadd.f32 %v6464, %v6616
      %v6649 = vadd.f32 %v6487, %v6617
      %v6650 = vadd.f32 %v6510, %v6618
      %v6651 = vadd.f32 %v6533, %v6619
      %v6652 = vadd.f32 %v6556, %v6620
      %v6653 = vadd.f32 %v6579, %v6621
      %v6654 = vadd.f32 %v6602, %v6622
      %v6655 = vadd.f32 %v6260, %v6623
      %v6656 = vadd.f32 %v6283, %v6624
      %v6657 = vadd.f32 %v6306, %v6625
      %v6658 = vadd.f32 %v6329, %v6626
      %v6659 = vadd.f32 %v6352, %v6627
      %v6660 = vadd.f32 %v6375, %v6628
      %v6661 = vadd.f32 %v6398, %v6629
      %v6662 = vadd.f32 %v6421, %v6630
      %v6663 = vadd.f32 %v6444, %v6631
      %v6664 = vadd.f32 %v6467, %v6632
      %v6665 = vadd.f32 %v6490, %v6633
      %v6666 = vadd.f32 %v6513, %v6634
      %v6667 = vadd.f32 %v6536, %v6635
      %v6668 = vadd.f32 %v6559, %v6636
      %v6669 = vadd.f32 %v6582, %v6637
      %v6670 = vadd.f32 %v6605, %v6638
      %v6671 = vmax.f32 %v6639, 0.0
      %v6672 = vmax.f32 %v6640, 0.0
      %v6673 = vmax.f32 %v6641, 0.0
      %v6674 = vmax.f32 %v6642, 0.0
      %v6675 = vmax.f32 %v6643, 0.0
      %v6676 = vmax.f32 %v6644, 0.0
      %v6677 = vmax.f32 %v6645, 0.0
      %v6678 = vmax.f32 %v6646, 0.0
      %v6679 = vmax.f32 %v6647, 0.0
      %v6680 = vmax.f32 %v6648, 0.0
      %v6681 = vmax.f32 %v6649, 0.0
      %v6682 = vmax.f32 %v6650, 0.0
      %v6683 = vmax.f32 %v6651, 0.0
      %v6684 = vmax.f32 %v6652, 0.0
      %v6685 = vmax.f32 %v6653, 0.0
      %v6686 = vmax.f32 %v6654, 0.0
      %v6687 = vmax.f32 %v6655, 0.0
      %v6688 = vmax.f32 %v6656, 0.0
      %v6689 = vmax.f32 %v6657, 0.0
      %v6690 = vmax.f32 %v6658, 0.0
      %v6691 = vmax.f32 %v6659, 0.0
      %v6692 = vmax.f32 %v6660, 0.0
      %v6693 = vmax.f32 %v6661, 0.0
      %v6694 = vmax.f32 %v6662, 0.0
      %v6695 = vmax.f32 %v6663, 0.0
      %v6696 = vmax.f32 %v6664, 0.0
      %v6697 = vmax.f32 %v6665, 0.0
      %v6698 = vmax.f32 %v6666, 0.0
      %v6699 = vmax.f32 %v6667, 0.0
      %v6700 = vmax.f32 %v6668, 0.0
      %v6701 = vmax.f32 %v6669, 0.0
      %v6702 = vmax.f32 %v6670, 0.0
      %6703 = vst [vmem:[%s305] sm:$0xff] %v6671
      %6704 = vst [vmem:[%s305 + $0x8] sm:$0xff] %v6672
      %6705 = vst [vmem:[%s305 + $0x10] sm:$0xff] %v6673
      %6706 = vst [vmem:[%s305 + $0x18] sm:$0xff] %v6674
      %6707 = vst [vmem:[%s305 + $0x20] sm:$0xff] %v6675
      %6708 = vst [vmem:[%s305 + $0x28] sm:$0xff] %v6676
      %6709 = vst [vmem:[%s305 + $0x30] sm:$0xff] %v6677
      %6710 = vst [vmem:[%s305 + $0x38] sm:$0xff] %v6678
      %6711 = vst [vmem:[%s305 + $0x40] sm:$0xff] %v6679
      %6712 = vst [vmem:[%s305 + $0x48] sm:$0xff] %v6680
      %6713 = vst [vmem:[%s305 + $0x50] sm:$0xff] %v6681
      %6714 = vst [vmem:[%s305 + $0x58] sm:$0xff] %v6682
      %6715 = vst [vmem:[%s305 + $0x60] sm:$0xff] %v6683
      %6716 = vst [vmem:[%s305 + $0x68] sm:$0xff] %v6684
      %6717 = vst [vmem:[%s305 + $0x70] sm:$0xff] %v6685
      %6718 = vst [vmem:[%s305 + $0x78] sm:$0xff] %v6686
      %6719 = vst [vmem:[%s305 + $0x80] sm:$0xff] %v6687
      %6720 = vst [vmem:[%s305 + $0x88] sm:$0xff] %v6688
      %6721 = vst [vmem:[%s305 + $0x90] sm:$0xff] %v6689
      %6722 = vst [vmem:[%s305 + $0x98] sm:$0xff] %v6690
      %6723 = vst [vmem:[%s305 + $0xa0] sm:$0xff] %v6691
      %6724 = vst [vmem:[%s305 + $0xa8] sm:$0xff] %v6692
      %6725 = vst [vmem:[%s305 + $0xb0] sm:$0xff] %v6693
      %6726 = vst [vmem:[%s305 + $0xb8] sm:$0xff] %v6694
      %6727 = vst [vmem:[%s305 + $0xc0] sm:$0xff] %v6695
      %6728 = vst [vmem:[%s305 + $0xc8] sm:$0xff] %v6696
      %6729 = vst [vmem:[%s305 + $0xd0] sm:$0xff] %v6697
      %6730 = vst [vmem:[%s305 + $0xd8] sm:$0xff] %v6698
      %6731 = vst [vmem:[%s305 + $0xe0] sm:$0xff] %v6699
      %6732 = vst [vmem:[%s305 + $0xe8] sm:$0xff] %v6700
      %6733 = vst [vmem:[%s305 + $0xf0] sm:$0xff] %v6701
      %6734 = vst [vmem:[%s305 + $0xf8] sm:$0xff] %v6702
      %p6735 = scmp.lt.s32.totalorder %s19, 1
      %s6736 = scalar_select %p6735, %s19, 1
      %s6737 = smul.addr %s6736, 32
      %s6738 = smul.addr %s6737, 8
      %s6739 = scalar_lea.vmem %s8, %s6738
      // Predicated region
      $region53: #{bottleneck3d_forward.1} parent=51 // pred_check
        %p6740 = pneg %p210
      $region54: #{bottleneck3d_forward.1} parent=51 // pred_check_branch
        %6742 = sbr.rel (%p6740) target = $region56
      $region55: #{bottleneck3d_forward.1} parent=51 // pred_region
        _
      $region56: #{bottleneck3d_forward.1} parent=51 // pred_fallthru
        _
    $region52: #{bottleneck3d_forward.1} parent=5 // pred_fallthru
      _
    %p6743 = scmp.le.s32.totalorder 2, %s14
    // Predicated region
    $region57: #{bottleneck3d_forward.1} parent=5 // pred_check
      %p6744 = pneg %p6743
    $region58: #{bottleneck3d_forward.1} parent=5 // pred_check_branch
      %6746 = sbr.rel (%p6744) target = $region60
    $region59: #{bottleneck3d_forward.1} parent=5 // pred_region
      %s6747 = ssub.s32 %s14, 2
      // Predicated region
      $region61: #{bottleneck3d_forward.1} parent=59 // pred_check
        %p6748 = pneg %p216
      $region62: #{bottleneck3d_forward.1} parent=59 // pred_check_branch
        %6750 = sbr.rel (%p6748) target = $region64
      $region63: #{bottleneck3d_forward.1} parent=59 // pred_region
        %p6751 = scmp.lt.s32.totalorder %s20, 1
        %s6752 = scalar_select %p6751, %s20, 1
        %s6753 = smul.addr %s6752, 32
        %s6754 = smul.addr %s6753, 8
        %s6755 = scalar_lea.vmem %s8, %s6754
      $region64: #{bottleneck3d_forward.1} parent=59 // pred_fallthru
        _
    $region60: #{bottleneck3d_forward.1} parent=5 // pred_fallthru
      _
  $region6: #{bottleneck3d_forward.1} parent=0 // loop_footer
    %s18 = sadd.s32 1, %s14
  $region7: #{bottleneck3d_forward.1} parent=0 // loop_footer_branch
    %13 = sbr.rel target = $region3
  $region8: #{bottleneck3d_forward.1} parent=0 // loop_exit
    _

</llo_original>
